<compile_context>
chip_gen: v7x
topology: tpu7x:2x2x1
jax: 0.10.0
libtpu: 0.0.40
codegen_flags: <defaults>
</compile_context>

<pallas_src>
import functools

import jax
import jax.numpy as jnp
from jax.experimental import pallas as pl
from jax.experimental.pallas import tpu as pltpu

VOCAB = 74963
EMB_DIM = 300
HIDDEN = 128
NUM_LAYERS = 2
BN_EPS = 1e-5
LANE = 128


# ----------------------------------------------------------------------------
# Single fused kernel: layer-0 proj + recurrence, layer-1 proj + recurrence,
# MLP head.  Gate order along the 4H axis is the PERMUTED order [i, f, o, g]
# (permutation is applied to the weights/biases once, in glue).
#
# Refs:
#   x_ref    : (T*B, Dpad)  bf16   time-major embedded inputs (zero-padded K)
#   wih{0,1} : (Din, 8H)    bf16   [W_ih_f^T | W_ih_b^T]   (gate-permuted)
#   b{0,1}l  : (1, 8H)      f32    [b_f | b_b]  (b_ih + b_hh, gate-permuted)
#   whh{0,1} : (2H, 4H)     bf16   vstack(W_hh_f^T, W_hh_b^T)  (gate-permuted)
#   w1..bm3  : MLP weights (BN folded into s*/t* scale-shift)
#   o_ref    : (B, 1)       f32
# Scratch:
#   gx_scr   : (T*B, 8H) f32  input-gate projections (reused by both layers)
#   y0_scr   : (T*B, 2H) f32  layer-0 per-timestep [h_f | h_b] outputs
# ----------------------------------------------------------------------------
def fused_bilstm_mlp_kernel(
        x_ref, wih0_ref, b0_ref, whh0_ref,
        wih1_ref, b1l_ref, whh1_ref,
        w1_ref, bm1_ref, s1_ref, t1_ref,
        w2_ref, bm2_ref, s2_ref, t2_ref,
        w3_ref, bm3_ref,
        o_ref,
        gx_scr, y0_scr):
    TB = x_ref.shape[0]
    B = o_ref.shape[0]
    T = TB // B
    H = whh0_ref.shape[0] // 2

    # Block-diagonal mask: rows [0:B] (fwd) keep cols [0:H], rows [B:2B] (bwd)
    # keep cols [H:2H].  Built once, outside the recurrent loops.
    row = jax.lax.broadcasted_iota(jnp.int32, (2 * B, 2 * H), 0)
    col = jax.lax.broadcasted_iota(jnp.int32, (2 * B, 2 * H), 1)
    fwd_blk = jnp.logical_and(row < B, col < H)
    bwd_blk = jnp.logical_and(row >= B, col >= H)
    dmask = jnp.where(jnp.logical_or(fwd_blk, bwd_blk), 1.0, 0.0)  # (2B, 2H) f32

    def bidir_recurrence(whh_ref, write_y):
        h = jnp.zeros((2 * B, H), jnp.float32)
        c = jnp.zeros((2 * B, H), jnp.float32)
        # TODO(synk): for long sequences switch to a rolled fori_loop with a
        # weight-stationary MXU setup (pltpu.matmul_push_rhs) instead of a
        # full unroll.
        for t in range(T):
            tb = T - 1 - t
            # Input-gate projections (precomputed, off the serial chain).
            gf = gx_scr[t * B:(t + 1) * B, 0:4 * H]          # fwd @ time t
            gb = gx_scr[tb * B:(tb + 1) * B, 4 * H:8 * H]    # bwd @ time T-1-t
            gx = jnp.concatenate([gf, gb], axis=0)           # (2B, 4H)

            # One fused (2B,2H) @ (2H,4H) matmul for both directions.
            # W_hh is read from VMEM inside the dot (do NOT hoist ~64 vregs
            # of weights into registers across the unrolled loop).
            lhs = (jnp.concatenate([h, h], axis=1) * dmask).astype(jnp.bfloat16)
            gates = gx + jnp.dot(lhs, whh_ref[...],
                                 preferred_element_type=jnp.float32)

            # Permuted gate order [i, f, o | g]: one contiguous sigmoid slab
            # plus one tanh slab (2 EUP issues instead of 4).
            sig = jax.nn.sigmoid(gates[:, 0:3 * H])
            g_t = jnp.tanh(gates[:, 3 * H:4 * H])
            c = sig[:, H:2 * H] * c + sig[:, 0:H] * g_t
            h = sig[:, 2 * H:3 * H] * jnp.tanh(c)

            if write_y:
                # Single (T*B, 2H) buffer: fwd in cols [0:H], bwd in [H:2H]
                # (lane-aligned slices; no XLA concat later).
                y0_scr[t * B:(t + 1) * B, 0:H] = h[0:B]
                y0_scr[tb * B:(tb + 1) * B, H:2 * H] = h[B:2 * B]
        return h

    # ---- layer 0: hoisted input projection (one big matmul) + recurrence ----
    gx_scr[...] = (jnp.dot(x_ref[...], wih0_ref[...],
                           preferred_element_type=jnp.float32) + b0_ref[...])
    bidir_recurrence(whh0_ref, write_y=True)

    # TODO(synk): inter-layer LSTM dropout (p=0.5) is training-only; identity in eval.

    # ---- layer 1: projection over layer-0 outputs + recurrence ----
    gx_scr[...] = (jnp.dot(y0_scr[...].astype(jnp.bfloat16), wih1_ref[...],
                           preferred_element_type=jnp.float32) + b1l_ref[...])
    h = bidir_recurrence(whh1_ref, write_y=False)

    # ---- fused MLP head: Linear+BN(eval)+ReLU x2 + Linear+Sigmoid ----
    # concat([h_n[-2], h_n[-1]]) along features: K = 256 single matmul.
    hcat = jnp.concatenate([h[0:B], h[B:2 * B]], axis=1).astype(jnp.bfloat16)
    h1 = jnp.dot(hcat, w1_ref[...],
                 preferred_element_type=jnp.float32) + bm1_ref[...]
    h1 = jnp.maximum(h1 * s1_ref[...] + t1_ref[...], 0.0)        # BN(eval)+ReLU
    # TODO(synk): nn.Dropout() layers are identity in eval mode.
    h2 = jnp.dot(h1.astype(jnp.bfloat16), w2_ref[...],
                 preferred_element_type=jnp.float32) + bm2_ref[...]
    h2 = jnp.maximum(h2 * s2_ref[...] + t2_ref[...], 0.0)        # BN(eval)+ReLU
    z = jnp.dot(h2.astype(jnp.bfloat16), w3_ref[...],
                preferred_element_type=jnp.float32) + bm3_ref[...]
    o_ref[...] = jax.nn.sigmoid(z)


# ----------------------------------------------------------------------------
# pallas_call wrapper (single launch, whole-array blocks, VMEM scratch).
# ----------------------------------------------------------------------------
def fused_forward(x_flat, wih0, b0, whh0, wih1, b1l, whh1,
                  w1, bm1, s1, t1, w2, bm2, s2, t2, w3, bm3, *, batch):
    TB = x_flat.shape[0]
    args = (x_flat, wih0, b0, whh0, wih1, b1l, whh1,
            w1, bm1, s1, t1, w2, bm2, s2, t2, w3, bm3)
    return pl.pallas_call(
        fused_bilstm_mlp_kernel,
        grid=(1,),
        in_specs=[pl.BlockSpec(a.shape, lambda i: (0, 0)) for a in args],
        out_specs=pl.BlockSpec((batch, 1), lambda i: (0, 0)),
        out_shape=jax.ShapeDtypeStruct((batch, 1), jnp.float32),
        scratch_shapes=[pltpu.VMEM((TB, 8 * HIDDEN), jnp.float32),
                        pltpu.VMEM((TB, 2 * HIDDEN), jnp.float32)],
        compiler_params=pltpu.CompilerParams(
            dimension_semantics=("arbitrary",)),
    )(*args)


# ----------------------------------------------------------------------------
# Weight preparation (done once in glue; constant-folded under jit).
# ----------------------------------------------------------------------------
def _perm_gates_last(w):
    """Permute the 4H gate axis (last) from PyTorch [i,f,g,o] to [i,f,o,g]."""
    H = w.shape[-1] // 4
    return jnp.concatenate([w[..., 0:2 * H], w[..., 3 * H:4 * H],
                            w[..., 2 * H:3 * H]], axis=-1)


def _layer_weights(lp):
    """Stack fwd/bwd direction weights for the fused bidirectional kernel."""
    wih = jnp.concatenate(
        [_perm_gates_last(lp["w_ih_f"].T), _perm_gates_last(lp["w_ih_b"].T)],
        axis=1).astype(jnp.bfloat16)                                 # (Din, 8H)
    bias = jnp.concatenate(
        [_perm_gates_last((lp["b_ih_f"] + lp["b_hh_f"])[None, :]),
         _perm_gates_last((lp["b_ih_b"] + lp["b_hh_b"])[None, :])],
        axis=1).astype(jnp.float32)                                  # (1, 8H)
    whh = jnp.concatenate(
        [_perm_gates_last(lp["w_hh_f"].T), _perm_gates_last(lp["w_hh_b"].T)],
        axis=0).astype(jnp.bfloat16)                                 # (2H, 4H)
    return wih, bias, whh


def _fold_bn(gamma, beta, rm, rv):
    s = gamma / jnp.sqrt(rv + BN_EPS)
    t = beta - rm * s
    return s.reshape(1, -1).astype(jnp.float32), t.reshape(1, -1).astype(jnp.float32)


# ----------------------------------------------------------------------------
# Full model forward (only the embedding gather stays in XLA glue).
# ----------------------------------------------------------------------------
def model_forward(params, x_idx):
    B, T = x_idx.shape
    emb = params["embedding"][x_idx]                       # (B, T, 300) gather
    x = jnp.transpose(emb, (1, 0, 2)).reshape(T * B, EMB_DIM).astype(jnp.bfloat16)

    # Pad the K dimension of layer-0 (300 -> 384 = 3*128) with zeros.
    pad = (-EMB_DIM) % LANE
    x = jnp.pad(x, ((0, 0), (0, pad)))

    wih0, b0, whh0 = _layer_weights(params["lstm"][0])
    wih0 = jnp.pad(wih0, ((0, pad), (0, 0)))
    wih1, b1l, whh1 = _layer_weights(params["lstm"][1])

    mlp = params["mlp"]
    s1, t1 = _fold_bn(mlp["bn1_gamma"], mlp["bn1_beta"], mlp["bn1_rm"], mlp["bn1_rv"])
    s2, t2 = _fold_bn(mlp["bn2_gamma"], mlp["bn2_beta"], mlp["bn2_rm"], mlp["bn2_rv"])
    w1 = mlp["w1"].T.astype(jnp.bfloat16)                  # (256, 128)
    bm1 = mlp["b1"].reshape(1, -1).astype(jnp.float32)
    w2 = mlp["w2"].T.astype(jnp.bfloat16)                  # (128, 64)
    bm2 = mlp["b2"].reshape(1, -1).astype(jnp.float32)
    w3 = mlp["w3"].T.astype(jnp.bfloat16)                  # (64, 1)
    bm3 = mlp["b3"].reshape(1, 1).astype(jnp.float32)

    return fused_forward(x, wih0, b0, whh0, wih1, b1l, whh1,
                         w1, bm1, s1, t1, w2, bm2, s2, t2, w3, bm3, batch=B)


# ----------------------------------------------------------------------------
# Deterministic parameter initialization (PyTorch-style init distributions).
# ----------------------------------------------------------------------------
def init_params(key):
    keys = iter(jax.random.split(key, 64))
    u = lambda shape, k: jax.random.uniform(next(keys), shape, jnp.float32, -k, k)

    params = {"embedding": jax.random.normal(next(keys), (VOCAB, EMB_DIM), jnp.float32)}

    k_lstm = 1.0 / (HIDDEN ** 0.5)
    lstm_layers = []
    for layer in range(NUM_LAYERS):
        d_in = EMB_DIM if layer == 0 else 2 * HIDDEN
        lp = {}
        for d in ("f", "b"):
            lp[f"w_ih_{d}"] = u((4 * HIDDEN, d_in), k_lstm)
            lp[f"w_hh_{d}"] = u((4 * HIDDEN, HIDDEN), k_lstm)
            lp[f"b_ih_{d}"] = u((4 * HIDDEN,), k_lstm)
            lp[f"b_hh_{d}"] = u((4 * HIDDEN,), k_lstm)
        lstm_layers.append(lp)
    params["lstm"] = lstm_layers

    mlp = {
        "w1": u((128, 256), 1.0 / (256 ** 0.5)), "b1": u((128,), 1.0 / (256 ** 0.5)),
        "bn1_gamma": jnp.ones((128,), jnp.float32), "bn1_beta": jnp.zeros((128,), jnp.float32),
        "bn1_rm": jnp.zeros((128,), jnp.float32), "bn1_rv": jnp.ones((128,), jnp.float32),
        "w2": u((64, 128), 1.0 / (128 ** 0.5)), "b2": u((64,), 1.0 / (128 ** 0.5)),
        "bn2_gamma": jnp.ones((64,), jnp.float32), "bn2_beta": jnp.zeros((64,), jnp.float32),
        "bn2_rm": jnp.zeros((64,), jnp.float32), "bn2_rv": jnp.ones((64,), jnp.float32),
        "w3": u((1, 64), 1.0 / (64 ** 0.5)), "b3": u((1,), 1.0 / (64 ** 0.5)),
    }
    params["mlp"] = mlp
    return params


if __name__ == "__main__":
    key = jax.random.PRNGKey(0)
    pkey, xkey = jax.random.split(key)

    params = init_params(pkey)

    B, T = 2, 8
    x_idx = jax.random.randint(xkey, (B, T), 0, VOCAB, dtype=jnp.int32)

    fwd = jax.jit(functools.partial(model_forward, params))
    out = fwd(x_idx)
    out = jax.block_until_ready(out)

    assert out.shape == (B, 1) and out.dtype == jnp.float32
    assert bool(jnp.all((out >= 0.0) & (out <= 1.0)))
    print("KERNEL_OK")
</pallas_src>

<mosaic_0001>
module attributes {stable_mosaic.version = 11 : i64} {
  func.func @fused_bilstm_mlp_kernel(%arg0: i32, %arg1: memref<16x384xbf16, #tpu.memory_space<vmem>>, %arg2: memref<384x1024xbf16, #tpu.memory_space<vmem>>, %arg3: memref<1x1024xf32, #tpu.memory_space<vmem>>, %arg4: memref<256x512xbf16, #tpu.memory_space<vmem>>, %arg5: memref<256x1024xbf16, #tpu.memory_space<vmem>>, %arg6: memref<1x1024xf32, #tpu.memory_space<vmem>>, %arg7: memref<256x512xbf16, #tpu.memory_space<vmem>>, %arg8: memref<256x128xbf16, #tpu.memory_space<vmem>>, %arg9: memref<1x128xf32, #tpu.memory_space<vmem>>, %arg10: memref<1x128xf32, #tpu.memory_space<vmem>>, %arg11: memref<1x128xf32, #tpu.memory_space<vmem>>, %arg12: memref<128x64xbf16, #tpu.memory_space<vmem>>, %arg13: memref<1x64xf32, #tpu.memory_space<vmem>>, %arg14: memref<1x64xf32, #tpu.memory_space<vmem>>, %arg15: memref<1x64xf32, #tpu.memory_space<vmem>>, %arg16: memref<64x1xbf16, #tpu.memory_space<vmem>>, %arg17: memref<1x1xf32, #tpu.memory_space<vmem>>, %arg18: memref<2x1xf32, #tpu.memory_space<vmem>>, %arg19: memref<16x1024xf32, #tpu.memory_space<vmem>>, %arg20: memref<16x256xf32, #tpu.memory_space<vmem>>) attributes {dimension_semantics = [#tpu.dimension_semantics<arbitrary>], iteration_bounds = array<i64: 1>, scalar_prefetch = 0 : i64, scratch_operands = 2 : i64, tpu.core_type = #tpu.core_type<tc>, window_params = [{pipeline_mode = #tpu.pipeline_mode<synchronous>, transform_indices = @transform_0, window_bounds = array<i64: 16, 384>}, {pipeline_mode = #tpu.pipeline_mode<synchronous>, transform_indices = @transform_1, window_bounds = array<i64: 384, 1024>}, {pipeline_mode = #tpu.pipeline_mode<synchronous>, transform_indices = @transform_2, window_bounds = array<i64: 1, 1024>}, {pipeline_mode = #tpu.pipeline_mode<synchronous>, transform_indices = @transform_3, window_bounds = array<i64: 256, 512>}, {pipeline_mode = #tpu.pipeline_mode<synchronous>, transform_indices = @transform_4, window_bounds = array<i64: 256, 1024>}, {pipeline_mode = #tpu.pipeline_mode<synchronous>, transform_indices = @transform_5, window_bounds = array<i64: 1, 1024>}, {pipeline_mode = #tpu.pipeline_mode<synchronous>, transform_indices = @transform_6, window_bounds = array<i64: 256, 512>}, {pipeline_mode = #tpu.pipeline_mode<synchronous>, transform_indices = @transform_7, window_bounds = array<i64: 256, 128>}, {pipeline_mode = #tpu.pipeline_mode<synchronous>, transform_indices = @transform_8, window_bounds = array<i64: 1, 128>}, {pipeline_mode = #tpu.pipeline_mode<synchronous>, transform_indices = @transform_9, window_bounds = array<i64: 1, 128>}, {pipeline_mode = #tpu.pipeline_mode<synchronous>, transform_indices = @transform_10, window_bounds = array<i64: 1, 128>}, {pipeline_mode = #tpu.pipeline_mode<synchronous>, transform_indices = @transform_11, window_bounds = array<i64: 128, 64>}, {pipeline_mode = #tpu.pipeline_mode<synchronous>, transform_indices = @transform_12, window_bounds = array<i64: 1, 64>}, {pipeline_mode = #tpu.pipeline_mode<synchronous>, transform_indices = @transform_13, window_bounds = array<i64: 1, 64>}, {pipeline_mode = #tpu.pipeline_mode<synchronous>, transform_indices = @transform_14, window_bounds = array<i64: 1, 64>}, {pipeline_mode = #tpu.pipeline_mode<synchronous>, transform_indices = @transform_15, window_bounds = array<i64: 64, 1>}, {pipeline_mode = #tpu.pipeline_mode<synchronous>, transform_indices = @transform_16, window_bounds = array<i64: 1, 1>}, {pipeline_mode = #tpu.pipeline_mode<synchronous>, transform_indices = @transform_17, window_bounds = array<i64: 2, 1>}]} {
    %0 = tpu.iota {dimensions = array<i32: 0>} : vector<4x256xi32>
    %1 = tpu.iota {dimensions = array<i32: 1>} : vector<4x256xi32>
    %c2_i32 = arith.constant 2 : i32
    %2 = vector.broadcast %c2_i32 : i32 to vector<4x256xi32>
    %3 = arith.cmpi slt, %0, %2 : vector<4x256xi32>
    %c128_i32 = arith.constant 128 : i32
    %4 = vector.broadcast %c128_i32 : i32 to vector<4x256xi32>
    %5 = arith.cmpi slt, %1, %4 : vector<4x256xi32>
    %6 = arith.andi %3, %5 : vector<4x256xi1>
    %c2_i32_0 = arith.constant 2 : i32
    %7 = vector.broadcast %c2_i32_0 : i32 to vector<4x256xi32>
    %8 = arith.cmpi sge, %0, %7 : vector<4x256xi32>
    %c128_i32_1 = arith.constant 128 : i32
    %9 = vector.broadcast %c128_i32_1 : i32 to vector<4x256xi32>
    %10 = arith.cmpi sge, %1, %9 : vector<4x256xi32>
    %11 = arith.andi %8, %10 : vector<4x256xi1>
    %12 = arith.ori %6, %11 : vector<4x256xi1>
    %cst = arith.constant 1.000000e+00 : f32
    %cst_2 = arith.constant 0.000000e+00 : f32
    %13 = vector.broadcast %cst : f32 to vector<4x256xf32>
    %14 = vector.broadcast %cst_2 : f32 to vector<4x256xf32>
    %15 = arith.select %12, %13, %14 : vector<4x256xi1>, vector<4x256xf32>
    %c0 = arith.constant 0 : index
    %c0_3 = arith.constant 0 : index
    %16 = vector.load %arg1[%c0, %c0_3] : memref<16x384xbf16, #tpu.memory_space<vmem>>, vector<16x384xbf16>
    %c0_4 = arith.constant 0 : index
    %c0_5 = arith.constant 0 : index
    %17 = vector.load %arg2[%c0_4, %c0_5] : memref<384x1024xbf16, #tpu.memory_space<vmem>>, vector<384x1024xbf16>
    %cst_6 = arith.constant dense<0.000000e+00> : vector<16x1024xf32>
    %18 = tpu.matmul %16, %17, %cst_6 {dimension_numbers = #tpu.dot_dimension_numbers<[1], [0], [0], [1], [0, 0, 1, 1], [], []>} : vector<16x384xbf16>, vector<384x1024xbf16>, vector<16x1024xf32> -> vector<16x1024xf32>
    %c0_7 = arith.constant 0 : index
    %c0_8 = arith.constant 0 : index
    %19 = vector.load %arg3[%c0_7, %c0_8] : memref<1x1024xf32, #tpu.memory_space<vmem>>, vector<1x1024xf32>
    %20 = vector.broadcast %19 : vector<1x1024xf32> to vector<16x1024xf32>
    %21 = arith.addf %18, %20 : vector<16x1024xf32>
    %c0_9 = arith.constant 0 : index
    %c0_10 = arith.constant 0 : index
    %22 = vector.load %arg19[%c0_9, %c0_10] : memref<16x1024xf32, #tpu.memory_space<vmem>>, vector<16x1024xf32>
    tpu.vector_store %arg19[%c0_9, %c0_10], %21 {strides = array<i32>} : memref<16x1024xf32, #tpu.memory_space<vmem>>, vector<16x1024xf32>,
    %cst_11 = arith.constant 0.000000e+00 : f32
    %23 = vector.broadcast %cst_11 : f32 to vector<4x128xf32>
    %cst_12 = arith.constant 0.000000e+00 : f32
    %24 = vector.broadcast %cst_12 : f32 to vector<4x128xf32>
    %c0_13 = arith.constant 0 : index
    %c0_14 = arith.constant 0 : index
    %25 = vector.load %arg19[%c0_13, %c0_14] : memref<16x1024xf32, #tpu.memory_space<vmem>>, vector<2x512xf32>
    %c14 = arith.constant 14 : index
    %c512 = arith.constant 512 : index
    %26 = vector.load %arg19[%c14, %c512] : memref<16x1024xf32, #tpu.memory_space<vmem>>, vector<2x512xf32>
    %27 = tpu.concatenate %25, %26 in 0 : vector<2x512xf32>, vector<2x512xf32> -> vector<4x512xf32>
    %28 = tpu.concatenate %23, %23 in 1 : vector<4x128xf32>, vector<4x128xf32> -> vector<4x256xf32>
    %29 = arith.mulf %28, %15 : vector<4x256xf32>
    %30 = arith.truncf %29 : vector<4x256xf32> to vector<4x256xbf16>
    %c0_15 = arith.constant 0 : index
    %c0_16 = arith.constant 0 : index
    %31 = vector.load %arg4[%c0_15, %c0_16] : memref<256x512xbf16, #tpu.memory_space<vmem>>, vector<256x512xbf16>
    %cst_17 = arith.constant dense<0.000000e+00> : vector<4x512xf32>
    %32 = tpu.matmul %30, %31, %cst_17 {dimension_numbers = #tpu.dot_dimension_numbers<[1], [0], [0], [1], [0, 0, 1, 1], [], []>} : vector<4x256xbf16>, vector<256x512xbf16>, vector<4x512xf32> -> vector<4x512xf32>
    %33 = arith.addf %27, %32 : vector<4x512xf32>
    %34 = vector.extract_strided_slice %33 {offsets = [0, 0], sizes = [4, 384], strides = [1, 1]} : vector<4x512xf32> to vector<4x384xf32>
    %35 = arith.negf %34 : vector<4x384xf32>
    %36 = math.exp %35 : vector<4x384xf32>
    %cst_18 = arith.constant 1.000000e+00 : f32
    %37 = vector.broadcast %cst_18 : f32 to vector<4x384xf32>
    %38 = arith.addf %37, %36 : vector<4x384xf32>
    %39 = arith.divf %37, %38 : vector<4x384xf32>
    %40 = vector.extract_strided_slice %33 {offsets = [0, 384], sizes = [4, 128], strides = [1, 1]} : vector<4x512xf32> to vector<4x128xf32>
    %41 = math.tanh %40 : vector<4x128xf32>
    %42 = vector.extract_strided_slice %39 {offsets = [0, 128], sizes = [4, 128], strides = [1, 1]} : vector<4x384xf32> to vector<4x128xf32>
    %43 = arith.mulf %42, %24 : vector<4x128xf32>
    %44 = vector.extract_strided_slice %39 {offsets = [0, 0], sizes = [4, 128], strides = [1, 1]} : vector<4x384xf32> to vector<4x128xf32>
    %45 = arith.mulf %44, %41 : vector<4x128xf32>
    %46 = arith.addf %43, %45 : vector<4x128xf32>
    %47 = vector.extract_strided_slice %39 {offsets = [0, 256], sizes = [4, 128], strides = [1, 1]} : vector<4x384xf32> to vector<4x128xf32>
    %48 = math.tanh %46 : vector<4x128xf32>
    %49 = arith.mulf %47, %48 : vector<4x128xf32>
    %50 = vector.extract_strided_slice %49 {offsets = [0, 0], sizes = [2, 128], strides = [1, 1]} : vector<4x128xf32> to vector<2x128xf32>
    %c0_19 = arith.constant 0 : index
    %c0_20 = arith.constant 0 : index
    %51 = vector.load %arg20[%c0_19, %c0_20] : memref<16x256xf32, #tpu.memory_space<vmem>>, vector<2x128xf32>
    tpu.vector_store %arg20[%c0_19, %c0_20], %50 {strides = array<i32>} : memref<16x256xf32, #tpu.memory_space<vmem>>, vector<2x128xf32>,
    %52 = vector.extract_strided_slice %49 {offsets = [2, 0], sizes = [2, 128], strides = [1, 1]} : vector<4x128xf32> to vector<2x128xf32>
    %c14_21 = arith.constant 14 : index
    %c128 = arith.constant 128 : index
    %53 = vector.load %arg20[%c14_21, %c128] : memref<16x256xf32, #tpu.memory_space<vmem>>, vector<2x128xf32>
    tpu.vector_store %arg20[%c14_21, %c128], %52 {strides = array<i32>} : memref<16x256xf32, #tpu.memory_space<vmem>>, vector<2x128xf32>,
    %c2 = arith.constant 2 : index
    %c0_22 = arith.constant 0 : index
    %54 = vector.load %arg19[%c2, %c0_22] : memref<16x1024xf32, #tpu.memory_space<vmem>>, vector<2x512xf32>
    %c12 = arith.constant 12 : index
    %c512_23 = arith.constant 512 : index
    %55 = vector.load %arg19[%c12, %c512_23] : memref<16x1024xf32, #tpu.memory_space<vmem>>, vector<2x512xf32>
    %56 = tpu.concatenate %54, %55 in 0 : vector<2x512xf32>, vector<2x512xf32> -> vector<4x512xf32>
    %57 = tpu.concatenate %49, %49 in 1 : vector<4x128xf32>, vector<4x128xf32> -> vector<4x256xf32>
    %58 = arith.mulf %57, %15 : vector<4x256xf32>
    %59 = arith.truncf %58 : vector<4x256xf32> to vector<4x256xbf16>
    %c0_24 = arith.constant 0 : index
    %c0_25 = arith.constant 0 : index
    %60 = vector.load %arg4[%c0_24, %c0_25] : memref<256x512xbf16, #tpu.memory_space<vmem>>, vector<256x512xbf16>
    %cst_26 = arith.constant dense<0.000000e+00> : vector<4x512xf32>
    %61 = tpu.matmul %59, %60, %cst_26 {dimension_numbers = #tpu.dot_dimension_numbers<[1], [0], [0], [1], [0, 0, 1, 1], [], []>} : vector<4x256xbf16>, vector<256x512xbf16>, vector<4x512xf32> -> vector<4x512xf32>
    %62 = arith.addf %56, %61 : vector<4x512xf32>
    %63 = vector.extract_strided_slice %62 {offsets = [0, 0], sizes = [4, 384], strides = [1, 1]} : vector<4x512xf32> to vector<4x384xf32>
    %64 = arith.negf %63 : vector<4x384xf32>
    %65 = math.exp %64 : vector<4x384xf32>
    %cst_27 = arith.constant 1.000000e+00 : f32
    %66 = vector.broadcast %cst_27 : f32 to vector<4x384xf32>
    %67 = arith.addf %66, %65 : vector<4x384xf32>
    %68 = arith.divf %66, %67 : vector<4x384xf32>
    %69 = vector.extract_strided_slice %62 {offsets = [0, 384], sizes = [4, 128], strides = [1, 1]} : vector<4x512xf32> to vector<4x128xf32>
    %70 = math.tanh %69 : vector<4x128xf32>
    %71 = vector.extract_strided_slice %68 {offsets = [0, 128], sizes = [4, 128], strides = [1, 1]} : vector<4x384xf32> to vector<4x128xf32>
    %72 = arith.mulf %71, %46 : vector<4x128xf32>
    %73 = vector.extract_strided_slice %68 {offsets = [0, 0], sizes = [4, 128], strides = [1, 1]} : vector<4x384xf32> to vector<4x128xf32>
    %74 = arith.mulf %73, %70 : vector<4x128xf32>
    %75 = arith.addf %72, %74 : vector<4x128xf32>
    %76 = vector.extract_strided_slice %68 {offsets = [0, 256], sizes = [4, 128], strides = [1, 1]} : vector<4x384xf32> to vector<4x128xf32>
    %77 = math.tanh %75 : vector<4x128xf32>
    %78 = arith.mulf %76, %77 : vector<4x128xf32>
    %79 = vector.extract_strided_slice %78 {offsets = [0, 0], sizes = [2, 128], strides = [1, 1]} : vector<4x128xf32> to vector<2x128xf32>
    %c2_28 = arith.constant 2 : index
    %c0_29 = arith.constant 0 : index
    %80 = vector.load %arg20[%c2_28, %c0_29] : memref<16x256xf32, #tpu.memory_space<vmem>>, vector<2x128xf32>
    tpu.vector_store %arg20[%c2_28, %c0_29], %79 {strides = array<i32>} : memref<16x256xf32, #tpu.memory_space<vmem>>, vector<2x128xf32>,
    %81 = vector.extract_strided_slice %78 {offsets = [2, 0], sizes = [2, 128], strides = [1, 1]} : vector<4x128xf32> to vector<2x128xf32>
    %c12_30 = arith.constant 12 : index
    %c128_31 = arith.constant 128 : index
    %82 = vector.load %arg20[%c12_30, %c128_31] : memref<16x256xf32, #tpu.memory_space<vmem>>, vector<2x128xf32>
    tpu.vector_store %arg20[%c12_30, %c128_31], %81 {strides = array<i32>} : memref<16x256xf32, #tpu.memory_space<vmem>>, vector<2x128xf32>,
    %c4 = arith.constant 4 : index
    %c0_32 = arith.constant 0 : index
    %83 = vector.load %arg19[%c4, %c0_32] : memref<16x1024xf32, #tpu.memory_space<vmem>>, vector<2x512xf32>
    %c10 = arith.constant 10 : index
    %c512_33 = arith.constant 512 : index
    %84 = vector.load %arg19[%c10, %c512_33] : memref<16x1024xf32, #tpu.memory_space<vmem>>, vector<2x512xf32>
    %85 = tpu.concatenate %83, %84 in 0 : vector<2x512xf32>, vector<2x512xf32> -> vector<4x512xf32>
    %86 = tpu.concatenate %78, %78 in 1 : vector<4x128xf32>, vector<4x128xf32> -> vector<4x256xf32>
    %87 = arith.mulf %86, %15 : vector<4x256xf32>
    %88 = arith.truncf %87 : vector<4x256xf32> to vector<4x256xbf16>
    %c0_34 = arith.constant 0 : index
    %c0_35 = arith.constant 0 : index
    %89 = vector.load %arg4[%c0_34, %c0_35] : memref<256x512xbf16, #tpu.memory_space<vmem>>, vector<256x512xbf16>
    %cst_36 = arith.constant dense<0.000000e+00> : vector<4x512xf32>
    %90 = tpu.matmul %88, %89, %cst_36 {dimension_numbers = #tpu.dot_dimension_numbers<[1], [0], [0], [1], [0, 0, 1, 1], [], []>} : vector<4x256xbf16>, vector<256x512xbf16>, vector<4x512xf32> -> vector<4x512xf32>
    %91 = arith.addf %85, %90 : vector<4x512xf32>
    %92 = vector.extract_strided_slice %91 {offsets = [0, 0], sizes = [4, 384], strides = [1, 1]} : vector<4x512xf32> to vector<4x384xf32>
    %93 = arith.negf %92 : vector<4x384xf32>
    %94 = math.exp %93 : vector<4x384xf32>
    %cst_37 = arith.constant 1.000000e+00 : f32
    %95 = vector.broadcast %cst_37 : f32 to vector<4x384xf32>
    %96 = arith.addf %95, %94 : vector<4x384xf32>
    %97 = arith.divf %95, %96 : vector<4x384xf32>
    %98 = vector.extract_strided_slice %91 {offsets = [0, 384], sizes = [4, 128], strides = [1, 1]} : vector<4x512xf32> to vector<4x128xf32>
    %99 = math.tanh %98 : vector<4x128xf32>
    %100 = vector.extract_strided_slice %97 {offsets = [0, 128], sizes = [4, 128], strides = [1, 1]} : vector<4x384xf32> to vector<4x128xf32>
    %101 = arith.mulf %100, %75 : vector<4x128xf32>
    %102 = vector.extract_strided_slice %97 {offsets = [0, 0], sizes = [4, 128], strides = [1, 1]} : vector<4x384xf32> to vector<4x128xf32>
    %103 = arith.mulf %102, %99 : vector<4x128xf32>
    %104 = arith.addf %101, %103 : vector<4x128xf32>
    %105 = vector.extract_strided_slice %97 {offsets = [0, 256], sizes = [4, 128], strides = [1, 1]} : vector<4x384xf32> to vector<4x128xf32>
    %106 = math.tanh %104 : vector<4x128xf32>
    %107 = arith.mulf %105, %106 : vector<4x128xf32>
    %108 = vector.extract_strided_slice %107 {offsets = [0, 0], sizes = [2, 128], strides = [1, 1]} : vector<4x128xf32> to vector<2x128xf32>
    %c4_38 = arith.constant 4 : index
    %c0_39 = arith.constant 0 : index
    %109 = vector.load %arg20[%c4_38, %c0_39] : memref<16x256xf32, #tpu.memory_space<vmem>>, vector<2x128xf32>
    tpu.vector_store %arg20[%c4_38, %c0_39], %108 {strides = array<i32>} : memref<16x256xf32, #tpu.memory_space<vmem>>, vector<2x128xf32>,
    %110 = vector.extract_strided_slice %107 {offsets = [2, 0], sizes = [2, 128], strides = [1, 1]} : vector<4x128xf32> to vector<2x128xf32>
    %c10_40 = arith.constant 10 : index
    %c128_41 = arith.constant 128 : index
    %111 = vector.load %arg20[%c10_40, %c128_41] : memref<16x256xf32, #tpu.memory_space<vmem>>, vector<2x128xf32>
    tpu.vector_store %arg20[%c10_40, %c128_41], %110 {strides = array<i32>} : memref<16x256xf32, #tpu.memory_space<vmem>>, vector<2x128xf32>,
    %c6 = arith.constant 6 : index
    %c0_42 = arith.constant 0 : index
    %112 = vector.load %arg19[%c6, %c0_42] : memref<16x1024xf32, #tpu.memory_space<vmem>>, vector<2x512xf32>
    %c8 = arith.constant 8 : index
    %c512_43 = arith.constant 512 : index
    %113 = vector.load %arg19[%c8, %c512_43] : memref<16x1024xf32, #tpu.memory_space<vmem>>, vector<2x512xf32>
    %114 = tpu.concatenate %112, %113 in 0 : vector<2x512xf32>, vector<2x512xf32> -> vector<4x512xf32>
    %115 = tpu.concatenate %107, %107 in 1 : vector<4x128xf32>, vector<4x128xf32> -> vector<4x256xf32>
    %116 = arith.mulf %115, %15 : vector<4x256xf32>
    %117 = arith.truncf %116 : vector<4x256xf32> to vector<4x256xbf16>
    %c0_44 = arith.constant 0 : index
    %c0_45 = arith.constant 0 : index
    %118 = vector.load %arg4[%c0_44, %c0_45] : memref<256x512xbf16, #tpu.memory_space<vmem>>, vector<256x512xbf16>
    %cst_46 = arith.constant dense<0.000000e+00> : vector<4x512xf32>
    %119 = tpu.matmul %117, %118, %cst_46 {dimension_numbers = #tpu.dot_dimension_numbers<[1], [0], [0], [1], [0, 0, 1, 1], [], []>} : vector<4x256xbf16>, vector<256x512xbf16>, vector<4x512xf32> -> vector<4x512xf32>
    %120 = arith.addf %114, %119 : vector<4x512xf32>
    %121 = vector.extract_strided_slice %120 {offsets = [0, 0], sizes = [4, 384], strides = [1, 1]} : vector<4x512xf32> to vector<4x384xf32>
    %122 = arith.negf %121 : vector<4x384xf32>
    %123 = math.exp %122 : vector<4x384xf32>
    %cst_47 = arith.constant 1.000000e+00 : f32
    %124 = vector.broadcast %cst_47 : f32 to vector<4x384xf32>
    %125 = arith.addf %124, %123 : vector<4x384xf32>
    %126 = arith.divf %124, %125 : vector<4x384xf32>
    %127 = vector.extract_strided_slice %120 {offsets = [0, 384], sizes = [4, 128], strides = [1, 1]} : vector<4x512xf32> to vector<4x128xf32>
    %128 = math.tanh %127 : vector<4x128xf32>
    %129 = vector.extract_strided_slice %126 {offsets = [0, 128], sizes = [4, 128], strides = [1, 1]} : vector<4x384xf32> to vector<4x128xf32>
    %130 = arith.mulf %129, %104 : vector<4x128xf32>
    %131 = vector.extract_strided_slice %126 {offsets = [0, 0], sizes = [4, 128], strides = [1, 1]} : vector<4x384xf32> to vector<4x128xf32>
    %132 = arith.mulf %131, %128 : vector<4x128xf32>
    %133 = arith.addf %130, %132 : vector<4x128xf32>
    %134 = vector.extract_strided_slice %126 {offsets = [0, 256], sizes = [4, 128], strides = [1, 1]} : vector<4x384xf32> to vector<4x128xf32>
    %135 = math.tanh %133 : vector<4x128xf32>
    %136 = arith.mulf %134, %135 : vector<4x128xf32>
    %137 = vector.extract_strided_slice %136 {offsets = [0, 0], sizes = [2, 128], strides = [1, 1]} : vector<4x128xf32> to vector<2x128xf32>
    %c6_48 = arith.constant 6 : index
    %c0_49 = arith.constant 0 : index
    %138 = vector.load %arg20[%c6_48, %c0_49] : memref<16x256xf32, #tpu.memory_space<vmem>>, vector<2x128xf32>
    tpu.vector_store %arg20[%c6_48, %c0_49], %137 {strides = array<i32>} : memref<16x256xf32, #tpu.memory_space<vmem>>, vector<2x128xf32>,
    %139 = vector.extract_strided_slice %136 {offsets = [2, 0], sizes = [2, 128], strides = [1, 1]} : vector<4x128xf32> to vector<2x128xf32>
    %c8_50 = arith.constant 8 : index
    %c128_51 = arith.constant 128 : index
    %140 = vector.load %arg20[%c8_50, %c128_51] : memref<16x256xf32, #tpu.memory_space<vmem>>, vector<2x128xf32>
    tpu.vector_store %arg20[%c8_50, %c128_51], %139 {strides = array<i32>} : memref<16x256xf32, #tpu.memory_space<vmem>>, vector<2x128xf32>,
    %c8_52 = arith.constant 8 : index
    %c0_53 = arith.constant 0 : index
    %141 = vector.load %arg19[%c8_52, %c0_53] : memref<16x1024xf32, #tpu.memory_space<vmem>>, vector<2x512xf32>
    %c6_54 = arith.constant 6 : index
    %c512_55 = arith.constant 512 : index
    %142 = vector.load %arg19[%c6_54, %c512_55] : memref<16x1024xf32, #tpu.memory_space<vmem>>, vector<2x512xf32>
    %143 = tpu.concatenate %141, %142 in 0 : vector<2x512xf32>, vector<2x512xf32> -> vector<4x512xf32>
    %144 = tpu.concatenate %136, %136 in 1 : vector<4x128xf32>, vector<4x128xf32> -> vector<4x256xf32>
    %145 = arith.mulf %144, %15 : vector<4x256xf32>
    %146 = arith.truncf %145 : vector<4x256xf32> to vector<4x256xbf16>
    %c0_56 = arith.constant 0 : index
    %c0_57 = arith.constant 0 : index
    %147 = vector.load %arg4[%c0_56, %c0_57] : memref<256x512xbf16, #tpu.memory_space<vmem>>, vector<256x512xbf16>
    %cst_58 = arith.constant dense<0.000000e+00> : vector<4x512xf32>
    %148 = tpu.matmul %146, %147, %cst_58 {dimension_numbers = #tpu.dot_dimension_numbers<[1], [0], [0], [1], [0, 0, 1, 1], [], []>} : vector<4x256xbf16>, vector<256x512xbf16>, vector<4x512xf32> -> vector<4x512xf32>
    %149 = arith.addf %143, %148 : vector<4x512xf32>
    %150 = vector.extract_strided_slice %149 {offsets = [0, 0], sizes = [4, 384], strides = [1, 1]} : vector<4x512xf32> to vector<4x384xf32>
    %151 = arith.negf %150 : vector<4x384xf32>
    %152 = math.exp %151 : vector<4x384xf32>
    %cst_59 = arith.constant 1.000000e+00 : f32
    %153 = vector.broadcast %cst_59 : f32 to vector<4x384xf32>
    %154 = arith.addf %153, %152 : vector<4x384xf32>
    %155 = arith.divf %153, %154 : vector<4x384xf32>
    %156 = vector.extract_strided_slice %149 {offsets = [0, 384], sizes = [4, 128], strides = [1, 1]} : vector<4x512xf32> to vector<4x128xf32>
    %157 = math.tanh %156 : vector<4x128xf32>
    %158 = vector.extract_strided_slice %155 {offsets = [0, 128], sizes = [4, 128], strides = [1, 1]} : vector<4x384xf32> to vector<4x128xf32>
    %159 = arith.mulf %158, %133 : vector<4x128xf32>
    %160 = vector.extract_strided_slice %155 {offsets = [0, 0], sizes = [4, 128], strides = [1, 1]} : vector<4x384xf32> to vector<4x128xf32>
    %161 = arith.mulf %160, %157 : vector<4x128xf32>
    %162 = arith.addf %159, %161 : vector<4x128xf32>
    %163 = vector.extract_strided_slice %155 {offsets = [0, 256], sizes = [4, 128], strides = [1, 1]} : vector<4x384xf32> to vector<4x128xf32>
    %164 = math.tanh %162 : vector<4x128xf32>
    %165 = arith.mulf %163, %164 : vector<4x128xf32>
    %166 = vector.extract_strided_slice %165 {offsets = [0, 0], sizes = [2, 128], strides = [1, 1]} : vector<4x128xf32> to vector<2x128xf32>
    %c8_60 = arith.constant 8 : index
    %c0_61 = arith.constant 0 : index
    %167 = vector.load %arg20[%c8_60, %c0_61] : memref<16x256xf32, #tpu.memory_space<vmem>>, vector<2x128xf32>
    tpu.vector_store %arg20[%c8_60, %c0_61], %166 {strides = array<i32>} : memref<16x256xf32, #tpu.memory_space<vmem>>, vector<2x128xf32>,
    %168 = vector.extract_strided_slice %165 {offsets = [2, 0], sizes = [2, 128], strides = [1, 1]} : vector<4x128xf32> to vector<2x128xf32>
    %c6_62 = arith.constant 6 : index
    %c128_63 = arith.constant 128 : index
    %169 = vector.load %arg20[%c6_62, %c128_63] : memref<16x256xf32, #tpu.memory_space<vmem>>, vector<2x128xf32>
    tpu.vector_store %arg20[%c6_62, %c128_63], %168 {strides = array<i32>} : memref<16x256xf32, #tpu.memory_space<vmem>>, vector<2x128xf32>,
    %c10_64 = arith.constant 10 : index
    %c0_65 = arith.constant 0 : index
    %170 = vector.load %arg19[%c10_64, %c0_65] : memref<16x1024xf32, #tpu.memory_space<vmem>>, vector<2x512xf32>
    %c4_66 = arith.constant 4 : index
    %c512_67 = arith.constant 512 : index
    %171 = vector.load %arg19[%c4_66, %c512_67] : memref<16x1024xf32, #tpu.memory_space<vmem>>, vector<2x512xf32>
    %172 = tpu.concatenate %170, %171 in 0 : vector<2x512xf32>, vector<2x512xf32> -> vector<4x512xf32>
    %173 = tpu.concatenate %165, %165 in 1 : vector<4x128xf32>, vector<4x128xf32> -> vector<4x256xf32>
    %174 = arith.mulf %173, %15 : vector<4x256xf32>
    %175 = arith.truncf %174 : vector<4x256xf32> to vector<4x256xbf16>
    %c0_68 = arith.constant 0 : index
    %c0_69 = arith.constant 0 : index
    %176 = vector.load %arg4[%c0_68, %c0_69] : memref<256x512xbf16, #tpu.memory_space<vmem>>, vector<256x512xbf16>
    %cst_70 = arith.constant dense<0.000000e+00> : vector<4x512xf32>
    %177 = tpu.matmul %175, %176, %cst_70 {dimension_numbers = #tpu.dot_dimension_numbers<[1], [0], [0], [1], [0, 0, 1, 1], [], []>} : vector<4x256xbf16>, vector<256x512xbf16>, vector<4x512xf32> -> vector<4x512xf32>
    %178 = arith.addf %172, %177 : vector<4x512xf32>
    %179 = vector.extract_strided_slice %178 {offsets = [0, 0], sizes = [4, 384], strides = [1, 1]} : vector<4x512xf32> to vector<4x384xf32>
    %180 = arith.negf %179 : vector<4x384xf32>
    %181 = math.exp %180 : vector<4x384xf32>
    %cst_71 = arith.constant 1.000000e+00 : f32
    %182 = vector.broadcast %cst_71 : f32 to vector<4x384xf32>
    %183 = arith.addf %182, %181 : vector<4x384xf32>
    %184 = arith.divf %182, %183 : vector<4x384xf32>
    %185 = vector.extract_strided_slice %178 {offsets = [0, 384], sizes = [4, 128], strides = [1, 1]} : vector<4x512xf32> to vector<4x128xf32>
    %186 = math.tanh %185 : vector<4x128xf32>
    %187 = vector.extract_strided_slice %184 {offsets = [0, 128], sizes = [4, 128], strides = [1, 1]} : vector<4x384xf32> to vector<4x128xf32>
    %188 = arith.mulf %187, %162 : vector<4x128xf32>
    %189 = vector.extract_strided_slice %184 {offsets = [0, 0], sizes = [4, 128], strides = [1, 1]} : vector<4x384xf32> to vector<4x128xf32>
    %190 = arith.mulf %189, %186 : vector<4x128xf32>
    %191 = arith.addf %188, %190 : vector<4x128xf32>
    %192 = vector.extract_strided_slice %184 {offsets = [0, 256], sizes = [4, 128], strides = [1, 1]} : vector<4x384xf32> to vector<4x128xf32>
    %193 = math.tanh %191 : vector<4x128xf32>
    %194 = arith.mulf %192, %193 : vector<4x128xf32>
    %195 = vector.extract_strided_slice %194 {offsets = [0, 0], sizes = [2, 128], strides = [1, 1]} : vector<4x128xf32> to vector<2x128xf32>
    %c10_72 = arith.constant 10 : index
    %c0_73 = arith.constant 0 : index
    %196 = vector.load %arg20[%c10_72, %c0_73] : memref<16x256xf32, #tpu.memory_space<vmem>>, vector<2x128xf32>
    tpu.vector_store %arg20[%c10_72, %c0_73], %195 {strides = array<i32>} : memref<16x256xf32, #tpu.memory_space<vmem>>, vector<2x128xf32>,
    %197 = vector.extract_strided_slice %194 {offsets = [2, 0], sizes = [2, 128], strides = [1, 1]} : vector<4x128xf32> to vector<2x128xf32>
    %c4_74 = arith.constant 4 : index
    %c128_75 = arith.constant 128 : index
    %198 = vector.load %arg20[%c4_74, %c128_75] : memref<16x256xf32, #tpu.memory_space<vmem>>, vector<2x128xf32>
    tpu.vector_store %arg20[%c4_74, %c128_75], %197 {strides = array<i32>} : memref<16x256xf32, #tpu.memory_space<vmem>>, vector<2x128xf32>,
    %c12_76 = arith.constant 12 : index
    %c0_77 = arith.constant 0 : index
    %199 = vector.load %arg19[%c12_76, %c0_77] : memref<16x1024xf32, #tpu.memory_space<vmem>>, vector<2x512xf32>
    %c2_78 = arith.constant 2 : index
    %c512_79 = arith.constant 512 : index
    %200 = vector.load %arg19[%c2_78, %c512_79] : memref<16x1024xf32, #tpu.memory_space<vmem>>, vector<2x512xf32>
    %201 = tpu.concatenate %199, %200 in 0 : vector<2x512xf32>, vector<2x512xf32> -> vector<4x512xf32>
    %202 = tpu.concatenate %194, %194 in 1 : vector<4x128xf32>, vector<4x128xf32> -> vector<4x256xf32>
    %203 = arith.mulf %202, %15 : vector<4x256xf32>
    %204 = arith.truncf %203 : vector<4x256xf32> to vector<4x256xbf16>
    %c0_80 = arith.constant 0 : index
    %c0_81 = arith.constant 0 : index
    %205 = vector.load %arg4[%c0_80, %c0_81] : memref<256x512xbf16, #tpu.memory_space<vmem>>, vector<256x512xbf16>
    %cst_82 = arith.constant dense<0.000000e+00> : vector<4x512xf32>
    %206 = tpu.matmul %204, %205, %cst_82 {dimension_numbers = #tpu.dot_dimension_numbers<[1], [0], [0], [1], [0, 0, 1, 1], [], []>} : vector<4x256xbf16>, vector<256x512xbf16>, vector<4x512xf32> -> vector<4x512xf32>
    %207 = arith.addf %201, %206 : vector<4x512xf32>
    %208 = vector.extract_strided_slice %207 {offsets = [0, 0], sizes = [4, 384], strides = [1, 1]} : vector<4x512xf32> to vector<4x384xf32>
    %209 = arith.negf %208 : vector<4x384xf32>
    %210 = math.exp %209 : vector<4x384xf32>
    %cst_83 = arith.constant 1.000000e+00 : f32
    %211 = vector.broadcast %cst_83 : f32 to vector<4x384xf32>
    %212 = arith.addf %211, %210 : vector<4x384xf32>
    %213 = arith.divf %211, %212 : vector<4x384xf32>
    %214 = vector.extract_strided_slice %207 {offsets = [0, 384], sizes = [4, 128], strides = [1, 1]} : vector<4x512xf32> to vector<4x128xf32>
    %215 = math.tanh %214 : vector<4x128xf32>
    %216 = vector.extract_strided_slice %213 {offsets = [0, 128], sizes = [4, 128], strides = [1, 1]} : vector<4x384xf32> to vector<4x128xf32>
    %217 = arith.mulf %216, %191 : vector<4x128xf32>
    %218 = vector.extract_strided_slice %213 {offsets = [0, 0], sizes = [4, 128], strides = [1, 1]} : vector<4x384xf32> to vector<4x128xf32>
    %219 = arith.mulf %218, %215 : vector<4x128xf32>
    %220 = arith.addf %217, %219 : vector<4x128xf32>
    %221 = vector.extract_strided_slice %213 {offsets = [0, 256], sizes = [4, 128], strides = [1, 1]} : vector<4x384xf32> to vector<4x128xf32>
    %222 = math.tanh %220 : vector<4x128xf32>
    %223 = arith.mulf %221, %222 : vector<4x128xf32>
    %224 = vector.extract_strided_slice %223 {offsets = [0, 0], sizes = [2, 128], strides = [1, 1]} : vector<4x128xf32> to vector<2x128xf32>
    %c12_84 = arith.constant 12 : index
    %c0_85 = arith.constant 0 : index
    %225 = vector.load %arg20[%c12_84, %c0_85] : memref<16x256xf32, #tpu.memory_space<vmem>>, vector<2x128xf32>
    tpu.vector_store %arg20[%c12_84, %c0_85], %224 {strides = array<i32>} : memref<16x256xf32, #tpu.memory_space<vmem>>, vector<2x128xf32>,
    %226 = vector.extract_strided_slice %223 {offsets = [2, 0], sizes = [2, 128], strides = [1, 1]} : vector<4x128xf32> to vector<2x128xf32>
    %c2_86 = arith.constant 2 : index
    %c128_87 = arith.constant 128 : index
    %227 = vector.load %arg20[%c2_86, %c128_87] : memref<16x256xf32, #tpu.memory_space<vmem>>, vector<2x128xf32>
    tpu.vector_store %arg20[%c2_86, %c128_87], %226 {strides = array<i32>} : memref<16x256xf32, #tpu.memory_space<vmem>>, vector<2x128xf32>,
    %c14_88 = arith.constant 14 : index
    %c0_89 = arith.constant 0 : index
    %228 = vector.load %arg19[%c14_88, %c0_89] : memref<16x1024xf32, #tpu.memory_space<vmem>>, vector<2x512xf32>
    %c0_90 = arith.constant 0 : index
    %c512_91 = arith.constant 512 : index
    %229 = vector.load %arg19[%c0_90, %c512_91] : memref<16x1024xf32, #tpu.memory_space<vmem>>, vector<2x512xf32>
    %230 = tpu.concatenate %228, %229 in 0 : vector<2x512xf32>, vector<2x512xf32> -> vector<4x512xf32>
    %231 = tpu.concatenate %223, %223 in 1 : vector<4x128xf32>, vector<4x128xf32> -> vector<4x256xf32>
    %232 = arith.mulf %231, %15 : vector<4x256xf32>
    %233 = arith.truncf %232 : vector<4x256xf32> to vector<4x256xbf16>
    %c0_92 = arith.constant 0 : index
    %c0_93 = arith.constant 0 : index
    %234 = vector.load %arg4[%c0_92, %c0_93] : memref<256x512xbf16, #tpu.memory_space<vmem>>, vector<256x512xbf16>
    %cst_94 = arith.constant dense<0.000000e+00> : vector<4x512xf32>
    %235 = tpu.matmul %233, %234, %cst_94 {dimension_numbers = #tpu.dot_dimension_numbers<[1], [0], [0], [1], [0, 0, 1, 1], [], []>} : vector<4x256xbf16>, vector<256x512xbf16>, vector<4x512xf32> -> vector<4x512xf32>
    %236 = arith.addf %230, %235 : vector<4x512xf32>
    %237 = vector.extract_strided_slice %236 {offsets = [0, 0], sizes = [4, 384], strides = [1, 1]} : vector<4x512xf32> to vector<4x384xf32>
    %238 = arith.negf %237 : vector<4x384xf32>
    %239 = math.exp %238 : vector<4x384xf32>
    %cst_95 = arith.constant 1.000000e+00 : f32
    %240 = vector.broadcast %cst_95 : f32 to vector<4x384xf32>
    %241 = arith.addf %240, %239 : vector<4x384xf32>
    %242 = arith.divf %240, %241 : vector<4x384xf32>
    %243 = vector.extract_strided_slice %236 {offsets = [0, 384], sizes = [4, 128], strides = [1, 1]} : vector<4x512xf32> to vector<4x128xf32>
    %244 = math.tanh %243 : vector<4x128xf32>
    %245 = vector.extract_strided_slice %242 {offsets = [0, 128], sizes = [4, 128], strides = [1, 1]} : vector<4x384xf32> to vector<4x128xf32>
    %246 = arith.mulf %245, %220 : vector<4x128xf32>
    %247 = vector.extract_strided_slice %242 {offsets = [0, 0], sizes = [4, 128], strides = [1, 1]} : vector<4x384xf32> to vector<4x128xf32>
    %248 = arith.mulf %247, %244 : vector<4x128xf32>
    %249 = arith.addf %246, %248 : vector<4x128xf32>
    %250 = vector.extract_strided_slice %242 {offsets = [0, 256], sizes = [4, 128], strides = [1, 1]} : vector<4x384xf32> to vector<4x128xf32>
    %251 = math.tanh %249 : vector<4x128xf32>
    %252 = arith.mulf %250, %251 : vector<4x128xf32>
    %253 = vector.extract_strided_slice %252 {offsets = [0, 0], sizes = [2, 128], strides = [1, 1]} : vector<4x128xf32> to vector<2x128xf32>
    %c14_96 = arith.constant 14 : index
    %c0_97 = arith.constant 0 : index
    %254 = vector.load %arg20[%c14_96, %c0_97] : memref<16x256xf32, #tpu.memory_space<vmem>>, vector<2x128xf32>
    tpu.vector_store %arg20[%c14_96, %c0_97], %253 {strides = array<i32>} : memref<16x256xf32, #tpu.memory_space<vmem>>, vector<2x128xf32>,
    %255 = vector.extract_strided_slice %252 {offsets = [2, 0], sizes = [2, 128], strides = [1, 1]} : vector<4x128xf32> to vector<2x128xf32>
    %c0_98 = arith.constant 0 : index
    %c128_99 = arith.constant 128 : index
    %256 = vector.load %arg20[%c0_98, %c128_99] : memref<16x256xf32, #tpu.memory_space<vmem>>, vector<2x128xf32>
    tpu.vector_store %arg20[%c0_98, %c128_99], %255 {strides = array<i32>} : memref<16x256xf32, #tpu.memory_space<vmem>>, vector<2x128xf32>,
    %c0_100 = arith.constant 0 : index
    %c0_101 = arith.constant 0 : index
    %257 = vector.load %arg20[%c0_100, %c0_101] : memref<16x256xf32, #tpu.memory_space<vmem>>, vector<16x256xf32>
    %258 = arith.truncf %257 : vector<16x256xf32> to vector<16x256xbf16>
    %c0_102 = arith.constant 0 : index
    %c0_103 = arith.constant 0 : index
    %259 = vector.load %arg5[%c0_102, %c0_103] : memref<256x1024xbf16, #tpu.memory_space<vmem>>, vector<256x1024xbf16>
    %cst_104 = arith.constant dense<0.000000e+00> : vector<16x1024xf32>
    %260 = tpu.matmul %258, %259, %cst_104 {dimension_numbers = #tpu.dot_dimension_numbers<[1], [0], [0], [1], [0, 0, 1, 1], [], []>} : vector<16x256xbf16>, vector<256x1024xbf16>, vector<16x1024xf32> -> vector<16x1024xf32>
    %c0_105 = arith.constant 0 : index
    %c0_106 = arith.constant 0 : index
    %261 = vector.load %arg6[%c0_105, %c0_106] : memref<1x1024xf32, #tpu.memory_space<vmem>>, vector<1x1024xf32>
    %262 = vector.broadcast %261 : vector<1x1024xf32> to vector<16x1024xf32>
    %263 = arith.addf %260, %262 : vector<16x1024xf32>
    %c0_107 = arith.constant 0 : index
    %c0_108 = arith.constant 0 : index
    %264 = vector.load %arg19[%c0_107, %c0_108] : memref<16x1024xf32, #tpu.memory_space<vmem>>, vector<16x1024xf32>
    tpu.vector_store %arg19[%c0_107, %c0_108], %263 {strides = array<i32>} : memref<16x1024xf32, #tpu.memory_space<vmem>>, vector<16x1024xf32>,
    %cst_109 = arith.constant 0.000000e+00 : f32
    %265 = vector.broadcast %cst_109 : f32 to vector<4x128xf32>
    %cst_110 = arith.constant 0.000000e+00 : f32
    %266 = vector.broadcast %cst_110 : f32 to vector<4x128xf32>
    %c0_111 = arith.constant 0 : index
    %c0_112 = arith.constant 0 : index
    %267 = vector.load %arg19[%c0_111, %c0_112] : memref<16x1024xf32, #tpu.memory_space<vmem>>, vector<2x512xf32>
    %c14_113 = arith.constant 14 : index
    %c512_114 = arith.constant 512 : index
    %268 = vector.load %arg19[%c14_113, %c512_114] : memref<16x1024xf32, #tpu.memory_space<vmem>>, vector<2x512xf32>
    %269 = tpu.concatenate %267, %268 in 0 : vector<2x512xf32>, vector<2x512xf32> -> vector<4x512xf32>
    %270 = tpu.concatenate %265, %265 in 1 : vector<4x128xf32>, vector<4x128xf32> -> vector<4x256xf32>
    %271 = arith.mulf %270, %15 : vector<4x256xf32>
    %272 = arith.truncf %271 : vector<4x256xf32> to vector<4x256xbf16>
    %c0_115 = arith.constant 0 : index
    %c0_116 = arith.constant 0 : index
    %273 = vector.load %arg7[%c0_115, %c0_116] : memref<256x512xbf16, #tpu.memory_space<vmem>>, vector<256x512xbf16>
    %cst_117 = arith.constant dense<0.000000e+00> : vector<4x512xf32>
    %274 = tpu.matmul %272, %273, %cst_117 {dimension_numbers = #tpu.dot_dimension_numbers<[1], [0], [0], [1], [0, 0, 1, 1], [], []>} : vector<4x256xbf16>, vector<256x512xbf16>, vector<4x512xf32> -> vector<4x512xf32>
    %275 = arith.addf %269, %274 : vector<4x512xf32>
    %276 = vector.extract_strided_slice %275 {offsets = [0, 0], sizes = [4, 384], strides = [1, 1]} : vector<4x512xf32> to vector<4x384xf32>
    %277 = arith.negf %276 : vector<4x384xf32>
    %278 = math.exp %277 : vector<4x384xf32>
    %cst_118 = arith.constant 1.000000e+00 : f32
    %279 = vector.broadcast %cst_118 : f32 to vector<4x384xf32>
    %280 = arith.addf %279, %278 : vector<4x384xf32>
    %281 = arith.divf %279, %280 : vector<4x384xf32>
    %282 = vector.extract_strided_slice %275 {offsets = [0, 384], sizes = [4, 128], strides = [1, 1]} : vector<4x512xf32> to vector<4x128xf32>
    %283 = math.tanh %282 : vector<4x128xf32>
    %284 = vector.extract_strided_slice %281 {offsets = [0, 128], sizes = [4, 128], strides = [1, 1]} : vector<4x384xf32> to vector<4x128xf32>
    %285 = arith.mulf %284, %266 : vector<4x128xf32>
    %286 = vector.extract_strided_slice %281 {offsets = [0, 0], sizes = [4, 128], strides = [1, 1]} : vector<4x384xf32> to vector<4x128xf32>
    %287 = arith.mulf %286, %283 : vector<4x128xf32>
    %288 = arith.addf %285, %287 : vector<4x128xf32>
    %289 = vector.extract_strided_slice %281 {offsets = [0, 256], sizes = [4, 128], strides = [1, 1]} : vector<4x384xf32> to vector<4x128xf32>
    %290 = math.tanh %288 : vector<4x128xf32>
    %291 = arith.mulf %289, %290 : vector<4x128xf32>
    %c2_119 = arith.constant 2 : index
    %c0_120 = arith.constant 0 : index
    %292 = vector.load %arg19[%c2_119, %c0_120] : memref<16x1024xf32, #tpu.memory_space<vmem>>, vector<2x512xf32>
    %c12_121 = arith.constant 12 : index
    %c512_122 = arith.constant 512 : index
    %293 = vector.load %arg19[%c12_121, %c512_122] : memref<16x1024xf32, #tpu.memory_space<vmem>>, vector<2x512xf32>
    %294 = tpu.concatenate %292, %293 in 0 : vector<2x512xf32>, vector<2x512xf32> -> vector<4x512xf32>
    %295 = tpu.concatenate %291, %291 in 1 : vector<4x128xf32>, vector<4x128xf32> -> vector<4x256xf32>
    %296 = arith.mulf %295, %15 : vector<4x256xf32>
    %297 = arith.truncf %296 : vector<4x256xf32> to vector<4x256xbf16>
    %c0_123 = arith.constant 0 : index
    %c0_124 = arith.constant 0 : index
    %298 = vector.load %arg7[%c0_123, %c0_124] : memref<256x512xbf16, #tpu.memory_space<vmem>>, vector<256x512xbf16>
    %cst_125 = arith.constant dense<0.000000e+00> : vector<4x512xf32>
    %299 = tpu.matmul %297, %298, %cst_125 {dimension_numbers = #tpu.dot_dimension_numbers<[1], [0], [0], [1], [0, 0, 1, 1], [], []>} : vector<4x256xbf16>, vector<256x512xbf16>, vector<4x512xf32> -> vector<4x512xf32>
    %300 = arith.addf %294, %299 : vector<4x512xf32>
    %301 = vector.extract_strided_slice %300 {offsets = [0, 0], sizes = [4, 384], strides = [1, 1]} : vector<4x512xf32> to vector<4x384xf32>
    %302 = arith.negf %301 : vector<4x384xf32>
    %303 = math.exp %302 : vector<4x384xf32>
    %cst_126 = arith.constant 1.000000e+00 : f32
    %304 = vector.broadcast %cst_126 : f32 to vector<4x384xf32>
    %305 = arith.addf %304, %303 : vector<4x384xf32>
    %306 = arith.divf %304, %305 : vector<4x384xf32>
    %307 = vector.extract_strided_slice %300 {offsets = [0, 384], sizes = [4, 128], strides = [1, 1]} : vector<4x512xf32> to vector<4x128xf32>
    %308 = math.tanh %307 : vector<4x128xf32>
    %309 = vector.extract_strided_slice %306 {offsets = [0, 128], sizes = [4, 128], strides = [1, 1]} : vector<4x384xf32> to vector<4x128xf32>
    %310 = arith.mulf %309, %288 : vector<4x128xf32>
    %311 = vector.extract_strided_slice %306 {offsets = [0, 0], sizes = [4, 128], strides = [1, 1]} : vector<4x384xf32> to vector<4x128xf32>
    %312 = arith.mulf %311, %308 : vector<4x128xf32>
    %313 = arith.addf %310, %312 : vector<4x128xf32>
    %314 = vector.extract_strided_slice %306 {offsets = [0, 256], sizes = [4, 128], strides = [1, 1]} : vector<4x384xf32> to vector<4x128xf32>
    %315 = math.tanh %313 : vector<4x128xf32>
    %316 = arith.mulf %314, %315 : vector<4x128xf32>
    %c4_127 = arith.constant 4 : index
    %c0_128 = arith.constant 0 : index
    %317 = vector.load %arg19[%c4_127, %c0_128] : memref<16x1024xf32, #tpu.memory_space<vmem>>, vector<2x512xf32>
    %c10_129 = arith.constant 10 : index
    %c512_130 = arith.constant 512 : index
    %318 = vector.load %arg19[%c10_129, %c512_130] : memref<16x1024xf32, #tpu.memory_space<vmem>>, vector<2x512xf32>
    %319 = tpu.concatenate %317, %318 in 0 : vector<2x512xf32>, vector<2x512xf32> -> vector<4x512xf32>
    %320 = tpu.concatenate %316, %316 in 1 : vector<4x128xf32>, vector<4x128xf32> -> vector<4x256xf32>
    %321 = arith.mulf %320, %15 : vector<4x256xf32>
    %322 = arith.truncf %321 : vector<4x256xf32> to vector<4x256xbf16>
    %c0_131 = arith.constant 0 : index
    %c0_132 = arith.constant 0 : index
    %323 = vector.load %arg7[%c0_131, %c0_132] : memref<256x512xbf16, #tpu.memory_space<vmem>>, vector<256x512xbf16>
    %cst_133 = arith.constant dense<0.000000e+00> : vector<4x512xf32>
    %324 = tpu.matmul %322, %323, %cst_133 {dimension_numbers = #tpu.dot_dimension_numbers<[1], [0], [0], [1], [0, 0, 1, 1], [], []>} : vector<4x256xbf16>, vector<256x512xbf16>, vector<4x512xf32> -> vector<4x512xf32>
    %325 = arith.addf %319, %324 : vector<4x512xf32>
    %326 = vector.extract_strided_slice %325 {offsets = [0, 0], sizes = [4, 384], strides = [1, 1]} : vector<4x512xf32> to vector<4x384xf32>
    %327 = arith.negf %326 : vector<4x384xf32>
    %328 = math.exp %327 : vector<4x384xf32>
    %cst_134 = arith.constant 1.000000e+00 : f32
    %329 = vector.broadcast %cst_134 : f32 to vector<4x384xf32>
    %330 = arith.addf %329, %328 : vector<4x384xf32>
    %331 = arith.divf %329, %330 : vector<4x384xf32>
    %332 = vector.extract_strided_slice %325 {offsets = [0, 384], sizes = [4, 128], strides = [1, 1]} : vector<4x512xf32> to vector<4x128xf32>
    %333 = math.tanh %332 : vector<4x128xf32>
    %334 = vector.extract_strided_slice %331 {offsets = [0, 128], sizes = [4, 128], strides = [1, 1]} : vector<4x384xf32> to vector<4x128xf32>
    %335 = arith.mulf %334, %313 : vector<4x128xf32>
    %336 = vector.extract_strided_slice %331 {offsets = [0, 0], sizes = [4, 128], strides = [1, 1]} : vector<4x384xf32> to vector<4x128xf32>
    %337 = arith.mulf %336, %333 : vector<4x128xf32>
    %338 = arith.addf %335, %337 : vector<4x128xf32>
    %339 = vector.extract_strided_slice %331 {offsets = [0, 256], sizes = [4, 128], strides = [1, 1]} : vector<4x384xf32> to vector<4x128xf32>
    %340 = math.tanh %338 : vector<4x128xf32>
    %341 = arith.mulf %339, %340 : vector<4x128xf32>
    %c6_135 = arith.constant 6 : index
    %c0_136 = arith.constant 0 : index
    %342 = vector.load %arg19[%c6_135, %c0_136] : memref<16x1024xf32, #tpu.memory_space<vmem>>, vector<2x512xf32>
    %c8_137 = arith.constant 8 : index
    %c512_138 = arith.constant 512 : index
    %343 = vector.load %arg19[%c8_137, %c512_138] : memref<16x1024xf32, #tpu.memory_space<vmem>>, vector<2x512xf32>
    %344 = tpu.concatenate %342, %343 in 0 : vector<2x512xf32>, vector<2x512xf32> -> vector<4x512xf32>
    %345 = tpu.concatenate %341, %341 in 1 : vector<4x128xf32>, vector<4x128xf32> -> vector<4x256xf32>
    %346 = arith.mulf %345, %15 : vector<4x256xf32>
    %347 = arith.truncf %346 : vector<4x256xf32> to vector<4x256xbf16>
    %c0_139 = arith.constant 0 : index
    %c0_140 = arith.constant 0 : index
    %348 = vector.load %arg7[%c0_139, %c0_140] : memref<256x512xbf16, #tpu.memory_space<vmem>>, vector<256x512xbf16>
    %cst_141 = arith.constant dense<0.000000e+00> : vector<4x512xf32>
    %349 = tpu.matmul %347, %348, %cst_141 {dimension_numbers = #tpu.dot_dimension_numbers<[1], [0], [0], [1], [0, 0, 1, 1], [], []>} : vector<4x256xbf16>, vector<256x512xbf16>, vector<4x512xf32> -> vector<4x512xf32>
    %350 = arith.addf %344, %349 : vector<4x512xf32>
    %351 = vector.extract_strided_slice %350 {offsets = [0, 0], sizes = [4, 384], strides = [1, 1]} : vector<4x512xf32> to vector<4x384xf32>
    %352 = arith.negf %351 : vector<4x384xf32>
    %353 = math.exp %352 : vector<4x384xf32>
    %cst_142 = arith.constant 1.000000e+00 : f32
    %354 = vector.broadcast %cst_142 : f32 to vector<4x384xf32>
    %355 = arith.addf %354, %353 : vector<4x384xf32>
    %356 = arith.divf %354, %355 : vector<4x384xf32>
    %357 = vector.extract_strided_slice %350 {offsets = [0, 384], sizes = [4, 128], strides = [1, 1]} : vector<4x512xf32> to vector<4x128xf32>
    %358 = math.tanh %357 : vector<4x128xf32>
    %359 = vector.extract_strided_slice %356 {offsets = [0, 128], sizes = [4, 128], strides = [1, 1]} : vector<4x384xf32> to vector<4x128xf32>
    %360 = arith.mulf %359, %338 : vector<4x128xf32>
    %361 = vector.extract_strided_slice %356 {offsets = [0, 0], sizes = [4, 128], strides = [1, 1]} : vector<4x384xf32> to vector<4x128xf32>
    %362 = arith.mulf %361, %358 : vector<4x128xf32>
    %363 = arith.addf %360, %362 : vector<4x128xf32>
    %364 = vector.extract_strided_slice %356 {offsets = [0, 256], sizes = [4, 128], strides = [1, 1]} : vector<4x384xf32> to vector<4x128xf32>
    %365 = math.tanh %363 : vector<4x128xf32>
    %366 = arith.mulf %364, %365 : vector<4x128xf32>
    %c8_143 = arith.constant 8 : index
    %c0_144 = arith.constant 0 : index
    %367 = vector.load %arg19[%c8_143, %c0_144] : memref<16x1024xf32, #tpu.memory_space<vmem>>, vector<2x512xf32>
    %c6_145 = arith.constant 6 : index
    %c512_146 = arith.constant 512 : index
    %368 = vector.load %arg19[%c6_145, %c512_146] : memref<16x1024xf32, #tpu.memory_space<vmem>>, vector<2x512xf32>
    %369 = tpu.concatenate %367, %368 in 0 : vector<2x512xf32>, vector<2x512xf32> -> vector<4x512xf32>
    %370 = tpu.concatenate %366, %366 in 1 : vector<4x128xf32>, vector<4x128xf32> -> vector<4x256xf32>
    %371 = arith.mulf %370, %15 : vector<4x256xf32>
    %372 = arith.truncf %371 : vector<4x256xf32> to vector<4x256xbf16>
    %c0_147 = arith.constant 0 : index
    %c0_148 = arith.constant 0 : index
    %373 = vector.load %arg7[%c0_147, %c0_148] : memref<256x512xbf16, #tpu.memory_space<vmem>>, vector<256x512xbf16>
    %cst_149 = arith.constant dense<0.000000e+00> : vector<4x512xf32>
    %374 = tpu.matmul %372, %373, %cst_149 {dimension_numbers = #tpu.dot_dimension_numbers<[1], [0], [0], [1], [0, 0, 1, 1], [], []>} : vector<4x256xbf16>, vector<256x512xbf16>, vector<4x512xf32> -> vector<4x512xf32>
    %375 = arith.addf %369, %374 : vector<4x512xf32>
    %376 = vector.extract_strided_slice %375 {offsets = [0, 0], sizes = [4, 384], strides = [1, 1]} : vector<4x512xf32> to vector<4x384xf32>
    %377 = arith.negf %376 : vector<4x384xf32>
    %378 = math.exp %377 : vector<4x384xf32>
    %cst_150 = arith.constant 1.000000e+00 : f32
    %379 = vector.broadcast %cst_150 : f32 to vector<4x384xf32>
    %380 = arith.addf %379, %378 : vector<4x384xf32>
    %381 = arith.divf %379, %380 : vector<4x384xf32>
    %382 = vector.extract_strided_slice %375 {offsets = [0, 384], sizes = [4, 128], strides = [1, 1]} : vector<4x512xf32> to vector<4x128xf32>
    %383 = math.tanh %382 : vector<4x128xf32>
    %384 = vector.extract_strided_slice %381 {offsets = [0, 128], sizes = [4, 128], strides = [1, 1]} : vector<4x384xf32> to vector<4x128xf32>
    %385 = arith.mulf %384, %363 : vector<4x128xf32>
    %386 = vector.extract_strided_slice %381 {offsets = [0, 0], sizes = [4, 128], strides = [1, 1]} : vector<4x384xf32> to vector<4x128xf32>
    %387 = arith.mulf %386, %383 : vector<4x128xf32>
    %388 = arith.addf %385, %387 : vector<4x128xf32>
    %389 = vector.extract_strided_slice %381 {offsets = [0, 256], sizes = [4, 128], strides = [1, 1]} : vector<4x384xf32> to vector<4x128xf32>
    %390 = math.tanh %388 : vector<4x128xf32>
    %391 = arith.mulf %389, %390 : vector<4x128xf32>
    %c10_151 = arith.constant 10 : index
    %c0_152 = arith.constant 0 : index
    %392 = vector.load %arg19[%c10_151, %c0_152] : memref<16x1024xf32, #tpu.memory_space<vmem>>, vector<2x512xf32>
    %c4_153 = arith.constant 4 : index
    %c512_154 = arith.constant 512 : index
    %393 = vector.load %arg19[%c4_153, %c512_154] : memref<16x1024xf32, #tpu.memory_space<vmem>>, vector<2x512xf32>
    %394 = tpu.concatenate %392, %393 in 0 : vector<2x512xf32>, vector<2x512xf32> -> vector<4x512xf32>
    %395 = tpu.concatenate %391, %391 in 1 : vector<4x128xf32>, vector<4x128xf32> -> vector<4x256xf32>
    %396 = arith.mulf %395, %15 : vector<4x256xf32>
    %397 = arith.truncf %396 : vector<4x256xf32> to vector<4x256xbf16>
    %c0_155 = arith.constant 0 : index
    %c0_156 = arith.constant 0 : index
    %398 = vector.load %arg7[%c0_155, %c0_156] : memref<256x512xbf16, #tpu.memory_space<vmem>>, vector<256x512xbf16>
    %cst_157 = arith.constant dense<0.000000e+00> : vector<4x512xf32>
    %399 = tpu.matmul %397, %398, %cst_157 {dimension_numbers = #tpu.dot_dimension_numbers<[1], [0], [0], [1], [0, 0, 1, 1], [], []>} : vector<4x256xbf16>, vector<256x512xbf16>, vector<4x512xf32> -> vector<4x512xf32>
    %400 = arith.addf %394, %399 : vector<4x512xf32>
    %401 = vector.extract_strided_slice %400 {offsets = [0, 0], sizes = [4, 384], strides = [1, 1]} : vector<4x512xf32> to vector<4x384xf32>
    %402 = arith.negf %401 : vector<4x384xf32>
    %403 = math.exp %402 : vector<4x384xf32>
    %cst_158 = arith.constant 1.000000e+00 : f32
    %404 = vector.broadcast %cst_158 : f32 to vector<4x384xf32>
    %405 = arith.addf %404, %403 : vector<4x384xf32>
    %406 = arith.divf %404, %405 : vector<4x384xf32>
    %407 = vector.extract_strided_slice %400 {offsets = [0, 384], sizes = [4, 128], strides = [1, 1]} : vector<4x512xf32> to vector<4x128xf32>
    %408 = math.tanh %407 : vector<4x128xf32>
    %409 = vector.extract_strided_slice %406 {offsets = [0, 128], sizes = [4, 128], strides = [1, 1]} : vector<4x384xf32> to vector<4x128xf32>
    %410 = arith.mulf %409, %388 : vector<4x128xf32>
    %411 = vector.extract_strided_slice %406 {offsets = [0, 0], sizes = [4, 128], strides = [1, 1]} : vector<4x384xf32> to vector<4x128xf32>
    %412 = arith.mulf %411, %408 : vector<4x128xf32>
    %413 = arith.addf %410, %412 : vector<4x128xf32>
    %414 = vector.extract_strided_slice %406 {offsets = [0, 256], sizes = [4, 128], strides = [1, 1]} : vector<4x384xf32> to vector<4x128xf32>
    %415 = math.tanh %413 : vector<4x128xf32>
    %416 = arith.mulf %414, %415 : vector<4x128xf32>
    %c12_159 = arith.constant 12 : index
    %c0_160 = arith.constant 0 : index
    %417 = vector.load %arg19[%c12_159, %c0_160] : memref<16x1024xf32, #tpu.memory_space<vmem>>, vector<2x512xf32>
    %c2_161 = arith.constant 2 : index
    %c512_162 = arith.constant 512 : index
    %418 = vector.load %arg19[%c2_161, %c512_162] : memref<16x1024xf32, #tpu.memory_space<vmem>>, vector<2x512xf32>
    %419 = tpu.concatenate %417, %418 in 0 : vector<2x512xf32>, vector<2x512xf32> -> vector<4x512xf32>
    %420 = tpu.concatenate %416, %416 in 1 : vector<4x128xf32>, vector<4x128xf32> -> vector<4x256xf32>
    %421 = arith.mulf %420, %15 : vector<4x256xf32>
    %422 = arith.truncf %421 : vector<4x256xf32> to vector<4x256xbf16>
    %c0_163 = arith.constant 0 : index
    %c0_164 = arith.constant 0 : index
    %423 = vector.load %arg7[%c0_163, %c0_164] : memref<256x512xbf16, #tpu.memory_space<vmem>>, vector<256x512xbf16>
    %cst_165 = arith.constant dense<0.000000e+00> : vector<4x512xf32>
    %424 = tpu.matmul %422, %423, %cst_165 {dimension_numbers = #tpu.dot_dimension_numbers<[1], [0], [0], [1], [0, 0, 1, 1], [], []>} : vector<4x256xbf16>, vector<256x512xbf16>, vector<4x512xf32> -> vector<4x512xf32>
    %425 = arith.addf %419, %424 : vector<4x512xf32>
    %426 = vector.extract_strided_slice %425 {offsets = [0, 0], sizes = [4, 384], strides = [1, 1]} : vector<4x512xf32> to vector<4x384xf32>
    %427 = arith.negf %426 : vector<4x384xf32>
    %428 = math.exp %427 : vector<4x384xf32>
    %cst_166 = arith.constant 1.000000e+00 : f32
    %429 = vector.broadcast %cst_166 : f32 to vector<4x384xf32>
    %430 = arith.addf %429, %428 : vector<4x384xf32>
    %431 = arith.divf %429, %430 : vector<4x384xf32>
    %432 = vector.extract_strided_slice %425 {offsets = [0, 384], sizes = [4, 128], strides = [1, 1]} : vector<4x512xf32> to vector<4x128xf32>
    %433 = math.tanh %432 : vector<4x128xf32>
    %434 = vector.extract_strided_slice %431 {offsets = [0, 128], sizes = [4, 128], strides = [1, 1]} : vector<4x384xf32> to vector<4x128xf32>
    %435 = arith.mulf %434, %413 : vector<4x128xf32>
    %436 = vector.extract_strided_slice %431 {offsets = [0, 0], sizes = [4, 128], strides = [1, 1]} : vector<4x384xf32> to vector<4x128xf32>
    %437 = arith.mulf %436, %433 : vector<4x128xf32>
    %438 = arith.addf %435, %437 : vector<4x128xf32>
    %439 = vector.extract_strided_slice %431 {offsets = [0, 256], sizes = [4, 128], strides = [1, 1]} : vector<4x384xf32> to vector<4x128xf32>
    %440 = math.tanh %438 : vector<4x128xf32>
    %441 = arith.mulf %439, %440 : vector<4x128xf32>
    %c14_167 = arith.constant 14 : index
    %c0_168 = arith.constant 0 : index
    %442 = vector.load %arg19[%c14_167, %c0_168] : memref<16x1024xf32, #tpu.memory_space<vmem>>, vector<2x512xf32>
    %c0_169 = arith.constant 0 : index
    %c512_170 = arith.constant 512 : index
    %443 = vector.load %arg19[%c0_169, %c512_170] : memref<16x1024xf32, #tpu.memory_space<vmem>>, vector<2x512xf32>
    %444 = tpu.concatenate %442, %443 in 0 : vector<2x512xf32>, vector<2x512xf32> -> vector<4x512xf32>
    %445 = tpu.concatenate %441, %441 in 1 : vector<4x128xf32>, vector<4x128xf32> -> vector<4x256xf32>
    %446 = arith.mulf %445, %15 : vector<4x256xf32>
    %447 = arith.truncf %446 : vector<4x256xf32> to vector<4x256xbf16>
    %c0_171 = arith.constant 0 : index
    %c0_172 = arith.constant 0 : index
    %448 = vector.load %arg7[%c0_171, %c0_172] : memref<256x512xbf16, #tpu.memory_space<vmem>>, vector<256x512xbf16>
    %cst_173 = arith.constant dense<0.000000e+00> : vector<4x512xf32>
    %449 = tpu.matmul %447, %448, %cst_173 {dimension_numbers = #tpu.dot_dimension_numbers<[1], [0], [0], [1], [0, 0, 1, 1], [], []>} : vector<4x256xbf16>, vector<256x512xbf16>, vector<4x512xf32> -> vector<4x512xf32>
    %450 = arith.addf %444, %449 : vector<4x512xf32>
    %451 = vector.extract_strided_slice %450 {offsets = [0, 0], sizes = [4, 384], strides = [1, 1]} : vector<4x512xf32> to vector<4x384xf32>
    %452 = arith.negf %451 : vector<4x384xf32>
    %453 = math.exp %452 : vector<4x384xf32>
    %cst_174 = arith.constant 1.000000e+00 : f32
    %454 = vector.broadcast %cst_174 : f32 to vector<4x384xf32>
    %455 = arith.addf %454, %453 : vector<4x384xf32>
    %456 = arith.divf %454, %455 : vector<4x384xf32>
    %457 = vector.extract_strided_slice %450 {offsets = [0, 384], sizes = [4, 128], strides = [1, 1]} : vector<4x512xf32> to vector<4x128xf32>
    %458 = math.tanh %457 : vector<4x128xf32>
    %459 = vector.extract_strided_slice %456 {offsets = [0, 128], sizes = [4, 128], strides = [1, 1]} : vector<4x384xf32> to vector<4x128xf32>
    %460 = arith.mulf %459, %438 : vector<4x128xf32>
    %461 = vector.extract_strided_slice %456 {offsets = [0, 0], sizes = [4, 128], strides = [1, 1]} : vector<4x384xf32> to vector<4x128xf32>
    %462 = arith.mulf %461, %458 : vector<4x128xf32>
    %463 = arith.addf %460, %462 : vector<4x128xf32>
    %464 = vector.extract_strided_slice %456 {offsets = [0, 256], sizes = [4, 128], strides = [1, 1]} : vector<4x384xf32> to vector<4x128xf32>
    %465 = math.tanh %463 : vector<4x128xf32>
    %466 = arith.mulf %464, %465 : vector<4x128xf32>
    %467 = vector.extract_strided_slice %466 {offsets = [0, 0], sizes = [2, 128], strides = [1, 1]} : vector<4x128xf32> to vector<2x128xf32>
    %468 = vector.extract_strided_slice %466 {offsets = [2, 0], sizes = [2, 128], strides = [1, 1]} : vector<4x128xf32> to vector<2x128xf32>
    %469 = tpu.concatenate %467, %468 in 1 : vector<2x128xf32>, vector<2x128xf32> -> vector<2x256xf32>
    %470 = arith.truncf %469 : vector<2x256xf32> to vector<2x256xbf16>
    %c0_175 = arith.constant 0 : index
    %c0_176 = arith.constant 0 : index
    %471 = vector.load %arg8[%c0_175, %c0_176] : memref<256x128xbf16, #tpu.memory_space<vmem>>, vector<256x128xbf16>
    %cst_177 = arith.constant dense<0.000000e+00> : vector<2x128xf32>
    %472 = tpu.matmul %470, %471, %cst_177 {dimension_numbers = #tpu.dot_dimension_numbers<[1], [0], [0], [1], [0, 0, 1, 1], [], []>} : vector<2x256xbf16>, vector<256x128xbf16>, vector<2x128xf32> -> vector<2x128xf32>
    %c0_178 = arith.constant 0 : index
    %c0_179 = arith.constant 0 : index
    %473 = vector.load %arg9[%c0_178, %c0_179] : memref<1x128xf32, #tpu.memory_space<vmem>>, vector<1x128xf32>
    %474 = vector.broadcast %473 : vector<1x128xf32> to vector<2x128xf32>
    %475 = arith.addf %472, %474 : vector<2x128xf32>
    %c0_180 = arith.constant 0 : index
    %c0_181 = arith.constant 0 : index
    %476 = vector.load %arg10[%c0_180, %c0_181] : memref<1x128xf32, #tpu.memory_space<vmem>>, vector<1x128xf32>
    %477 = vector.broadcast %476 : vector<1x128xf32> to vector<2x128xf32>
    %478 = arith.mulf %475, %477 : vector<2x128xf32>
    %c0_182 = arith.constant 0 : index
    %c0_183 = arith.constant 0 : index
    %479 = vector.load %arg11[%c0_182, %c0_183] : memref<1x128xf32, #tpu.memory_space<vmem>>, vector<1x128xf32>
    %480 = vector.broadcast %479 : vector<1x128xf32> to vector<2x128xf32>
    %481 = arith.addf %478, %480 : vector<2x128xf32>
    %cst_184 = arith.constant 0.000000e+00 : f32
    %482 = vector.broadcast %cst_184 : f32 to vector<2x128xf32>
    %483 = arith.maximumf %481, %482 : vector<2x128xf32>
    %484 = arith.truncf %483 : vector<2x128xf32> to vector<2x128xbf16>
    %c0_185 = arith.constant 0 : index
    %c0_186 = arith.constant 0 : index
    %485 = vector.load %arg12[%c0_185, %c0_186] : memref<128x64xbf16, #tpu.memory_space<vmem>>, vector<128x64xbf16>
    %cst_187 = arith.constant dense<0.000000e+00> : vector<2x64xf32>
    %486 = tpu.matmul %484, %485, %cst_187 {dimension_numbers = #tpu.dot_dimension_numbers<[1], [0], [0], [1], [0, 0, 1, 1], [], []>} : vector<2x128xbf16>, vector<128x64xbf16>, vector<2x64xf32> -> vector<2x64xf32>
    %c0_188 = arith.constant 0 : index
    %c0_189 = arith.constant 0 : index
    %487 = vector.load %arg13[%c0_188, %c0_189] : memref<1x64xf32, #tpu.memory_space<vmem>>, vector<1x64xf32>
    %488 = vector.broadcast %487 : vector<1x64xf32> to vector<2x64xf32>
    %489 = arith.addf %486, %488 : vector<2x64xf32>
    %c0_190 = arith.constant 0 : index
    %c0_191 = arith.constant 0 : index
    %490 = vector.load %arg14[%c0_190, %c0_191] : memref<1x64xf32, #tpu.memory_space<vmem>>, vector<1x64xf32>
    %491 = vector.broadcast %490 : vector<1x64xf32> to vector<2x64xf32>
    %492 = arith.mulf %489, %491 : vector<2x64xf32>
    %c0_192 = arith.constant 0 : index
    %c0_193 = arith.constant 0 : index
    %493 = vector.load %arg15[%c0_192, %c0_193] : memref<1x64xf32, #tpu.memory_space<vmem>>, vector<1x64xf32>
    %494 = vector.broadcast %493 : vector<1x64xf32> to vector<2x64xf32>
    %495 = arith.addf %492, %494 : vector<2x64xf32>
    %cst_194 = arith.constant 0.000000e+00 : f32
    %496 = vector.broadcast %cst_194 : f32 to vector<2x64xf32>
    %497 = arith.maximumf %495, %496 : vector<2x64xf32>
    %498 = arith.truncf %497 : vector<2x64xf32> to vector<2x64xbf16>
    %c0_195 = arith.constant 0 : index
    %c0_196 = arith.constant 0 : index
    %499 = vector.load %arg16[%c0_195, %c0_196] : memref<64x1xbf16, #tpu.memory_space<vmem>>, vector<64x1xbf16>
    %cst_197 = arith.constant dense<0.000000e+00> : vector<2x1xf32>
    %500 = tpu.matmul %498, %499, %cst_197 {dimension_numbers = #tpu.dot_dimension_numbers<[1], [0], [0], [1], [0, 0, 1, 1], [], []>} : vector<2x64xbf16>, vector<64x1xbf16>, vector<2x1xf32> -> vector<2x1xf32>
    %c0_198 = arith.constant 0 : index
    %c0_199 = arith.constant 0 : index
    %501 = vector.load %arg17[%c0_198, %c0_199] : memref<1x1xf32, #tpu.memory_space<vmem>>, vector<1x1xf32>
    %502 = vector.broadcast %501 : vector<1x1xf32> to vector<2x1xf32>
    %503 = arith.addf %500, %502 : vector<2x1xf32>
    %504 = arith.negf %503 : vector<2x1xf32>
    %505 = math.exp %504 : vector<2x1xf32>
    %cst_200 = arith.constant 1.000000e+00 : f32
    %506 = vector.broadcast %cst_200 : f32 to vector<2x1xf32>
    %507 = arith.addf %506, %505 : vector<2x1xf32>
    %508 = arith.divf %506, %507 : vector<2x1xf32>
    %c0_201 = arith.constant 0 : index
    %c0_202 = arith.constant 0 : index
    %509 = vector.load %arg18[%c0_201, %c0_202] : memref<2x1xf32, #tpu.memory_space<vmem>>, vector<2x1xf32>
    tpu.vector_store %arg18[%c0_201, %c0_202], %508 {strides = array<i32>} : memref<2x1xf32, #tpu.memory_space<vmem>>, vector<2x1xf32>,
    return
  }
  func.func @transform_0(%arg0: i32) -> (i32, i32) {
    %c0_i32 = arith.constant 0 : i32
    %c0_i32_0 = arith.constant 0 : i32
    %c0_i32_1 = arith.constant 0 : i32
    return %c0_i32, %c0_i32_0 : i32, i32
  }
  func.func @transform_1(%arg0: i32) -> (i32, i32) {
    %c0_i32 = arith.constant 0 : i32
    %c0_i32_0 = arith.constant 0 : i32
    %c0_i32_1 = arith.constant 0 : i32
    return %c0_i32, %c0_i32_0 : i32, i32
  }
  func.func @transform_2(%arg0: i32) -> (i32, i32) {
    %c0_i32 = arith.constant 0 : i32
    %c0_i32_0 = arith.constant 0 : i32
    %c0_i32_1 = arith.constant 0 : i32
    return %c0_i32, %c0_i32_0 : i32, i32
  }
  func.func @transform_3(%arg0: i32) -> (i32, i32) {
    %c0_i32 = arith.constant 0 : i32
    %c0_i32_0 = arith.constant 0 : i32
    %c0_i32_1 = arith.constant 0 : i32
    return %c0_i32, %c0_i32_0 : i32, i32
  }
  func.func @transform_4(%arg0: i32) -> (i32, i32) {
    %c0_i32 = arith.constant 0 : i32
    %c0_i32_0 = arith.constant 0 : i32
    %c0_i32_1 = arith.constant 0 : i32
    return %c0_i32, %c0_i32_0 : i32, i32
  }
  func.func @transform_5(%arg0: i32) -> (i32, i32) {
    %c0_i32 = arith.constant 0 : i32
    %c0_i32_0 = arith.constant 0 : i32
    %c0_i32_1 = arith.constant 0 : i32
    return %c0_i32, %c0_i32_0 : i32, i32
  }
  func.func @transform_6(%arg0: i32) -> (i32, i32) {
    %c0_i32 = arith.constant 0 : i32
    %c0_i32_0 = arith.constant 0 : i32
    %c0_i32_1 = arith.constant 0 : i32
    return %c0_i32, %c0_i32_0 : i32, i32
  }
  func.func @transform_7(%arg0: i32) -> (i32, i32) {
    %c0_i32 = arith.constant 0 : i32
    %c0_i32_0 = arith.constant 0 : i32
    %c0_i32_1 = arith.constant 0 : i32
    return %c0_i32, %c0_i32_0 : i32, i32
  }
  func.func @transform_8(%arg0: i32) -> (i32, i32) {
    %c0_i32 = arith.constant 0 : i32
    %c0_i32_0 = arith.constant 0 : i32
    %c0_i32_1 = arith.constant 0 : i32
    return %c0_i32, %c0_i32_0 : i32, i32
  }
  func.func @transform_9(%arg0: i32) -> (i32, i32) {
    %c0_i32 = arith.constant 0 : i32
    %c0_i32_0 = arith.constant 0 : i32
    %c0_i32_1 = arith.constant 0 : i32
    return %c0_i32, %c0_i32_0 : i32, i32
  }
  func.func @transform_10(%arg0: i32) -> (i32, i32) {
    %c0_i32 = arith.constant 0 : i32
    %c0_i32_0 = arith.constant 0 : i32
    %c0_i32_1 = arith.constant 0 : i32
    return %c0_i32, %c0_i32_0 : i32, i32
  }
  func.func @transform_11(%arg0: i32) -> (i32, i32) {
    %c0_i32 = arith.constant 0 : i32
    %c0_i32_0 = arith.constant 0 : i32
    %c0_i32_1 = arith.constant 0 : i32
    return %c0_i32, %c0_i32_0 : i32, i32
  }
  func.func @transform_12(%arg0: i32) -> (i32, i32) {
    %c0_i32 = arith.constant 0 : i32
    %c0_i32_0 = arith.constant 0 : i32
    %c0_i32_1 = arith.constant 0 : i32
    return %c0_i32, %c0_i32_0 : i32, i32
  }
  func.func @transform_13(%arg0: i32) -> (i32, i32) {
    %c0_i32 = arith.constant 0 : i32
    %c0_i32_0 = arith.constant 0 : i32
    %c0_i32_1 = arith.constant 0 : i32
    return %c0_i32, %c0_i32_0 : i32, i32
  }
  func.func @transform_14(%arg0: i32) -> (i32, i32) {
    %c0_i32 = arith.constant 0 : i32
    %c0_i32_0 = arith.constant 0 : i32
    %c0_i32_1 = arith.constant 0 : i32
    return %c0_i32, %c0_i32_0 : i32, i32
  }
  func.func @transform_15(%arg0: i32) -> (i32, i32) {
    %c0_i32 = arith.constant 0 : i32
    %c0_i32_0 = arith.constant 0 : i32
    %c0_i32_1 = arith.constant 0 : i32
    return %c0_i32, %c0_i32_0 : i32, i32
  }
  func.func @transform_16(%arg0: i32) -> (i32, i32) {
    %c0_i32 = arith.constant 0 : i32
    %c0_i32_0 = arith.constant 0 : i32
    %c0_i32_1 = arith.constant 0 : i32
    return %c0_i32, %c0_i32_0 : i32, i32
  }
  func.func @transform_17(%arg0: i32) -> (i32, i32) {
    %c0_i32 = arith.constant 0 : i32
    %c0_i32_0 = arith.constant 0 : i32
    %c0_i32_1 = arith.constant 0 : i32
    return %c0_i32, %c0_i32_0 : i32, i32
  }
}

</mosaic_0001>

<llo_original>
// kernel: model_forward.1
$region0: #{model_forward.1}
  #allocation0 [shape = 'u32[]', space=smem, size = 0x4, offset = 0x4, fixed_abs, tag = 'smem constant byte address 0x4 - core index']
  #allocation1 [shape = 'u32[144,128]{1,0:T(1,128)}', space=vmem, size = 0x12000, scoped, tag = 'internal scratch']
  #allocation2 [shape = 'f32[16,1024]{1,0:T(8,128)}', space=vmem, size = 0x10000, scoped, tag = 'scratch operand']
  #allocation3 [shape = 'f32[16,256]{1,0:T(8,128)}', space=vmem, size = 0x4000, scoped, tag = 'scratch operand']
  #allocation4 [shape = 'f32[1,1]{1,0:T(1,128)S(1)}', space=vmem, size = 0x200, scoped, tag = 'scoped memory for model_forward.1']
  %s0 = inlined_call_operand.vmem [shape: bf16[16,384], index: 0, kind: input, shape index: {}]
  %s1 = inlined_call_operand.vmem [shape: bf16[384,1024], index: 1, kind: input, shape index: {}]
  %s2 = inlined_call_operand.hbm [shape: f32[1,1024], index: 2, kind: input, shape index: {}]
  %s3 = inlined_call_operand.vmem [shape: bf16[256,512], index: 3, kind: input, shape index: {}]
  %s4 = inlined_call_operand.vmem [shape: bf16[256,1024], index: 4, kind: input, shape index: {}]
  %s5 = inlined_call_operand.hbm [shape: f32[1,1024], index: 5, kind: input, shape index: {}]
  %s6 = inlined_call_operand.vmem [shape: bf16[256,512], index: 6, kind: input, shape index: {}]
  %s7 = inlined_call_operand.hbm [shape: bf16[256,128], index: 7, kind: input, shape index: {}]
  %s8 = inlined_call_operand.hbm [shape: f32[1,128], index: 8, kind: input, shape index: {}]
  %s9 = inlined_call_operand.vmem [shape: f32[1,128], index: 9, kind: input, shape index: {}]
  %s10 = inlined_call_operand.vmem [shape: f32[1,128], index: 10, kind: input, shape index: {}]
  %s11 = inlined_call_operand.hbm [shape: bf16[128,64], index: 11, kind: input, shape index: {}]
  %s12 = inlined_call_operand.hbm [shape: f32[1,64], index: 12, kind: input, shape index: {}]
  %s13 = inlined_call_operand.vmem [shape: f32[1,64], index: 13, kind: input, shape index: {}]
  %s14 = inlined_call_operand.vmem [shape: f32[1,64], index: 14, kind: input, shape index: {}]
  %s15 = inlined_call_operand.hbm [shape: bf16[64,1], index: 15, kind: input, shape index: {}]
  %s16 = inlined_call_operand.<no memory space> [shape: f32[1,1], index: 16, kind: input, shape index: {}]
  %s17 = inlined_call_operand.vmem [shape: f32[2,1], index: 17, kind: output, shape index: {}]
  %s18 = sld [smem:[#allocation0]]
  $region106: #{model_forward.1} parent=0
    _
  %s20 = ssub.s32 1, %s18
  %s21 = scalar_select 0, %s20, %s18
  %v22 = vstv %s16
  %23 = vst [vmem:[#allocation4] sm:$0x1] %v22
  $region1: #{model_forward.1} parent=0
    #allocation5 [shape = 'u8[4096]{0}', space=vmem, size = 0x1000, scoped, tag = 'input window, operand 2, single buffered']
    #allocation6 [shape = 's32[1]{0}', space=sflag, size = 0x4, scoped, tag = 'scoped memory for model_forward.1']
    #allocation7 [shape = 'u8[4096]{0}', space=vmem, size = 0x1000, scoped, tag = 'input window, operand 5, single buffered']
    #allocation8 [shape = 's32[1]{0}', space=sflag, size = 0x4, scoped, tag = 'scoped memory for model_forward.1']
    #allocation9 [shape = 'u8[65536]{0}', space=vmem, size = 0x10000, scoped, tag = 'input window, operand 7, single buffered']
    #allocation10 [shape = 'u8[512]{0}', space=vmem, size = 0x400, scoped, tag = 'input window, operand 8, single buffered']
    #allocation11 [shape = 's32[1]{0}', space=sflag, size = 0x4, scoped, tag = 'scoped memory for model_forward.1']
    #allocation12 [shape = 'u8[32768]{0}', space=vmem, size = 0x8000, scoped, tag = 'input window, operand 11, single buffered']
    #allocation13 [shape = 'u8[512]{0}', space=vmem, size = 0x400, scoped, tag = 'input window, operand 12, single buffered']
    #allocation14 [shape = 's32[1]{0}', space=sflag, size = 0x4, scoped, tag = 'scoped memory for model_forward.1']
    #allocation15 [shape = 'u8[16384]{0}', space=vmem, size = 0x4000, scoped, tag = 'input window, operand 15, single buffered']
    %24 = vsyncpa [#allocation6], 0
    %25 = vsyncpa [#allocation8], 0
    %26 = vsyncpa [#allocation11], 0
    %27 = vsyncpa [#allocation14], 0
    // Predicated region
    $region2: #{model_forward.1} parent=1 // pred_check
      _
    $region3: #{model_forward.1} parent=1 // pred_check_branch
      %29 = sbr.rel (0) target = $region5
    $region4: #{model_forward.1} parent=1 // pred_region
      _
    $region5: #{model_forward.1} parent=1 // pred_fallthru
      _
    // Predicated region
    $region6: #{model_forward.1} parent=1 // pred_check
      _
    $region7: #{model_forward.1} parent=1 // pred_check_branch
      %31 = sbr.rel (0) target = $region9
    $region8: #{model_forward.1} parent=1 // pred_region
      _
    $region9: #{model_forward.1} parent=1 // pred_fallthru
      _
    // Predicated region
    $region10: #{model_forward.1} parent=1 // pred_check
      _
    $region11: #{model_forward.1} parent=1 // pred_check_branch
      %33 = sbr.rel (0) target = $region13
    $region12: #{model_forward.1} parent=1 // pred_region
      %s35 = ssub.s32 128, 128
      %36 = vsyncadd [#allocation6], %s35
      %s38 = sshll.u32 [#allocation5], 4
      %s39 = int_to_ptr.vmem [resolvable:$true] %s38
      %41 = dma.hbm_to_vmem [thread:$0]  %s2, 128, %s39, [#allocation6]
    $region13: #{model_forward.1} parent=1 // pred_fallthru
      _
    // Predicated region
    $region14: #{model_forward.1} parent=1 // pred_check
      _
    $region15: #{model_forward.1} parent=1 // pred_check_branch
      %43 = sbr.rel (0) target = $region17
    $region16: #{model_forward.1} parent=1 // pred_region
      _
    $region17: #{model_forward.1} parent=1 // pred_fallthru
      _
    // Predicated region
    $region18: #{model_forward.1} parent=1 // pred_check
      _
    $region19: #{model_forward.1} parent=1 // pred_check_branch
      %45 = sbr.rel (0) target = $region21
    $region20: #{model_forward.1} parent=1 // pred_region
      _
    $region21: #{model_forward.1} parent=1 // pred_fallthru
      _
    // Predicated region
    $region22: #{model_forward.1} parent=1 // pred_check
      _
    $region23: #{model_forward.1} parent=1 // pred_check_branch
      %47 = sbr.rel (0) target = $region25
    $region24: #{model_forward.1} parent=1 // pred_region
      %s49 = ssub.s32 128, 128
      %50 = vsyncadd [#allocation8], %s49
      %s52 = sshll.u32 [#allocation7], 4
      %s53 = int_to_ptr.vmem [resolvable:$true] %s52
      %55 = dma.hbm_to_vmem [thread:$0]  %s5, 128, %s53, [#allocation8]
    $region25: #{model_forward.1} parent=1 // pred_fallthru
      _
    // Predicated region
    $region26: #{model_forward.1} parent=1 // pred_check
      _
    $region27: #{model_forward.1} parent=1 // pred_check_branch
      %57 = sbr.rel (0) target = $region29
    $region28: #{model_forward.1} parent=1 // pred_region
      _
    $region29: #{model_forward.1} parent=1 // pred_fallthru
      _
    // Predicated region
    $region30: #{model_forward.1} parent=1 // pred_check
      _
    $region31: #{model_forward.1} parent=1 // pred_check_branch
      %59 = sbr.rel (0) target = $region33
    $region32: #{model_forward.1} parent=1 // pred_region
      %s61 = ssub.s32 2048, 2048
      %62 = vsyncadd [#allocation8], %s61
      %s63 = sshll.u32 [#allocation9], 4
      %s64 = int_to_ptr.vmem [resolvable:$true] %s63
      %69 = dma.hbm_to_vmem [thread:$0]  %s7, 2048, %s64, [#allocation8], 64, 64, 4
    $region33: #{model_forward.1} parent=1 // pred_fallthru
      _
    // Predicated region
    $region34: #{model_forward.1} parent=1 // pred_check
      _
    $region35: #{model_forward.1} parent=1 // pred_check_branch
      %71 = sbr.rel (0) target = $region37
    $region36: #{model_forward.1} parent=1 // pred_region
      %s73 = ssub.s32 16, 16
      %74 = vsyncadd [#allocation11], %s73
      %s76 = sshll.u32 [#allocation10], 4
      %s77 = int_to_ptr.vmem [resolvable:$true] %s76
      %79 = dma.hbm_to_vmem [thread:$0]  %s8, 16, %s77, [#allocation11]
    $region37: #{model_forward.1} parent=1 // pred_fallthru
      _
    // Predicated region
    $region38: #{model_forward.1} parent=1 // pred_check
      _
    $region39: #{model_forward.1} parent=1 // pred_check_branch
      %81 = sbr.rel (0) target = $region41
    $region40: #{model_forward.1} parent=1 // pred_region
      _
    $region41: #{model_forward.1} parent=1 // pred_fallthru
      _
    // Predicated region
    $region42: #{model_forward.1} parent=1 // pred_check
      _
    $region43: #{model_forward.1} parent=1 // pred_check_branch
      %83 = sbr.rel (0) target = $region45
    $region44: #{model_forward.1} parent=1 // pred_region
      _
    $region45: #{model_forward.1} parent=1 // pred_fallthru
      _
    // Predicated region
    $region46: #{model_forward.1} parent=1 // pred_check
      _
    $region47: #{model_forward.1} parent=1 // pred_check_branch
      %85 = sbr.rel (0) target = $region49
    $region48: #{model_forward.1} parent=1 // pred_region
      %s87 = ssub.s32 1024, 1024
      %88 = vsyncadd [#allocation11], %s87
      %s89 = sshll.u32 [#allocation12], 4
      %s90 = int_to_ptr.vmem [resolvable:$true] %s89
      %95 = dma.hbm_to_vmem [thread:$0]  %s11, 1024, %s90, [#allocation11], 64, 64, 4
    $region49: #{model_forward.1} parent=1 // pred_fallthru
      _
    // Predicated region
    $region50: #{model_forward.1} parent=1 // pred_check
      _
    $region51: #{model_forward.1} parent=1 // pred_check_branch
      %97 = sbr.rel (0) target = $region53
    $region52: #{model_forward.1} parent=1 // pred_region
      %s99 = ssub.s32 16, 16
      %100 = vsyncadd [#allocation14], %s99
      %s102 = sshll.u32 [#allocation13], 4
      %s103 = int_to_ptr.vmem [resolvable:$true] %s102
      %105 = dma.hbm_to_vmem [thread:$0]  %s12, 16, %s103, [#allocation14]
    $region53: #{model_forward.1} parent=1 // pred_fallthru
      _
    // Predicated region
    $region54: #{model_forward.1} parent=1 // pred_check
      _
    $region55: #{model_forward.1} parent=1 // pred_check_branch
      %107 = sbr.rel (0) target = $region57
    $region56: #{model_forward.1} parent=1 // pred_region
      _
    $region57: #{model_forward.1} parent=1 // pred_fallthru
      _
    // Predicated region
    $region58: #{model_forward.1} parent=1 // pred_check
      _
    $region59: #{model_forward.1} parent=1 // pred_check_branch
      %109 = sbr.rel (0) target = $region61
    $region60: #{model_forward.1} parent=1 // pred_region
      _
    $region61: #{model_forward.1} parent=1 // pred_fallthru
      _
    // Predicated region
    $region62: #{model_forward.1} parent=1 // pred_check
      _
    $region63: #{model_forward.1} parent=1 // pred_check_branch
      %111 = sbr.rel (0) target = $region65
    $region64: #{model_forward.1} parent=1 // pred_region
      %s113 = ssub.s32 512, 512
      %114 = vsyncadd [#allocation14], %s113
      %s115 = sshll.u32 [#allocation15], 4
      %s116 = int_to_ptr.vmem [resolvable:$true] %s115
      %121 = dma.hbm_to_vmem [thread:$0]  %s15, 512, %s116, [#allocation14], 64, 64, 4
    $region65: #{model_forward.1} parent=1 // pred_fallthru
      _
    // Predicated region
    $region66: #{model_forward.1} parent=1 // pred_check
      _
    $region67: #{model_forward.1} parent=1 // pred_check_branch
      %123 = sbr.rel (0) target = $region69
    $region68: #{model_forward.1} parent=1 // pred_region
      _
    $region69: #{model_forward.1} parent=1 // pred_fallthru
      _
    // Predicated region
    $region70: #{model_forward.1} parent=1 // pred_check
      _
    $region71: #{model_forward.1} parent=1 // pred_check_branch
      %125 = sbr.rel (0) target = $region73
    $region72: #{model_forward.1} parent=1 // pred_region
      %126 = dma.done [#allocation6], 128
    $region73: #{model_forward.1} parent=1 // pred_fallthru
      _
    // Predicated region
    $region74: #{model_forward.1} parent=1 // pred_check
      _
    $region75: #{model_forward.1} parent=1 // pred_check_branch
      %128 = sbr.rel (0) target = $region77
    $region76: #{model_forward.1} parent=1 // pred_region
      %129 = dma.done [#allocation8], 128
    $region77: #{model_forward.1} parent=1 // pred_fallthru
      _
    // Predicated region
    $region78: #{model_forward.1} parent=1 // pred_check
      _
    $region79: #{model_forward.1} parent=1 // pred_check_branch
      %131 = sbr.rel (0) target = $region81
    $region80: #{model_forward.1} parent=1 // pred_region
      %132 = dma.done [#allocation8], 2048
    $region81: #{model_forward.1} parent=1 // pred_fallthru
      _
    // Predicated region
    $region82: #{model_forward.1} parent=1 // pred_check
      _
    $region83: #{model_forward.1} parent=1 // pred_check_branch
      %134 = sbr.rel (0) target = $region85
    $region84: #{model_forward.1} parent=1 // pred_region
      %135 = dma.done [#allocation11], 16
    $region85: #{model_forward.1} parent=1 // pred_fallthru
      _
    // Predicated region
    $region86: #{model_forward.1} parent=1 // pred_check
      _
    $region87: #{model_forward.1} parent=1 // pred_check_branch
      %137 = sbr.rel (0) target = $region89
    $region88: #{model_forward.1} parent=1 // pred_region
      %138 = dma.done [#allocation11], 1024
    $region89: #{model_forward.1} parent=1 // pred_fallthru
      _
    // Predicated region
    $region90: #{model_forward.1} parent=1 // pred_check
      _
    $region91: #{model_forward.1} parent=1 // pred_check_branch
      %140 = sbr.rel (0) target = $region93
    $region92: #{model_forward.1} parent=1 // pred_region
      %141 = dma.done [#allocation14], 16
    $region93: #{model_forward.1} parent=1 // pred_fallthru
      _
    // Predicated region
    $region94: #{model_forward.1} parent=1 // pred_check
      _
    $region95: #{model_forward.1} parent=1 // pred_check_branch
      %143 = sbr.rel (0) target = $region97
    $region96: #{model_forward.1} parent=1 // pred_region
      %144 = dma.done [#allocation14], 512
    $region97: #{model_forward.1} parent=1 // pred_fallthru
      _
    %v146 = vlaneseq
    %v147 = vshrl.u32 %v146, 7
    %v148 = vlaneseq
    %v149 = vand.u32 %v148, 127
    %v150 = vadd.s32 %v149, 128
    %vm151 = vcmp.lt.s32.totalorder %v147, 2
    %vm152 = vcmp.lt.s32.totalorder %v149, 128
    %vm153 = vcmp.lt.s32.totalorder %v150, 128
    %vm154 = vmand %vm151, %vm152
    %vm155 = vmand %vm151, %vm153
    %vm156 = vcmp.ge.s32.totalorder %v147, 2
    %vm157 = vcmp.ge.s32.totalorder %v149, 128
    %vm158 = vcmp.ge.s32.totalorder %v150, 128
    %vm159 = vmand %vm156, %vm157
    %vm160 = vmand %vm156, %vm158
    %vm161 = vmor %vm154, %vm159
    %vm162 = vmor %vm155, %vm160
    %v163 = vsel %vm161, 1.0, 0.0
    %v164 = vsel %vm162, 1.0, 0.0
    %v165 = vld [vmem:[%s0] sm:$0xff]
    %v166 = vld [vmem:[%s0 + $0x8] sm:$0xf]
    %v167 = vld [vmem:[%s0 + $0xc] sm:$0xff]
    %v168 = vld [vmem:[%s0 + $0x14] sm:$0xf]
    %v169 = vld [vmem:[%s1] sm:$0xff]
    %v170 = vld [vmem:[%s1 + $0x8] sm:$0xff]
    %v171 = vld [vmem:[%s1 + $0x10] sm:$0xff]
    %v172 = vld [vmem:[%s1 + $0x18] sm:$0xff]
    %v173 = vld [vmem:[%s1 + $0x20] sm:$0xff]
    %v174 = vld [vmem:[%s1 + $0x28] sm:$0xff]
    %v175 = vld [vmem:[%s1 + $0x30] sm:$0xff]
    %v176 = vld [vmem:[%s1 + $0x38] sm:$0xff]
    %v177 = vld [vmem:[%s1 + $0x40] sm:$0xff]
    %v178 = vld [vmem:[%s1 + $0x48] sm:$0xff]
    %v179 = vld [vmem:[%s1 + $0x50] sm:$0xff]
    %v180 = vld [vmem:[%s1 + $0x58] sm:$0xff]
    %v181 = vld [vmem:[%s1 + $0x60] sm:$0xff]
    %v182 = vld [vmem:[%s1 + $0x68] sm:$0xff]
    %v183 = vld [vmem:[%s1 + $0x70] sm:$0xff]
    %v184 = vld [vmem:[%s1 + $0x78] sm:$0xff]
    %v185 = vld [vmem:[%s1 + $0x80] sm:$0xff]
    %v186 = vld [vmem:[%s1 + $0x88] sm:$0xff]
    %v187 = vld [vmem:[%s1 + $0x90] sm:$0xff]
    %v188 = vld [vmem:[%s1 + $0x98] sm:$0xff]
    %v189 = vld [vmem:[%s1 + $0xa0] sm:$0xff]
    %v190 = vld [vmem:[%s1 + $0xa8] sm:$0xff]
    %v191 = vld [vmem:[%s1 + $0xb0] sm:$0xff]
    %v192 = vld [vmem:[%s1 + $0xb8] sm:$0xff]
    %v193 = vld [vmem:[%s1 + $0xc0] sm:$0xff]
    %v194 = vld [vmem:[%s1 + $0xc8] sm:$0xff]
    %v195 = vld [vmem:[%s1 + $0xd0] sm:$0xff]
    %v196 = vld [vmem:[%s1 + $0xd8] sm:$0xff]
    %v197 = vld [vmem:[%s1 + $0xe0] sm:$0xff]
    %v198 = vld [vmem:[%s1 + $0xe8] sm:$0xff]
    %v199 = vld [vmem:[%s1 + $0xf0] sm:$0xff]
    %v200 = vld [vmem:[%s1 + $0xf8] sm:$0xff]
    %v201 = vld [vmem:[%s1 + $0x100] sm:$0xff]
    %v202 = vld [vmem:[%s1 + $0x108] sm:$0xff]
    %v203 = vld [vmem:[%s1 + $0x110] sm:$0xff]
    %v204 = vld [vmem:[%s1 + $0x118] sm:$0xff]
    %v205 = vld [vmem:[%s1 + $0x120] sm:$0xff]
    %v206 = vld [vmem:[%s1 + $0x128] sm:$0xff]
    %v207 = vld [vmem:[%s1 + $0x130] sm:$0xff]
    %v208 = vld [vmem:[%s1 + $0x138] sm:$0xff]
    %v209 = vld [vmem:[%s1 + $0x140] sm:$0xff]
    %v210 = vld [vmem:[%s1 + $0x148] sm:$0xff]
    %v211 = vld [vmem:[%s1 + $0x150] sm:$0xff]
    %v212 = vld [vmem:[%s1 + $0x158] sm:$0xff]
    %v213 = vld [vmem:[%s1 + $0x160] sm:$0xff]
    %v214 = vld [vmem:[%s1 + $0x168] sm:$0xff]
    %v215 = vld [vmem:[%s1 + $0x170] sm:$0xff]
    %v216 = vld [vmem:[%s1 + $0x178] sm:$0xff]
    %v217 = vld [vmem:[%s1 + $0x180] sm:$0xff]
    %v218 = vld [vmem:[%s1 + $0x188] sm:$0xff]
    %v219 = vld [vmem:[%s1 + $0x190] sm:$0xff]
    %v220 = vld [vmem:[%s1 + $0x198] sm:$0xff]
    %v221 = vld [vmem:[%s1 + $0x1a0] sm:$0xff]
    %v222 = vld [vmem:[%s1 + $0x1a8] sm:$0xff]
    %v223 = vld [vmem:[%s1 + $0x1b0] sm:$0xff]
    %v224 = vld [vmem:[%s1 + $0x1b8] sm:$0xff]
    %v225 = vld [vmem:[%s1 + $0x1c0] sm:$0xff]
    %v226 = vld [vmem:[%s1 + $0x1c8] sm:$0xff]
    %v227 = vld [vmem:[%s1 + $0x1d0] sm:$0xff]
    %v228 = vld [vmem:[%s1 + $0x1d8] sm:$0xff]
    %v229 = vld [vmem:[%s1 + $0x1e0] sm:$0xff]
    %v230 = vld [vmem:[%s1 + $0x1e8] sm:$0xff]
    %v231 = vld [vmem:[%s1 + $0x1f0] sm:$0xff]
    %v232 = vld [vmem:[%s1 + $0x1f8] sm:$0xff]
    %v233 = vld [vmem:[%s1 + $0x200] sm:$0xff]
    %v234 = vld [vmem:[%s1 + $0x208] sm:$0xff]
    %v235 = vld [vmem:[%s1 + $0x210] sm:$0xff]
    %v236 = vld [vmem:[%s1 + $0x218] sm:$0xff]
    %v237 = vld [vmem:[%s1 + $0x220] sm:$0xff]
    %v238 = vld [vmem:[%s1 + $0x228] sm:$0xff]
    %v239 = vld [vmem:[%s1 + $0x230] sm:$0xff]
    %v240 = vld [vmem:[%s1 + $0x238] sm:$0xff]
    %v241 = vld [vmem:[%s1 + $0x240] sm:$0xff]
    %v242 = vld [vmem:[%s1 + $0x248] sm:$0xff]
    %v243 = vld [vmem:[%s1 + $0x250] sm:$0xff]
    %v244 = vld [vmem:[%s1 + $0x258] sm:$0xff]
    %v245 = vld [vmem:[%s1 + $0x260] sm:$0xff]
    %v246 = vld [vmem:[%s1 + $0x268] sm:$0xff]
    %v247 = vld [vmem:[%s1 + $0x270] sm:$0xff]
    %v248 = vld [vmem:[%s1 + $0x278] sm:$0xff]
    %v249 = vld [vmem:[%s1 + $0x280] sm:$0xff]
    %v250 = vld [vmem:[%s1 + $0x288] sm:$0xff]
    %v251 = vld [vmem:[%s1 + $0x290] sm:$0xff]
    %v252 = vld [vmem:[%s1 + $0x298] sm:$0xff]
    %v253 = vld [vmem:[%s1 + $0x2a0] sm:$0xff]
    %v254 = vld [vmem:[%s1 + $0x2a8] sm:$0xff]
    %v255 = vld [vmem:[%s1 + $0x2b0] sm:$0xff]
    %v256 = vld [vmem:[%s1 + $0x2b8] sm:$0xff]
    %v257 = vld [vmem:[%s1 + $0x2c0] sm:$0xff]
    %v258 = vld [vmem:[%s1 + $0x2c8] sm:$0xff]
    %v259 = vld [vmem:[%s1 + $0x2d0] sm:$0xff]
    %v260 = vld [vmem:[%s1 + $0x2d8] sm:$0xff]
    %v261 = vld [vmem:[%s1 + $0x2e0] sm:$0xff]
    %v262 = vld [vmem:[%s1 + $0x2e8] sm:$0xff]
    %v263 = vld [vmem:[%s1 + $0x2f0] sm:$0xff]
    %v264 = vld [vmem:[%s1 + $0x2f8] sm:$0xff]
    %v265 = vld [vmem:[%s1 + $0x300] sm:$0xff]
    %v266 = vld [vmem:[%s1 + $0x308] sm:$0xff]
    %v267 = vld [vmem:[%s1 + $0x310] sm:$0xff]
    %v268 = vld [vmem:[%s1 + $0x318] sm:$0xff]
    %v269 = vld [vmem:[%s1 + $0x320] sm:$0xff]
    %v270 = vld [vmem:[%s1 + $0x328] sm:$0xff]
    %v271 = vld [vmem:[%s1 + $0x330] sm:$0xff]
    %v272 = vld [vmem:[%s1 + $0x338] sm:$0xff]
    %v273 = vld [vmem:[%s1 + $0x340] sm:$0xff]
    %v274 = vld [vmem:[%s1 + $0x348] sm:$0xff]
    %v275 = vld [vmem:[%s1 + $0x350] sm:$0xff]
    %v276 = vld [vmem:[%s1 + $0x358] sm:$0xff]
    %v277 = vld [vmem:[%s1 + $0x360] sm:$0xff]
    %v278 = vld [vmem:[%s1 + $0x368] sm:$0xff]
    %v279 = vld [vmem:[%s1 + $0x370] sm:$0xff]
    %v280 = vld [vmem:[%s1 + $0x378] sm:$0xff]
    %v281 = vld [vmem:[%s1 + $0x380] sm:$0xff]
    %v282 = vld [vmem:[%s1 + $0x388] sm:$0xff]
    %v283 = vld [vmem:[%s1 + $0x390] sm:$0xff]
    %v284 = vld [vmem:[%s1 + $0x398] sm:$0xff]
    %v285 = vld [vmem:[%s1 + $0x3a0] sm:$0xff]
    %v286 = vld [vmem:[%s1 + $0x3a8] sm:$0xff]
    %v287 = vld [vmem:[%s1 + $0x3b0] sm:$0xff]
    %v288 = vld [vmem:[%s1 + $0x3b8] sm:$0xff]
    %v289 = vld [vmem:[%s1 + $0x3c0] sm:$0xff]
    %v290 = vld [vmem:[%s1 + $0x3c8] sm:$0xff]
    %v291 = vld [vmem:[%s1 + $0x3d0] sm:$0xff]
    %v292 = vld [vmem:[%s1 + $0x3d8] sm:$0xff]
    %v293 = vld [vmem:[%s1 + $0x3e0] sm:$0xff]
    %v294 = vld [vmem:[%s1 + $0x3e8] sm:$0xff]
    %v295 = vld [vmem:[%s1 + $0x3f0] sm:$0xff]
    %v296 = vld [vmem:[%s1 + $0x3f8] sm:$0xff]
    %v297 = vld [vmem:[%s1 + $0x400] sm:$0xff]
    %v298 = vld [vmem:[%s1 + $0x408] sm:$0xff]
    %v299 = vld [vmem:[%s1 + $0x410] sm:$0xff]
    %v300 = vld [vmem:[%s1 + $0x418] sm:$0xff]
    %v301 = vld [vmem:[%s1 + $0x420] sm:$0xff]
    %v302 = vld [vmem:[%s1 + $0x428] sm:$0xff]
    %v303 = vld [vmem:[%s1 + $0x430] sm:$0xff]
    %v304 = vld [vmem:[%s1 + $0x438] sm:$0xff]
    %v305 = vld [vmem:[%s1 + $0x440] sm:$0xff]
    %v306 = vld [vmem:[%s1 + $0x448] sm:$0xff]
    %v307 = vld [vmem:[%s1 + $0x450] sm:$0xff]
    %v308 = vld [vmem:[%s1 + $0x458] sm:$0xff]
    %v309 = vld [vmem:[%s1 + $0x460] sm:$0xff]
    %v310 = vld [vmem:[%s1 + $0x468] sm:$0xff]
    %v311 = vld [vmem:[%s1 + $0x470] sm:$0xff]
    %v312 = vld [vmem:[%s1 + $0x478] sm:$0xff]
    %v313 = vld [vmem:[%s1 + $0x480] sm:$0xff]
    %v314 = vld [vmem:[%s1 + $0x488] sm:$0xff]
    %v315 = vld [vmem:[%s1 + $0x490] sm:$0xff]
    %v316 = vld [vmem:[%s1 + $0x498] sm:$0xff]
    %v317 = vld [vmem:[%s1 + $0x4a0] sm:$0xff]
    %v318 = vld [vmem:[%s1 + $0x4a8] sm:$0xff]
    %v319 = vld [vmem:[%s1 + $0x4b0] sm:$0xff]
    %v320 = vld [vmem:[%s1 + $0x4b8] sm:$0xff]
    %v321 = vld [vmem:[%s1 + $0x4c0] sm:$0xff]
    %v322 = vld [vmem:[%s1 + $0x4c8] sm:$0xff]
    %v323 = vld [vmem:[%s1 + $0x4d0] sm:$0xff]
    %v324 = vld [vmem:[%s1 + $0x4d8] sm:$0xff]
    %v325 = vld [vmem:[%s1 + $0x4e0] sm:$0xff]
    %v326 = vld [vmem:[%s1 + $0x4e8] sm:$0xff]
    %v327 = vld [vmem:[%s1 + $0x4f0] sm:$0xff]
    %v328 = vld [vmem:[%s1 + $0x4f8] sm:$0xff]
    %v329 = vld [vmem:[%s1 + $0x500] sm:$0xff]
    %v330 = vld [vmem:[%s1 + $0x508] sm:$0xff]
    %v331 = vld [vmem:[%s1 + $0x510] sm:$0xff]
    %v332 = vld [vmem:[%s1 + $0x518] sm:$0xff]
    %v333 = vld [vmem:[%s1 + $0x520] sm:$0xff]
    %v334 = vld [vmem:[%s1 + $0x528] sm:$0xff]
    %v335 = vld [vmem:[%s1 + $0x530] sm:$0xff]
    %v336 = vld [vmem:[%s1 + $0x538] sm:$0xff]
    %v337 = vld [vmem:[%s1 + $0x540] sm:$0xff]
    %v338 = vld [vmem:[%s1 + $0x548] sm:$0xff]
    %v339 = vld [vmem:[%s1 + $0x550] sm:$0xff]
    %v340 = vld [vmem:[%s1 + $0x558] sm:$0xff]
    %v341 = vld [vmem:[%s1 + $0x560] sm:$0xff]
    %v342 = vld [vmem:[%s1 + $0x568] sm:$0xff]
    %v343 = vld [vmem:[%s1 + $0x570] sm:$0xff]
    %v344 = vld [vmem:[%s1 + $0x578] sm:$0xff]
    %v345 = vld [vmem:[%s1 + $0x580] sm:$0xff]
    %v346 = vld [vmem:[%s1 + $0x588] sm:$0xff]
    %v347 = vld [vmem:[%s1 + $0x590] sm:$0xff]
    %v348 = vld [vmem:[%s1 + $0x598] sm:$0xff]
    %v349 = vld [vmem:[%s1 + $0x5a0] sm:$0xff]
    %v350 = vld [vmem:[%s1 + $0x5a8] sm:$0xff]
    %v351 = vld [vmem:[%s1 + $0x5b0] sm:$0xff]
    %v352 = vld [vmem:[%s1 + $0x5b8] sm:$0xff]
    %v353 = vld [vmem:[%s1 + $0x5c0] sm:$0xff]
    %v354 = vld [vmem:[%s1 + $0x5c8] sm:$0xff]
    %v355 = vld [vmem:[%s1 + $0x5d0] sm:$0xff]
    %v356 = vld [vmem:[%s1 + $0x5d8] sm:$0xff]
    %v357 = vld [vmem:[%s1 + $0x5e0] sm:$0xff]
    %v358 = vld [vmem:[%s1 + $0x5e8] sm:$0xff]
    %v359 = vld [vmem:[%s1 + $0x5f0] sm:$0xff]
    %v360 = vld [vmem:[%s1 + $0x5f8] sm:$0xff]
    %v361 = vld [vmem:[#allocation5] sm:$0xff]
    %v363 = vlaneseq
    %v364 = vshrl.u32 %v363, 7
    %v365 = vsub.s32 0, %v364
    %v366 = vrot.slane %v361, %v365
    %v367 = vlaneseq
    %v368 = vshrl.u32 %v367, 7
    %v369 = vsub.s32 1, %v368
    %v370 = vrot.slane %v361, %v369
    %v371 = vlaneseq
    %v372 = vshrl.u32 %v371, 7
    %v373 = vsub.s32 2, %v372
    %v374 = vrot.slane %v361, %v373
    %v375 = vlaneseq
    %v376 = vshrl.u32 %v375, 7
    %v377 = vsub.s32 3, %v376
    %v378 = vrot.slane %v361, %v377
    %v379 = vlaneseq
    %v380 = vshrl.u32 %v379, 7
    %v381 = vsub.s32 4, %v380
    %v382 = vrot.slane %v361, %v381
    %v383 = vlaneseq
    %v384 = vshrl.u32 %v383, 7
    %v385 = vsub.s32 5, %v384
    %v386 = vrot.slane %v361, %v385
    %v387 = vlaneseq
    %v388 = vshrl.u32 %v387, 7
    %v389 = vsub.s32 6, %v388
    %v390 = vrot.slane %v361, %v389
    %v391 = vlaneseq
    %v392 = vshrl.u32 %v391, 7
    %v393 = vsub.s32 7, %v392
    %v394 = vrot.slane %v361, %v393
    %v407 = vunpack.c.l.b16 %v165
    %v408 = vunpack.c.h.b16 %v165
    %v409 = vunpack.c.l.b16 %v166
    %v410 = vunpack.c.l.b16 %v167
    %v411 = vunpack.c.h.b16 %v167
    %v412 = vunpack.c.l.b16 %v168
    %v413 = vpack.c.b16 %v410, %v407
    %v414 = vpack.c.b16 %v411, %v408
    %v415 = vpack.c.b16 %v412, %v409
    %v611 = vunpack.c.l.b16 %v169
    %v612 = vunpack.c.h.b16 %v169
    %v613 = vunpack.c.l.b16 %v170
    %v614 = vunpack.c.h.b16 %v170
    %v615 = vunpack.c.l.b16 %v171
    %v616 = vunpack.c.h.b16 %v171
    %v617 = vunpack.c.l.b16 %v172
    %v618 = vunpack.c.h.b16 %v172
    %v619 = vunpack.c.l.b16 %v173
    %v620 = vunpack.c.h.b16 %v173
    %v621 = vunpack.c.l.b16 %v174
    %v622 = vunpack.c.h.b16 %v174
    %v623 = vunpack.c.l.b16 %v175
    %v624 = vunpack.c.h.b16 %v175
    %v625 = vunpack.c.l.b16 %v176
    %v626 = vunpack.c.h.b16 %v176
    %v627 = vunpack.c.l.b16 %v177
    %v628 = vunpack.c.h.b16 %v177
    %v629 = vunpack.c.l.b16 %v178
    %v630 = vunpack.c.h.b16 %v178
    %v631 = vunpack.c.l.b16 %v179
    %v632 = vunpack.c.h.b16 %v179
    %v633 = vunpack.c.l.b16 %v180
    %v634 = vunpack.c.h.b16 %v180
    %v635 = vunpack.c.l.b16 %v181
    %v636 = vunpack.c.h.b16 %v181
    %v637 = vunpack.c.l.b16 %v182
    %v638 = vunpack.c.h.b16 %v182
    %v639 = vunpack.c.l.b16 %v183
    %v640 = vunpack.c.h.b16 %v183
    %v641 = vunpack.c.l.b16 %v184
    %v642 = vunpack.c.h.b16 %v184
    %v643 = vunpack.c.l.b16 %v185
    %v644 = vunpack.c.h.b16 %v185
    %v645 = vunpack.c.l.b16 %v186
    %v646 = vunpack.c.h.b16 %v186
    %v647 = vunpack.c.l.b16 %v187
    %v648 = vunpack.c.h.b16 %v187
    %v649 = vunpack.c.l.b16 %v188
    %v650 = vunpack.c.h.b16 %v188
    %v651 = vunpack.c.l.b16 %v189
    %v652 = vunpack.c.h.b16 %v189
    %v653 = vunpack.c.l.b16 %v190
    %v654 = vunpack.c.h.b16 %v190
    %v655 = vunpack.c.l.b16 %v191
    %v656 = vunpack.c.h.b16 %v191
    %v657 = vunpack.c.l.b16 %v192
    %v658 = vunpack.c.h.b16 %v192
    %v659 = vunpack.c.l.b16 %v193
    %v660 = vunpack.c.h.b16 %v193
    %v661 = vunpack.c.l.b16 %v194
    %v662 = vunpack.c.h.b16 %v194
    %v663 = vunpack.c.l.b16 %v195
    %v664 = vunpack.c.h.b16 %v195
    %v665 = vunpack.c.l.b16 %v196
    %v666 = vunpack.c.h.b16 %v196
    %v667 = vunpack.c.l.b16 %v197
    %v668 = vunpack.c.h.b16 %v197
    %v669 = vunpack.c.l.b16 %v198
    %v670 = vunpack.c.h.b16 %v198
    %v671 = vunpack.c.l.b16 %v199
    %v672 = vunpack.c.h.b16 %v199
    %v673 = vunpack.c.l.b16 %v200
    %v674 = vunpack.c.h.b16 %v200
    %v675 = vunpack.c.l.b16 %v201
    %v676 = vunpack.c.h.b16 %v201
    %v677 = vunpack.c.l.b16 %v202
    %v678 = vunpack.c.h.b16 %v202
    %v679 = vunpack.c.l.b16 %v203
    %v680 = vunpack.c.h.b16 %v203
    %v681 = vunpack.c.l.b16 %v204
    %v682 = vunpack.c.h.b16 %v204
    %v683 = vunpack.c.l.b16 %v205
    %v684 = vunpack.c.h.b16 %v205
    %v685 = vunpack.c.l.b16 %v206
    %v686 = vunpack.c.h.b16 %v206
    %v687 = vunpack.c.l.b16 %v207
    %v688 = vunpack.c.h.b16 %v207
    %v689 = vunpack.c.l.b16 %v208
    %v690 = vunpack.c.h.b16 %v208
    %v691 = vunpack.c.l.b16 %v209
    %v692 = vunpack.c.h.b16 %v209
    %v693 = vunpack.c.l.b16 %v210
    %v694 = vunpack.c.h.b16 %v210
    %v695 = vunpack.c.l.b16 %v211
    %v696 = vunpack.c.h.b16 %v211
    %v697 = vunpack.c.l.b16 %v212
    %v698 = vunpack.c.h.b16 %v212
    %v699 = vunpack.c.l.b16 %v213
    %v700 = vunpack.c.h.b16 %v213
    %v701 = vunpack.c.l.b16 %v214
    %v702 = vunpack.c.h.b16 %v214
    %v703 = vunpack.c.l.b16 %v215
    %v704 = vunpack.c.h.b16 %v215
    %v705 = vunpack.c.l.b16 %v216
    %v706 = vunpack.c.h.b16 %v216
    %v707 = vunpack.c.l.b16 %v217
    %v708 = vunpack.c.h.b16 %v217
    %v709 = vunpack.c.l.b16 %v218
    %v710 = vunpack.c.h.b16 %v218
    %v711 = vunpack.c.l.b16 %v219
    %v712 = vunpack.c.h.b16 %v219
    %v713 = vunpack.c.l.b16 %v220
    %v714 = vunpack.c.h.b16 %v220
    %v715 = vunpack.c.l.b16 %v221
    %v716 = vunpack.c.h.b16 %v221
    %v717 = vunpack.c.l.b16 %v222
    %v718 = vunpack.c.h.b16 %v222
    %v719 = vunpack.c.l.b16 %v223
    %v720 = vunpack.c.h.b16 %v223
    %v721 = vunpack.c.l.b16 %v224
    %v722 = vunpack.c.h.b16 %v224
    %v723 = vunpack.c.l.b16 %v225
    %v724 = vunpack.c.h.b16 %v225
    %v725 = vunpack.c.l.b16 %v226
    %v726 = vunpack.c.h.b16 %v226
    %v727 = vunpack.c.l.b16 %v227
    %v728 = vunpack.c.h.b16 %v227
    %v729 = vunpack.c.l.b16 %v228
    %v730 = vunpack.c.h.b16 %v228
    %v731 = vunpack.c.l.b16 %v229
    %v732 = vunpack.c.h.b16 %v229
    %v733 = vunpack.c.l.b16 %v230
    %v734 = vunpack.c.h.b16 %v230
    %v735 = vunpack.c.l.b16 %v231
    %v736 = vunpack.c.h.b16 %v231
    %v737 = vunpack.c.l.b16 %v232
    %v738 = vunpack.c.h.b16 %v232
    %v739 = vunpack.c.l.b16 %v233
    %v740 = vunpack.c.h.b16 %v233
    %v741 = vunpack.c.l.b16 %v234
    %v742 = vunpack.c.h.b16 %v234
    %v743 = vunpack.c.l.b16 %v235
    %v744 = vunpack.c.h.b16 %v235
    %v745 = vunpack.c.l.b16 %v236
    %v746 = vunpack.c.h.b16 %v236
    %v747 = vunpack.c.l.b16 %v237
    %v748 = vunpack.c.h.b16 %v237
    %v749 = vunpack.c.l.b16 %v238
    %v750 = vunpack.c.h.b16 %v238
    %v751 = vunpack.c.l.b16 %v239
    %v752 = vunpack.c.h.b16 %v239
    %v753 = vunpack.c.l.b16 %v240
    %v754 = vunpack.c.h.b16 %v240
    %v755 = vunpack.c.l.b16 %v241
    %v756 = vunpack.c.h.b16 %v241
    %v757 = vunpack.c.l.b16 %v242
    %v758 = vunpack.c.h.b16 %v242
    %v759 = vunpack.c.l.b16 %v243
    %v760 = vunpack.c.h.b16 %v243
    %v761 = vunpack.c.l.b16 %v244
    %v762 = vunpack.c.h.b16 %v244
    %v763 = vunpack.c.l.b16 %v245
    %v764 = vunpack.c.h.b16 %v245
    %v765 = vunpack.c.l.b16 %v246
    %v766 = vunpack.c.h.b16 %v246
    %v767 = vunpack.c.l.b16 %v247
    %v768 = vunpack.c.h.b16 %v247
    %v769 = vunpack.c.l.b16 %v248
    %v770 = vunpack.c.h.b16 %v248
    %v771 = vunpack.c.l.b16 %v249
    %v772 = vunpack.c.h.b16 %v249
    %v773 = vunpack.c.l.b16 %v250
    %v774 = vunpack.c.h.b16 %v250
    %v775 = vunpack.c.l.b16 %v251
    %v776 = vunpack.c.h.b16 %v251
    %v777 = vunpack.c.l.b16 %v252
    %v778 = vunpack.c.h.b16 %v252
    %v779 = vunpack.c.l.b16 %v253
    %v780 = vunpack.c.h.b16 %v253
    %v781 = vunpack.c.l.b16 %v254
    %v782 = vunpack.c.h.b16 %v254
    %v783 = vunpack.c.l.b16 %v255
    %v784 = vunpack.c.h.b16 %v255
    %v785 = vunpack.c.l.b16 %v256
    %v786 = vunpack.c.h.b16 %v256
    %v787 = vunpack.c.l.b16 %v257
    %v788 = vunpack.c.h.b16 %v257
    %v789 = vunpack.c.l.b16 %v258
    %v790 = vunpack.c.h.b16 %v258
    %v791 = vunpack.c.l.b16 %v259
    %v792 = vunpack.c.h.b16 %v259
    %v793 = vunpack.c.l.b16 %v260
    %v794 = vunpack.c.h.b16 %v260
    %v795 = vunpack.c.l.b16 %v261
    %v796 = vunpack.c.h.b16 %v261
    %v797 = vunpack.c.l.b16 %v262
    %v798 = vunpack.c.h.b16 %v262
    %v799 = vunpack.c.l.b16 %v263
    %v800 = vunpack.c.h.b16 %v263
    %v801 = vunpack.c.l.b16 %v264
    %v802 = vunpack.c.h.b16 %v264
    %v803 = vunpack.c.l.b16 %v265
    %v804 = vunpack.c.h.b16 %v265
    %v805 = vunpack.c.l.b16 %v266
    %v806 = vunpack.c.h.b16 %v266
    %v807 = vunpack.c.l.b16 %v267
    %v808 = vunpack.c.h.b16 %v267
    %v809 = vunpack.c.l.b16 %v268
    %v810 = vunpack.c.h.b16 %v268
    %v811 = vunpack.c.l.b16 %v269
    %v812 = vunpack.c.h.b16 %v269
    %v813 = vunpack.c.l.b16 %v270
    %v814 = vunpack.c.h.b16 %v270
    %v815 = vunpack.c.l.b16 %v271
    %v816 = vunpack.c.h.b16 %v271
    %v817 = vunpack.c.l.b16 %v272
    %v818 = vunpack.c.h.b16 %v272
    %v819 = vunpack.c.l.b16 %v273
    %v820 = vunpack.c.h.b16 %v273
    %v821 = vunpack.c.l.b16 %v274
    %v822 = vunpack.c.h.b16 %v274
    %v823 = vunpack.c.l.b16 %v275
    %v824 = vunpack.c.h.b16 %v275
    %v825 = vunpack.c.l.b16 %v276
    %v826 = vunpack.c.h.b16 %v276
    %v827 = vunpack.c.l.b16 %v277
    %v828 = vunpack.c.h.b16 %v277
    %v829 = vunpack.c.l.b16 %v278
    %v830 = vunpack.c.h.b16 %v278
    %v831 = vunpack.c.l.b16 %v279
    %v832 = vunpack.c.h.b16 %v279
    %v833 = vunpack.c.l.b16 %v280
    %v834 = vunpack.c.h.b16 %v280
    %v835 = vunpack.c.l.b16 %v281
    %v836 = vunpack.c.h.b16 %v281
    %v837 = vunpack.c.l.b16 %v282
    %v838 = vunpack.c.h.b16 %v282
    %v839 = vunpack.c.l.b16 %v283
    %v840 = vunpack.c.h.b16 %v283
    %v841 = vunpack.c.l.b16 %v284
    %v842 = vunpack.c.h.b16 %v284
    %v843 = vunpack.c.l.b16 %v285
    %v844 = vunpack.c.h.b16 %v285
    %v845 = vunpack.c.l.b16 %v286
    %v846 = vunpack.c.h.b16 %v286
    %v847 = vunpack.c.l.b16 %v287
    %v848 = vunpack.c.h.b16 %v287
    %v849 = vunpack.c.l.b16 %v288
    %v850 = vunpack.c.h.b16 %v288
    %v851 = vunpack.c.l.b16 %v289
    %v852 = vunpack.c.h.b16 %v289
    %v853 = vunpack.c.l.b16 %v290
    %v854 = vunpack.c.h.b16 %v290
    %v855 = vunpack.c.l.b16 %v291
    %v856 = vunpack.c.h.b16 %v291
    %v857 = vunpack.c.l.b16 %v292
    %v858 = vunpack.c.h.b16 %v292
    %v859 = vunpack.c.l.b16 %v293
    %v860 = vunpack.c.h.b16 %v293
    %v861 = vunpack.c.l.b16 %v294
    %v862 = vunpack.c.h.b16 %v294
    %v863 = vunpack.c.l.b16 %v295
    %v864 = vunpack.c.h.b16 %v295
    %v865 = vunpack.c.l.b16 %v296
    %v866 = vunpack.c.h.b16 %v296
    %v867 = vunpack.c.l.b16 %v297
    %v868 = vunpack.c.h.b16 %v297
    %v869 = vunpack.c.l.b16 %v298
    %v870 = vunpack.c.h.b16 %v298
    %v871 = vunpack.c.l.b16 %v299
    %v872 = vunpack.c.h.b16 %v299
    %v873 = vunpack.c.l.b16 %v300
    %v874 = vunpack.c.h.b16 %v300
    %v875 = vunpack.c.l.b16 %v301
    %v876 = vunpack.c.h.b16 %v301
    %v877 = vunpack.c.l.b16 %v302
    %v878 = vunpack.c.h.b16 %v302
    %v879 = vunpack.c.l.b16 %v303
    %v880 = vunpack.c.h.b16 %v303
    %v881 = vunpack.c.l.b16 %v304
    %v882 = vunpack.c.h.b16 %v304
    %v883 = vunpack.c.l.b16 %v305
    %v884 = vunpack.c.h.b16 %v305
    %v885 = vunpack.c.l.b16 %v306
    %v886 = vunpack.c.h.b16 %v306
    %v887 = vunpack.c.l.b16 %v307
    %v888 = vunpack.c.h.b16 %v307
    %v889 = vunpack.c.l.b16 %v308
    %v890 = vunpack.c.h.b16 %v308
    %v891 = vunpack.c.l.b16 %v309
    %v892 = vunpack.c.h.b16 %v309
    %v893 = vunpack.c.l.b16 %v310
    %v894 = vunpack.c.h.b16 %v310
    %v895 = vunpack.c.l.b16 %v311
    %v896 = vunpack.c.h.b16 %v311
    %v897 = vunpack.c.l.b16 %v312
    %v898 = vunpack.c.h.b16 %v312
    %v899 = vunpack.c.l.b16 %v313
    %v900 = vunpack.c.h.b16 %v313
    %v901 = vunpack.c.l.b16 %v314
    %v902 = vunpack.c.h.b16 %v314
    %v903 = vunpack.c.l.b16 %v315
    %v904 = vunpack.c.h.b16 %v315
    %v905 = vunpack.c.l.b16 %v316
    %v906 = vunpack.c.h.b16 %v316
    %v907 = vunpack.c.l.b16 %v317
    %v908 = vunpack.c.h.b16 %v317
    %v909 = vunpack.c.l.b16 %v318
    %v910 = vunpack.c.h.b16 %v318
    %v911 = vunpack.c.l.b16 %v319
    %v912 = vunpack.c.h.b16 %v319
    %v913 = vunpack.c.l.b16 %v320
    %v914 = vunpack.c.h.b16 %v320
    %v915 = vunpack.c.l.b16 %v321
    %v916 = vunpack.c.h.b16 %v321
    %v917 = vunpack.c.l.b16 %v322
    %v918 = vunpack.c.h.b16 %v322
    %v919 = vunpack.c.l.b16 %v323
    %v920 = vunpack.c.h.b16 %v323
    %v921 = vunpack.c.l.b16 %v324
    %v922 = vunpack.c.h.b16 %v324
    %v923 = vunpack.c.l.b16 %v325
    %v924 = vunpack.c.h.b16 %v325
    %v925 = vunpack.c.l.b16 %v326
    %v926 = vunpack.c.h.b16 %v326
    %v927 = vunpack.c.l.b16 %v327
    %v928 = vunpack.c.h.b16 %v327
    %v929 = vunpack.c.l.b16 %v328
    %v930 = vunpack.c.h.b16 %v328
    %v931 = vunpack.c.l.b16 %v329
    %v932 = vunpack.c.h.b16 %v329
    %v933 = vunpack.c.l.b16 %v330
    %v934 = vunpack.c.h.b16 %v330
    %v935 = vunpack.c.l.b16 %v331
    %v936 = vunpack.c.h.b16 %v331
    %v937 = vunpack.c.l.b16 %v332
    %v938 = vunpack.c.h.b16 %v332
    %v939 = vunpack.c.l.b16 %v333
    %v940 = vunpack.c.h.b16 %v333
    %v941 = vunpack.c.l.b16 %v334
    %v942 = vunpack.c.h.b16 %v334
    %v943 = vunpack.c.l.b16 %v335
    %v944 = vunpack.c.h.b16 %v335
    %v945 = vunpack.c.l.b16 %v336
    %v946 = vunpack.c.h.b16 %v336
    %v947 = vunpack.c.l.b16 %v337
    %v948 = vunpack.c.h.b16 %v337
    %v949 = vunpack.c.l.b16 %v338
    %v950 = vunpack.c.h.b16 %v338
    %v951 = vunpack.c.l.b16 %v339
    %v952 = vunpack.c.h.b16 %v339
    %v953 = vunpack.c.l.b16 %v340
    %v954 = vunpack.c.h.b16 %v340
    %v955 = vunpack.c.l.b16 %v341
    %v956 = vunpack.c.h.b16 %v341
    %v957 = vunpack.c.l.b16 %v342
    %v958 = vunpack.c.h.b16 %v342
    %v959 = vunpack.c.l.b16 %v343
    %v960 = vunpack.c.h.b16 %v343
    %v961 = vunpack.c.l.b16 %v344
    %v962 = vunpack.c.h.b16 %v344
    %v963 = vunpack.c.l.b16 %v345
    %v964 = vunpack.c.h.b16 %v345
    %v965 = vunpack.c.l.b16 %v346
    %v966 = vunpack.c.h.b16 %v346
    %v967 = vunpack.c.l.b16 %v347
    %v968 = vunpack.c.h.b16 %v347
    %v969 = vunpack.c.l.b16 %v348
    %v970 = vunpack.c.h.b16 %v348
    %v971 = vunpack.c.l.b16 %v349
    %v972 = vunpack.c.h.b16 %v349
    %v973 = vunpack.c.l.b16 %v350
    %v974 = vunpack.c.h.b16 %v350
    %v975 = vunpack.c.l.b16 %v351
    %v976 = vunpack.c.h.b16 %v351
    %v977 = vunpack.c.l.b16 %v352
    %v978 = vunpack.c.h.b16 %v352
    %v979 = vunpack.c.l.b16 %v353
    %v980 = vunpack.c.h.b16 %v353
    %v981 = vunpack.c.l.b16 %v354
    %v982 = vunpack.c.h.b16 %v354
    %v983 = vunpack.c.l.b16 %v355
    %v984 = vunpack.c.h.b16 %v355
    %v985 = vunpack.c.l.b16 %v356
    %v986 = vunpack.c.h.b16 %v356
    %v987 = vunpack.c.l.b16 %v357
    %v988 = vunpack.c.h.b16 %v357
    %v989 = vunpack.c.l.b16 %v358
    %v990 = vunpack.c.h.b16 %v358
    %v991 = vunpack.c.l.b16 %v359
    %v992 = vunpack.c.h.b16 %v359
    %v993 = vunpack.c.l.b16 %v360
    %v994 = vunpack.c.h.b16 %v360
    %v995 = vpack.c.b16 %v619, %v611
    %v996 = vpack.c.b16 %v620, %v612
    %v997 = vpack.c.b16 %v621, %v613
    %v998 = vpack.c.b16 %v622, %v614
    %v999 = vpack.c.b16 %v623, %v615
    %v1000 = vpack.c.b16 %v624, %v616
    %v1001 = vpack.c.b16 %v625, %v617
    %v1002 = vpack.c.b16 %v626, %v618
    %v1003 = vpack.c.b16 %v635, %v627
    %v1004 = vpack.c.b16 %v636, %v628
    %v1005 = vpack.c.b16 %v637, %v629
    %v1006 = vpack.c.b16 %v638, %v630
    %v1007 = vpack.c.b16 %v639, %v631
    %v1008 = vpack.c.b16 %v640, %v632
    %v1009 = vpack.c.b16 %v641, %v633
    %v1010 = vpack.c.b16 %v642, %v634
    %v1011 = vpack.c.b16 %v651, %v643
    %v1012 = vpack.c.b16 %v652, %v644
    %v1013 = vpack.c.b16 %v653, %v645
    %v1014 = vpack.c.b16 %v654, %v646
    %v1015 = vpack.c.b16 %v655, %v647
    %v1016 = vpack.c.b16 %v656, %v648
    %v1017 = vpack.c.b16 %v657, %v649
    %v1018 = vpack.c.b16 %v658, %v650
    %v1019 = vpack.c.b16 %v667, %v659
    %v1020 = vpack.c.b16 %v668, %v660
    %v1021 = vpack.c.b16 %v669, %v661
    %v1022 = vpack.c.b16 %v670, %v662
    %v1023 = vpack.c.b16 %v671, %v663
    %v1024 = vpack.c.b16 %v672, %v664
    %v1025 = vpack.c.b16 %v673, %v665
    %v1026 = vpack.c.b16 %v674, %v666
    %v1027 = vpack.c.b16 %v683, %v675
    %v1028 = vpack.c.b16 %v684, %v676
    %v1029 = vpack.c.b16 %v685, %v677
    %v1030 = vpack.c.b16 %v686, %v678
    %v1031 = vpack.c.b16 %v687, %v679
    %v1032 = vpack.c.b16 %v688, %v680
    %v1033 = vpack.c.b16 %v689, %v681
    %v1034 = vpack.c.b16 %v690, %v682
    %v1035 = vpack.c.b16 %v699, %v691
    %v1036 = vpack.c.b16 %v700, %v692
    %v1037 = vpack.c.b16 %v701, %v693
    %v1038 = vpack.c.b16 %v702, %v694
    %v1039 = vpack.c.b16 %v703, %v695
    %v1040 = vpack.c.b16 %v704, %v696
    %v1041 = vpack.c.b16 %v705, %v697
    %v1042 = vpack.c.b16 %v706, %v698
    %v1043 = vpack.c.b16 %v715, %v707
    %v1044 = vpack.c.b16 %v716, %v708
    %v1045 = vpack.c.b16 %v717, %v709
    %v1046 = vpack.c.b16 %v718, %v710
    %v1047 = vpack.c.b16 %v719, %v711
    %v1048 = vpack.c.b16 %v720, %v712
    %v1049 = vpack.c.b16 %v721, %v713
    %v1050 = vpack.c.b16 %v722, %v714
    %v1051 = vpack.c.b16 %v731, %v723
    %v1052 = vpack.c.b16 %v732, %v724
    %v1053 = vpack.c.b16 %v733, %v725
    %v1054 = vpack.c.b16 %v734, %v726
    %v1055 = vpack.c.b16 %v735, %v727
    %v1056 = vpack.c.b16 %v736, %v728
    %v1057 = vpack.c.b16 %v737, %v729
    %v1058 = vpack.c.b16 %v738, %v730
    %v1059 = vpack.c.b16 %v747, %v739
    %v1060 = vpack.c.b16 %v748, %v740
    %v1061 = vpack.c.b16 %v749, %v741
    %v1062 = vpack.c.b16 %v750, %v742
    %v1063 = vpack.c.b16 %v751, %v743
    %v1064 = vpack.c.b16 %v752, %v744
    %v1065 = vpack.c.b16 %v753, %v745
    %v1066 = vpack.c.b16 %v754, %v746
    %v1067 = vpack.c.b16 %v763, %v755
    %v1068 = vpack.c.b16 %v764, %v756
    %v1069 = vpack.c.b16 %v765, %v757
    %v1070 = vpack.c.b16 %v766, %v758
    %v1071 = vpack.c.b16 %v767, %v759
    %v1072 = vpack.c.b16 %v768, %v760
    %v1073 = vpack.c.b16 %v769, %v761
    %v1074 = vpack.c.b16 %v770, %v762
    %v1075 = vpack.c.b16 %v779, %v771
    %v1076 = vpack.c.b16 %v780, %v772
    %v1077 = vpack.c.b16 %v781, %v773
    %v1078 = vpack.c.b16 %v782, %v774
    %v1079 = vpack.c.b16 %v783, %v775
    %v1080 = vpack.c.b16 %v784, %v776
    %v1081 = vpack.c.b16 %v785, %v777
    %v1082 = vpack.c.b16 %v786, %v778
    %v1083 = vpack.c.b16 %v795, %v787
    %v1084 = vpack.c.b16 %v796, %v788
    %v1085 = vpack.c.b16 %v797, %v789
    %v1086 = vpack.c.b16 %v798, %v790
    %v1087 = vpack.c.b16 %v799, %v791
    %v1088 = vpack.c.b16 %v800, %v792
    %v1089 = vpack.c.b16 %v801, %v793
    %v1090 = vpack.c.b16 %v802, %v794
    %v1091 = vpack.c.b16 %v811, %v803
    %v1092 = vpack.c.b16 %v812, %v804
    %v1093 = vpack.c.b16 %v813, %v805
    %v1094 = vpack.c.b16 %v814, %v806
    %v1095 = vpack.c.b16 %v815, %v807
    %v1096 = vpack.c.b16 %v816, %v808
    %v1097 = vpack.c.b16 %v817, %v809
    %v1098 = vpack.c.b16 %v818, %v810
    %v1099 = vpack.c.b16 %v827, %v819
    %v1100 = vpack.c.b16 %v828, %v820
    %v1101 = vpack.c.b16 %v829, %v821
    %v1102 = vpack.c.b16 %v830, %v822
    %v1103 = vpack.c.b16 %v831, %v823
    %v1104 = vpack.c.b16 %v832, %v824
    %v1105 = vpack.c.b16 %v833, %v825
    %v1106 = vpack.c.b16 %v834, %v826
    %v1107 = vpack.c.b16 %v843, %v835
    %v1108 = vpack.c.b16 %v844, %v836
    %v1109 = vpack.c.b16 %v845, %v837
    %v1110 = vpack.c.b16 %v846, %v838
    %v1111 = vpack.c.b16 %v847, %v839
    %v1112 = vpack.c.b16 %v848, %v840
    %v1113 = vpack.c.b16 %v849, %v841
    %v1114 = vpack.c.b16 %v850, %v842
    %v1115 = vpack.c.b16 %v859, %v851
    %v1116 = vpack.c.b16 %v860, %v852
    %v1117 = vpack.c.b16 %v861, %v853
    %v1118 = vpack.c.b16 %v862, %v854
    %v1119 = vpack.c.b16 %v863, %v855
    %v1120 = vpack.c.b16 %v864, %v856
    %v1121 = vpack.c.b16 %v865, %v857
    %v1122 = vpack.c.b16 %v866, %v858
    %v1123 = vpack.c.b16 %v875, %v867
    %v1124 = vpack.c.b16 %v876, %v868
    %v1125 = vpack.c.b16 %v877, %v869
    %v1126 = vpack.c.b16 %v878, %v870
    %v1127 = vpack.c.b16 %v879, %v871
    %v1128 = vpack.c.b16 %v880, %v872
    %v1129 = vpack.c.b16 %v881, %v873
    %v1130 = vpack.c.b16 %v882, %v874
    %v1131 = vpack.c.b16 %v891, %v883
    %v1132 = vpack.c.b16 %v892, %v884
    %v1133 = vpack.c.b16 %v893, %v885
    %v1134 = vpack.c.b16 %v894, %v886
    %v1135 = vpack.c.b16 %v895, %v887
    %v1136 = vpack.c.b16 %v896, %v888
    %v1137 = vpack.c.b16 %v897, %v889
    %v1138 = vpack.c.b16 %v898, %v890
    %v1139 = vpack.c.b16 %v907, %v899
    %v1140 = vpack.c.b16 %v908, %v900
    %v1141 = vpack.c.b16 %v909, %v901
    %v1142 = vpack.c.b16 %v910, %v902
    %v1143 = vpack.c.b16 %v911, %v903
    %v1144 = vpack.c.b16 %v912, %v904
    %v1145 = vpack.c.b16 %v913, %v905
    %v1146 = vpack.c.b16 %v914, %v906
    %v1147 = vpack.c.b16 %v923, %v915
    %v1148 = vpack.c.b16 %v924, %v916
    %v1149 = vpack.c.b16 %v925, %v917
    %v1150 = vpack.c.b16 %v926, %v918
    %v1151 = vpack.c.b16 %v927, %v919
    %v1152 = vpack.c.b16 %v928, %v920
    %v1153 = vpack.c.b16 %v929, %v921
    %v1154 = vpack.c.b16 %v930, %v922
    %v1155 = vpack.c.b16 %v939, %v931
    %v1156 = vpack.c.b16 %v940, %v932
    %v1157 = vpack.c.b16 %v941, %v933
    %v1158 = vpack.c.b16 %v942, %v934
    %v1159 = vpack.c.b16 %v943, %v935
    %v1160 = vpack.c.b16 %v944, %v936
    %v1161 = vpack.c.b16 %v945, %v937
    %v1162 = vpack.c.b16 %v946, %v938
    %v1163 = vpack.c.b16 %v955, %v947
    %v1164 = vpack.c.b16 %v956, %v948
    %v1165 = vpack.c.b16 %v957, %v949
    %v1166 = vpack.c.b16 %v958, %v950
    %v1167 = vpack.c.b16 %v959, %v951
    %v1168 = vpack.c.b16 %v960, %v952
    %v1169 = vpack.c.b16 %v961, %v953
    %v1170 = vpack.c.b16 %v962, %v954
    %v1171 = vpack.c.b16 %v971, %v963
    %v1172 = vpack.c.b16 %v972, %v964
    %v1173 = vpack.c.b16 %v973, %v965
    %v1174 = vpack.c.b16 %v974, %v966
    %v1175 = vpack.c.b16 %v975, %v967
    %v1176 = vpack.c.b16 %v976, %v968
    %v1177 = vpack.c.b16 %v977, %v969
    %v1178 = vpack.c.b16 %v978, %v970
    %v1179 = vpack.c.b16 %v987, %v979
    %v1180 = vpack.c.b16 %v988, %v980
    %v1181 = vpack.c.b16 %v989, %v981
    %v1182 = vpack.c.b16 %v990, %v982
    %v1183 = vpack.c.b16 %v991, %v983
    %v1184 = vpack.c.b16 %v992, %v984
    %v1185 = vpack.c.b16 %v993, %v985
    %v1186 = vpack.c.b16 %v994, %v986
    %1379 = vmatprep.subr.bf16.mxu0 %v996
    %1380 = vmatpush1.bf16.msra.mxu0 %v995
    %1381 = vmatprep.subr.bf16.mxu0 %v1004
    %1382 = vmatpush1.bf16.msra.mxu0 %v1003
    %1383 = vmatprep.subr.bf16.mxu0 %v1012
    %1384 = vmatpush1.bf16.msra.mxu0 %v1011
    %1385 = vmatprep.subr.bf16.mxu0 %v1020
    %1386 = vmatpush1.bf16.msra.mxu0 %v1019
    %1387 = vmatprep.subr.bf16.mxu0 %v1028
    %1388 = vmatpush1.bf16.msra.mxu0 %v1027
    %1389 = vmatprep.subr.bf16.mxu0 %v1036
    %1390 = vmatpush1.bf16.msra.mxu0 %v1035
    %1391 = vmatprep.subr.bf16.mxu0 %v1044
    %1392 = vmatpush1.bf16.msra.mxu0 %v1043
    %1393 = vmatprep.subr.bf16.mxu0 %v1052
    %1394 = vmatpush1.bf16.msra.mxu0 %v1051
    %1395 = vmatprep.subr.bf16.mxu0 %v1060
    %1396 = vmatpush1.bf16.msra.mxu0 %v1059
    %1397 = vmatprep.subr.bf16.mxu0 %v1068
    %1398 = vmatpush1.bf16.msra.mxu0 %v1067
    %1399 = vmatprep.subr.bf16.mxu0 %v1076
    %1400 = vmatpush1.bf16.msra.mxu0 %v1075
    %1401 = vmatprep.subr.bf16.mxu0 %v1084
    %1402 = vmatpush1.bf16.msra.mxu0 %v1083
    %1403 = vmatprep.subr.bf16.mxu0 %v1092
    %1404 = vmatpush1.bf16.msra.mxu0 %v1091
    %1405 = vmatprep.subr.bf16.mxu0 %v1100
    %1406 = vmatpush1.bf16.msra.mxu0 %v1099
    %1407 = vmatprep.subr.bf16.mxu0 %v1108
    %1408 = vmatpush1.bf16.msra.mxu0 %v1107
    %1409 = vmatprep.subr.bf16.mxu0 %v1116
    %1410 = vmatpush1.bf16.msra.mxu0 %v1115
    %1411 = vmatprep.mubr.bf16.mxu0 %v414
    %1412 = vmatmul.mubr.bf16.gmra.mrb[0].mxu0 %v413
    %v1413 = vpop.f32.mrb[0].mxu0
    %v1414 = vadd.f32 %v366, %v1413
    %v1415 = vpop.f32.mrb[0].mxu0
    %v1416 = vadd.f32 %v370, %v1415
    %v1417 = vpop.f32.mrb[0].mxu0
    %v1418 = vadd.f32 %v366, %v1417
    %v1419 = vpop.f32.mrb[0].mxu0
    %v1420 = vadd.f32 %v370, %v1419
    %1421 = vdwg.mxu0
    %1422 = vmatprep.subr.bf16.mxu0 %v1124
    %1423 = vmatpush1.bf16.msra.mxu0 %v1123
    %1424 = vmatprep.subr.bf16.mxu0 %v1132
    %1425 = vmatpush1.bf16.msra.mxu0 %v1131
    %1426 = vmatprep.subr.bf16.mxu0 %v1140
    %1427 = vmatpush1.bf16.msra.mxu0 %v1139
    %1428 = vmatprep.subr.bf16.mxu0 %v1148
    %1429 = vmatpush1.bf16.msra.mxu0 %v1147
    %1430 = vmatprep.subr.bf16.mxu0 %v1156
    %1431 = vmatpush1.bf16.msra.mxu0 %v1155
    %1432 = vmatprep.subr.bf16.mxu0 %v1164
    %1433 = vmatpush1.bf16.msra.mxu0 %v1163
    %1434 = vmatprep.subr.bf16.mxu0 %v1172
    %1435 = vmatpush1.bf16.msra.mxu0 %v1171
    %1436 = vmatprep.subr.bf16.mxu0 %v1180
    %1437 = vmatpush1.bf16.msra.mxu0 %v1179
    %1438 = vmatprep.subr.bf16.mxu0 0
    %1439 = vmatpush1.bf16.msra.mxu0 0
    %1440 = vmatprep.subr.bf16.mxu0 0
    %1441 = vmatpush1.bf16.msra.mxu0 0
    %1442 = vmatprep.subr.bf16.mxu0 0
    %1443 = vmatpush1.bf16.msra.mxu0 0
    %1444 = vmatprep.subr.bf16.mxu0 0
    %1445 = vmatpush1.bf16.msra.mxu0 0
    %1446 = vmatprep.subr.bf16.mxu0 0
    %1447 = vmatpush1.bf16.msra.mxu0 0
    %1448 = vmatprep.subr.bf16.mxu0 0
    %1449 = vmatpush1.bf16.msra.mxu0 0
    %1450 = vmatprep.subr.bf16.mxu0 0
    %1451 = vmatpush1.bf16.msra.mxu0 0
    %1452 = vmatprep.subr.bf16.mxu0 0
    %1453 = vmatpush1.bf16.msra.mxu0 0
    %1454 = vmatprep.mubr.bf16.mxu0 0
    %1455 = vmatmul.mubr.bf16.gmra.mrb[0].mxu0 %v415
    %v1456 = vpop.f32.mrb[0].mxu0
    %v1457 = vadd.f32 %v1414, %v1456
    %v1458 = vpop.f32.mrb[0].mxu0
    %v1459 = vadd.f32 %v1416, %v1458
    %v1460 = vpop.f32.mrb[0].mxu0
    %v1461 = vadd.f32 %v1418, %v1460
    %v1462 = vpop.f32.mrb[0].mxu0
    %v1463 = vadd.f32 %v1420, %v1462
    %1464 = vdwg.mxu0
    %1465 = vmatprep.subr.bf16.mxu0 %v998
    %1466 = vmatpush1.bf16.msra.mxu0 %v997
    %1467 = vmatprep.subr.bf16.mxu0 %v1006
    %1468 = vmatpush1.bf16.msra.mxu0 %v1005
    %1469 = vmatprep.subr.bf16.mxu0 %v1014
    %1470 = vmatpush1.bf16.msra.mxu0 %v1013
    %1471 = vmatprep.subr.bf16.mxu0 %v1022
    %1472 = vmatpush1.bf16.msra.mxu0 %v1021
    %1473 = vmatprep.subr.bf16.mxu0 %v1030
    %1474 = vmatpush1.bf16.msra.mxu0 %v1029
    %1475 = vmatprep.subr.bf16.mxu0 %v1038
    %1476 = vmatpush1.bf16.msra.mxu0 %v1037
    %1477 = vmatprep.subr.bf16.mxu0 %v1046
    %1478 = vmatpush1.bf16.msra.mxu0 %v1045
    %1479 = vmatprep.subr.bf16.mxu0 %v1054
    %1480 = vmatpush1.bf16.msra.mxu0 %v1053
    %1481 = vmatprep.subr.bf16.mxu0 %v1062
    %1482 = vmatpush1.bf16.msra.mxu0 %v1061
    %1483 = vmatprep.subr.bf16.mxu0 %v1070
    %1484 = vmatpush1.bf16.msra.mxu0 %v1069
    %1485 = vmatprep.subr.bf16.mxu0 %v1078
    %1486 = vmatpush1.bf16.msra.mxu0 %v1077
    %1487 = vmatprep.subr.bf16.mxu0 %v1086
    %1488 = vmatpush1.bf16.msra.mxu0 %v1085
    %1489 = vmatprep.subr.bf16.mxu0 %v1094
    %1490 = vmatpush1.bf16.msra.mxu0 %v1093
    %1491 = vmatprep.subr.bf16.mxu0 %v1102
    %1492 = vmatpush1.bf16.msra.mxu0 %v1101
    %1493 = vmatprep.subr.bf16.mxu0 %v1110
    %1494 = vmatpush1.bf16.msra.mxu0 %v1109
    %1495 = vmatprep.subr.bf16.mxu0 %v1118
    %1496 = vmatpush1.bf16.msra.mxu0 %v1117
    %1497 = vmatprep.mubr.bf16.mxu0 %v414
    %1498 = vmatmul.mubr.bf16.gmra.mrb[0].mxu0 %v413
    %v1499 = vpop.f32.mrb[0].mxu0
    %v1500 = vadd.f32 %v374, %v1499
    %v1501 = vpop.f32.mrb[0].mxu0
    %v1502 = vadd.f32 %v378, %v1501
    %v1503 = vpop.f32.mrb[0].mxu0
    %v1504 = vadd.f32 %v374, %v1503
    %v1505 = vpop.f32.mrb[0].mxu0
    %v1506 = vadd.f32 %v378, %v1505
    %1507 = vdwg.mxu0
    %1508 = vmatprep.subr.bf16.mxu0 %v1126
    %1509 = vmatpush1.bf16.msra.mxu0 %v1125
    %1510 = vmatprep.subr.bf16.mxu0 %v1134
    %1511 = vmatpush1.bf16.msra.mxu0 %v1133
    %1512 = vmatprep.subr.bf16.mxu0 %v1142
    %1513 = vmatpush1.bf16.msra.mxu0 %v1141
    %1514 = vmatprep.subr.bf16.mxu0 %v1150
    %1515 = vmatpush1.bf16.msra.mxu0 %v1149
    %1516 = vmatprep.subr.bf16.mxu0 %v1158
    %1517 = vmatpush1.bf16.msra.mxu0 %v1157
    %1518 = vmatprep.subr.bf16.mxu0 %v1166
    %1519 = vmatpush1.bf16.msra.mxu0 %v1165
    %1520 = vmatprep.subr.bf16.mxu0 %v1174
    %1521 = vmatpush1.bf16.msra.mxu0 %v1173
    %1522 = vmatprep.subr.bf16.mxu0 %v1182
    %1523 = vmatpush1.bf16.msra.mxu0 %v1181
    %1524 = vmatprep.subr.bf16.mxu0 0
    %1525 = vmatpush1.bf16.msra.mxu0 0
    %1526 = vmatprep.subr.bf16.mxu0 0
    %1527 = vmatpush1.bf16.msra.mxu0 0
    %1528 = vmatprep.subr.bf16.mxu0 0
    %1529 = vmatpush1.bf16.msra.mxu0 0
    %1530 = vmatprep.subr.bf16.mxu0 0
    %1531 = vmatpush1.bf16.msra.mxu0 0
    %1532 = vmatprep.subr.bf16.mxu0 0
    %1533 = vmatpush1.bf16.msra.mxu0 0
    %1534 = vmatprep.subr.bf16.mxu0 0
    %1535 = vmatpush1.bf16.msra.mxu0 0
    %1536 = vmatprep.subr.bf16.mxu0 0
    %1537 = vmatpush1.bf16.msra.mxu0 0
    %1538 = vmatprep.subr.bf16.mxu0 0
    %1539 = vmatpush1.bf16.msra.mxu0 0
    %1540 = vmatprep.mubr.bf16.mxu0 0
    %1541 = vmatmul.mubr.bf16.gmra.mrb[0].mxu0 %v415
    %v1542 = vpop.f32.mrb[0].mxu0
    %v1543 = vadd.f32 %v1500, %v1542
    %v1544 = vpop.f32.mrb[0].mxu0
    %v1545 = vadd.f32 %v1502, %v1544
    %v1546 = vpop.f32.mrb[0].mxu0
    %v1547 = vadd.f32 %v1504, %v1546
    %v1548 = vpop.f32.mrb[0].mxu0
    %v1549 = vadd.f32 %v1506, %v1548
    %1550 = vdwg.mxu0
    %1551 = vmatprep.subr.bf16.mxu0 %v1000
    %1552 = vmatpush1.bf16.msra.mxu0 %v999
    %1553 = vmatprep.subr.bf16.mxu0 %v1008
    %1554 = vmatpush1.bf16.msra.mxu0 %v1007
    %1555 = vmatprep.subr.bf16.mxu0 %v1016
    %1556 = vmatpush1.bf16.msra.mxu0 %v1015
    %1557 = vmatprep.subr.bf16.mxu0 %v1024
    %1558 = vmatpush1.bf16.msra.mxu0 %v1023
    %1559 = vmatprep.subr.bf16.mxu0 %v1032
    %1560 = vmatpush1.bf16.msra.mxu0 %v1031
    %1561 = vmatprep.subr.bf16.mxu0 %v1040
    %1562 = vmatpush1.bf16.msra.mxu0 %v1039
    %1563 = vmatprep.subr.bf16.mxu0 %v1048
    %1564 = vmatpush1.bf16.msra.mxu0 %v1047
    %1565 = vmatprep.subr.bf16.mxu0 %v1056
    %1566 = vmatpush1.bf16.msra.mxu0 %v1055
    %1567 = vmatprep.subr.bf16.mxu0 %v1064
    %1568 = vmatpush1.bf16.msra.mxu0 %v1063
    %1569 = vmatprep.subr.bf16.mxu0 %v1072
    %1570 = vmatpush1.bf16.msra.mxu0 %v1071
    %1571 = vmatprep.subr.bf16.mxu0 %v1080
    %1572 = vmatpush1.bf16.msra.mxu0 %v1079
    %1573 = vmatprep.subr.bf16.mxu0 %v1088
    %1574 = vmatpush1.bf16.msra.mxu0 %v1087
    %1575 = vmatprep.subr.bf16.mxu0 %v1096
    %1576 = vmatpush1.bf16.msra.mxu0 %v1095
    %1577 = vmatprep.subr.bf16.mxu0 %v1104
    %1578 = vmatpush1.bf16.msra.mxu0 %v1103
    %1579 = vmatprep.subr.bf16.mxu0 %v1112
    %1580 = vmatpush1.bf16.msra.mxu0 %v1111
    %1581 = vmatprep.subr.bf16.mxu0 %v1120
    %1582 = vmatpush1.bf16.msra.mxu0 %v1119
    %1583 = vmatprep.mubr.bf16.mxu0 %v414
    %1584 = vmatmul.mubr.bf16.gmra.mrb[0].mxu0 %v413
    %v1585 = vpop.f32.mrb[0].mxu0
    %v1586 = vadd.f32 %v382, %v1585
    %v1587 = vpop.f32.mrb[0].mxu0
    %v1588 = vadd.f32 %v386, %v1587
    %v1589 = vpop.f32.mrb[0].mxu0
    %v1590 = vadd.f32 %v382, %v1589
    %v1591 = vpop.f32.mrb[0].mxu0
    %v1592 = vadd.f32 %v386, %v1591
    %1593 = vdwg.mxu0
    %1594 = vmatprep.subr.bf16.mxu0 %v1128
    %1595 = vmatpush1.bf16.msra.mxu0 %v1127
    %1596 = vmatprep.subr.bf16.mxu0 %v1136
    %1597 = vmatpush1.bf16.msra.mxu0 %v1135
    %1598 = vmatprep.subr.bf16.mxu0 %v1144
    %1599 = vmatpush1.bf16.msra.mxu0 %v1143
    %1600 = vmatprep.subr.bf16.mxu0 %v1152
    %1601 = vmatpush1.bf16.msra.mxu0 %v1151
    %1602 = vmatprep.subr.bf16.mxu0 %v1160
    %1603 = vmatpush1.bf16.msra.mxu0 %v1159
    %1604 = vmatprep.subr.bf16.mxu0 %v1168
    %1605 = vmatpush1.bf16.msra.mxu0 %v1167
    %1606 = vmatprep.subr.bf16.mxu0 %v1176
    %1607 = vmatpush1.bf16.msra.mxu0 %v1175
    %1608 = vmatprep.subr.bf16.mxu0 %v1184
    %1609 = vmatpush1.bf16.msra.mxu0 %v1183
    %1610 = vmatprep.subr.bf16.mxu0 0
    %1611 = vmatpush1.bf16.msra.mxu0 0
    %1612 = vmatprep.subr.bf16.mxu0 0
    %1613 = vmatpush1.bf16.msra.mxu0 0
    %1614 = vmatprep.subr.bf16.mxu0 0
    %1615 = vmatpush1.bf16.msra.mxu0 0
    %1616 = vmatprep.subr.bf16.mxu0 0
    %1617 = vmatpush1.bf16.msra.mxu0 0
    %1618 = vmatprep.subr.bf16.mxu0 0
    %1619 = vmatpush1.bf16.msra.mxu0 0
    %1620 = vmatprep.subr.bf16.mxu0 0
    %1621 = vmatpush1.bf16.msra.mxu0 0
    %1622 = vmatprep.subr.bf16.mxu0 0
    %1623 = vmatpush1.bf16.msra.mxu0 0
    %1624 = vmatprep.subr.bf16.mxu0 0
    %1625 = vmatpush1.bf16.msra.mxu0 0
    %1626 = vmatprep.mubr.bf16.mxu0 0
    %1627 = vmatmul.mubr.bf16.gmra.mrb[0].mxu0 %v415
    %v1628 = vpop.f32.mrb[0].mxu0
    %v1629 = vadd.f32 %v1586, %v1628
    %v1630 = vpop.f32.mrb[0].mxu0
    %v1631 = vadd.f32 %v1588, %v1630
    %v1632 = vpop.f32.mrb[0].mxu0
    %v1633 = vadd.f32 %v1590, %v1632
    %v1634 = vpop.f32.mrb[0].mxu0
    %v1635 = vadd.f32 %v1592, %v1634
    %1636 = vdwg.mxu0
    %1637 = vmatprep.subr.bf16.mxu0 %v1002
    %1638 = vmatpush1.bf16.msra.mxu0 %v1001
    %1639 = vmatprep.subr.bf16.mxu0 %v1010
    %1640 = vmatpush1.bf16.msra.mxu0 %v1009
    %1641 = vmatprep.subr.bf16.mxu0 %v1018
    %1642 = vmatpush1.bf16.msra.mxu0 %v1017
    %1643 = vmatprep.subr.bf16.mxu0 %v1026
    %1644 = vmatpush1.bf16.msra.mxu0 %v1025
    %1645 = vmatprep.subr.bf16.mxu0 %v1034
    %1646 = vmatpush1.bf16.msra.mxu0 %v1033
    %1647 = vmatprep.subr.bf16.mxu0 %v1042
    %1648 = vmatpush1.bf16.msra.mxu0 %v1041
    %1649 = vmatprep.subr.bf16.mxu0 %v1050
    %1650 = vmatpush1.bf16.msra.mxu0 %v1049
    %1651 = vmatprep.subr.bf16.mxu0 %v1058
    %1652 = vmatpush1.bf16.msra.mxu0 %v1057
    %1653 = vmatprep.subr.bf16.mxu0 %v1066
    %1654 = vmatpush1.bf16.msra.mxu0 %v1065
    %1655 = vmatprep.subr.bf16.mxu0 %v1074
    %1656 = vmatpush1.bf16.msra.mxu0 %v1073
    %1657 = vmatprep.subr.bf16.mxu0 %v1082
    %1658 = vmatpush1.bf16.msra.mxu0 %v1081
    %1659 = vmatprep.subr.bf16.mxu0 %v1090
    %1660 = vmatpush1.bf16.msra.mxu0 %v1089
    %1661 = vmatprep.subr.bf16.mxu0 %v1098
    %1662 = vmatpush1.bf16.msra.mxu0 %v1097
    %1663 = vmatprep.subr.bf16.mxu0 %v1106
    %1664 = vmatpush1.bf16.msra.mxu0 %v1105
    %1665 = vmatprep.subr.bf16.mxu0 %v1114
    %1666 = vmatpush1.bf16.msra.mxu0 %v1113
    %1667 = vmatprep.subr.bf16.mxu0 %v1122
    %1668 = vmatpush1.bf16.msra.mxu0 %v1121
    %1669 = vmatprep.mubr.bf16.mxu0 %v414
    %1670 = vmatmul.mubr.bf16.gmra.mrb[0].mxu0 %v413
    %v1671 = vpop.f32.mrb[0].mxu0
    %v1672 = vadd.f32 %v390, %v1671
    %v1673 = vpop.f32.mrb[0].mxu0
    %v1674 = vadd.f32 %v394, %v1673
    %v1675 = vpop.f32.mrb[0].mxu0
    %v1676 = vadd.f32 %v390, %v1675
    %v1677 = vpop.f32.mrb[0].mxu0
    %v1678 = vadd.f32 %v394, %v1677
    %1679 = vdwg.mxu0
    %1680 = vmatprep.subr.bf16.mxu0 %v1130
    %1681 = vmatpush1.bf16.msra.mxu0 %v1129
    %1682 = vmatprep.subr.bf16.mxu0 %v1138
    %1683 = vmatpush1.bf16.msra.mxu0 %v1137
    %1684 = vmatprep.subr.bf16.mxu0 %v1146
    %1685 = vmatpush1.bf16.msra.mxu0 %v1145
    %1686 = vmatprep.subr.bf16.mxu0 %v1154
    %1687 = vmatpush1.bf16.msra.mxu0 %v1153
    %1688 = vmatprep.subr.bf16.mxu0 %v1162
    %1689 = vmatpush1.bf16.msra.mxu0 %v1161
    %1690 = vmatprep.subr.bf16.mxu0 %v1170
    %1691 = vmatpush1.bf16.msra.mxu0 %v1169
    %1692 = vmatprep.subr.bf16.mxu0 %v1178
    %1693 = vmatpush1.bf16.msra.mxu0 %v1177
    %1694 = vmatprep.subr.bf16.mxu0 %v1186
    %1695 = vmatpush1.bf16.msra.mxu0 %v1185
    %1696 = vmatprep.subr.bf16.mxu0 0
    %1697 = vmatpush1.bf16.msra.mxu0 0
    %1698 = vmatprep.subr.bf16.mxu0 0
    %1699 = vmatpush1.bf16.msra.mxu0 0
    %1700 = vmatprep.subr.bf16.mxu0 0
    %1701 = vmatpush1.bf16.msra.mxu0 0
    %1702 = vmatprep.subr.bf16.mxu0 0
    %1703 = vmatpush1.bf16.msra.mxu0 0
    %1704 = vmatprep.subr.bf16.mxu0 0
    %1705 = vmatpush1.bf16.msra.mxu0 0
    %1706 = vmatprep.subr.bf16.mxu0 0
    %1707 = vmatpush1.bf16.msra.mxu0 0
    %1708 = vmatprep.subr.bf16.mxu0 0
    %1709 = vmatpush1.bf16.msra.mxu0 0
    %1710 = vmatprep.subr.bf16.mxu0 0
    %1711 = vmatpush1.bf16.msra.mxu0 0
    %1712 = vmatprep.mubr.bf16.mxu0 0
    %1713 = vmatmul.mubr.bf16.gmra.mrb[0].mxu0 %v415
    %v1714 = vpop.f32.mrb[0].mxu0
    %v1715 = vadd.f32 %v1672, %v1714
    %v1716 = vpop.f32.mrb[0].mxu0
    %v1717 = vadd.f32 %v1674, %v1716
    %v1718 = vpop.f32.mrb[0].mxu0
    %v1719 = vadd.f32 %v1676, %v1718
    %v1720 = vpop.f32.mrb[0].mxu0
    %v1721 = vadd.f32 %v1678, %v1720
    %1722 = vdwg.mxu0
    %1723 = vst [vmem:[#allocation2] sm:$0xff] %v1457
    %1724 = vst [vmem:[#allocation2 + $0x8] sm:$0xff] %v1459
    %1725 = vst [vmem:[#allocation2 + $0x10] sm:$0xff] %v1543
    %1726 = vst [vmem:[#allocation2 + $0x18] sm:$0xff] %v1545
    %1727 = vst [vmem:[#allocation2 + $0x20] sm:$0xff] %v1629
    %1728 = vst [vmem:[#allocation2 + $0x28] sm:$0xff] %v1631
    %1729 = vst [vmem:[#allocation2 + $0x30] sm:$0xff] %v1715
    %1730 = vst [vmem:[#allocation2 + $0x38] sm:$0xff] %v1717
    %1731 = vst [vmem:[#allocation2 + $0x40] sm:$0xff] %v1461
    %1732 = vst [vmem:[#allocation2 + $0x48] sm:$0xff] %v1463
    %1733 = vst [vmem:[#allocation2 + $0x50] sm:$0xff] %v1547
    %1734 = vst [vmem:[#allocation2 + $0x58] sm:$0xff] %v1549
    %1735 = vst [vmem:[#allocation2 + $0x60] sm:$0xff] %v1633
    %1736 = vst [vmem:[#allocation2 + $0x68] sm:$0xff] %v1635
    %1737 = vst [vmem:[#allocation2 + $0x70] sm:$0xff] %v1719
    %1738 = vst [vmem:[#allocation2 + $0x78] sm:$0xff] %v1721
    %v1739 = vld [vmem:[#allocation2] sm:$0x3]
    %v1740 = vld [vmem:[#allocation2 + $0x8] sm:$0x3]
    %v1741 = vld [vmem:[#allocation2 + $0x10] sm:$0x3]
    %v1742 = vld [vmem:[#allocation2 + $0x18] sm:$0x3]
    %v1743 = vld [vmem:[#allocation2 + $0x60] sm:$0xc0]
    %v1744 = vld [vmem:[#allocation2 + $0x68] sm:$0xc0]
    %v1745 = vld [vmem:[#allocation2 + $0x70] sm:$0xc0]
    %v1746 = vld [vmem:[#allocation2 + $0x78] sm:$0xc0]
    %v1751 = vrot.slane %v1743, 4
    %v1752 = vrot.slane %v1744, 4
    %v1753 = vrot.slane %v1745, 4
    %v1754 = vrot.slane %v1746, 4
    %vm1759 = vcmask 1041408
    %v1760 = vsel %vm1759, %v1739, %v1751
    %v1761 = vsel %vm1759, %v1740, %v1752
    %v1762 = vsel %vm1759, %v1741, %v1753
    %v1763 = vsel %vm1759, %v1742, %v1754
    %v1764 = vmul.f32 %v163, 0.0
    %v1765 = vmul.f32 %v164, 0.0
    %v1766 = vpack.c.bf16 %v1764, %v1764
    %v1767 = vpack.c.bf16 %v1765, %v1765
    %v1768 = vld [vmem:[%s3] sm:$0xff]
    %v1769 = vld [vmem:[%s3 + $0x8] sm:$0xff]
    %v1770 = vld [vmem:[%s3 + $0x10] sm:$0xff]
    %v1771 = vld [vmem:[%s3 + $0x18] sm:$0xff]
    %v1772 = vld [vmem:[%s3 + $0x20] sm:$0xff]
    %v1773 = vld [vmem:[%s3 + $0x28] sm:$0xff]
    %v1774 = vld [vmem:[%s3 + $0x30] sm:$0xff]
    %v1775 = vld [vmem:[%s3 + $0x38] sm:$0xff]
    %v1776 = vld [vmem:[%s3 + $0x40] sm:$0xff]
    %v1777 = vld [vmem:[%s3 + $0x48] sm:$0xff]
    %v1778 = vld [vmem:[%s3 + $0x50] sm:$0xff]
    %v1779 = vld [vmem:[%s3 + $0x58] sm:$0xff]
    %v1780 = vld [vmem:[%s3 + $0x60] sm:$0xff]
    %v1781 = vld [vmem:[%s3 + $0x68] sm:$0xff]
    %v1782 = vld [vmem:[%s3 + $0x70] sm:$0xff]
    %v1783 = vld [vmem:[%s3 + $0x78] sm:$0xff]
    %v1784 = vld [vmem:[%s3 + $0x80] sm:$0xff]
    %v1785 = vld [vmem:[%s3 + $0x88] sm:$0xff]
    %v1786 = vld [vmem:[%s3 + $0x90] sm:$0xff]
    %v1787 = vld [vmem:[%s3 + $0x98] sm:$0xff]
    %v1788 = vld [vmem:[%s3 + $0xa0] sm:$0xff]
    %v1789 = vld [vmem:[%s3 + $0xa8] sm:$0xff]
    %v1790 = vld [vmem:[%s3 + $0xb0] sm:$0xff]
    %v1791 = vld [vmem:[%s3 + $0xb8] sm:$0xff]
    %v1792 = vld [vmem:[%s3 + $0xc0] sm:$0xff]
    %v1793 = vld [vmem:[%s3 + $0xc8] sm:$0xff]
    %v1794 = vld [vmem:[%s3 + $0xd0] sm:$0xff]
    %v1795 = vld [vmem:[%s3 + $0xd8] sm:$0xff]
    %v1796 = vld [vmem:[%s3 + $0xe0] sm:$0xff]
    %v1797 = vld [vmem:[%s3 + $0xe8] sm:$0xff]
    %v1798 = vld [vmem:[%s3 + $0xf0] sm:$0xff]
    %v1799 = vld [vmem:[%s3 + $0xf8] sm:$0xff]
    %v1800 = vld [vmem:[%s3 + $0x100] sm:$0xff]
    %v1801 = vld [vmem:[%s3 + $0x108] sm:$0xff]
    %v1802 = vld [vmem:[%s3 + $0x110] sm:$0xff]
    %v1803 = vld [vmem:[%s3 + $0x118] sm:$0xff]
    %v1804 = vld [vmem:[%s3 + $0x120] sm:$0xff]
    %v1805 = vld [vmem:[%s3 + $0x128] sm:$0xff]
    %v1806 = vld [vmem:[%s3 + $0x130] sm:$0xff]
    %v1807 = vld [vmem:[%s3 + $0x138] sm:$0xff]
    %v1808 = vld [vmem:[%s3 + $0x140] sm:$0xff]
    %v1809 = vld [vmem:[%s3 + $0x148] sm:$0xff]
    %v1810 = vld [vmem:[%s3 + $0x150] sm:$0xff]
    %v1811 = vld [vmem:[%s3 + $0x158] sm:$0xff]
    %v1812 = vld [vmem:[%s3 + $0x160] sm:$0xff]
    %v1813 = vld [vmem:[%s3 + $0x168] sm:$0xff]
    %v1814 = vld [vmem:[%s3 + $0x170] sm:$0xff]
    %v1815 = vld [vmem:[%s3 + $0x178] sm:$0xff]
    %v1816 = vld [vmem:[%s3 + $0x180] sm:$0xff]
    %v1817 = vld [vmem:[%s3 + $0x188] sm:$0xff]
    %v1818 = vld [vmem:[%s3 + $0x190] sm:$0xff]
    %v1819 = vld [vmem:[%s3 + $0x198] sm:$0xff]
    %v1820 = vld [vmem:[%s3 + $0x1a0] sm:$0xff]
    %v1821 = vld [vmem:[%s3 + $0x1a8] sm:$0xff]
    %v1822 = vld [vmem:[%s3 + $0x1b0] sm:$0xff]
    %v1823 = vld [vmem:[%s3 + $0x1b8] sm:$0xff]
    %v1824 = vld [vmem:[%s3 + $0x1c0] sm:$0xff]
    %v1825 = vld [vmem:[%s3 + $0x1c8] sm:$0xff]
    %v1826 = vld [vmem:[%s3 + $0x1d0] sm:$0xff]
    %v1827 = vld [vmem:[%s3 + $0x1d8] sm:$0xff]
    %v1828 = vld [vmem:[%s3 + $0x1e0] sm:$0xff]
    %v1829 = vld [vmem:[%s3 + $0x1e8] sm:$0xff]
    %v1830 = vld [vmem:[%s3 + $0x1f0] sm:$0xff]
    %v1831 = vld [vmem:[%s3 + $0x1f8] sm:$0xff]
    %v1896 = vunpack.c.l.b16 %v1768
    %v1897 = vunpack.c.h.b16 %v1768
    %v1898 = vunpack.c.l.b16 %v1769
    %v1899 = vunpack.c.h.b16 %v1769
    %v1900 = vunpack.c.l.b16 %v1770
    %v1901 = vunpack.c.h.b16 %v1770
    %v1902 = vunpack.c.l.b16 %v1771
    %v1903 = vunpack.c.h.b16 %v1771
    %v1904 = vunpack.c.l.b16 %v1772
    %v1905 = vunpack.c.h.b16 %v1772
    %v1906 = vunpack.c.l.b16 %v1773
    %v1907 = vunpack.c.h.b16 %v1773
    %v1908 = vunpack.c.l.b16 %v1774
    %v1909 = vunpack.c.h.b16 %v1774
    %v1910 = vunpack.c.l.b16 %v1775
    %v1911 = vunpack.c.h.b16 %v1775
    %v1912 = vunpack.c.l.b16 %v1776
    %v1913 = vunpack.c.h.b16 %v1776
    %v1914 = vunpack.c.l.b16 %v1777
    %v1915 = vunpack.c.h.b16 %v1777
    %v1916 = vunpack.c.l.b16 %v1778
    %v1917 = vunpack.c.h.b16 %v1778
    %v1918 = vunpack.c.l.b16 %v1779
    %v1919 = vunpack.c.h.b16 %v1779
    %v1920 = vunpack.c.l.b16 %v1780
    %v1921 = vunpack.c.h.b16 %v1780
    %v1922 = vunpack.c.l.b16 %v1781
    %v1923 = vunpack.c.h.b16 %v1781
    %v1924 = vunpack.c.l.b16 %v1782
    %v1925 = vunpack.c.h.b16 %v1782
    %v1926 = vunpack.c.l.b16 %v1783
    %v1927 = vunpack.c.h.b16 %v1783
    %v1928 = vunpack.c.l.b16 %v1784
    %v1929 = vunpack.c.h.b16 %v1784
    %v1930 = vunpack.c.l.b16 %v1785
    %v1931 = vunpack.c.h.b16 %v1785
    %v1932 = vunpack.c.l.b16 %v1786
    %v1933 = vunpack.c.h.b16 %v1786
    %v1934 = vunpack.c.l.b16 %v1787
    %v1935 = vunpack.c.h.b16 %v1787
    %v1936 = vunpack.c.l.b16 %v1788
    %v1937 = vunpack.c.h.b16 %v1788
    %v1938 = vunpack.c.l.b16 %v1789
    %v1939 = vunpack.c.h.b16 %v1789
    %v1940 = vunpack.c.l.b16 %v1790
    %v1941 = vunpack.c.h.b16 %v1790
    %v1942 = vunpack.c.l.b16 %v1791
    %v1943 = vunpack.c.h.b16 %v1791
    %v1944 = vunpack.c.l.b16 %v1792
    %v1945 = vunpack.c.h.b16 %v1792
    %v1946 = vunpack.c.l.b16 %v1793
    %v1947 = vunpack.c.h.b16 %v1793
    %v1948 = vunpack.c.l.b16 %v1794
    %v1949 = vunpack.c.h.b16 %v1794
    %v1950 = vunpack.c.l.b16 %v1795
    %v1951 = vunpack.c.h.b16 %v1795
    %v1952 = vunpack.c.l.b16 %v1796
    %v1953 = vunpack.c.h.b16 %v1796
    %v1954 = vunpack.c.l.b16 %v1797
    %v1955 = vunpack.c.h.b16 %v1797
    %v1956 = vunpack.c.l.b16 %v1798
    %v1957 = vunpack.c.h.b16 %v1798
    %v1958 = vunpack.c.l.b16 %v1799
    %v1959 = vunpack.c.h.b16 %v1799
    %v1960 = vunpack.c.l.b16 %v1800
    %v1961 = vunpack.c.h.b16 %v1800
    %v1962 = vunpack.c.l.b16 %v1801
    %v1963 = vunpack.c.h.b16 %v1801
    %v1964 = vunpack.c.l.b16 %v1802
    %v1965 = vunpack.c.h.b16 %v1802
    %v1966 = vunpack.c.l.b16 %v1803
    %v1967 = vunpack.c.h.b16 %v1803
    %v1968 = vunpack.c.l.b16 %v1804
    %v1969 = vunpack.c.h.b16 %v1804
    %v1970 = vunpack.c.l.b16 %v1805
    %v1971 = vunpack.c.h.b16 %v1805
    %v1972 = vunpack.c.l.b16 %v1806
    %v1973 = vunpack.c.h.b16 %v1806
    %v1974 = vunpack.c.l.b16 %v1807
    %v1975 = vunpack.c.h.b16 %v1807
    %v1976 = vunpack.c.l.b16 %v1808
    %v1977 = vunpack.c.h.b16 %v1808
    %v1978 = vunpack.c.l.b16 %v1809
    %v1979 = vunpack.c.h.b16 %v1809
    %v1980 = vunpack.c.l.b16 %v1810
    %v1981 = vunpack.c.h.b16 %v1810
    %v1982 = vunpack.c.l.b16 %v1811
    %v1983 = vunpack.c.h.b16 %v1811
    %v1984 = vunpack.c.l.b16 %v1812
    %v1985 = vunpack.c.h.b16 %v1812
    %v1986 = vunpack.c.l.b16 %v1813
    %v1987 = vunpack.c.h.b16 %v1813
    %v1988 = vunpack.c.l.b16 %v1814
    %v1989 = vunpack.c.h.b16 %v1814
    %v1990 = vunpack.c.l.b16 %v1815
    %v1991 = vunpack.c.h.b16 %v1815
    %v1992 = vunpack.c.l.b16 %v1816
    %v1993 = vunpack.c.h.b16 %v1816
    %v1994 = vunpack.c.l.b16 %v1817
    %v1995 = vunpack.c.h.b16 %v1817
    %v1996 = vunpack.c.l.b16 %v1818
    %v1997 = vunpack.c.h.b16 %v1818
    %v1998 = vunpack.c.l.b16 %v1819
    %v1999 = vunpack.c.h.b16 %v1819
    %v2000 = vunpack.c.l.b16 %v1820
    %v2001 = vunpack.c.h.b16 %v1820
    %v2002 = vunpack.c.l.b16 %v1821
    %v2003 = vunpack.c.h.b16 %v1821
    %v2004 = vunpack.c.l.b16 %v1822
    %v2005 = vunpack.c.h.b16 %v1822
    %v2006 = vunpack.c.l.b16 %v1823
    %v2007 = vunpack.c.h.b16 %v1823
    %v2008 = vunpack.c.l.b16 %v1824
    %v2009 = vunpack.c.h.b16 %v1824
    %v2010 = vunpack.c.l.b16 %v1825
    %v2011 = vunpack.c.h.b16 %v1825
    %v2012 = vunpack.c.l.b16 %v1826
    %v2013 = vunpack.c.h.b16 %v1826
    %v2014 = vunpack.c.l.b16 %v1827
    %v2015 = vunpack.c.h.b16 %v1827
    %v2016 = vunpack.c.l.b16 %v1828
    %v2017 = vunpack.c.h.b16 %v1828
    %v2018 = vunpack.c.l.b16 %v1829
    %v2019 = vunpack.c.h.b16 %v1829
    %v2020 = vunpack.c.l.b16 %v1830
    %v2021 = vunpack.c.h.b16 %v1830
    %v2022 = vunpack.c.l.b16 %v1831
    %v2023 = vunpack.c.h.b16 %v1831
    %v2024 = vpack.c.b16 %v1900, %v1896
    %v2025 = vpack.c.b16 %v1901, %v1897
    %v2026 = vpack.c.b16 %v1902, %v1898
    %v2027 = vpack.c.b16 %v1903, %v1899
    %v2028 = vpack.c.b16 %v1908, %v1904
    %v2029 = vpack.c.b16 %v1909, %v1905
    %v2030 = vpack.c.b16 %v1910, %v1906
    %v2031 = vpack.c.b16 %v1911, %v1907
    %v2032 = vpack.c.b16 %v1916, %v1912
    %v2033 = vpack.c.b16 %v1917, %v1913
    %v2034 = vpack.c.b16 %v1918, %v1914
    %v2035 = vpack.c.b16 %v1919, %v1915
    %v2036 = vpack.c.b16 %v1924, %v1920
    %v2037 = vpack.c.b16 %v1925, %v1921
    %v2038 = vpack.c.b16 %v1926, %v1922
    %v2039 = vpack.c.b16 %v1927, %v1923
    %v2040 = vpack.c.b16 %v1932, %v1928
    %v2041 = vpack.c.b16 %v1933, %v1929
    %v2042 = vpack.c.b16 %v1934, %v1930
    %v2043 = vpack.c.b16 %v1935, %v1931
    %v2044 = vpack.c.b16 %v1940, %v1936
    %v2045 = vpack.c.b16 %v1941, %v1937
    %v2046 = vpack.c.b16 %v1942, %v1938
    %v2047 = vpack.c.b16 %v1943, %v1939
    %v2048 = vpack.c.b16 %v1948, %v1944
    %v2049 = vpack.c.b16 %v1949, %v1945
    %v2050 = vpack.c.b16 %v1950, %v1946
    %v2051 = vpack.c.b16 %v1951, %v1947
    %v2052 = vpack.c.b16 %v1956, %v1952
    %v2053 = vpack.c.b16 %v1957, %v1953
    %v2054 = vpack.c.b16 %v1958, %v1954
    %v2055 = vpack.c.b16 %v1959, %v1955
    %v2056 = vpack.c.b16 %v1964, %v1960
    %v2057 = vpack.c.b16 %v1965, %v1961
    %v2058 = vpack.c.b16 %v1966, %v1962
    %v2059 = vpack.c.b16 %v1967, %v1963
    %v2060 = vpack.c.b16 %v1972, %v1968
    %v2061 = vpack.c.b16 %v1973, %v1969
    %v2062 = vpack.c.b16 %v1974, %v1970
    %v2063 = vpack.c.b16 %v1975, %v1971
    %v2064 = vpack.c.b16 %v1980, %v1976
    %v2065 = vpack.c.b16 %v1981, %v1977
    %v2066 = vpack.c.b16 %v1982, %v1978
    %v2067 = vpack.c.b16 %v1983, %v1979
    %v2068 = vpack.c.b16 %v1988, %v1984
    %v2069 = vpack.c.b16 %v1989, %v1985
    %v2070 = vpack.c.b16 %v1990, %v1986
    %v2071 = vpack.c.b16 %v1991, %v1987
    %v2072 = vpack.c.b16 %v1996, %v1992
    %v2073 = vpack.c.b16 %v1997, %v1993
    %v2074 = vpack.c.b16 %v1998, %v1994
    %v2075 = vpack.c.b16 %v1999, %v1995
    %v2076 = vpack.c.b16 %v2004, %v2000
    %v2077 = vpack.c.b16 %v2005, %v2001
    %v2078 = vpack.c.b16 %v2006, %v2002
    %v2079 = vpack.c.b16 %v2007, %v2003
    %v2080 = vpack.c.b16 %v2012, %v2008
    %v2081 = vpack.c.b16 %v2013, %v2009
    %v2082 = vpack.c.b16 %v2014, %v2010
    %v2083 = vpack.c.b16 %v2015, %v2011
    %v2084 = vpack.c.b16 %v2020, %v2016
    %v2085 = vpack.c.b16 %v2021, %v2017
    %v2086 = vpack.c.b16 %v2022, %v2018
    %v2087 = vpack.c.b16 %v2023, %v2019
    %2152 = vmatprep.subr.bf16.mxu0 %v2025
    %2153 = vmatpush1.bf16.msra.mxu0 %v2024
    %2154 = vmatprep.subr.bf16.mxu0 %v2029
    %2155 = vmatpush1.bf16.msra.mxu0 %v2028
    %2156 = vmatprep.subr.bf16.mxu0 %v2033
    %2157 = vmatpush1.bf16.msra.mxu0 %v2032
    %2158 = vmatprep.subr.bf16.mxu0 %v2037
    %2159 = vmatpush1.bf16.msra.mxu0 %v2036
    %2160 = vmatprep.subr.bf16.mxu0 %v2041
    %2161 = vmatpush1.bf16.msra.mxu0 %v2040
    %2162 = vmatprep.subr.bf16.mxu0 %v2045
    %2163 = vmatpush1.bf16.msra.mxu0 %v2044
    %2164 = vmatprep.subr.bf16.mxu0 %v2049
    %2165 = vmatpush1.bf16.msra.mxu0 %v2048
    %2166 = vmatprep.subr.bf16.mxu0 %v2053
    %2167 = vmatpush1.bf16.msra.mxu0 %v2052
    %2168 = vmatprep.subr.bf16.mxu0 %v2057
    %2169 = vmatpush1.bf16.msra.mxu0 %v2056
    %2170 = vmatprep.subr.bf16.mxu0 %v2061
    %2171 = vmatpush1.bf16.msra.mxu0 %v2060
    %2172 = vmatprep.subr.bf16.mxu0 %v2065
    %2173 = vmatpush1.bf16.msra.mxu0 %v2064
    %2174 = vmatprep.subr.bf16.mxu0 %v2069
    %2175 = vmatpush1.bf16.msra.mxu0 %v2068
    %2176 = vmatprep.subr.bf16.mxu0 %v2073
    %2177 = vmatpush1.bf16.msra.mxu0 %v2072
    %2178 = vmatprep.subr.bf16.mxu0 %v2077
    %2179 = vmatpush1.bf16.msra.mxu0 %v2076
    %2180 = vmatprep.subr.bf16.mxu0 %v2081
    %2181 = vmatpush1.bf16.msra.mxu0 %v2080
    %2182 = vmatprep.subr.bf16.mxu0 %v2085
    %2183 = vmatpush1.bf16.msra.mxu0 %v2084
    %2184 = vmatprep.mubr.bf16.mxu0 %v1767
    %2185 = vmatmul.mubr.bf16.gmra.mrb[0].mxu0 %v1766
    %v2186 = vpop.f32.mrb[0].mxu0
    %v2187 = vadd.f32 0.0, %v2186
    %v2188 = vpop.f32.mrb[0].mxu0
    %v2189 = vadd.f32 0.0, %v2188
    %v2190 = vpop.f32.mrb[0].mxu0
    %v2191 = vpop.f32.mrb[0].mxu0
    %2192 = vdwg.mxu0
    %2193 = vmatprep.subr.bf16.mxu0 %v2027
    %2194 = vmatpush1.bf16.msra.mxu0 %v2026
    %2195 = vmatprep.subr.bf16.mxu0 %v2031
    %2196 = vmatpush1.bf16.msra.mxu0 %v2030
    %2197 = vmatprep.subr.bf16.mxu0 %v2035
    %2198 = vmatpush1.bf16.msra.mxu0 %v2034
    %2199 = vmatprep.subr.bf16.mxu0 %v2039
    %2200 = vmatpush1.bf16.msra.mxu0 %v2038
    %2201 = vmatprep.subr.bf16.mxu0 %v2043
    %2202 = vmatpush1.bf16.msra.mxu0 %v2042
    %2203 = vmatprep.subr.bf16.mxu0 %v2047
    %2204 = vmatpush1.bf16.msra.mxu0 %v2046
    %2205 = vmatprep.subr.bf16.mxu0 %v2051
    %2206 = vmatpush1.bf16.msra.mxu0 %v2050
    %2207 = vmatprep.subr.bf16.mxu0 %v2055
    %2208 = vmatpush1.bf16.msra.mxu0 %v2054
    %2209 = vmatprep.subr.bf16.mxu0 %v2059
    %2210 = vmatpush1.bf16.msra.mxu0 %v2058
    %2211 = vmatprep.subr.bf16.mxu0 %v2063
    %2212 = vmatpush1.bf16.msra.mxu0 %v2062
    %2213 = vmatprep.subr.bf16.mxu0 %v2067
    %2214 = vmatpush1.bf16.msra.mxu0 %v2066
    %2215 = vmatprep.subr.bf16.mxu0 %v2071
    %2216 = vmatpush1.bf16.msra.mxu0 %v2070
    %2217 = vmatprep.subr.bf16.mxu0 %v2075
    %2218 = vmatpush1.bf16.msra.mxu0 %v2074
    %2219 = vmatprep.subr.bf16.mxu0 %v2079
    %2220 = vmatpush1.bf16.msra.mxu0 %v2078
    %2221 = vmatprep.subr.bf16.mxu0 %v2083
    %2222 = vmatpush1.bf16.msra.mxu0 %v2082
    %2223 = vmatprep.subr.bf16.mxu0 %v2087
    %2224 = vmatpush1.bf16.msra.mxu0 %v2086
    %2225 = vmatprep.mubr.bf16.mxu0 %v1767
    %2226 = vmatmul.mubr.bf16.gmra.mrb[0].mxu0 %v1766
    %v2227 = vpop.f32.mrb[0].mxu0
    %v2228 = vadd.f32 0.0, %v2227
    %v2229 = vpop.f32.mrb[0].mxu0
    %v2230 = vadd.f32 0.0, %v2229
    %v2231 = vpop.f32.mrb[0].mxu0
    %v2232 = vpop.f32.mrb[0].mxu0
    %2233 = vdwg.mxu0
    %v2234 = vadd.f32 %v1760, %v2187
    %v2235 = vadd.f32 %v1761, %v2189
    %v2236 = vadd.f32 %v1762, %v2228
    %v2237 = vadd.f32 %v1763, %v2230
    %v2238 = vxor.u32 %v2234, 2147483648
    %v2239 = vxor.u32 %v2235, 2147483648
    %v2240 = vxor.u32 %v2236, 2147483648
    %v2241 = vmul.f32 %v2238, 1.442695
    %v2242 = vpow.pop %v2241
    %v2243 = vmul.f32 %v2239, 1.442695
    %v2244 = vpow.pop %v2243
    %v2245 = vmul.f32 %v2240, 1.442695
    %v2246 = vpow.pop %v2245
    %v2247 = vadd.f32 %v2242, 1.0
    %v2248 = vadd.f32 %v2244, 1.0
    %v2249 = vadd.f32 %v2246, 1.0
    %v2250 = vrcp.pop %v2247
    %v2251 = vmul.f32 1.0, %v2250
    %v2252 = vrcp.pop %v2248
    %v2253 = vmul.f32 1.0, %v2252
    %v2254 = vrcp.pop %v2249
    %v2255 = vmul.f32 1.0, %v2254
    %v2256 = vtanh.pop %v2237
    %v2257 = vmul.f32 %v2253, 0.0
    %v2258 = vmul.f32 %v2251, %v2256
    %v2259 = vadd.f32 %v2257, %v2258
    %v2260 = vtanh.pop %v2259
    %v2261 = vmul.f32 %v2255, %v2260
    %2262 = vst [vmem:[#allocation3] sm:$0x3] %v2261
    %v2264 = vrot.slane %v2261, 4
    %2266 = vst [vmem:[#allocation3 + $0x18] sm:$0xc0] %v2264
    %v2267 = vld [vmem:[#allocation2] sm:$0xc]
    %v2268 = vld [vmem:[#allocation2 + $0x8] sm:$0xc]
    %v2269 = vld [vmem:[#allocation2 + $0x10] sm:$0xc]
    %v2270 = vld [vmem:[#allocation2 + $0x18] sm:$0xc]
    %v2271 = vld [vmem:[#allocation2 + $0x60] sm:$0x30]
    %v2272 = vld [vmem:[#allocation2 + $0x68] sm:$0x30]
    %v2273 = vld [vmem:[#allocation2 + $0x70] sm:$0x30]
    %v2274 = vld [vmem:[#allocation2 + $0x78] sm:$0x30]
    %v2279 = vrot.slane %v2267, 2
    %v2280 = vrot.slane %v2268, 2
    %v2281 = vrot.slane %v2269, 2
    %v2282 = vrot.slane %v2270, 2
    %v2291 = vrot.slane %v2271, 2
    %v2292 = vrot.slane %v2272, 2
    %v2293 = vrot.slane %v2273, 2
    %v2294 = vrot.slane %v2274, 2
    %v2299 = vsel %vm1759, %v2279, %v2291
    %v2300 = vsel %vm1759, %v2280, %v2292
    %v2301 = vsel %vm1759, %v2281, %v2293
    %v2302 = vsel %vm1759, %v2282, %v2294
    %v2303 = vmul.f32 %v2261, %v163
    %v2304 = vmul.f32 %v2261, %v164
    %v2305 = vpack.c.bf16 %v2303, %v2303
    %v2306 = vpack.c.bf16 %v2304, %v2304
    %v2307 = vld [vmem:[%s3] sm:$0xff]
    %v2308 = vld [vmem:[%s3 + $0x8] sm:$0xff]
    %v2309 = vld [vmem:[%s3 + $0x10] sm:$0xff]
    %v2310 = vld [vmem:[%s3 + $0x18] sm:$0xff]
    %v2311 = vld [vmem:[%s3 + $0x20] sm:$0xff]
    %v2312 = vld [vmem:[%s3 + $0x28] sm:$0xff]
    %v2313 = vld [vmem:[%s3 + $0x30] sm:$0xff]
    %v2314 = vld [vmem:[%s3 + $0x38] sm:$0xff]
    %v2315 = vld [vmem:[%s3 + $0x40] sm:$0xff]
    %v2316 = vld [vmem:[%s3 + $0x48] sm:$0xff]
    %v2317 = vld [vmem:[%s3 + $0x50] sm:$0xff]
    %v2318 = vld [vmem:[%s3 + $0x58] sm:$0xff]
    %v2319 = vld [vmem:[%s3 + $0x60] sm:$0xff]
    %v2320 = vld [vmem:[%s3 + $0x68] sm:$0xff]
    %v2321 = vld [vmem:[%s3 + $0x70] sm:$0xff]
    %v2322 = vld [vmem:[%s3 + $0x78] sm:$0xff]
    %v2323 = vld [vmem:[%s3 + $0x80] sm:$0xff]
    %v2324 = vld [vmem:[%s3 + $0x88] sm:$0xff]
    %v2325 = vld [vmem:[%s3 + $0x90] sm:$0xff]
    %v2326 = vld [vmem:[%s3 + $0x98] sm:$0xff]
    %v2327 = vld [vmem:[%s3 + $0xa0] sm:$0xff]
    %v2328 = vld [vmem:[%s3 + $0xa8] sm:$0xff]
    %v2329 = vld [vmem:[%s3 + $0xb0] sm:$0xff]
    %v2330 = vld [vmem:[%s3 + $0xb8] sm:$0xff]
    %v2331 = vld [vmem:[%s3 + $0xc0] sm:$0xff]
    %v2332 = vld [vmem:[%s3 + $0xc8] sm:$0xff]
    %v2333 = vld [vmem:[%s3 + $0xd0] sm:$0xff]
    %v2334 = vld [vmem:[%s3 + $0xd8] sm:$0xff]
    %v2335 = vld [vmem:[%s3 + $0xe0] sm:$0xff]
    %v2336 = vld [vmem:[%s3 + $0xe8] sm:$0xff]
    %v2337 = vld [vmem:[%s3 + $0xf0] sm:$0xff]
    %v2338 = vld [vmem:[%s3 + $0xf8] sm:$0xff]
    %v2339 = vld [vmem:[%s3 + $0x100] sm:$0xff]
    %v2340 = vld [vmem:[%s3 + $0x108] sm:$0xff]
    %v2341 = vld [vmem:[%s3 + $0x110] sm:$0xff]
    %v2342 = vld [vmem:[%s3 + $0x118] sm:$0xff]
    %v2343 = vld [vmem:[%s3 + $0x120] sm:$0xff]
    %v2344 = vld [vmem:[%s3 + $0x128] sm:$0xff]
    %v2345 = vld [vmem:[%s3 + $0x130] sm:$0xff]
    %v2346 = vld [vmem:[%s3 + $0x138] sm:$0xff]
    %v2347 = vld [vmem:[%s3 + $0x140] sm:$0xff]
    %v2348 = vld [vmem:[%s3 + $0x148] sm:$0xff]
    %v2349 = vld [vmem:[%s3 + $0x150] sm:$0xff]
    %v2350 = vld [vmem:[%s3 + $0x158] sm:$0xff]
    %v2351 = vld [vmem:[%s3 + $0x160] sm:$0xff]
    %v2352 = vld [vmem:[%s3 + $0x168] sm:$0xff]
    %v2353 = vld [vmem:[%s3 + $0x170] sm:$0xff]
    %v2354 = vld [vmem:[%s3 + $0x178] sm:$0xff]
    %v2355 = vld [vmem:[%s3 + $0x180] sm:$0xff]
    %v2356 = vld [vmem:[%s3 + $0x188] sm:$0xff]
    %v2357 = vld [vmem:[%s3 + $0x190] sm:$0xff]
    %v2358 = vld [vmem:[%s3 + $0x198] sm:$0xff]
    %v2359 = vld [vmem:[%s3 + $0x1a0] sm:$0xff]
    %v2360 = vld [vmem:[%s3 + $0x1a8] sm:$0xff]
    %v2361 = vld [vmem:[%s3 + $0x1b0] sm:$0xff]
    %v2362 = vld [vmem:[%s3 + $0x1b8] sm:$0xff]
    %v2363 = vld [vmem:[%s3 + $0x1c0] sm:$0xff]
    %v2364 = vld [vmem:[%s3 + $0x1c8] sm:$0xff]
    %v2365 = vld [vmem:[%s3 + $0x1d0] sm:$0xff]
    %v2366 = vld [vmem:[%s3 + $0x1d8] sm:$0xff]
    %v2367 = vld [vmem:[%s3 + $0x1e0] sm:$0xff]
    %v2368 = vld [vmem:[%s3 + $0x1e8] sm:$0xff]
    %v2369 = vld [vmem:[%s3 + $0x1f0] sm:$0xff]
    %v2370 = vld [vmem:[%s3 + $0x1f8] sm:$0xff]
    %v2435 = vunpack.c.l.b16 %v2307
    %v2436 = vunpack.c.h.b16 %v2307
    %v2437 = vunpack.c.l.b16 %v2308
    %v2438 = vunpack.c.h.b16 %v2308
    %v2439 = vunpack.c.l.b16 %v2309
    %v2440 = vunpack.c.h.b16 %v2309
    %v2441 = vunpack.c.l.b16 %v2310
    %v2442 = vunpack.c.h.b16 %v2310
    %v2443 = vunpack.c.l.b16 %v2311
    %v2444 = vunpack.c.h.b16 %v2311
    %v2445 = vunpack.c.l.b16 %v2312
    %v2446 = vunpack.c.h.b16 %v2312
    %v2447 = vunpack.c.l.b16 %v2313
    %v2448 = vunpack.c.h.b16 %v2313
    %v2449 = vunpack.c.l.b16 %v2314
    %v2450 = vunpack.c.h.b16 %v2314
    %v2451 = vunpack.c.l.b16 %v2315
    %v2452 = vunpack.c.h.b16 %v2315
    %v2453 = vunpack.c.l.b16 %v2316
    %v2454 = vunpack.c.h.b16 %v2316
    %v2455 = vunpack.c.l.b16 %v2317
    %v2456 = vunpack.c.h.b16 %v2317
    %v2457 = vunpack.c.l.b16 %v2318
    %v2458 = vunpack.c.h.b16 %v2318
    %v2459 = vunpack.c.l.b16 %v2319
    %v2460 = vunpack.c.h.b16 %v2319
    %v2461 = vunpack.c.l.b16 %v2320
    %v2462 = vunpack.c.h.b16 %v2320
    %v2463 = vunpack.c.l.b16 %v2321
    %v2464 = vunpack.c.h.b16 %v2321
    %v2465 = vunpack.c.l.b16 %v2322
    %v2466 = vunpack.c.h.b16 %v2322
    %v2467 = vunpack.c.l.b16 %v2323
    %v2468 = vunpack.c.h.b16 %v2323
    %v2469 = vunpack.c.l.b16 %v2324
    %v2470 = vunpack.c.h.b16 %v2324
    %v2471 = vunpack.c.l.b16 %v2325
    %v2472 = vunpack.c.h.b16 %v2325
    %v2473 = vunpack.c.l.b16 %v2326
    %v2474 = vunpack.c.h.b16 %v2326
    %v2475 = vunpack.c.l.b16 %v2327
    %v2476 = vunpack.c.h.b16 %v2327
    %v2477 = vunpack.c.l.b16 %v2328
    %v2478 = vunpack.c.h.b16 %v2328
    %v2479 = vunpack.c.l.b16 %v2329
    %v2480 = vunpack.c.h.b16 %v2329
    %v2481 = vunpack.c.l.b16 %v2330
    %v2482 = vunpack.c.h.b16 %v2330
    %v2483 = vunpack.c.l.b16 %v2331
    %v2484 = vunpack.c.h.b16 %v2331
    %v2485 = vunpack.c.l.b16 %v2332
    %v2486 = vunpack.c.h.b16 %v2332
    %v2487 = vunpack.c.l.b16 %v2333
    %v2488 = vunpack.c.h.b16 %v2333
    %v2489 = vunpack.c.l.b16 %v2334
    %v2490 = vunpack.c.h.b16 %v2334
    %v2491 = vunpack.c.l.b16 %v2335
    %v2492 = vunpack.c.h.b16 %v2335
    %v2493 = vunpack.c.l.b16 %v2336
    %v2494 = vunpack.c.h.b16 %v2336
    %v2495 = vunpack.c.l.b16 %v2337
    %v2496 = vunpack.c.h.b16 %v2337
    %v2497 = vunpack.c.l.b16 %v2338
    %v2498 = vunpack.c.h.b16 %v2338
    %v2499 = vunpack.c.l.b16 %v2339
    %v2500 = vunpack.c.h.b16 %v2339
    %v2501 = vunpack.c.l.b16 %v2340
    %v2502 = vunpack.c.h.b16 %v2340
    %v2503 = vunpack.c.l.b16 %v2341
    %v2504 = vunpack.c.h.b16 %v2341
    %v2505 = vunpack.c.l.b16 %v2342
    %v2506 = vunpack.c.h.b16 %v2342
    %v2507 = vunpack.c.l.b16 %v2343
    %v2508 = vunpack.c.h.b16 %v2343
    %v2509 = vunpack.c.l.b16 %v2344
    %v2510 = vunpack.c.h.b16 %v2344
    %v2511 = vunpack.c.l.b16 %v2345
    %v2512 = vunpack.c.h.b16 %v2345
    %v2513 = vunpack.c.l.b16 %v2346
    %v2514 = vunpack.c.h.b16 %v2346
    %v2515 = vunpack.c.l.b16 %v2347
    %v2516 = vunpack.c.h.b16 %v2347
    %v2517 = vunpack.c.l.b16 %v2348
    %v2518 = vunpack.c.h.b16 %v2348
    %v2519 = vunpack.c.l.b16 %v2349
    %v2520 = vunpack.c.h.b16 %v2349
    %v2521 = vunpack.c.l.b16 %v2350
    %v2522 = vunpack.c.h.b16 %v2350
    %v2523 = vunpack.c.l.b16 %v2351
    %v2524 = vunpack.c.h.b16 %v2351
    %v2525 = vunpack.c.l.b16 %v2352
    %v2526 = vunpack.c.h.b16 %v2352
    %v2527 = vunpack.c.l.b16 %v2353
    %v2528 = vunpack.c.h.b16 %v2353
    %v2529 = vunpack.c.l.b16 %v2354
    %v2530 = vunpack.c.h.b16 %v2354
    %v2531 = vunpack.c.l.b16 %v2355
    %v2532 = vunpack.c.h.b16 %v2355
    %v2533 = vunpack.c.l.b16 %v2356
    %v2534 = vunpack.c.h.b16 %v2356
    %v2535 = vunpack.c.l.b16 %v2357
    %v2536 = vunpack.c.h.b16 %v2357
    %v2537 = vunpack.c.l.b16 %v2358
    %v2538 = vunpack.c.h.b16 %v2358
    %v2539 = vunpack.c.l.b16 %v2359
    %v2540 = vunpack.c.h.b16 %v2359
    %v2541 = vunpack.c.l.b16 %v2360
    %v2542 = vunpack.c.h.b16 %v2360
    %v2543 = vunpack.c.l.b16 %v2361
    %v2544 = vunpack.c.h.b16 %v2361
    %v2545 = vunpack.c.l.b16 %v2362
    %v2546 = vunpack.c.h.b16 %v2362
    %v2547 = vunpack.c.l.b16 %v2363
    %v2548 = vunpack.c.h.b16 %v2363
    %v2549 = vunpack.c.l.b16 %v2364
    %v2550 = vunpack.c.h.b16 %v2364
    %v2551 = vunpack.c.l.b16 %v2365
    %v2552 = vunpack.c.h.b16 %v2365
    %v2553 = vunpack.c.l.b16 %v2366
    %v2554 = vunpack.c.h.b16 %v2366
    %v2555 = vunpack.c.l.b16 %v2367
    %v2556 = vunpack.c.h.b16 %v2367
    %v2557 = vunpack.c.l.b16 %v2368
    %v2558 = vunpack.c.h.b16 %v2368
    %v2559 = vunpack.c.l.b16 %v2369
    %v2560 = vunpack.c.h.b16 %v2369
    %v2561 = vunpack.c.l.b16 %v2370
    %v2562 = vunpack.c.h.b16 %v2370
    %v2563 = vpack.c.b16 %v2439, %v2435
    %v2564 = vpack.c.b16 %v2440, %v2436
    %v2565 = vpack.c.b16 %v2441, %v2437
    %v2566 = vpack.c.b16 %v2442, %v2438
    %v2567 = vpack.c.b16 %v2447, %v2443
    %v2568 = vpack.c.b16 %v2448, %v2444
    %v2569 = vpack.c.b16 %v2449, %v2445
    %v2570 = vpack.c.b16 %v2450, %v2446
    %v2571 = vpack.c.b16 %v2455, %v2451
    %v2572 = vpack.c.b16 %v2456, %v2452
    %v2573 = vpack.c.b16 %v2457, %v2453
    %v2574 = vpack.c.b16 %v2458, %v2454
    %v2575 = vpack.c.b16 %v2463, %v2459
    %v2576 = vpack.c.b16 %v2464, %v2460
    %v2577 = vpack.c.b16 %v2465, %v2461
    %v2578 = vpack.c.b16 %v2466, %v2462
    %v2579 = vpack.c.b16 %v2471, %v2467
    %v2580 = vpack.c.b16 %v2472, %v2468
    %v2581 = vpack.c.b16 %v2473, %v2469
    %v2582 = vpack.c.b16 %v2474, %v2470
    %v2583 = vpack.c.b16 %v2479, %v2475
    %v2584 = vpack.c.b16 %v2480, %v2476
    %v2585 = vpack.c.b16 %v2481, %v2477
    %v2586 = vpack.c.b16 %v2482, %v2478
    %v2587 = vpack.c.b16 %v2487, %v2483
    %v2588 = vpack.c.b16 %v2488, %v2484
    %v2589 = vpack.c.b16 %v2489, %v2485
    %v2590 = vpack.c.b16 %v2490, %v2486
    %v2591 = vpack.c.b16 %v2495, %v2491
    %v2592 = vpack.c.b16 %v2496, %v2492
    %v2593 = vpack.c.b16 %v2497, %v2493
    %v2594 = vpack.c.b16 %v2498, %v2494
    %v2595 = vpack.c.b16 %v2503, %v2499
    %v2596 = vpack.c.b16 %v2504, %v2500
    %v2597 = vpack.c.b16 %v2505, %v2501
    %v2598 = vpack.c.b16 %v2506, %v2502
    %v2599 = vpack.c.b16 %v2511, %v2507
    %v2600 = vpack.c.b16 %v2512, %v2508
    %v2601 = vpack.c.b16 %v2513, %v2509
    %v2602 = vpack.c.b16 %v2514, %v2510
    %v2603 = vpack.c.b16 %v2519, %v2515
    %v2604 = vpack.c.b16 %v2520, %v2516
    %v2605 = vpack.c.b16 %v2521, %v2517
    %v2606 = vpack.c.b16 %v2522, %v2518
    %v2607 = vpack.c.b16 %v2527, %v2523
    %v2608 = vpack.c.b16 %v2528, %v2524
    %v2609 = vpack.c.b16 %v2529, %v2525
    %v2610 = vpack.c.b16 %v2530, %v2526
    %v2611 = vpack.c.b16 %v2535, %v2531
    %v2612 = vpack.c.b16 %v2536, %v2532
    %v2613 = vpack.c.b16 %v2537, %v2533
    %v2614 = vpack.c.b16 %v2538, %v2534
    %v2615 = vpack.c.b16 %v2543, %v2539
    %v2616 = vpack.c.b16 %v2544, %v2540
    %v2617 = vpack.c.b16 %v2545, %v2541
    %v2618 = vpack.c.b16 %v2546, %v2542
    %v2619 = vpack.c.b16 %v2551, %v2547
    %v2620 = vpack.c.b16 %v2552, %v2548
    %v2621 = vpack.c.b16 %v2553, %v2549
    %v2622 = vpack.c.b16 %v2554, %v2550
    %v2623 = vpack.c.b16 %v2559, %v2555
    %v2624 = vpack.c.b16 %v2560, %v2556
    %v2625 = vpack.c.b16 %v2561, %v2557
    %v2626 = vpack.c.b16 %v2562, %v2558
    %2691 = vmatprep.subr.bf16.mxu0 %v2564
    %2692 = vmatpush1.bf16.msra.mxu0 %v2563
    %2693 = vmatprep.subr.bf16.mxu0 %v2568
    %2694 = vmatpush1.bf16.msra.mxu0 %v2567
    %2695 = vmatprep.subr.bf16.mxu0 %v2572
    %2696 = vmatpush1.bf16.msra.mxu0 %v2571
    %2697 = vmatprep.subr.bf16.mxu0 %v2576
    %2698 = vmatpush1.bf16.msra.mxu0 %v2575
    %2699 = vmatprep.subr.bf16.mxu0 %v2580
    %2700 = vmatpush1.bf16.msra.mxu0 %v2579
    %2701 = vmatprep.subr.bf16.mxu0 %v2584
    %2702 = vmatpush1.bf16.msra.mxu0 %v2583
    %2703 = vmatprep.subr.bf16.mxu0 %v2588
    %2704 = vmatpush1.bf16.msra.mxu0 %v2587
    %2705 = vmatprep.subr.bf16.mxu0 %v2592
    %2706 = vmatpush1.bf16.msra.mxu0 %v2591
    %2707 = vmatprep.subr.bf16.mxu0 %v2596
    %2708 = vmatpush1.bf16.msra.mxu0 %v2595
    %2709 = vmatprep.subr.bf16.mxu0 %v2600
    %2710 = vmatpush1.bf16.msra.mxu0 %v2599
    %2711 = vmatprep.subr.bf16.mxu0 %v2604
    %2712 = vmatpush1.bf16.msra.mxu0 %v2603
    %2713 = vmatprep.subr.bf16.mxu0 %v2608
    %2714 = vmatpush1.bf16.msra.mxu0 %v2607
    %2715 = vmatprep.subr.bf16.mxu0 %v2612
    %2716 = vmatpush1.bf16.msra.mxu0 %v2611
    %2717 = vmatprep.subr.bf16.mxu0 %v2616
    %2718 = vmatpush1.bf16.msra.mxu0 %v2615
    %2719 = vmatprep.subr.bf16.mxu0 %v2620
    %2720 = vmatpush1.bf16.msra.mxu0 %v2619
    %2721 = vmatprep.subr.bf16.mxu0 %v2624
    %2722 = vmatpush1.bf16.msra.mxu0 %v2623
    %2723 = vmatprep.mubr.bf16.mxu0 %v2306
    %2724 = vmatmul.mubr.bf16.gmra.mrb[0].mxu0 %v2305
    %v2725 = vpop.f32.mrb[0].mxu0
    %v2726 = vadd.f32 0.0, %v2725
    %v2727 = vpop.f32.mrb[0].mxu0
    %v2728 = vadd.f32 0.0, %v2727
    %v2729 = vpop.f32.mrb[0].mxu0
    %v2730 = vpop.f32.mrb[0].mxu0
    %2731 = vdwg.mxu0
    %2732 = vmatprep.subr.bf16.mxu0 %v2566
    %2733 = vmatpush1.bf16.msra.mxu0 %v2565
    %2734 = vmatprep.subr.bf16.mxu0 %v2570
    %2735 = vmatpush1.bf16.msra.mxu0 %v2569
    %2736 = vmatprep.subr.bf16.mxu0 %v2574
    %2737 = vmatpush1.bf16.msra.mxu0 %v2573
    %2738 = vmatprep.subr.bf16.mxu0 %v2578
    %2739 = vmatpush1.bf16.msra.mxu0 %v2577
    %2740 = vmatprep.subr.bf16.mxu0 %v2582
    %2741 = vmatpush1.bf16.msra.mxu0 %v2581
    %2742 = vmatprep.subr.bf16.mxu0 %v2586
    %2743 = vmatpush1.bf16.msra.mxu0 %v2585
    %2744 = vmatprep.subr.bf16.mxu0 %v2590
    %2745 = vmatpush1.bf16.msra.mxu0 %v2589
    %2746 = vmatprep.subr.bf16.mxu0 %v2594
    %2747 = vmatpush1.bf16.msra.mxu0 %v2593
    %2748 = vmatprep.subr.bf16.mxu0 %v2598
    %2749 = vmatpush1.bf16.msra.mxu0 %v2597
    %2750 = vmatprep.subr.bf16.mxu0 %v2602
    %2751 = vmatpush1.bf16.msra.mxu0 %v2601
    %2752 = vmatprep.subr.bf16.mxu0 %v2606
    %2753 = vmatpush1.bf16.msra.mxu0 %v2605
    %2754 = vmatprep.subr.bf16.mxu0 %v2610
    %2755 = vmatpush1.bf16.msra.mxu0 %v2609
    %2756 = vmatprep.subr.bf16.mxu0 %v2614
    %2757 = vmatpush1.bf16.msra.mxu0 %v2613
    %2758 = vmatprep.subr.bf16.mxu0 %v2618
    %2759 = vmatpush1.bf16.msra.mxu0 %v2617
    %2760 = vmatprep.subr.bf16.mxu0 %v2622
    %2761 = vmatpush1.bf16.msra.mxu0 %v2621
    %2762 = vmatprep.subr.bf16.mxu0 %v2626
    %2763 = vmatpush1.bf16.msra.mxu0 %v2625
    %2764 = vmatprep.mubr.bf16.mxu0 %v2306
    %2765 = vmatmul.mubr.bf16.gmra.mrb[0].mxu0 %v2305
    %v2766 = vpop.f32.mrb[0].mxu0
    %v2767 = vadd.f32 0.0, %v2766
    %v2768 = vpop.f32.mrb[0].mxu0
    %v2769 = vadd.f32 0.0, %v2768
    %v2770 = vpop.f32.mrb[0].mxu0
    %v2771 = vpop.f32.mrb[0].mxu0
    %2772 = vdwg.mxu0
    %v2773 = vadd.f32 %v2299, %v2726
    %v2774 = vadd.f32 %v2300, %v2728
    %v2775 = vadd.f32 %v2301, %v2767
    %v2776 = vadd.f32 %v2302, %v2769
    %v2777 = vxor.u32 %v2773, 2147483648
    %v2778 = vxor.u32 %v2774, 2147483648
    %v2779 = vxor.u32 %v2775, 2147483648
    %v2780 = vmul.f32 %v2777, 1.442695
    %v2781 = vpow.pop %v2780
    %v2782 = vmul.f32 %v2778, 1.442695
    %v2783 = vpow.pop %v2782
    %v2784 = vmul.f32 %v2779, 1.442695
    %v2785 = vpow.pop %v2784
    %v2786 = vadd.f32 %v2781, 1.0
    %v2787 = vadd.f32 %v2783, 1.0
    %v2788 = vadd.f32 %v2785, 1.0
    %v2789 = vrcp.pop %v2786
    %v2790 = vmul.f32 1.0, %v2789
    %v2791 = vrcp.pop %v2787
    %v2792 = vmul.f32 1.0, %v2791
    %v2793 = vrcp.pop %v2788
    %v2794 = vmul.f32 1.0, %v2793
    %v2795 = vtanh.pop %v2776
    %v2796 = vmul.f32 %v2792, %v2259
    %v2797 = vmul.f32 %v2790, %v2795
    %v2798 = vadd.f32 %v2796, %v2797
    %v2799 = vtanh.pop %v2798
    %v2800 = vmul.f32 %v2794, %v2799
    %v2802 = vrot.slane %v2800, 6
    %2804 = vst [vmem:[#allocation3] sm:$0xc] %v2802
    %2805 = vst [vmem:[#allocation3 + $0x18] sm:$0x30] %v2802
    %v2806 = vld [vmem:[#allocation2] sm:$0x30]
    %v2807 = vld [vmem:[#allocation2 + $0x8] sm:$0x30]
    %v2808 = vld [vmem:[#allocation2 + $0x10] sm:$0x30]
    %v2809 = vld [vmem:[#allocation2 + $0x18] sm:$0x30]
    %v2810 = vld [vmem:[#allocation2 + $0x60] sm:$0xc]
    %v2811 = vld [vmem:[#allocation2 + $0x68] sm:$0xc]
    %v2812 = vld [vmem:[#allocation2 + $0x70] sm:$0xc]
    %v2813 = vld [vmem:[#allocation2 + $0x78] sm:$0xc]
    %v2818 = vrot.slane %v2806, 4
    %v2819 = vrot.slane %v2807, 4
    %v2820 = vrot.slane %v2808, 4
    %v2821 = vrot.slane %v2809, 4
    %v2826 = vsel %vm1759, %v2818, %v2810
    %v2827 = vsel %vm1759, %v2819, %v2811
    %v2828 = vsel %vm1759, %v2820, %v2812
    %v2829 = vsel %vm1759, %v2821, %v2813
    %v2830 = vmul.f32 %v2800, %v163
    %v2831 = vmul.f32 %v2800, %v164
    %v2832 = vpack.c.bf16 %v2830, %v2830
    %v2833 = vpack.c.bf16 %v2831, %v2831
    %v2834 = vld [vmem:[%s3] sm:$0xff]
    %v2835 = vld [vmem:[%s3 + $0x8] sm:$0xff]
    %v2836 = vld [vmem:[%s3 + $0x10] sm:$0xff]
    %v2837 = vld [vmem:[%s3 + $0x18] sm:$0xff]
    %v2838 = vld [vmem:[%s3 + $0x20] sm:$0xff]
    %v2839 = vld [vmem:[%s3 + $0x28] sm:$0xff]
    %v2840 = vld [vmem:[%s3 + $0x30] sm:$0xff]
    %v2841 = vld [vmem:[%s3 + $0x38] sm:$0xff]
    %v2842 = vld [vmem:[%s3 + $0x40] sm:$0xff]
    %v2843 = vld [vmem:[%s3 + $0x48] sm:$0xff]
    %v2844 = vld [vmem:[%s3 + $0x50] sm:$0xff]
    %v2845 = vld [vmem:[%s3 + $0x58] sm:$0xff]
    %v2846 = vld [vmem:[%s3 + $0x60] sm:$0xff]
    %v2847 = vld [vmem:[%s3 + $0x68] sm:$0xff]
    %v2848 = vld [vmem:[%s3 + $0x70] sm:$0xff]
    %v2849 = vld [vmem:[%s3 + $0x78] sm:$0xff]
    %v2850 = vld [vmem:[%s3 + $0x80] sm:$0xff]
    %v2851 = vld [vmem:[%s3 + $0x88] sm:$0xff]
    %v2852 = vld [vmem:[%s3 + $0x90] sm:$0xff]
    %v2853 = vld [vmem:[%s3 + $0x98] sm:$0xff]
    %v2854 = vld [vmem:[%s3 + $0xa0] sm:$0xff]
    %v2855 = vld [vmem:[%s3 + $0xa8] sm:$0xff]
    %v2856 = vld [vmem:[%s3 + $0xb0] sm:$0xff]
    %v2857 = vld [vmem:[%s3 + $0xb8] sm:$0xff]
    %v2858 = vld [vmem:[%s3 + $0xc0] sm:$0xff]
    %v2859 = vld [vmem:[%s3 + $0xc8] sm:$0xff]
    %v2860 = vld [vmem:[%s3 + $0xd0] sm:$0xff]
    %v2861 = vld [vmem:[%s3 + $0xd8] sm:$0xff]
    %v2862 = vld [vmem:[%s3 + $0xe0] sm:$0xff]
    %v2863 = vld [vmem:[%s3 + $0xe8] sm:$0xff]
    %v2864 = vld [vmem:[%s3 + $0xf0] sm:$0xff]
    %v2865 = vld [vmem:[%s3 + $0xf8] sm:$0xff]
    %v2866 = vld [vmem:[%s3 + $0x100] sm:$0xff]
    %v2867 = vld [vmem:[%s3 + $0x108] sm:$0xff]
    %v2868 = vld [vmem:[%s3 + $0x110] sm:$0xff]
    %v2869 = vld [vmem:[%s3 + $0x118] sm:$0xff]
    %v2870 = vld [vmem:[%s3 + $0x120] sm:$0xff]
    %v2871 = vld [vmem:[%s3 + $0x128] sm:$0xff]
    %v2872 = vld [vmem:[%s3 + $0x130] sm:$0xff]
    %v2873 = vld [vmem:[%s3 + $0x138] sm:$0xff]
    %v2874 = vld [vmem:[%s3 + $0x140] sm:$0xff]
    %v2875 = vld [vmem:[%s3 + $0x148] sm:$0xff]
    %v2876 = vld [vmem:[%s3 + $0x150] sm:$0xff]
    %v2877 = vld [vmem:[%s3 + $0x158] sm:$0xff]
    %v2878 = vld [vmem:[%s3 + $0x160] sm:$0xff]
    %v2879 = vld [vmem:[%s3 + $0x168] sm:$0xff]
    %v2880 = vld [vmem:[%s3 + $0x170] sm:$0xff]
    %v2881 = vld [vmem:[%s3 + $0x178] sm:$0xff]
    %v2882 = vld [vmem:[%s3 + $0x180] sm:$0xff]
    %v2883 = vld [vmem:[%s3 + $0x188] sm:$0xff]
    %v2884 = vld [vmem:[%s3 + $0x190] sm:$0xff]
    %v2885 = vld [vmem:[%s3 + $0x198] sm:$0xff]
    %v2886 = vld [vmem:[%s3 + $0x1a0] sm:$0xff]
    %v2887 = vld [vmem:[%s3 + $0x1a8] sm:$0xff]
    %v2888 = vld [vmem:[%s3 + $0x1b0] sm:$0xff]
    %v2889 = vld [vmem:[%s3 + $0x1b8] sm:$0xff]
    %v2890 = vld [vmem:[%s3 + $0x1c0] sm:$0xff]
    %v2891 = vld [vmem:[%s3 + $0x1c8] sm:$0xff]
    %v2892 = vld [vmem:[%s3 + $0x1d0] sm:$0xff]
    %v2893 = vld [vmem:[%s3 + $0x1d8] sm:$0xff]
    %v2894 = vld [vmem:[%s3 + $0x1e0] sm:$0xff]
    %v2895 = vld [vmem:[%s3 + $0x1e8] sm:$0xff]
    %v2896 = vld [vmem:[%s3 + $0x1f0] sm:$0xff]
    %v2897 = vld [vmem:[%s3 + $0x1f8] sm:$0xff]
    %v2962 = vunpack.c.l.b16 %v2834
    %v2963 = vunpack.c.h.b16 %v2834
    %v2964 = vunpack.c.l.b16 %v2835
    %v2965 = vunpack.c.h.b16 %v2835
    %v2966 = vunpack.c.l.b16 %v2836
    %v2967 = vunpack.c.h.b16 %v2836
    %v2968 = vunpack.c.l.b16 %v2837
    %v2969 = vunpack.c.h.b16 %v2837
    %v2970 = vunpack.c.l.b16 %v2838
    %v2971 = vunpack.c.h.b16 %v2838
    %v2972 = vunpack.c.l.b16 %v2839
    %v2973 = vunpack.c.h.b16 %v2839
    %v2974 = vunpack.c.l.b16 %v2840
    %v2975 = vunpack.c.h.b16 %v2840
    %v2976 = vunpack.c.l.b16 %v2841
    %v2977 = vunpack.c.h.b16 %v2841
    %v2978 = vunpack.c.l.b16 %v2842
    %v2979 = vunpack.c.h.b16 %v2842
    %v2980 = vunpack.c.l.b16 %v2843
    %v2981 = vunpack.c.h.b16 %v2843
    %v2982 = vunpack.c.l.b16 %v2844
    %v2983 = vunpack.c.h.b16 %v2844
    %v2984 = vunpack.c.l.b16 %v2845
    %v2985 = vunpack.c.h.b16 %v2845
    %v2986 = vunpack.c.l.b16 %v2846
    %v2987 = vunpack.c.h.b16 %v2846
    %v2988 = vunpack.c.l.b16 %v2847
    %v2989 = vunpack.c.h.b16 %v2847
    %v2990 = vunpack.c.l.b16 %v2848
    %v2991 = vunpack.c.h.b16 %v2848
    %v2992 = vunpack.c.l.b16 %v2849
    %v2993 = vunpack.c.h.b16 %v2849
    %v2994 = vunpack.c.l.b16 %v2850
    %v2995 = vunpack.c.h.b16 %v2850
    %v2996 = vunpack.c.l.b16 %v2851
    %v2997 = vunpack.c.h.b16 %v2851
    %v2998 = vunpack.c.l.b16 %v2852
    %v2999 = vunpack.c.h.b16 %v2852
    %v3000 = vunpack.c.l.b16 %v2853
    %v3001 = vunpack.c.h.b16 %v2853
    %v3002 = vunpack.c.l.b16 %v2854
    %v3003 = vunpack.c.h.b16 %v2854
    %v3004 = vunpack.c.l.b16 %v2855
    %v3005 = vunpack.c.h.b16 %v2855
    %v3006 = vunpack.c.l.b16 %v2856
    %v3007 = vunpack.c.h.b16 %v2856
    %v3008 = vunpack.c.l.b16 %v2857
    %v3009 = vunpack.c.h.b16 %v2857
    %v3010 = vunpack.c.l.b16 %v2858
    %v3011 = vunpack.c.h.b16 %v2858
    %v3012 = vunpack.c.l.b16 %v2859
    %v3013 = vunpack.c.h.b16 %v2859
    %v3014 = vunpack.c.l.b16 %v2860
    %v3015 = vunpack.c.h.b16 %v2860
    %v3016 = vunpack.c.l.b16 %v2861
    %v3017 = vunpack.c.h.b16 %v2861
    %v3018 = vunpack.c.l.b16 %v2862
    %v3019 = vunpack.c.h.b16 %v2862
    %v3020 = vunpack.c.l.b16 %v2863
    %v3021 = vunpack.c.h.b16 %v2863
    %v3022 = vunpack.c.l.b16 %v2864
    %v3023 = vunpack.c.h.b16 %v2864
    %v3024 = vunpack.c.l.b16 %v2865
    %v3025 = vunpack.c.h.b16 %v2865
    %v3026 = vunpack.c.l.b16 %v2866
    %v3027 = vunpack.c.h.b16 %v2866
    %v3028 = vunpack.c.l.b16 %v2867
    %v3029 = vunpack.c.h.b16 %v2867
    %v3030 = vunpack.c.l.b16 %v2868
    %v3031 = vunpack.c.h.b16 %v2868
    %v3032 = vunpack.c.l.b16 %v2869
    %v3033 = vunpack.c.h.b16 %v2869
    %v3034 = vunpack.c.l.b16 %v2870
    %v3035 = vunpack.c.h.b16 %v2870
    %v3036 = vunpack.c.l.b16 %v2871
    %v3037 = vunpack.c.h.b16 %v2871
    %v3038 = vunpack.c.l.b16 %v2872
    %v3039 = vunpack.c.h.b16 %v2872
    %v3040 = vunpack.c.l.b16 %v2873
    %v3041 = vunpack.c.h.b16 %v2873
    %v3042 = vunpack.c.l.b16 %v2874
    %v3043 = vunpack.c.h.b16 %v2874
    %v3044 = vunpack.c.l.b16 %v2875
    %v3045 = vunpack.c.h.b16 %v2875
    %v3046 = vunpack.c.l.b16 %v2876
    %v3047 = vunpack.c.h.b16 %v2876
    %v3048 = vunpack.c.l.b16 %v2877
    %v3049 = vunpack.c.h.b16 %v2877
    %v3050 = vunpack.c.l.b16 %v2878
    %v3051 = vunpack.c.h.b16 %v2878
    %v3052 = vunpack.c.l.b16 %v2879
    %v3053 = vunpack.c.h.b16 %v2879
    %v3054 = vunpack.c.l.b16 %v2880
    %v3055 = vunpack.c.h.b16 %v2880
    %v3056 = vunpack.c.l.b16 %v2881
    %v3057 = vunpack.c.h.b16 %v2881
    %v3058 = vunpack.c.l.b16 %v2882
    %v3059 = vunpack.c.h.b16 %v2882
    %v3060 = vunpack.c.l.b16 %v2883
    %v3061 = vunpack.c.h.b16 %v2883
    %v3062 = vunpack.c.l.b16 %v2884
    %v3063 = vunpack.c.h.b16 %v2884
    %v3064 = vunpack.c.l.b16 %v2885
    %v3065 = vunpack.c.h.b16 %v2885
    %v3066 = vunpack.c.l.b16 %v2886
    %v3067 = vunpack.c.h.b16 %v2886
    %v3068 = vunpack.c.l.b16 %v2887
    %v3069 = vunpack.c.h.b16 %v2887
    %v3070 = vunpack.c.l.b16 %v2888
    %v3071 = vunpack.c.h.b16 %v2888
    %v3072 = vunpack.c.l.b16 %v2889
    %v3073 = vunpack.c.h.b16 %v2889
    %v3074 = vunpack.c.l.b16 %v2890
    %v3075 = vunpack.c.h.b16 %v2890
    %v3076 = vunpack.c.l.b16 %v2891
    %v3077 = vunpack.c.h.b16 %v2891
    %v3078 = vunpack.c.l.b16 %v2892
    %v3079 = vunpack.c.h.b16 %v2892
    %v3080 = vunpack.c.l.b16 %v2893
    %v3081 = vunpack.c.h.b16 %v2893
    %v3082 = vunpack.c.l.b16 %v2894
    %v3083 = vunpack.c.h.b16 %v2894
    %v3084 = vunpack.c.l.b16 %v2895
    %v3085 = vunpack.c.h.b16 %v2895
    %v3086 = vunpack.c.l.b16 %v2896
    %v3087 = vunpack.c.h.b16 %v2896
    %v3088 = vunpack.c.l.b16 %v2897
    %v3089 = vunpack.c.h.b16 %v2897
    %v3090 = vpack.c.b16 %v2966, %v2962
    %v3091 = vpack.c.b16 %v2967, %v2963
    %v3092 = vpack.c.b16 %v2968, %v2964
    %v3093 = vpack.c.b16 %v2969, %v2965
    %v3094 = vpack.c.b16 %v2974, %v2970
    %v3095 = vpack.c.b16 %v2975, %v2971
    %v3096 = vpack.c.b16 %v2976, %v2972
    %v3097 = vpack.c.b16 %v2977, %v2973
    %v3098 = vpack.c.b16 %v2982, %v2978
    %v3099 = vpack.c.b16 %v2983, %v2979
    %v3100 = vpack.c.b16 %v2984, %v2980
    %v3101 = vpack.c.b16 %v2985, %v2981
    %v3102 = vpack.c.b16 %v2990, %v2986
    %v3103 = vpack.c.b16 %v2991, %v2987
    %v3104 = vpack.c.b16 %v2992, %v2988
    %v3105 = vpack.c.b16 %v2993, %v2989
    %v3106 = vpack.c.b16 %v2998, %v2994
    %v3107 = vpack.c.b16 %v2999, %v2995
    %v3108 = vpack.c.b16 %v3000, %v2996
    %v3109 = vpack.c.b16 %v3001, %v2997
    %v3110 = vpack.c.b16 %v3006, %v3002
    %v3111 = vpack.c.b16 %v3007, %v3003
    %v3112 = vpack.c.b16 %v3008, %v3004
    %v3113 = vpack.c.b16 %v3009, %v3005
    %v3114 = vpack.c.b16 %v3014, %v3010
    %v3115 = vpack.c.b16 %v3015, %v3011
    %v3116 = vpack.c.b16 %v3016, %v3012
    %v3117 = vpack.c.b16 %v3017, %v3013
    %v3118 = vpack.c.b16 %v3022, %v3018
    %v3119 = vpack.c.b16 %v3023, %v3019
    %v3120 = vpack.c.b16 %v3024, %v3020
    %v3121 = vpack.c.b16 %v3025, %v3021
    %v3122 = vpack.c.b16 %v3030, %v3026
    %v3123 = vpack.c.b16 %v3031, %v3027
    %v3124 = vpack.c.b16 %v3032, %v3028
    %v3125 = vpack.c.b16 %v3033, %v3029
    %v3126 = vpack.c.b16 %v3038, %v3034
    %v3127 = vpack.c.b16 %v3039, %v3035
    %v3128 = vpack.c.b16 %v3040, %v3036
    %v3129 = vpack.c.b16 %v3041, %v3037
    %v3130 = vpack.c.b16 %v3046, %v3042
    %v3131 = vpack.c.b16 %v3047, %v3043
    %v3132 = vpack.c.b16 %v3048, %v3044
    %v3133 = vpack.c.b16 %v3049, %v3045
    %v3134 = vpack.c.b16 %v3054, %v3050
    %v3135 = vpack.c.b16 %v3055, %v3051
    %v3136 = vpack.c.b16 %v3056, %v3052
    %v3137 = vpack.c.b16 %v3057, %v3053
    %v3138 = vpack.c.b16 %v3062, %v3058
    %v3139 = vpack.c.b16 %v3063, %v3059
    %v3140 = vpack.c.b16 %v3064, %v3060
    %v3141 = vpack.c.b16 %v3065, %v3061
    %v3142 = vpack.c.b16 %v3070, %v3066
    %v3143 = vpack.c.b16 %v3071, %v3067
    %v3144 = vpack.c.b16 %v3072, %v3068
    %v3145 = vpack.c.b16 %v3073, %v3069
    %v3146 = vpack.c.b16 %v3078, %v3074
    %v3147 = vpack.c.b16 %v3079, %v3075
    %v3148 = vpack.c.b16 %v3080, %v3076
    %v3149 = vpack.c.b16 %v3081, %v3077
    %v3150 = vpack.c.b16 %v3086, %v3082
    %v3151 = vpack.c.b16 %v3087, %v3083
    %v3152 = vpack.c.b16 %v3088, %v3084
    %v3153 = vpack.c.b16 %v3089, %v3085
    %3218 = vmatprep.subr.bf16.mxu0 %v3091
    %3219 = vmatpush1.bf16.msra.mxu0 %v3090
    %3220 = vmatprep.subr.bf16.mxu0 %v3095
    %3221 = vmatpush1.bf16.msra.mxu0 %v3094
    %3222 = vmatprep.subr.bf16.mxu0 %v3099
    %3223 = vmatpush1.bf16.msra.mxu0 %v3098
    %3224 = vmatprep.subr.bf16.mxu0 %v3103
    %3225 = vmatpush1.bf16.msra.mxu0 %v3102
    %3226 = vmatprep.subr.bf16.mxu0 %v3107
    %3227 = vmatpush1.bf16.msra.mxu0 %v3106
    %3228 = vmatprep.subr.bf16.mxu0 %v3111
    %3229 = vmatpush1.bf16.msra.mxu0 %v3110
    %3230 = vmatprep.subr.bf16.mxu0 %v3115
    %3231 = vmatpush1.bf16.msra.mxu0 %v3114
    %3232 = vmatprep.subr.bf16.mxu0 %v3119
    %3233 = vmatpush1.bf16.msra.mxu0 %v3118
    %3234 = vmatprep.subr.bf16.mxu0 %v3123
    %3235 = vmatpush1.bf16.msra.mxu0 %v3122
    %3236 = vmatprep.subr.bf16.mxu0 %v3127
    %3237 = vmatpush1.bf16.msra.mxu0 %v3126
    %3238 = vmatprep.subr.bf16.mxu0 %v3131
    %3239 = vmatpush1.bf16.msra.mxu0 %v3130
    %3240 = vmatprep.subr.bf16.mxu0 %v3135
    %3241 = vmatpush1.bf16.msra.mxu0 %v3134
    %3242 = vmatprep.subr.bf16.mxu0 %v3139
    %3243 = vmatpush1.bf16.msra.mxu0 %v3138
    %3244 = vmatprep.subr.bf16.mxu0 %v3143
    %3245 = vmatpush1.bf16.msra.mxu0 %v3142
    %3246 = vmatprep.subr.bf16.mxu0 %v3147
    %3247 = vmatpush1.bf16.msra.mxu0 %v3146
    %3248 = vmatprep.subr.bf16.mxu0 %v3151
    %3249 = vmatpush1.bf16.msra.mxu0 %v3150
    %3250 = vmatprep.mubr.bf16.mxu0 %v2833
    %3251 = vmatmul.mubr.bf16.gmra.mrb[0].mxu0 %v2832
    %v3252 = vpop.f32.mrb[0].mxu0
    %v3253 = vadd.f32 0.0, %v3252
    %v3254 = vpop.f32.mrb[0].mxu0
    %v3255 = vadd.f32 0.0, %v3254
    %v3256 = vpop.f32.mrb[0].mxu0
    %v3257 = vpop.f32.mrb[0].mxu0
    %3258 = vdwg.mxu0
    %3259 = vmatprep.subr.bf16.mxu0 %v3093
    %3260 = vmatpush1.bf16.msra.mxu0 %v3092
    %3261 = vmatprep.subr.bf16.mxu0 %v3097
    %3262 = vmatpush1.bf16.msra.mxu0 %v3096
    %3263 = vmatprep.subr.bf16.mxu0 %v3101
    %3264 = vmatpush1.bf16.msra.mxu0 %v3100
    %3265 = vmatprep.subr.bf16.mxu0 %v3105
    %3266 = vmatpush1.bf16.msra.mxu0 %v3104
    %3267 = vmatprep.subr.bf16.mxu0 %v3109
    %3268 = vmatpush1.bf16.msra.mxu0 %v3108
    %3269 = vmatprep.subr.bf16.mxu0 %v3113
    %3270 = vmatpush1.bf16.msra.mxu0 %v3112
    %3271 = vmatprep.subr.bf16.mxu0 %v3117
    %3272 = vmatpush1.bf16.msra.mxu0 %v3116
    %3273 = vmatprep.subr.bf16.mxu0 %v3121
    %3274 = vmatpush1.bf16.msra.mxu0 %v3120
    %3275 = vmatprep.subr.bf16.mxu0 %v3125
    %3276 = vmatpush1.bf16.msra.mxu0 %v3124
    %3277 = vmatprep.subr.bf16.mxu0 %v3129
    %3278 = vmatpush1.bf16.msra.mxu0 %v3128
    %3279 = vmatprep.subr.bf16.mxu0 %v3133
    %3280 = vmatpush1.bf16.msra.mxu0 %v3132
    %3281 = vmatprep.subr.bf16.mxu0 %v3137
    %3282 = vmatpush1.bf16.msra.mxu0 %v3136
    %3283 = vmatprep.subr.bf16.mxu0 %v3141
    %3284 = vmatpush1.bf16.msra.mxu0 %v3140
    %3285 = vmatprep.subr.bf16.mxu0 %v3145
    %3286 = vmatpush1.bf16.msra.mxu0 %v3144
    %3287 = vmatprep.subr.bf16.mxu0 %v3149
    %3288 = vmatpush1.bf16.msra.mxu0 %v3148
    %3289 = vmatprep.subr.bf16.mxu0 %v3153
    %3290 = vmatpush1.bf16.msra.mxu0 %v3152
    %3291 = vmatprep.mubr.bf16.mxu0 %v2833
    %3292 = vmatmul.mubr.bf16.gmra.mrb[0].mxu0 %v2832
    %v3293 = vpop.f32.mrb[0].mxu0
    %v3294 = vadd.f32 0.0, %v3293
    %v3295 = vpop.f32.mrb[0].mxu0
    %v3296 = vadd.f32 0.0, %v3295
    %v3297 = vpop.f32.mrb[0].mxu0
    %v3298 = vpop.f32.mrb[0].mxu0
    %3299 = vdwg.mxu0
    %v3300 = vadd.f32 %v2826, %v3253
    %v3301 = vadd.f32 %v2827, %v3255
    %v3302 = vadd.f32 %v2828, %v3294
    %v3303 = vadd.f32 %v2829, %v3296
    %v3304 = vxor.u32 %v3300, 2147483648
    %v3305 = vxor.u32 %v3301, 2147483648
    %v3306 = vxor.u32 %v3302, 2147483648
    %v3307 = vmul.f32 %v3304, 1.442695
    %v3308 = vpow.pop %v3307
    %v3309 = vmul.f32 %v3305, 1.442695
    %v3310 = vpow.pop %v3309
    %v3311 = vmul.f32 %v3306, 1.442695
    %v3312 = vpow.pop %v3311
    %v3313 = vadd.f32 %v3308, 1.0
    %v3314 = vadd.f32 %v3310, 1.0
    %v3315 = vadd.f32 %v3312, 1.0
    %v3316 = vrcp.pop %v3313
    %v3317 = vmul.f32 1.0, %v3316
    %v3318 = vrcp.pop %v3314
    %v3319 = vmul.f32 1.0, %v3318
    %v3320 = vrcp.pop %v3315
    %v3321 = vmul.f32 1.0, %v3320
    %v3322 = vtanh.pop %v3303
    %v3323 = vmul.f32 %v3319, %v2798
    %v3324 = vmul.f32 %v3317, %v3322
    %v3325 = vadd.f32 %v3323, %v3324
    %v3326 = vtanh.pop %v3325
    %v3327 = vmul.f32 %v3321, %v3326
    %v3329 = vrot.slane %v3327, 4
    %3331 = vst [vmem:[#allocation3] sm:$0x30] %v3329
    %3332 = vst [vmem:[#allocation3 + $0x18] sm:$0xc] %v3327
    %v3333 = vld [vmem:[#allocation2] sm:$0xc0]
    %v3334 = vld [vmem:[#allocation2 + $0x8] sm:$0xc0]
    %v3335 = vld [vmem:[#allocation2 + $0x10] sm:$0xc0]
    %v3336 = vld [vmem:[#allocation2 + $0x18] sm:$0xc0]
    %v3337 = vld [vmem:[#allocation2 + $0x60] sm:$0x3]
    %v3338 = vld [vmem:[#allocation2 + $0x68] sm:$0x3]
    %v3339 = vld [vmem:[#allocation2 + $0x70] sm:$0x3]
    %v3340 = vld [vmem:[#allocation2 + $0x78] sm:$0x3]
    %v3345 = vrot.slane %v3333, 6
    %v3346 = vrot.slane %v3334, 6
    %v3347 = vrot.slane %v3335, 6
    %v3348 = vrot.slane %v3336, 6
    %v3357 = vrot.slane %v3337, 6
    %v3358 = vrot.slane %v3338, 6
    %v3359 = vrot.slane %v3339, 6
    %v3360 = vrot.slane %v3340, 6
    %v3365 = vsel %vm1759, %v3345, %v3357
    %v3366 = vsel %vm1759, %v3346, %v3358
    %v3367 = vsel %vm1759, %v3347, %v3359
    %v3368 = vsel %vm1759, %v3348, %v3360
    %v3369 = vmul.f32 %v3327, %v163
    %v3370 = vmul.f32 %v3327, %v164
    %v3371 = vpack.c.bf16 %v3369, %v3369
    %v3372 = vpack.c.bf16 %v3370, %v3370
    %v3373 = vld [vmem:[%s3] sm:$0xff]
    %v3374 = vld [vmem:[%s3 + $0x8] sm:$0xff]
    %v3375 = vld [vmem:[%s3 + $0x10] sm:$0xff]
    %v3376 = vld [vmem:[%s3 + $0x18] sm:$0xff]
    %v3377 = vld [vmem:[%s3 + $0x20] sm:$0xff]
    %v3378 = vld [vmem:[%s3 + $0x28] sm:$0xff]
    %v3379 = vld [vmem:[%s3 + $0x30] sm:$0xff]
    %v3380 = vld [vmem:[%s3 + $0x38] sm:$0xff]
    %v3381 = vld [vmem:[%s3 + $0x40] sm:$0xff]
    %v3382 = vld [vmem:[%s3 + $0x48] sm:$0xff]
    %v3383 = vld [vmem:[%s3 + $0x50] sm:$0xff]
    %v3384 = vld [vmem:[%s3 + $0x58] sm:$0xff]
    %v3385 = vld [vmem:[%s3 + $0x60] sm:$0xff]
    %v3386 = vld [vmem:[%s3 + $0x68] sm:$0xff]
    %v3387 = vld [vmem:[%s3 + $0x70] sm:$0xff]
    %v3388 = vld [vmem:[%s3 + $0x78] sm:$0xff]
    %v3389 = vld [vmem:[%s3 + $0x80] sm:$0xff]
    %v3390 = vld [vmem:[%s3 + $0x88] sm:$0xff]
    %v3391 = vld [vmem:[%s3 + $0x90] sm:$0xff]
    %v3392 = vld [vmem:[%s3 + $0x98] sm:$0xff]
    %v3393 = vld [vmem:[%s3 + $0xa0] sm:$0xff]
    %v3394 = vld [vmem:[%s3 + $0xa8] sm:$0xff]
    %v3395 = vld [vmem:[%s3 + $0xb0] sm:$0xff]
    %v3396 = vld [vmem:[%s3 + $0xb8] sm:$0xff]
    %v3397 = vld [vmem:[%s3 + $0xc0] sm:$0xff]
    %v3398 = vld [vmem:[%s3 + $0xc8] sm:$0xff]
    %v3399 = vld [vmem:[%s3 + $0xd0] sm:$0xff]
    %v3400 = vld [vmem:[%s3 + $0xd8] sm:$0xff]
    %v3401 = vld [vmem:[%s3 + $0xe0] sm:$0xff]
    %v3402 = vld [vmem:[%s3 + $0xe8] sm:$0xff]
    %v3403 = vld [vmem:[%s3 + $0xf0] sm:$0xff]
    %v3404 = vld [vmem:[%s3 + $0xf8] sm:$0xff]
    %v3405 = vld [vmem:[%s3 + $0x100] sm:$0xff]
    %v3406 = vld [vmem:[%s3 + $0x108] sm:$0xff]
    %v3407 = vld [vmem:[%s3 + $0x110] sm:$0xff]
    %v3408 = vld [vmem:[%s3 + $0x118] sm:$0xff]
    %v3409 = vld [vmem:[%s3 + $0x120] sm:$0xff]
    %v3410 = vld [vmem:[%s3 + $0x128] sm:$0xff]
    %v3411 = vld [vmem:[%s3 + $0x130] sm:$0xff]
    %v3412 = vld [vmem:[%s3 + $0x138] sm:$0xff]
    %v3413 = vld [vmem:[%s3 + $0x140] sm:$0xff]
    %v3414 = vld [vmem:[%s3 + $0x148] sm:$0xff]
    %v3415 = vld [vmem:[%s3 + $0x150] sm:$0xff]
    %v3416 = vld [vmem:[%s3 + $0x158] sm:$0xff]
    %v3417 = vld [vmem:[%s3 + $0x160] sm:$0xff]
    %v3418 = vld [vmem:[%s3 + $0x168] sm:$0xff]
    %v3419 = vld [vmem:[%s3 + $0x170] sm:$0xff]
    %v3420 = vld [vmem:[%s3 + $0x178] sm:$0xff]
    %v3421 = vld [vmem:[%s3 + $0x180] sm:$0xff]
    %v3422 = vld [vmem:[%s3 + $0x188] sm:$0xff]
    %v3423 = vld [vmem:[%s3 + $0x190] sm:$0xff]
    %v3424 = vld [vmem:[%s3 + $0x198] sm:$0xff]
    %v3425 = vld [vmem:[%s3 + $0x1a0] sm:$0xff]
    %v3426 = vld [vmem:[%s3 + $0x1a8] sm:$0xff]
    %v3427 = vld [vmem:[%s3 + $0x1b0] sm:$0xff]
    %v3428 = vld [vmem:[%s3 + $0x1b8] sm:$0xff]
    %v3429 = vld [vmem:[%s3 + $0x1c0] sm:$0xff]
    %v3430 = vld [vmem:[%s3 + $0x1c8] sm:$0xff]
    %v3431 = vld [vmem:[%s3 + $0x1d0] sm:$0xff]
    %v3432 = vld [vmem:[%s3 + $0x1d8] sm:$0xff]
    %v3433 = vld [vmem:[%s3 + $0x1e0] sm:$0xff]
    %v3434 = vld [vmem:[%s3 + $0x1e8] sm:$0xff]
    %v3435 = vld [vmem:[%s3 + $0x1f0] sm:$0xff]
    %v3436 = vld [vmem:[%s3 + $0x1f8] sm:$0xff]
    %v3501 = vunpack.c.l.b16 %v3373
    %v3502 = vunpack.c.h.b16 %v3373
    %v3503 = vunpack.c.l.b16 %v3374
    %v3504 = vunpack.c.h.b16 %v3374
    %v3505 = vunpack.c.l.b16 %v3375
    %v3506 = vunpack.c.h.b16 %v3375
    %v3507 = vunpack.c.l.b16 %v3376
    %v3508 = vunpack.c.h.b16 %v3376
    %v3509 = vunpack.c.l.b16 %v3377
    %v3510 = vunpack.c.h.b16 %v3377
    %v3511 = vunpack.c.l.b16 %v3378
    %v3512 = vunpack.c.h.b16 %v3378
    %v3513 = vunpack.c.l.b16 %v3379
    %v3514 = vunpack.c.h.b16 %v3379
    %v3515 = vunpack.c.l.b16 %v3380
    %v3516 = vunpack.c.h.b16 %v3380
    %v3517 = vunpack.c.l.b16 %v3381
    %v3518 = vunpack.c.h.b16 %v3381
    %v3519 = vunpack.c.l.b16 %v3382
    %v3520 = vunpack.c.h.b16 %v3382
    %v3521 = vunpack.c.l.b16 %v3383
    %v3522 = vunpack.c.h.b16 %v3383
    %v3523 = vunpack.c.l.b16 %v3384
    %v3524 = vunpack.c.h.b16 %v3384
    %v3525 = vunpack.c.l.b16 %v3385
    %v3526 = vunpack.c.h.b16 %v3385
    %v3527 = vunpack.c.l.b16 %v3386
    %v3528 = vunpack.c.h.b16 %v3386
    %v3529 = vunpack.c.l.b16 %v3387
    %v3530 = vunpack.c.h.b16 %v3387
    %v3531 = vunpack.c.l.b16 %v3388
    %v3532 = vunpack.c.h.b16 %v3388
    %v3533 = vunpack.c.l.b16 %v3389
    %v3534 = vunpack.c.h.b16 %v3389
    %v3535 = vunpack.c.l.b16 %v3390
    %v3536 = vunpack.c.h.b16 %v3390
    %v3537 = vunpack.c.l.b16 %v3391
    %v3538 = vunpack.c.h.b16 %v3391
    %v3539 = vunpack.c.l.b16 %v3392
    %v3540 = vunpack.c.h.b16 %v3392
    %v3541 = vunpack.c.l.b16 %v3393
    %v3542 = vunpack.c.h.b16 %v3393
    %v3543 = vunpack.c.l.b16 %v3394
    %v3544 = vunpack.c.h.b16 %v3394
    %v3545 = vunpack.c.l.b16 %v3395
    %v3546 = vunpack.c.h.b16 %v3395
    %v3547 = vunpack.c.l.b16 %v3396
    %v3548 = vunpack.c.h.b16 %v3396
    %v3549 = vunpack.c.l.b16 %v3397
    %v3550 = vunpack.c.h.b16 %v3397
    %v3551 = vunpack.c.l.b16 %v3398
    %v3552 = vunpack.c.h.b16 %v3398
    %v3553 = vunpack.c.l.b16 %v3399
    %v3554 = vunpack.c.h.b16 %v3399
    %v3555 = vunpack.c.l.b16 %v3400
    %v3556 = vunpack.c.h.b16 %v3400
    %v3557 = vunpack.c.l.b16 %v3401
    %v3558 = vunpack.c.h.b16 %v3401
    %v3559 = vunpack.c.l.b16 %v3402
    %v3560 = vunpack.c.h.b16 %v3402
    %v3561 = vunpack.c.l.b16 %v3403
    %v3562 = vunpack.c.h.b16 %v3403
    %v3563 = vunpack.c.l.b16 %v3404
    %v3564 = vunpack.c.h.b16 %v3404
    %v3565 = vunpack.c.l.b16 %v3405
    %v3566 = vunpack.c.h.b16 %v3405
    %v3567 = vunpack.c.l.b16 %v3406
    %v3568 = vunpack.c.h.b16 %v3406
    %v3569 = vunpack.c.l.b16 %v3407
    %v3570 = vunpack.c.h.b16 %v3407
    %v3571 = vunpack.c.l.b16 %v3408
    %v3572 = vunpack.c.h.b16 %v3408
    %v3573 = vunpack.c.l.b16 %v3409
    %v3574 = vunpack.c.h.b16 %v3409
    %v3575 = vunpack.c.l.b16 %v3410
    %v3576 = vunpack.c.h.b16 %v3410
    %v3577 = vunpack.c.l.b16 %v3411
    %v3578 = vunpack.c.h.b16 %v3411
    %v3579 = vunpack.c.l.b16 %v3412
    %v3580 = vunpack.c.h.b16 %v3412
    %v3581 = vunpack.c.l.b16 %v3413
    %v3582 = vunpack.c.h.b16 %v3413
    %v3583 = vunpack.c.l.b16 %v3414
    %v3584 = vunpack.c.h.b16 %v3414
    %v3585 = vunpack.c.l.b16 %v3415
    %v3586 = vunpack.c.h.b16 %v3415
    %v3587 = vunpack.c.l.b16 %v3416
    %v3588 = vunpack.c.h.b16 %v3416
    %v3589 = vunpack.c.l.b16 %v3417
    %v3590 = vunpack.c.h.b16 %v3417
    %v3591 = vunpack.c.l.b16 %v3418
    %v3592 = vunpack.c.h.b16 %v3418
    %v3593 = vunpack.c.l.b16 %v3419
    %v3594 = vunpack.c.h.b16 %v3419
    %v3595 = vunpack.c.l.b16 %v3420
    %v3596 = vunpack.c.h.b16 %v3420
    %v3597 = vunpack.c.l.b16 %v3421
    %v3598 = vunpack.c.h.b16 %v3421
    %v3599 = vunpack.c.l.b16 %v3422
    %v3600 = vunpack.c.h.b16 %v3422
    %v3601 = vunpack.c.l.b16 %v3423
    %v3602 = vunpack.c.h.b16 %v3423
    %v3603 = vunpack.c.l.b16 %v3424
    %v3604 = vunpack.c.h.b16 %v3424
    %v3605 = vunpack.c.l.b16 %v3425
    %v3606 = vunpack.c.h.b16 %v3425
    %v3607 = vunpack.c.l.b16 %v3426
    %v3608 = vunpack.c.h.b16 %v3426
    %v3609 = vunpack.c.l.b16 %v3427
    %v3610 = vunpack.c.h.b16 %v3427
    %v3611 = vunpack.c.l.b16 %v3428
    %v3612 = vunpack.c.h.b16 %v3428
    %v3613 = vunpack.c.l.b16 %v3429
    %v3614 = vunpack.c.h.b16 %v3429
    %v3615 = vunpack.c.l.b16 %v3430
    %v3616 = vunpack.c.h.b16 %v3430
    %v3617 = vunpack.c.l.b16 %v3431
    %v3618 = vunpack.c.h.b16 %v3431
    %v3619 = vunpack.c.l.b16 %v3432
    %v3620 = vunpack.c.h.b16 %v3432
    %v3621 = vunpack.c.l.b16 %v3433
    %v3622 = vunpack.c.h.b16 %v3433
    %v3623 = vunpack.c.l.b16 %v3434
    %v3624 = vunpack.c.h.b16 %v3434
    %v3625 = vunpack.c.l.b16 %v3435
    %v3626 = vunpack.c.h.b16 %v3435
    %v3627 = vunpack.c.l.b16 %v3436
    %v3628 = vunpack.c.h.b16 %v3436
    %v3629 = vpack.c.b16 %v3505, %v3501
    %v3630 = vpack.c.b16 %v3506, %v3502
    %v3631 = vpack.c.b16 %v3507, %v3503
    %v3632 = vpack.c.b16 %v3508, %v3504
    %v3633 = vpack.c.b16 %v3513, %v3509
    %v3634 = vpack.c.b16 %v3514, %v3510
    %v3635 = vpack.c.b16 %v3515, %v3511
    %v3636 = vpack.c.b16 %v3516, %v3512
    %v3637 = vpack.c.b16 %v3521, %v3517
    %v3638 = vpack.c.b16 %v3522, %v3518
    %v3639 = vpack.c.b16 %v3523, %v3519
    %v3640 = vpack.c.b16 %v3524, %v3520
    %v3641 = vpack.c.b16 %v3529, %v3525
    %v3642 = vpack.c.b16 %v3530, %v3526
    %v3643 = vpack.c.b16 %v3531, %v3527
    %v3644 = vpack.c.b16 %v3532, %v3528
    %v3645 = vpack.c.b16 %v3537, %v3533
    %v3646 = vpack.c.b16 %v3538, %v3534
    %v3647 = vpack.c.b16 %v3539, %v3535
    %v3648 = vpack.c.b16 %v3540, %v3536
    %v3649 = vpack.c.b16 %v3545, %v3541
    %v3650 = vpack.c.b16 %v3546, %v3542
    %v3651 = vpack.c.b16 %v3547, %v3543
    %v3652 = vpack.c.b16 %v3548, %v3544
    %v3653 = vpack.c.b16 %v3553, %v3549
    %v3654 = vpack.c.b16 %v3554, %v3550
    %v3655 = vpack.c.b16 %v3555, %v3551
    %v3656 = vpack.c.b16 %v3556, %v3552
    %v3657 = vpack.c.b16 %v3561, %v3557
    %v3658 = vpack.c.b16 %v3562, %v3558
    %v3659 = vpack.c.b16 %v3563, %v3559
    %v3660 = vpack.c.b16 %v3564, %v3560
    %v3661 = vpack.c.b16 %v3569, %v3565
    %v3662 = vpack.c.b16 %v3570, %v3566
    %v3663 = vpack.c.b16 %v3571, %v3567
    %v3664 = vpack.c.b16 %v3572, %v3568
    %v3665 = vpack.c.b16 %v3577, %v3573
    %v3666 = vpack.c.b16 %v3578, %v3574
    %v3667 = vpack.c.b16 %v3579, %v3575
    %v3668 = vpack.c.b16 %v3580, %v3576
    %v3669 = vpack.c.b16 %v3585, %v3581
    %v3670 = vpack.c.b16 %v3586, %v3582
    %v3671 = vpack.c.b16 %v3587, %v3583
    %v3672 = vpack.c.b16 %v3588, %v3584
    %v3673 = vpack.c.b16 %v3593, %v3589
    %v3674 = vpack.c.b16 %v3594, %v3590
    %v3675 = vpack.c.b16 %v3595, %v3591
    %v3676 = vpack.c.b16 %v3596, %v3592
    %v3677 = vpack.c.b16 %v3601, %v3597
    %v3678 = vpack.c.b16 %v3602, %v3598
    %v3679 = vpack.c.b16 %v3603, %v3599
    %v3680 = vpack.c.b16 %v3604, %v3600
    %v3681 = vpack.c.b16 %v3609, %v3605
    %v3682 = vpack.c.b16 %v3610, %v3606
    %v3683 = vpack.c.b16 %v3611, %v3607
    %v3684 = vpack.c.b16 %v3612, %v3608
    %v3685 = vpack.c.b16 %v3617, %v3613
    %v3686 = vpack.c.b16 %v3618, %v3614
    %v3687 = vpack.c.b16 %v3619, %v3615
    %v3688 = vpack.c.b16 %v3620, %v3616
    %v3689 = vpack.c.b16 %v3625, %v3621
    %v3690 = vpack.c.b16 %v3626, %v3622
    %v3691 = vpack.c.b16 %v3627, %v3623
    %v3692 = vpack.c.b16 %v3628, %v3624
    %3757 = vmatprep.subr.bf16.mxu0 %v3630
    %3758 = vmatpush1.bf16.msra.mxu0 %v3629
    %3759 = vmatprep.subr.bf16.mxu0 %v3634
    %3760 = vmatpush1.bf16.msra.mxu0 %v3633
    %3761 = vmatprep.subr.bf16.mxu0 %v3638
    %3762 = vmatpush1.bf16.msra.mxu0 %v3637
    %3763 = vmatprep.subr.bf16.mxu0 %v3642
    %3764 = vmatpush1.bf16.msra.mxu0 %v3641
    %3765 = vmatprep.subr.bf16.mxu0 %v3646
    %3766 = vmatpush1.bf16.msra.mxu0 %v3645
    %3767 = vmatprep.subr.bf16.mxu0 %v3650
    %3768 = vmatpush1.bf16.msra.mxu0 %v3649
    %3769 = vmatprep.subr.bf16.mxu0 %v3654
    %3770 = vmatpush1.bf16.msra.mxu0 %v3653
    %3771 = vmatprep.subr.bf16.mxu0 %v3658
    %3772 = vmatpush1.bf16.msra.mxu0 %v3657
    %3773 = vmatprep.subr.bf16.mxu0 %v3662
    %3774 = vmatpush1.bf16.msra.mxu0 %v3661
    %3775 = vmatprep.subr.bf16.mxu0 %v3666
    %3776 = vmatpush1.bf16.msra.mxu0 %v3665
    %3777 = vmatprep.subr.bf16.mxu0 %v3670
    %3778 = vmatpush1.bf16.msra.mxu0 %v3669
    %3779 = vmatprep.subr.bf16.mxu0 %v3674
    %3780 = vmatpush1.bf16.msra.mxu0 %v3673
    %3781 = vmatprep.subr.bf16.mxu0 %v3678
    %3782 = vmatpush1.bf16.msra.mxu0 %v3677
    %3783 = vmatprep.subr.bf16.mxu0 %v3682
    %3784 = vmatpush1.bf16.msra.mxu0 %v3681
    %3785 = vmatprep.subr.bf16.mxu0 %v3686
    %3786 = vmatpush1.bf16.msra.mxu0 %v3685
    %3787 = vmatprep.subr.bf16.mxu0 %v3690
    %3788 = vmatpush1.bf16.msra.mxu0 %v3689
    %3789 = vmatprep.mubr.bf16.mxu0 %v3372
    %3790 = vmatmul.mubr.bf16.gmra.mrb[0].mxu0 %v3371
    %v3791 = vpop.f32.mrb[0].mxu0
    %v3792 = vadd.f32 0.0, %v3791
    %v3793 = vpop.f32.mrb[0].mxu0
    %v3794 = vadd.f32 0.0, %v3793
    %v3795 = vpop.f32.mrb[0].mxu0
    %v3796 = vpop.f32.mrb[0].mxu0
    %3797 = vdwg.mxu0
    %3798 = vmatprep.subr.bf16.mxu0 %v3632
    %3799 = vmatpush1.bf16.msra.mxu0 %v3631
    %3800 = vmatprep.subr.bf16.mxu0 %v3636
    %3801 = vmatpush1.bf16.msra.mxu0 %v3635
    %3802 = vmatprep.subr.bf16.mxu0 %v3640
    %3803 = vmatpush1.bf16.msra.mxu0 %v3639
    %3804 = vmatprep.subr.bf16.mxu0 %v3644
    %3805 = vmatpush1.bf16.msra.mxu0 %v3643
    %3806 = vmatprep.subr.bf16.mxu0 %v3648
    %3807 = vmatpush1.bf16.msra.mxu0 %v3647
    %3808 = vmatprep.subr.bf16.mxu0 %v3652
    %3809 = vmatpush1.bf16.msra.mxu0 %v3651
    %3810 = vmatprep.subr.bf16.mxu0 %v3656
    %3811 = vmatpush1.bf16.msra.mxu0 %v3655
    %3812 = vmatprep.subr.bf16.mxu0 %v3660
    %3813 = vmatpush1.bf16.msra.mxu0 %v3659
    %3814 = vmatprep.subr.bf16.mxu0 %v3664
    %3815 = vmatpush1.bf16.msra.mxu0 %v3663
    %3816 = vmatprep.subr.bf16.mxu0 %v3668
    %3817 = vmatpush1.bf16.msra.mxu0 %v3667
    %3818 = vmatprep.subr.bf16.mxu0 %v3672
    %3819 = vmatpush1.bf16.msra.mxu0 %v3671
    %3820 = vmatprep.subr.bf16.mxu0 %v3676
    %3821 = vmatpush1.bf16.msra.mxu0 %v3675
    %3822 = vmatprep.subr.bf16.mxu0 %v3680
    %3823 = vmatpush1.bf16.msra.mxu0 %v3679
    %3824 = vmatprep.subr.bf16.mxu0 %v3684
    %3825 = vmatpush1.bf16.msra.mxu0 %v3683
    %3826 = vmatprep.subr.bf16.mxu0 %v3688
    %3827 = vmatpush1.bf16.msra.mxu0 %v3687
    %3828 = vmatprep.subr.bf16.mxu0 %v3692
    %3829 = vmatpush1.bf16.msra.mxu0 %v3691
    %3830 = vmatprep.mubr.bf16.mxu0 %v3372
    %3831 = vmatmul.mubr.bf16.gmra.mrb[0].mxu0 %v3371
    %v3832 = vpop.f32.mrb[0].mxu0
    %v3833 = vadd.f32 0.0, %v3832
    %v3834 = vpop.f32.mrb[0].mxu0
    %v3835 = vadd.f32 0.0, %v3834
    %v3836 = vpop.f32.mrb[0].mxu0
    %v3837 = vpop.f32.mrb[0].mxu0
    %3838 = vdwg.mxu0
    %v3839 = vadd.f32 %v3365, %v3792
    %v3840 = vadd.f32 %v3366, %v3794
    %v3841 = vadd.f32 %v3367, %v3833
    %v3842 = vadd.f32 %v3368, %v3835
    %v3843 = vxor.u32 %v3839, 2147483648
    %v3844 = vxor.u32 %v3840, 2147483648
    %v3845 = vxor.u32 %v3841, 2147483648
    %v3846 = vmul.f32 %v3843, 1.442695
    %v3847 = vpow.pop %v3846
    %v3848 = vmul.f32 %v3844, 1.442695
    %v3849 = vpow.pop %v3848
    %v3850 = vmul.f32 %v3845, 1.442695
    %v3851 = vpow.pop %v3850
    %v3852 = vadd.f32 %v3847, 1.0
    %v3853 = vadd.f32 %v3849, 1.0
    %v3854 = vadd.f32 %v3851, 1.0
    %v3855 = vrcp.pop %v3852
    %v3856 = vmul.f32 1.0, %v3855
    %v3857 = vrcp.pop %v3853
    %v3858 = vmul.f32 1.0, %v3857
    %v3859 = vrcp.pop %v3854
    %v3860 = vmul.f32 1.0, %v3859
    %v3861 = vtanh.pop %v3842
    %v3862 = vmul.f32 %v3858, %v3325
    %v3863 = vmul.f32 %v3856, %v3861
    %v3864 = vadd.f32 %v3862, %v3863
    %v3865 = vtanh.pop %v3864
    %v3866 = vmul.f32 %v3860, %v3865
    %v3868 = vrot.slane %v3866, 2
    %3870 = vst [vmem:[#allocation3] sm:$0xc0] %v3868
    %3871 = vst [vmem:[#allocation3 + $0x18] sm:$0x3] %v3868
    %v3872 = vld [vmem:[#allocation2 + $0x40] sm:$0x3]
    %v3873 = vld [vmem:[#allocation2 + $0x48] sm:$0x3]
    %v3874 = vld [vmem:[#allocation2 + $0x50] sm:$0x3]
    %v3875 = vld [vmem:[#allocation2 + $0x58] sm:$0x3]
    %v3876 = vld [vmem:[#allocation2 + $0x20] sm:$0xc0]
    %v3877 = vld [vmem:[#allocation2 + $0x28] sm:$0xc0]
    %v3878 = vld [vmem:[#allocation2 + $0x30] sm:$0xc0]
    %v3879 = vld [vmem:[#allocation2 + $0x38] sm:$0xc0]
    %v3884 = vrot.slane %v3876, 4
    %v3885 = vrot.slane %v3877, 4
    %v3886 = vrot.slane %v3878, 4
    %v3887 = vrot.slane %v3879, 4
    %v3892 = vsel %vm1759, %v3872, %v3884
    %v3893 = vsel %vm1759, %v3873, %v3885
    %v3894 = vsel %vm1759, %v3874, %v3886
    %v3895 = vsel %vm1759, %v3875, %v3887
    %v3896 = vmul.f32 %v3866, %v163
    %v3897 = vmul.f32 %v3866, %v164
    %v3898 = vpack.c.bf16 %v3896, %v3896
    %v3899 = vpack.c.bf16 %v3897, %v3897
    %v3900 = vld [vmem:[%s3] sm:$0xff]
    %v3901 = vld [vmem:[%s3 + $0x8] sm:$0xff]
    %v3902 = vld [vmem:[%s3 + $0x10] sm:$0xff]
    %v3903 = vld [vmem:[%s3 + $0x18] sm:$0xff]
    %v3904 = vld [vmem:[%s3 + $0x20] sm:$0xff]
    %v3905 = vld [vmem:[%s3 + $0x28] sm:$0xff]
    %v3906 = vld [vmem:[%s3 + $0x30] sm:$0xff]
    %v3907 = vld [vmem:[%s3 + $0x38] sm:$0xff]
    %v3908 = vld [vmem:[%s3 + $0x40] sm:$0xff]
    %v3909 = vld [vmem:[%s3 + $0x48] sm:$0xff]
    %v3910 = vld [vmem:[%s3 + $0x50] sm:$0xff]
    %v3911 = vld [vmem:[%s3 + $0x58] sm:$0xff]
    %v3912 = vld [vmem:[%s3 + $0x60] sm:$0xff]
    %v3913 = vld [vmem:[%s3 + $0x68] sm:$0xff]
    %v3914 = vld [vmem:[%s3 + $0x70] sm:$0xff]
    %v3915 = vld [vmem:[%s3 + $0x78] sm:$0xff]
    %v3916 = vld [vmem:[%s3 + $0x80] sm:$0xff]
    %v3917 = vld [vmem:[%s3 + $0x88] sm:$0xff]
    %v3918 = vld [vmem:[%s3 + $0x90] sm:$0xff]
    %v3919 = vld [vmem:[%s3 + $0x98] sm:$0xff]
    %v3920 = vld [vmem:[%s3 + $0xa0] sm:$0xff]
    %v3921 = vld [vmem:[%s3 + $0xa8] sm:$0xff]
    %v3922 = vld [vmem:[%s3 + $0xb0] sm:$0xff]
    %v3923 = vld [vmem:[%s3 + $0xb8] sm:$0xff]
    %v3924 = vld [vmem:[%s3 + $0xc0] sm:$0xff]
    %v3925 = vld [vmem:[%s3 + $0xc8] sm:$0xff]
    %v3926 = vld [vmem:[%s3 + $0xd0] sm:$0xff]
    %v3927 = vld [vmem:[%s3 + $0xd8] sm:$0xff]
    %v3928 = vld [vmem:[%s3 + $0xe0] sm:$0xff]
    %v3929 = vld [vmem:[%s3 + $0xe8] sm:$0xff]
    %v3930 = vld [vmem:[%s3 + $0xf0] sm:$0xff]
    %v3931 = vld [vmem:[%s3 + $0xf8] sm:$0xff]
    %v3932 = vld [vmem:[%s3 + $0x100] sm:$0xff]
    %v3933 = vld [vmem:[%s3 + $0x108] sm:$0xff]
    %v3934 = vld [vmem:[%s3 + $0x110] sm:$0xff]
    %v3935 = vld [vmem:[%s3 + $0x118] sm:$0xff]
    %v3936 = vld [vmem:[%s3 + $0x120] sm:$0xff]
    %v3937 = vld [vmem:[%s3 + $0x128] sm:$0xff]
    %v3938 = vld [vmem:[%s3 + $0x130] sm:$0xff]
    %v3939 = vld [vmem:[%s3 + $0x138] sm:$0xff]
    %v3940 = vld [vmem:[%s3 + $0x140] sm:$0xff]
    %v3941 = vld [vmem:[%s3 + $0x148] sm:$0xff]
    %v3942 = vld [vmem:[%s3 + $0x150] sm:$0xff]
    %v3943 = vld [vmem:[%s3 + $0x158] sm:$0xff]
    %v3944 = vld [vmem:[%s3 + $0x160] sm:$0xff]
    %v3945 = vld [vmem:[%s3 + $0x168] sm:$0xff]
    %v3946 = vld [vmem:[%s3 + $0x170] sm:$0xff]
    %v3947 = vld [vmem:[%s3 + $0x178] sm:$0xff]
    %v3948 = vld [vmem:[%s3 + $0x180] sm:$0xff]
    %v3949 = vld [vmem:[%s3 + $0x188] sm:$0xff]
    %v3950 = vld [vmem:[%s3 + $0x190] sm:$0xff]
    %v3951 = vld [vmem:[%s3 + $0x198] sm:$0xff]
    %v3952 = vld [vmem:[%s3 + $0x1a0] sm:$0xff]
    %v3953 = vld [vmem:[%s3 + $0x1a8] sm:$0xff]
    %v3954 = vld [vmem:[%s3 + $0x1b0] sm:$0xff]
    %v3955 = vld [vmem:[%s3 + $0x1b8] sm:$0xff]
    %v3956 = vld [vmem:[%s3 + $0x1c0] sm:$0xff]
    %v3957 = vld [vmem:[%s3 + $0x1c8] sm:$0xff]
    %v3958 = vld [vmem:[%s3 + $0x1d0] sm:$0xff]
    %v3959 = vld [vmem:[%s3 + $0x1d8] sm:$0xff]
    %v3960 = vld [vmem:[%s3 + $0x1e0] sm:$0xff]
    %v3961 = vld [vmem:[%s3 + $0x1e8] sm:$0xff]
    %v3962 = vld [vmem:[%s3 + $0x1f0] sm:$0xff]
    %v3963 = vld [vmem:[%s3 + $0x1f8] sm:$0xff]
    %v4028 = vunpack.c.l.b16 %v3900
    %v4029 = vunpack.c.h.b16 %v3900
    %v4030 = vunpack.c.l.b16 %v3901
    %v4031 = vunpack.c.h.b16 %v3901
    %v4032 = vunpack.c.l.b16 %v3902
    %v4033 = vunpack.c.h.b16 %v3902
    %v4034 = vunpack.c.l.b16 %v3903
    %v4035 = vunpack.c.h.b16 %v3903
    %v4036 = vunpack.c.l.b16 %v3904
    %v4037 = vunpack.c.h.b16 %v3904
    %v4038 = vunpack.c.l.b16 %v3905
    %v4039 = vunpack.c.h.b16 %v3905
    %v4040 = vunpack.c.l.b16 %v3906
    %v4041 = vunpack.c.h.b16 %v3906
    %v4042 = vunpack.c.l.b16 %v3907
    %v4043 = vunpack.c.h.b16 %v3907
    %v4044 = vunpack.c.l.b16 %v3908
    %v4045 = vunpack.c.h.b16 %v3908
    %v4046 = vunpack.c.l.b16 %v3909
    %v4047 = vunpack.c.h.b16 %v3909
    %v4048 = vunpack.c.l.b16 %v3910
    %v4049 = vunpack.c.h.b16 %v3910
    %v4050 = vunpack.c.l.b16 %v3911
    %v4051 = vunpack.c.h.b16 %v3911
    %v4052 = vunpack.c.l.b16 %v3912
    %v4053 = vunpack.c.h.b16 %v3912
    %v4054 = vunpack.c.l.b16 %v3913
    %v4055 = vunpack.c.h.b16 %v3913
    %v4056 = vunpack.c.l.b16 %v3914
    %v4057 = vunpack.c.h.b16 %v3914
    %v4058 = vunpack.c.l.b16 %v3915
    %v4059 = vunpack.c.h.b16 %v3915
    %v4060 = vunpack.c.l.b16 %v3916
    %v4061 = vunpack.c.h.b16 %v3916
    %v4062 = vunpack.c.l.b16 %v3917
    %v4063 = vunpack.c.h.b16 %v3917
    %v4064 = vunpack.c.l.b16 %v3918
    %v4065 = vunpack.c.h.b16 %v3918
    %v4066 = vunpack.c.l.b16 %v3919
    %v4067 = vunpack.c.h.b16 %v3919
    %v4068 = vunpack.c.l.b16 %v3920
    %v4069 = vunpack.c.h.b16 %v3920
    %v4070 = vunpack.c.l.b16 %v3921
    %v4071 = vunpack.c.h.b16 %v3921
    %v4072 = vunpack.c.l.b16 %v3922
    %v4073 = vunpack.c.h.b16 %v3922
    %v4074 = vunpack.c.l.b16 %v3923
    %v4075 = vunpack.c.h.b16 %v3923
    %v4076 = vunpack.c.l.b16 %v3924
    %v4077 = vunpack.c.h.b16 %v3924
    %v4078 = vunpack.c.l.b16 %v3925
    %v4079 = vunpack.c.h.b16 %v3925
    %v4080 = vunpack.c.l.b16 %v3926
    %v4081 = vunpack.c.h.b16 %v3926
    %v4082 = vunpack.c.l.b16 %v3927
    %v4083 = vunpack.c.h.b16 %v3927
    %v4084 = vunpack.c.l.b16 %v3928
    %v4085 = vunpack.c.h.b16 %v3928
    %v4086 = vunpack.c.l.b16 %v3929
    %v4087 = vunpack.c.h.b16 %v3929
    %v4088 = vunpack.c.l.b16 %v3930
    %v4089 = vunpack.c.h.b16 %v3930
    %v4090 = vunpack.c.l.b16 %v3931
    %v4091 = vunpack.c.h.b16 %v3931
    %v4092 = vunpack.c.l.b16 %v3932
    %v4093 = vunpack.c.h.b16 %v3932
    %v4094 = vunpack.c.l.b16 %v3933
    %v4095 = vunpack.c.h.b16 %v3933
    %v4096 = vunpack.c.l.b16 %v3934
    %v4097 = vunpack.c.h.b16 %v3934
    %v4098 = vunpack.c.l.b16 %v3935
    %v4099 = vunpack.c.h.b16 %v3935
    %v4100 = vunpack.c.l.b16 %v3936
    %v4101 = vunpack.c.h.b16 %v3936
    %v4102 = vunpack.c.l.b16 %v3937
    %v4103 = vunpack.c.h.b16 %v3937
    %v4104 = vunpack.c.l.b16 %v3938
    %v4105 = vunpack.c.h.b16 %v3938
    %v4106 = vunpack.c.l.b16 %v3939
    %v4107 = vunpack.c.h.b16 %v3939
    %v4108 = vunpack.c.l.b16 %v3940
    %v4109 = vunpack.c.h.b16 %v3940
    %v4110 = vunpack.c.l.b16 %v3941
    %v4111 = vunpack.c.h.b16 %v3941
    %v4112 = vunpack.c.l.b16 %v3942
    %v4113 = vunpack.c.h.b16 %v3942
    %v4114 = vunpack.c.l.b16 %v3943
    %v4115 = vunpack.c.h.b16 %v3943
    %v4116 = vunpack.c.l.b16 %v3944
    %v4117 = vunpack.c.h.b16 %v3944
    %v4118 = vunpack.c.l.b16 %v3945
    %v4119 = vunpack.c.h.b16 %v3945
    %v4120 = vunpack.c.l.b16 %v3946
    %v4121 = vunpack.c.h.b16 %v3946
    %v4122 = vunpack.c.l.b16 %v3947
    %v4123 = vunpack.c.h.b16 %v3947
    %v4124 = vunpack.c.l.b16 %v3948
    %v4125 = vunpack.c.h.b16 %v3948
    %v4126 = vunpack.c.l.b16 %v3949
    %v4127 = vunpack.c.h.b16 %v3949
    %v4128 = vunpack.c.l.b16 %v3950
    %v4129 = vunpack.c.h.b16 %v3950
    %v4130 = vunpack.c.l.b16 %v3951
    %v4131 = vunpack.c.h.b16 %v3951
    %v4132 = vunpack.c.l.b16 %v3952
    %v4133 = vunpack.c.h.b16 %v3952
    %v4134 = vunpack.c.l.b16 %v3953
    %v4135 = vunpack.c.h.b16 %v3953
    %v4136 = vunpack.c.l.b16 %v3954
    %v4137 = vunpack.c.h.b16 %v3954
    %v4138 = vunpack.c.l.b16 %v3955
    %v4139 = vunpack.c.h.b16 %v3955
    %v4140 = vunpack.c.l.b16 %v3956
    %v4141 = vunpack.c.h.b16 %v3956
    %v4142 = vunpack.c.l.b16 %v3957
    %v4143 = vunpack.c.h.b16 %v3957
    %v4144 = vunpack.c.l.b16 %v3958
    %v4145 = vunpack.c.h.b16 %v3958
    %v4146 = vunpack.c.l.b16 %v3959
    %v4147 = vunpack.c.h.b16 %v3959
    %v4148 = vunpack.c.l.b16 %v3960
    %v4149 = vunpack.c.h.b16 %v3960
    %v4150 = vunpack.c.l.b16 %v3961
    %v4151 = vunpack.c.h.b16 %v3961
    %v4152 = vunpack.c.l.b16 %v3962
    %v4153 = vunpack.c.h.b16 %v3962
    %v4154 = vunpack.c.l.b16 %v3963
    %v4155 = vunpack.c.h.b16 %v3963
    %v4156 = vpack.c.b16 %v4032, %v4028
    %v4157 = vpack.c.b16 %v4033, %v4029
    %v4158 = vpack.c.b16 %v4034, %v4030
    %v4159 = vpack.c.b16 %v4035, %v4031
    %v4160 = vpack.c.b16 %v4040, %v4036
    %v4161 = vpack.c.b16 %v4041, %v4037
    %v4162 = vpack.c.b16 %v4042, %v4038
    %v4163 = vpack.c.b16 %v4043, %v4039
    %v4164 = vpack.c.b16 %v4048, %v4044
    %v4165 = vpack.c.b16 %v4049, %v4045
    %v4166 = vpack.c.b16 %v4050, %v4046
    %v4167 = vpack.c.b16 %v4051, %v4047
    %v4168 = vpack.c.b16 %v4056, %v4052
    %v4169 = vpack.c.b16 %v4057, %v4053
    %v4170 = vpack.c.b16 %v4058, %v4054
    %v4171 = vpack.c.b16 %v4059, %v4055
    %v4172 = vpack.c.b16 %v4064, %v4060
    %v4173 = vpack.c.b16 %v4065, %v4061
    %v4174 = vpack.c.b16 %v4066, %v4062
    %v4175 = vpack.c.b16 %v4067, %v4063
    %v4176 = vpack.c.b16 %v4072, %v4068
    %v4177 = vpack.c.b16 %v4073, %v4069
    %v4178 = vpack.c.b16 %v4074, %v4070
    %v4179 = vpack.c.b16 %v4075, %v4071
    %v4180 = vpack.c.b16 %v4080, %v4076
    %v4181 = vpack.c.b16 %v4081, %v4077
    %v4182 = vpack.c.b16 %v4082, %v4078
    %v4183 = vpack.c.b16 %v4083, %v4079
    %v4184 = vpack.c.b16 %v4088, %v4084
    %v4185 = vpack.c.b16 %v4089, %v4085
    %v4186 = vpack.c.b16 %v4090, %v4086
    %v4187 = vpack.c.b16 %v4091, %v4087
    %v4188 = vpack.c.b16 %v4096, %v4092
    %v4189 = vpack.c.b16 %v4097, %v4093
    %v4190 = vpack.c.b16 %v4098, %v4094
    %v4191 = vpack.c.b16 %v4099, %v4095
    %v4192 = vpack.c.b16 %v4104, %v4100
    %v4193 = vpack.c.b16 %v4105, %v4101
    %v4194 = vpack.c.b16 %v4106, %v4102
    %v4195 = vpack.c.b16 %v4107, %v4103
    %v4196 = vpack.c.b16 %v4112, %v4108
    %v4197 = vpack.c.b16 %v4113, %v4109
    %v4198 = vpack.c.b16 %v4114, %v4110
    %v4199 = vpack.c.b16 %v4115, %v4111
    %v4200 = vpack.c.b16 %v4120, %v4116
    %v4201 = vpack.c.b16 %v4121, %v4117
    %v4202 = vpack.c.b16 %v4122, %v4118
    %v4203 = vpack.c.b16 %v4123, %v4119
    %v4204 = vpack.c.b16 %v4128, %v4124
    %v4205 = vpack.c.b16 %v4129, %v4125
    %v4206 = vpack.c.b16 %v4130, %v4126
    %v4207 = vpack.c.b16 %v4131, %v4127
    %v4208 = vpack.c.b16 %v4136, %v4132
    %v4209 = vpack.c.b16 %v4137, %v4133
    %v4210 = vpack.c.b16 %v4138, %v4134
    %v4211 = vpack.c.b16 %v4139, %v4135
    %v4212 = vpack.c.b16 %v4144, %v4140
    %v4213 = vpack.c.b16 %v4145, %v4141
    %v4214 = vpack.c.b16 %v4146, %v4142
    %v4215 = vpack.c.b16 %v4147, %v4143
    %v4216 = vpack.c.b16 %v4152, %v4148
    %v4217 = vpack.c.b16 %v4153, %v4149
    %v4218 = vpack.c.b16 %v4154, %v4150
    %v4219 = vpack.c.b16 %v4155, %v4151
    %4284 = vmatprep.subr.bf16.mxu0 %v4157
    %4285 = vmatpush1.bf16.msra.mxu0 %v4156
    %4286 = vmatprep.subr.bf16.mxu0 %v4161
    %4287 = vmatpush1.bf16.msra.mxu0 %v4160
    %4288 = vmatprep.subr.bf16.mxu0 %v4165
    %4289 = vmatpush1.bf16.msra.mxu0 %v4164
    %4290 = vmatprep.subr.bf16.mxu0 %v4169
    %4291 = vmatpush1.bf16.msra.mxu0 %v4168
    %4292 = vmatprep.subr.bf16.mxu0 %v4173
    %4293 = vmatpush1.bf16.msra.mxu0 %v4172
    %4294 = vmatprep.subr.bf16.mxu0 %v4177
    %4295 = vmatpush1.bf16.msra.mxu0 %v4176
    %4296 = vmatprep.subr.bf16.mxu0 %v4181
    %4297 = vmatpush1.bf16.msra.mxu0 %v4180
    %4298 = vmatprep.subr.bf16.mxu0 %v4185
    %4299 = vmatpush1.bf16.msra.mxu0 %v4184
    %4300 = vmatprep.subr.bf16.mxu0 %v4189
    %4301 = vmatpush1.bf16.msra.mxu0 %v4188
    %4302 = vmatprep.subr.bf16.mxu0 %v4193
    %4303 = vmatpush1.bf16.msra.mxu0 %v4192
    %4304 = vmatprep.subr.bf16.mxu0 %v4197
    %4305 = vmatpush1.bf16.msra.mxu0 %v4196
    %4306 = vmatprep.subr.bf16.mxu0 %v4201
    %4307 = vmatpush1.bf16.msra.mxu0 %v4200
    %4308 = vmatprep.subr.bf16.mxu0 %v4205
    %4309 = vmatpush1.bf16.msra.mxu0 %v4204
    %4310 = vmatprep.subr.bf16.mxu0 %v4209
    %4311 = vmatpush1.bf16.msra.mxu0 %v4208
    %4312 = vmatprep.subr.bf16.mxu0 %v4213
    %4313 = vmatpush1.bf16.msra.mxu0 %v4212
    %4314 = vmatprep.subr.bf16.mxu0 %v4217
    %4315 = vmatpush1.bf16.msra.mxu0 %v4216
    %4316 = vmatprep.mubr.bf16.mxu0 %v3899
    %4317 = vmatmul.mubr.bf16.gmra.mrb[0].mxu0 %v3898
    %v4318 = vpop.f32.mrb[0].mxu0
    %v4319 = vadd.f32 0.0, %v4318
    %v4320 = vpop.f32.mrb[0].mxu0
    %v4321 = vadd.f32 0.0, %v4320
    %v4322 = vpop.f32.mrb[0].mxu0
    %v4323 = vpop.f32.mrb[0].mxu0
    %4324 = vdwg.mxu0
    %4325 = vmatprep.subr.bf16.mxu0 %v4159
    %4326 = vmatpush1.bf16.msra.mxu0 %v4158
    %4327 = vmatprep.subr.bf16.mxu0 %v4163
    %4328 = vmatpush1.bf16.msra.mxu0 %v4162
    %4329 = vmatprep.subr.bf16.mxu0 %v4167
    %4330 = vmatpush1.bf16.msra.mxu0 %v4166
    %4331 = vmatprep.subr.bf16.mxu0 %v4171
    %4332 = vmatpush1.bf16.msra.mxu0 %v4170
    %4333 = vmatprep.subr.bf16.mxu0 %v4175
    %4334 = vmatpush1.bf16.msra.mxu0 %v4174
    %4335 = vmatprep.subr.bf16.mxu0 %v4179
    %4336 = vmatpush1.bf16.msra.mxu0 %v4178
    %4337 = vmatprep.subr.bf16.mxu0 %v4183
    %4338 = vmatpush1.bf16.msra.mxu0 %v4182
    %4339 = vmatprep.subr.bf16.mxu0 %v4187
    %4340 = vmatpush1.bf16.msra.mxu0 %v4186
    %4341 = vmatprep.subr.bf16.mxu0 %v4191
    %4342 = vmatpush1.bf16.msra.mxu0 %v4190
    %4343 = vmatprep.subr.bf16.mxu0 %v4195
    %4344 = vmatpush1.bf16.msra.mxu0 %v4194
    %4345 = vmatprep.subr.bf16.mxu0 %v4199
    %4346 = vmatpush1.bf16.msra.mxu0 %v4198
    %4347 = vmatprep.subr.bf16.mxu0 %v4203
    %4348 = vmatpush1.bf16.msra.mxu0 %v4202
    %4349 = vmatprep.subr.bf16.mxu0 %v4207
    %4350 = vmatpush1.bf16.msra.mxu0 %v4206
    %4351 = vmatprep.subr.bf16.mxu0 %v4211
    %4352 = vmatpush1.bf16.msra.mxu0 %v4210
    %4353 = vmatprep.subr.bf16.mxu0 %v4215
    %4354 = vmatpush1.bf16.msra.mxu0 %v4214
    %4355 = vmatprep.subr.bf16.mxu0 %v4219
    %4356 = vmatpush1.bf16.msra.mxu0 %v4218
    %4357 = vmatprep.mubr.bf16.mxu0 %v3899
    %4358 = vmatmul.mubr.bf16.gmra.mrb[0].mxu0 %v3898
    %v4359 = vpop.f32.mrb[0].mxu0
    %v4360 = vadd.f32 0.0, %v4359
    %v4361 = vpop.f32.mrb[0].mxu0
    %v4362 = vadd.f32 0.0, %v4361
    %v4363 = vpop.f32.mrb[0].mxu0
    %v4364 = vpop.f32.mrb[0].mxu0
    %4365 = vdwg.mxu0
    %v4366 = vadd.f32 %v3892, %v4319
    %v4367 = vadd.f32 %v3893, %v4321
    %v4368 = vadd.f32 %v3894, %v4360
    %v4369 = vadd.f32 %v3895, %v4362
    %v4370 = vxor.u32 %v4366, 2147483648
    %v4371 = vxor.u32 %v4367, 2147483648
    %v4372 = vxor.u32 %v4368, 2147483648
    %v4373 = vmul.f32 %v4370, 1.442695
    %v4374 = vpow.pop %v4373
    %v4375 = vmul.f32 %v4371, 1.442695
    %v4376 = vpow.pop %v4375
    %v4377 = vmul.f32 %v4372, 1.442695
    %v4378 = vpow.pop %v4377
    %v4379 = vadd.f32 %v4374, 1.0
    %v4380 = vadd.f32 %v4376, 1.0
    %v4381 = vadd.f32 %v4378, 1.0
    %v4382 = vrcp.pop %v4379
    %v4383 = vmul.f32 1.0, %v4382
    %v4384 = vrcp.pop %v4380
    %v4385 = vmul.f32 1.0, %v4384
    %v4386 = vrcp.pop %v4381
    %v4387 = vmul.f32 1.0, %v4386
    %v4388 = vtanh.pop %v4369
    %v4389 = vmul.f32 %v4385, %v3864
    %v4390 = vmul.f32 %v4383, %v4388
    %v4391 = vadd.f32 %v4389, %v4390
    %v4392 = vtanh.pop %v4391
    %v4393 = vmul.f32 %v4387, %v4392
    %4394 = vst [vmem:[#allocation3 + $0x10] sm:$0x3] %v4393
    %v4396 = vrot.slane %v4393, 4
    %4398 = vst [vmem:[#allocation3 + $0x8] sm:$0xc0] %v4396
    %v4399 = vld [vmem:[#allocation2 + $0x40] sm:$0xc]
    %v4400 = vld [vmem:[#allocation2 + $0x48] sm:$0xc]
    %v4401 = vld [vmem:[#allocation2 + $0x50] sm:$0xc]
    %v4402 = vld [vmem:[#allocation2 + $0x58] sm:$0xc]
    %v4403 = vld [vmem:[#allocation2 + $0x20] sm:$0x30]
    %v4404 = vld [vmem:[#allocation2 + $0x28] sm:$0x30]
    %v4405 = vld [vmem:[#allocation2 + $0x30] sm:$0x30]
    %v4406 = vld [vmem:[#allocation2 + $0x38] sm:$0x30]
    %v4411 = vrot.slane %v4399, 2
    %v4412 = vrot.slane %v4400, 2
    %v4413 = vrot.slane %v4401, 2
    %v4414 = vrot.slane %v4402, 2
    %v4423 = vrot.slane %v4403, 2
    %v4424 = vrot.slane %v4404, 2
    %v4425 = vrot.slane %v4405, 2
    %v4426 = vrot.slane %v4406, 2
    %v4431 = vsel %vm1759, %v4411, %v4423
    %v4432 = vsel %vm1759, %v4412, %v4424
    %v4433 = vsel %vm1759, %v4413, %v4425
    %v4434 = vsel %vm1759, %v4414, %v4426
    %v4435 = vmul.f32 %v4393, %v163
    %v4436 = vmul.f32 %v4393, %v164
    %v4437 = vpack.c.bf16 %v4435, %v4435
    %v4438 = vpack.c.bf16 %v4436, %v4436
    %v4439 = vld [vmem:[%s3] sm:$0xff]
    %v4440 = vld [vmem:[%s3 + $0x8] sm:$0xff]
    %v4441 = vld [vmem:[%s3 + $0x10] sm:$0xff]
    %v4442 = vld [vmem:[%s3 + $0x18] sm:$0xff]
    %v4443 = vld [vmem:[%s3 + $0x20] sm:$0xff]
    %v4444 = vld [vmem:[%s3 + $0x28] sm:$0xff]
    %v4445 = vld [vmem:[%s3 + $0x30] sm:$0xff]
    %v4446 = vld [vmem:[%s3 + $0x38] sm:$0xff]
    %v4447 = vld [vmem:[%s3 + $0x40] sm:$0xff]
    %v4448 = vld [vmem:[%s3 + $0x48] sm:$0xff]
    %v4449 = vld [vmem:[%s3 + $0x50] sm:$0xff]
    %v4450 = vld [vmem:[%s3 + $0x58] sm:$0xff]
    %v4451 = vld [vmem:[%s3 + $0x60] sm:$0xff]
    %v4452 = vld [vmem:[%s3 + $0x68] sm:$0xff]
    %v4453 = vld [vmem:[%s3 + $0x70] sm:$0xff]
    %v4454 = vld [vmem:[%s3 + $0x78] sm:$0xff]
    %v4455 = vld [vmem:[%s3 + $0x80] sm:$0xff]
    %v4456 = vld [vmem:[%s3 + $0x88] sm:$0xff]
    %v4457 = vld [vmem:[%s3 + $0x90] sm:$0xff]
    %v4458 = vld [vmem:[%s3 + $0x98] sm:$0xff]
    %v4459 = vld [vmem:[%s3 + $0xa0] sm:$0xff]
    %v4460 = vld [vmem:[%s3 + $0xa8] sm:$0xff]
    %v4461 = vld [vmem:[%s3 + $0xb0] sm:$0xff]
    %v4462 = vld [vmem:[%s3 + $0xb8] sm:$0xff]
    %v4463 = vld [vmem:[%s3 + $0xc0] sm:$0xff]
    %v4464 = vld [vmem:[%s3 + $0xc8] sm:$0xff]
    %v4465 = vld [vmem:[%s3 + $0xd0] sm:$0xff]
    %v4466 = vld [vmem:[%s3 + $0xd8] sm:$0xff]
    %v4467 = vld [vmem:[%s3 + $0xe0] sm:$0xff]
    %v4468 = vld [vmem:[%s3 + $0xe8] sm:$0xff]
    %v4469 = vld [vmem:[%s3 + $0xf0] sm:$0xff]
    %v4470 = vld [vmem:[%s3 + $0xf8] sm:$0xff]
    %v4471 = vld [vmem:[%s3 + $0x100] sm:$0xff]
    %v4472 = vld [vmem:[%s3 + $0x108] sm:$0xff]
    %v4473 = vld [vmem:[%s3 + $0x110] sm:$0xff]
    %v4474 = vld [vmem:[%s3 + $0x118] sm:$0xff]
    %v4475 = vld [vmem:[%s3 + $0x120] sm:$0xff]
    %v4476 = vld [vmem:[%s3 + $0x128] sm:$0xff]
    %v4477 = vld [vmem:[%s3 + $0x130] sm:$0xff]
    %v4478 = vld [vmem:[%s3 + $0x138] sm:$0xff]
    %v4479 = vld [vmem:[%s3 + $0x140] sm:$0xff]
    %v4480 = vld [vmem:[%s3 + $0x148] sm:$0xff]
    %v4481 = vld [vmem:[%s3 + $0x150] sm:$0xff]
    %v4482 = vld [vmem:[%s3 + $0x158] sm:$0xff]
    %v4483 = vld [vmem:[%s3 + $0x160] sm:$0xff]
    %v4484 = vld [vmem:[%s3 + $0x168] sm:$0xff]
    %v4485 = vld [vmem:[%s3 + $0x170] sm:$0xff]
    %v4486 = vld [vmem:[%s3 + $0x178] sm:$0xff]
    %v4487 = vld [vmem:[%s3 + $0x180] sm:$0xff]
    %v4488 = vld [vmem:[%s3 + $0x188] sm:$0xff]
    %v4489 = vld [vmem:[%s3 + $0x190] sm:$0xff]
    %v4490 = vld [vmem:[%s3 + $0x198] sm:$0xff]
    %v4491 = vld [vmem:[%s3 + $0x1a0] sm:$0xff]
    %v4492 = vld [vmem:[%s3 + $0x1a8] sm:$0xff]
    %v4493 = vld [vmem:[%s3 + $0x1b0] sm:$0xff]
    %v4494 = vld [vmem:[%s3 + $0x1b8] sm:$0xff]
    %v4495 = vld [vmem:[%s3 + $0x1c0] sm:$0xff]
    %v4496 = vld [vmem:[%s3 + $0x1c8] sm:$0xff]
    %v4497 = vld [vmem:[%s3 + $0x1d0] sm:$0xff]
    %v4498 = vld [vmem:[%s3 + $0x1d8] sm:$0xff]
    %v4499 = vld [vmem:[%s3 + $0x1e0] sm:$0xff]
    %v4500 = vld [vmem:[%s3 + $0x1e8] sm:$0xff]
    %v4501 = vld [vmem:[%s3 + $0x1f0] sm:$0xff]
    %v4502 = vld [vmem:[%s3 + $0x1f8] sm:$0xff]
    %v4567 = vunpack.c.l.b16 %v4439
    %v4568 = vunpack.c.h.b16 %v4439
    %v4569 = vunpack.c.l.b16 %v4440
    %v4570 = vunpack.c.h.b16 %v4440
    %v4571 = vunpack.c.l.b16 %v4441
    %v4572 = vunpack.c.h.b16 %v4441
    %v4573 = vunpack.c.l.b16 %v4442
    %v4574 = vunpack.c.h.b16 %v4442
    %v4575 = vunpack.c.l.b16 %v4443
    %v4576 = vunpack.c.h.b16 %v4443
    %v4577 = vunpack.c.l.b16 %v4444
    %v4578 = vunpack.c.h.b16 %v4444
    %v4579 = vunpack.c.l.b16 %v4445
    %v4580 = vunpack.c.h.b16 %v4445
    %v4581 = vunpack.c.l.b16 %v4446
    %v4582 = vunpack.c.h.b16 %v4446
    %v4583 = vunpack.c.l.b16 %v4447
    %v4584 = vunpack.c.h.b16 %v4447
    %v4585 = vunpack.c.l.b16 %v4448
    %v4586 = vunpack.c.h.b16 %v4448
    %v4587 = vunpack.c.l.b16 %v4449
    %v4588 = vunpack.c.h.b16 %v4449
    %v4589 = vunpack.c.l.b16 %v4450
    %v4590 = vunpack.c.h.b16 %v4450
    %v4591 = vunpack.c.l.b16 %v4451
    %v4592 = vunpack.c.h.b16 %v4451
    %v4593 = vunpack.c.l.b16 %v4452
    %v4594 = vunpack.c.h.b16 %v4452
    %v4595 = vunpack.c.l.b16 %v4453
    %v4596 = vunpack.c.h.b16 %v4453
    %v4597 = vunpack.c.l.b16 %v4454
    %v4598 = vunpack.c.h.b16 %v4454
    %v4599 = vunpack.c.l.b16 %v4455
    %v4600 = vunpack.c.h.b16 %v4455
    %v4601 = vunpack.c.l.b16 %v4456
    %v4602 = vunpack.c.h.b16 %v4456
    %v4603 = vunpack.c.l.b16 %v4457
    %v4604 = vunpack.c.h.b16 %v4457
    %v4605 = vunpack.c.l.b16 %v4458
    %v4606 = vunpack.c.h.b16 %v4458
    %v4607 = vunpack.c.l.b16 %v4459
    %v4608 = vunpack.c.h.b16 %v4459
    %v4609 = vunpack.c.l.b16 %v4460
    %v4610 = vunpack.c.h.b16 %v4460
    %v4611 = vunpack.c.l.b16 %v4461
    %v4612 = vunpack.c.h.b16 %v4461
    %v4613 = vunpack.c.l.b16 %v4462
    %v4614 = vunpack.c.h.b16 %v4462
    %v4615 = vunpack.c.l.b16 %v4463
    %v4616 = vunpack.c.h.b16 %v4463
    %v4617 = vunpack.c.l.b16 %v4464
    %v4618 = vunpack.c.h.b16 %v4464
    %v4619 = vunpack.c.l.b16 %v4465
    %v4620 = vunpack.c.h.b16 %v4465
    %v4621 = vunpack.c.l.b16 %v4466
    %v4622 = vunpack.c.h.b16 %v4466
    %v4623 = vunpack.c.l.b16 %v4467
    %v4624 = vunpack.c.h.b16 %v4467
    %v4625 = vunpack.c.l.b16 %v4468
    %v4626 = vunpack.c.h.b16 %v4468
    %v4627 = vunpack.c.l.b16 %v4469
    %v4628 = vunpack.c.h.b16 %v4469
    %v4629 = vunpack.c.l.b16 %v4470
    %v4630 = vunpack.c.h.b16 %v4470
    %v4631 = vunpack.c.l.b16 %v4471
    %v4632 = vunpack.c.h.b16 %v4471
    %v4633 = vunpack.c.l.b16 %v4472
    %v4634 = vunpack.c.h.b16 %v4472
    %v4635 = vunpack.c.l.b16 %v4473
    %v4636 = vunpack.c.h.b16 %v4473
    %v4637 = vunpack.c.l.b16 %v4474
    %v4638 = vunpack.c.h.b16 %v4474
    %v4639 = vunpack.c.l.b16 %v4475
    %v4640 = vunpack.c.h.b16 %v4475
    %v4641 = vunpack.c.l.b16 %v4476
    %v4642 = vunpack.c.h.b16 %v4476
    %v4643 = vunpack.c.l.b16 %v4477
    %v4644 = vunpack.c.h.b16 %v4477
    %v4645 = vunpack.c.l.b16 %v4478
    %v4646 = vunpack.c.h.b16 %v4478
    %v4647 = vunpack.c.l.b16 %v4479
    %v4648 = vunpack.c.h.b16 %v4479
    %v4649 = vunpack.c.l.b16 %v4480
    %v4650 = vunpack.c.h.b16 %v4480
    %v4651 = vunpack.c.l.b16 %v4481
    %v4652 = vunpack.c.h.b16 %v4481
    %v4653 = vunpack.c.l.b16 %v4482
    %v4654 = vunpack.c.h.b16 %v4482
    %v4655 = vunpack.c.l.b16 %v4483
    %v4656 = vunpack.c.h.b16 %v4483
    %v4657 = vunpack.c.l.b16 %v4484
    %v4658 = vunpack.c.h.b16 %v4484
    %v4659 = vunpack.c.l.b16 %v4485
    %v4660 = vunpack.c.h.b16 %v4485
    %v4661 = vunpack.c.l.b16 %v4486
    %v4662 = vunpack.c.h.b16 %v4486
    %v4663 = vunpack.c.l.b16 %v4487
    %v4664 = vunpack.c.h.b16 %v4487
    %v4665 = vunpack.c.l.b16 %v4488
    %v4666 = vunpack.c.h.b16 %v4488
    %v4667 = vunpack.c.l.b16 %v4489
    %v4668 = vunpack.c.h.b16 %v4489
    %v4669 = vunpack.c.l.b16 %v4490
    %v4670 = vunpack.c.h.b16 %v4490
    %v4671 = vunpack.c.l.b16 %v4491
    %v4672 = vunpack.c.h.b16 %v4491
    %v4673 = vunpack.c.l.b16 %v4492
    %v4674 = vunpack.c.h.b16 %v4492
    %v4675 = vunpack.c.l.b16 %v4493
    %v4676 = vunpack.c.h.b16 %v4493
    %v4677 = vunpack.c.l.b16 %v4494
    %v4678 = vunpack.c.h.b16 %v4494
    %v4679 = vunpack.c.l.b16 %v4495
    %v4680 = vunpack.c.h.b16 %v4495
    %v4681 = vunpack.c.l.b16 %v4496
    %v4682 = vunpack.c.h.b16 %v4496
    %v4683 = vunpack.c.l.b16 %v4497
    %v4684 = vunpack.c.h.b16 %v4497
    %v4685 = vunpack.c.l.b16 %v4498
    %v4686 = vunpack.c.h.b16 %v4498
    %v4687 = vunpack.c.l.b16 %v4499
    %v4688 = vunpack.c.h.b16 %v4499
    %v4689 = vunpack.c.l.b16 %v4500
    %v4690 = vunpack.c.h.b16 %v4500
    %v4691 = vunpack.c.l.b16 %v4501
    %v4692 = vunpack.c.h.b16 %v4501
    %v4693 = vunpack.c.l.b16 %v4502
    %v4694 = vunpack.c.h.b16 %v4502
    %v4695 = vpack.c.b16 %v4571, %v4567
    %v4696 = vpack.c.b16 %v4572, %v4568
    %v4697 = vpack.c.b16 %v4573, %v4569
    %v4698 = vpack.c.b16 %v4574, %v4570
    %v4699 = vpack.c.b16 %v4579, %v4575
    %v4700 = vpack.c.b16 %v4580, %v4576
    %v4701 = vpack.c.b16 %v4581, %v4577
    %v4702 = vpack.c.b16 %v4582, %v4578
    %v4703 = vpack.c.b16 %v4587, %v4583
    %v4704 = vpack.c.b16 %v4588, %v4584
    %v4705 = vpack.c.b16 %v4589, %v4585
    %v4706 = vpack.c.b16 %v4590, %v4586
    %v4707 = vpack.c.b16 %v4595, %v4591
    %v4708 = vpack.c.b16 %v4596, %v4592
    %v4709 = vpack.c.b16 %v4597, %v4593
    %v4710 = vpack.c.b16 %v4598, %v4594
    %v4711 = vpack.c.b16 %v4603, %v4599
    %v4712 = vpack.c.b16 %v4604, %v4600
    %v4713 = vpack.c.b16 %v4605, %v4601
    %v4714 = vpack.c.b16 %v4606, %v4602
    %v4715 = vpack.c.b16 %v4611, %v4607
    %v4716 = vpack.c.b16 %v4612, %v4608
    %v4717 = vpack.c.b16 %v4613, %v4609
    %v4718 = vpack.c.b16 %v4614, %v4610
    %v4719 = vpack.c.b16 %v4619, %v4615
    %v4720 = vpack.c.b16 %v4620, %v4616
    %v4721 = vpack.c.b16 %v4621, %v4617
    %v4722 = vpack.c.b16 %v4622, %v4618
    %v4723 = vpack.c.b16 %v4627, %v4623
    %v4724 = vpack.c.b16 %v4628, %v4624
    %v4725 = vpack.c.b16 %v4629, %v4625
    %v4726 = vpack.c.b16 %v4630, %v4626
    %v4727 = vpack.c.b16 %v4635, %v4631
    %v4728 = vpack.c.b16 %v4636, %v4632
    %v4729 = vpack.c.b16 %v4637, %v4633
    %v4730 = vpack.c.b16 %v4638, %v4634
    %v4731 = vpack.c.b16 %v4643, %v4639
    %v4732 = vpack.c.b16 %v4644, %v4640
    %v4733 = vpack.c.b16 %v4645, %v4641
    %v4734 = vpack.c.b16 %v4646, %v4642
    %v4735 = vpack.c.b16 %v4651, %v4647
    %v4736 = vpack.c.b16 %v4652, %v4648
    %v4737 = vpack.c.b16 %v4653, %v4649
    %v4738 = vpack.c.b16 %v4654, %v4650
    %v4739 = vpack.c.b16 %v4659, %v4655
    %v4740 = vpack.c.b16 %v4660, %v4656
    %v4741 = vpack.c.b16 %v4661, %v4657
    %v4742 = vpack.c.b16 %v4662, %v4658
    %v4743 = vpack.c.b16 %v4667, %v4663
    %v4744 = vpack.c.b16 %v4668, %v4664
    %v4745 = vpack.c.b16 %v4669, %v4665
    %v4746 = vpack.c.b16 %v4670, %v4666
    %v4747 = vpack.c.b16 %v4675, %v4671
    %v4748 = vpack.c.b16 %v4676, %v4672
    %v4749 = vpack.c.b16 %v4677, %v4673
    %v4750 = vpack.c.b16 %v4678, %v4674
    %v4751 = vpack.c.b16 %v4683, %v4679
    %v4752 = vpack.c.b16 %v4684, %v4680
    %v4753 = vpack.c.b16 %v4685, %v4681
    %v4754 = vpack.c.b16 %v4686, %v4682
    %v4755 = vpack.c.b16 %v4691, %v4687
    %v4756 = vpack.c.b16 %v4692, %v4688
    %v4757 = vpack.c.b16 %v4693, %v4689
    %v4758 = vpack.c.b16 %v4694, %v4690
    %4823 = vmatprep.subr.bf16.mxu0 %v4696
    %4824 = vmatpush1.bf16.msra.mxu0 %v4695
    %4825 = vmatprep.subr.bf16.mxu0 %v4700
    %4826 = vmatpush1.bf16.msra.mxu0 %v4699
    %4827 = vmatprep.subr.bf16.mxu0 %v4704
    %4828 = vmatpush1.bf16.msra.mxu0 %v4703
    %4829 = vmatprep.subr.bf16.mxu0 %v4708
    %4830 = vmatpush1.bf16.msra.mxu0 %v4707
    %4831 = vmatprep.subr.bf16.mxu0 %v4712
    %4832 = vmatpush1.bf16.msra.mxu0 %v4711
    %4833 = vmatprep.subr.bf16.mxu0 %v4716
    %4834 = vmatpush1.bf16.msra.mxu0 %v4715
    %4835 = vmatprep.subr.bf16.mxu0 %v4720
    %4836 = vmatpush1.bf16.msra.mxu0 %v4719
    %4837 = vmatprep.subr.bf16.mxu0 %v4724
    %4838 = vmatpush1.bf16.msra.mxu0 %v4723
    %4839 = vmatprep.subr.bf16.mxu0 %v4728
    %4840 = vmatpush1.bf16.msra.mxu0 %v4727
    %4841 = vmatprep.subr.bf16.mxu0 %v4732
    %4842 = vmatpush1.bf16.msra.mxu0 %v4731
    %4843 = vmatprep.subr.bf16.mxu0 %v4736
    %4844 = vmatpush1.bf16.msra.mxu0 %v4735
    %4845 = vmatprep.subr.bf16.mxu0 %v4740
    %4846 = vmatpush1.bf16.msra.mxu0 %v4739
    %4847 = vmatprep.subr.bf16.mxu0 %v4744
    %4848 = vmatpush1.bf16.msra.mxu0 %v4743
    %4849 = vmatprep.subr.bf16.mxu0 %v4748
    %4850 = vmatpush1.bf16.msra.mxu0 %v4747
    %4851 = vmatprep.subr.bf16.mxu0 %v4752
    %4852 = vmatpush1.bf16.msra.mxu0 %v4751
    %4853 = vmatprep.subr.bf16.mxu0 %v4756
    %4854 = vmatpush1.bf16.msra.mxu0 %v4755
    %4855 = vmatprep.mubr.bf16.mxu0 %v4438
    %4856 = vmatmul.mubr.bf16.gmra.mrb[0].mxu0 %v4437
    %v4857 = vpop.f32.mrb[0].mxu0
    %v4858 = vadd.f32 0.0, %v4857
    %v4859 = vpop.f32.mrb[0].mxu0
    %v4860 = vadd.f32 0.0, %v4859
    %v4861 = vpop.f32.mrb[0].mxu0
    %v4862 = vpop.f32.mrb[0].mxu0
    %4863 = vdwg.mxu0
    %4864 = vmatprep.subr.bf16.mxu0 %v4698
    %4865 = vmatpush1.bf16.msra.mxu0 %v4697
    %4866 = vmatprep.subr.bf16.mxu0 %v4702
    %4867 = vmatpush1.bf16.msra.mxu0 %v4701
    %4868 = vmatprep.subr.bf16.mxu0 %v4706
    %4869 = vmatpush1.bf16.msra.mxu0 %v4705
    %4870 = vmatprep.subr.bf16.mxu0 %v4710
    %4871 = vmatpush1.bf16.msra.mxu0 %v4709
    %4872 = vmatprep.subr.bf16.mxu0 %v4714
    %4873 = vmatpush1.bf16.msra.mxu0 %v4713
    %4874 = vmatprep.subr.bf16.mxu0 %v4718
    %4875 = vmatpush1.bf16.msra.mxu0 %v4717
    %4876 = vmatprep.subr.bf16.mxu0 %v4722
    %4877 = vmatpush1.bf16.msra.mxu0 %v4721
    %4878 = vmatprep.subr.bf16.mxu0 %v4726
    %4879 = vmatpush1.bf16.msra.mxu0 %v4725
    %4880 = vmatprep.subr.bf16.mxu0 %v4730
    %4881 = vmatpush1.bf16.msra.mxu0 %v4729
    %4882 = vmatprep.subr.bf16.mxu0 %v4734
    %4883 = vmatpush1.bf16.msra.mxu0 %v4733
    %4884 = vmatprep.subr.bf16.mxu0 %v4738
    %4885 = vmatpush1.bf16.msra.mxu0 %v4737
    %4886 = vmatprep.subr.bf16.mxu0 %v4742
    %4887 = vmatpush1.bf16.msra.mxu0 %v4741
    %4888 = vmatprep.subr.bf16.mxu0 %v4746
    %4889 = vmatpush1.bf16.msra.mxu0 %v4745
    %4890 = vmatprep.subr.bf16.mxu0 %v4750
    %4891 = vmatpush1.bf16.msra.mxu0 %v4749
    %4892 = vmatprep.subr.bf16.mxu0 %v4754
    %4893 = vmatpush1.bf16.msra.mxu0 %v4753
    %4894 = vmatprep.subr.bf16.mxu0 %v4758
    %4895 = vmatpush1.bf16.msra.mxu0 %v4757
    %4896 = vmatprep.mubr.bf16.mxu0 %v4438
    %4897 = vmatmul.mubr.bf16.gmra.mrb[0].mxu0 %v4437
    %v4898 = vpop.f32.mrb[0].mxu0
    %v4899 = vadd.f32 0.0, %v4898
    %v4900 = vpop.f32.mrb[0].mxu0
    %v4901 = vadd.f32 0.0, %v4900
    %v4902 = vpop.f32.mrb[0].mxu0
    %v4903 = vpop.f32.mrb[0].mxu0
    %4904 = vdwg.mxu0
    %v4905 = vadd.f32 %v4431, %v4858
    %v4906 = vadd.f32 %v4432, %v4860
    %v4907 = vadd.f32 %v4433, %v4899
    %v4908 = vadd.f32 %v4434, %v4901
    %v4909 = vxor.u32 %v4905, 2147483648
    %v4910 = vxor.u32 %v4906, 2147483648
    %v4911 = vxor.u32 %v4907, 2147483648
    %v4912 = vmul.f32 %v4909, 1.442695
    %v4913 = vpow.pop %v4912
    %v4914 = vmul.f32 %v4910, 1.442695
    %v4915 = vpow.pop %v4914
    %v4916 = vmul.f32 %v4911, 1.442695
    %v4917 = vpow.pop %v4916
    %v4918 = vadd.f32 %v4913, 1.0
    %v4919 = vadd.f32 %v4915, 1.0
    %v4920 = vadd.f32 %v4917, 1.0
    %v4921 = vrcp.pop %v4918
    %v4922 = vmul.f32 1.0, %v4921
    %v4923 = vrcp.pop %v4919
    %v4924 = vmul.f32 1.0, %v4923
    %v4925 = vrcp.pop %v4920
    %v4926 = vmul.f32 1.0, %v4925
    %v4927 = vtanh.pop %v4908
    %v4928 = vmul.f32 %v4924, %v4391
    %v4929 = vmul.f32 %v4922, %v4927
    %v4930 = vadd.f32 %v4928, %v4929
    %v4931 = vtanh.pop %v4930
    %v4932 = vmul.f32 %v4926, %v4931
    %v4934 = vrot.slane %v4932, 6
    %4936 = vst [vmem:[#allocation3 + $0x10] sm:$0xc] %v4934
    %4937 = vst [vmem:[#allocation3 + $0x8] sm:$0x30] %v4934
    %v4938 = vld [vmem:[#allocation2 + $0x40] sm:$0x30]
    %v4939 = vld [vmem:[#allocation2 + $0x48] sm:$0x30]
    %v4940 = vld [vmem:[#allocation2 + $0x50] sm:$0x30]
    %v4941 = vld [vmem:[#allocation2 + $0x58] sm:$0x30]
    %v4942 = vld [vmem:[#allocation2 + $0x20] sm:$0xc]
    %v4943 = vld [vmem:[#allocation2 + $0x28] sm:$0xc]
    %v4944 = vld [vmem:[#allocation2 + $0x30] sm:$0xc]
    %v4945 = vld [vmem:[#allocation2 + $0x38] sm:$0xc]
    %v4950 = vrot.slane %v4938, 4
    %v4951 = vrot.slane %v4939, 4
    %v4952 = vrot.slane %v4940, 4
    %v4953 = vrot.slane %v4941, 4
    %v4958 = vsel %vm1759, %v4950, %v4942
    %v4959 = vsel %vm1759, %v4951, %v4943
    %v4960 = vsel %vm1759, %v4952, %v4944
    %v4961 = vsel %vm1759, %v4953, %v4945
    %v4962 = vmul.f32 %v4932, %v163
    %v4963 = vmul.f32 %v4932, %v164
    %v4964 = vpack.c.bf16 %v4962, %v4962
    %v4965 = vpack.c.bf16 %v4963, %v4963
    %v4966 = vld [vmem:[%s3] sm:$0xff]
    %v4967 = vld [vmem:[%s3 + $0x8] sm:$0xff]
    %v4968 = vld [vmem:[%s3 + $0x10] sm:$0xff]
    %v4969 = vld [vmem:[%s3 + $0x18] sm:$0xff]
    %v4970 = vld [vmem:[%s3 + $0x20] sm:$0xff]
    %v4971 = vld [vmem:[%s3 + $0x28] sm:$0xff]
    %v4972 = vld [vmem:[%s3 + $0x30] sm:$0xff]
    %v4973 = vld [vmem:[%s3 + $0x38] sm:$0xff]
    %v4974 = vld [vmem:[%s3 + $0x40] sm:$0xff]
    %v4975 = vld [vmem:[%s3 + $0x48] sm:$0xff]
    %v4976 = vld [vmem:[%s3 + $0x50] sm:$0xff]
    %v4977 = vld [vmem:[%s3 + $0x58] sm:$0xff]
    %v4978 = vld [vmem:[%s3 + $0x60] sm:$0xff]
    %v4979 = vld [vmem:[%s3 + $0x68] sm:$0xff]
    %v4980 = vld [vmem:[%s3 + $0x70] sm:$0xff]
    %v4981 = vld [vmem:[%s3 + $0x78] sm:$0xff]
    %v4982 = vld [vmem:[%s3 + $0x80] sm:$0xff]
    %v4983 = vld [vmem:[%s3 + $0x88] sm:$0xff]
    %v4984 = vld [vmem:[%s3 + $0x90] sm:$0xff]
    %v4985 = vld [vmem:[%s3 + $0x98] sm:$0xff]
    %v4986 = vld [vmem:[%s3 + $0xa0] sm:$0xff]
    %v4987 = vld [vmem:[%s3 + $0xa8] sm:$0xff]
    %v4988 = vld [vmem:[%s3 + $0xb0] sm:$0xff]
    %v4989 = vld [vmem:[%s3 + $0xb8] sm:$0xff]
    %v4990 = vld [vmem:[%s3 + $0xc0] sm:$0xff]
    %v4991 = vld [vmem:[%s3 + $0xc8] sm:$0xff]
    %v4992 = vld [vmem:[%s3 + $0xd0] sm:$0xff]
    %v4993 = vld [vmem:[%s3 + $0xd8] sm:$0xff]
    %v4994 = vld [vmem:[%s3 + $0xe0] sm:$0xff]
    %v4995 = vld [vmem:[%s3 + $0xe8] sm:$0xff]
    %v4996 = vld [vmem:[%s3 + $0xf0] sm:$0xff]
    %v4997 = vld [vmem:[%s3 + $0xf8] sm:$0xff]
    %v4998 = vld [vmem:[%s3 + $0x100] sm:$0xff]
    %v4999 = vld [vmem:[%s3 + $0x108] sm:$0xff]
    %v5000 = vld [vmem:[%s3 + $0x110] sm:$0xff]
    %v5001 = vld [vmem:[%s3 + $0x118] sm:$0xff]
    %v5002 = vld [vmem:[%s3 + $0x120] sm:$0xff]
    %v5003 = vld [vmem:[%s3 + $0x128] sm:$0xff]
    %v5004 = vld [vmem:[%s3 + $0x130] sm:$0xff]
    %v5005 = vld [vmem:[%s3 + $0x138] sm:$0xff]
    %v5006 = vld [vmem:[%s3 + $0x140] sm:$0xff]
    %v5007 = vld [vmem:[%s3 + $0x148] sm:$0xff]
    %v5008 = vld [vmem:[%s3 + $0x150] sm:$0xff]
    %v5009 = vld [vmem:[%s3 + $0x158] sm:$0xff]
    %v5010 = vld [vmem:[%s3 + $0x160] sm:$0xff]
    %v5011 = vld [vmem:[%s3 + $0x168] sm:$0xff]
    %v5012 = vld [vmem:[%s3 + $0x170] sm:$0xff]
    %v5013 = vld [vmem:[%s3 + $0x178] sm:$0xff]
    %v5014 = vld [vmem:[%s3 + $0x180] sm:$0xff]
    %v5015 = vld [vmem:[%s3 + $0x188] sm:$0xff]
    %v5016 = vld [vmem:[%s3 + $0x190] sm:$0xff]
    %v5017 = vld [vmem:[%s3 + $0x198] sm:$0xff]
    %v5018 = vld [vmem:[%s3 + $0x1a0] sm:$0xff]
    %v5019 = vld [vmem:[%s3 + $0x1a8] sm:$0xff]
    %v5020 = vld [vmem:[%s3 + $0x1b0] sm:$0xff]
    %v5021 = vld [vmem:[%s3 + $0x1b8] sm:$0xff]
    %v5022 = vld [vmem:[%s3 + $0x1c0] sm:$0xff]
    %v5023 = vld [vmem:[%s3 + $0x1c8] sm:$0xff]
    %v5024 = vld [vmem:[%s3 + $0x1d0] sm:$0xff]
    %v5025 = vld [vmem:[%s3 + $0x1d8] sm:$0xff]
    %v5026 = vld [vmem:[%s3 + $0x1e0] sm:$0xff]
    %v5027 = vld [vmem:[%s3 + $0x1e8] sm:$0xff]
    %v5028 = vld [vmem:[%s3 + $0x1f0] sm:$0xff]
    %v5029 = vld [vmem:[%s3 + $0x1f8] sm:$0xff]
    %v5094 = vunpack.c.l.b16 %v4966
    %v5095 = vunpack.c.h.b16 %v4966
    %v5096 = vunpack.c.l.b16 %v4967
    %v5097 = vunpack.c.h.b16 %v4967
    %v5098 = vunpack.c.l.b16 %v4968
    %v5099 = vunpack.c.h.b16 %v4968
    %v5100 = vunpack.c.l.b16 %v4969
    %v5101 = vunpack.c.h.b16 %v4969
    %v5102 = vunpack.c.l.b16 %v4970
    %v5103 = vunpack.c.h.b16 %v4970
    %v5104 = vunpack.c.l.b16 %v4971
    %v5105 = vunpack.c.h.b16 %v4971
    %v5106 = vunpack.c.l.b16 %v4972
    %v5107 = vunpack.c.h.b16 %v4972
    %v5108 = vunpack.c.l.b16 %v4973
    %v5109 = vunpack.c.h.b16 %v4973
    %v5110 = vunpack.c.l.b16 %v4974
    %v5111 = vunpack.c.h.b16 %v4974
    %v5112 = vunpack.c.l.b16 %v4975
    %v5113 = vunpack.c.h.b16 %v4975
    %v5114 = vunpack.c.l.b16 %v4976
    %v5115 = vunpack.c.h.b16 %v4976
    %v5116 = vunpack.c.l.b16 %v4977
    %v5117 = vunpack.c.h.b16 %v4977
    %v5118 = vunpack.c.l.b16 %v4978
    %v5119 = vunpack.c.h.b16 %v4978
    %v5120 = vunpack.c.l.b16 %v4979
    %v5121 = vunpack.c.h.b16 %v4979
    %v5122 = vunpack.c.l.b16 %v4980
    %v5123 = vunpack.c.h.b16 %v4980
    %v5124 = vunpack.c.l.b16 %v4981
    %v5125 = vunpack.c.h.b16 %v4981
    %v5126 = vunpack.c.l.b16 %v4982
    %v5127 = vunpack.c.h.b16 %v4982
    %v5128 = vunpack.c.l.b16 %v4983
    %v5129 = vunpack.c.h.b16 %v4983
    %v5130 = vunpack.c.l.b16 %v4984
    %v5131 = vunpack.c.h.b16 %v4984
    %v5132 = vunpack.c.l.b16 %v4985
    %v5133 = vunpack.c.h.b16 %v4985
    %v5134 = vunpack.c.l.b16 %v4986
    %v5135 = vunpack.c.h.b16 %v4986
    %v5136 = vunpack.c.l.b16 %v4987
    %v5137 = vunpack.c.h.b16 %v4987
    %v5138 = vunpack.c.l.b16 %v4988
    %v5139 = vunpack.c.h.b16 %v4988
    %v5140 = vunpack.c.l.b16 %v4989
    %v5141 = vunpack.c.h.b16 %v4989
    %v5142 = vunpack.c.l.b16 %v4990
    %v5143 = vunpack.c.h.b16 %v4990
    %v5144 = vunpack.c.l.b16 %v4991
    %v5145 = vunpack.c.h.b16 %v4991
    %v5146 = vunpack.c.l.b16 %v4992
    %v5147 = vunpack.c.h.b16 %v4992
    %v5148 = vunpack.c.l.b16 %v4993
    %v5149 = vunpack.c.h.b16 %v4993
    %v5150 = vunpack.c.l.b16 %v4994
    %v5151 = vunpack.c.h.b16 %v4994
    %v5152 = vunpack.c.l.b16 %v4995
    %v5153 = vunpack.c.h.b16 %v4995
    %v5154 = vunpack.c.l.b16 %v4996
    %v5155 = vunpack.c.h.b16 %v4996
    %v5156 = vunpack.c.l.b16 %v4997
    %v5157 = vunpack.c.h.b16 %v4997
    %v5158 = vunpack.c.l.b16 %v4998
    %v5159 = vunpack.c.h.b16 %v4998
    %v5160 = vunpack.c.l.b16 %v4999
    %v5161 = vunpack.c.h.b16 %v4999
    %v5162 = vunpack.c.l.b16 %v5000
    %v5163 = vunpack.c.h.b16 %v5000
    %v5164 = vunpack.c.l.b16 %v5001
    %v5165 = vunpack.c.h.b16 %v5001
    %v5166 = vunpack.c.l.b16 %v5002
    %v5167 = vunpack.c.h.b16 %v5002
    %v5168 = vunpack.c.l.b16 %v5003
    %v5169 = vunpack.c.h.b16 %v5003
    %v5170 = vunpack.c.l.b16 %v5004
    %v5171 = vunpack.c.h.b16 %v5004
    %v5172 = vunpack.c.l.b16 %v5005
    %v5173 = vunpack.c.h.b16 %v5005
    %v5174 = vunpack.c.l.b16 %v5006
    %v5175 = vunpack.c.h.b16 %v5006
    %v5176 = vunpack.c.l.b16 %v5007
    %v5177 = vunpack.c.h.b16 %v5007
    %v5178 = vunpack.c.l.b16 %v5008
    %v5179 = vunpack.c.h.b16 %v5008
    %v5180 = vunpack.c.l.b16 %v5009
    %v5181 = vunpack.c.h.b16 %v5009
    %v5182 = vunpack.c.l.b16 %v5010
    %v5183 = vunpack.c.h.b16 %v5010
    %v5184 = vunpack.c.l.b16 %v5011
    %v5185 = vunpack.c.h.b16 %v5011
    %v5186 = vunpack.c.l.b16 %v5012
    %v5187 = vunpack.c.h.b16 %v5012
    %v5188 = vunpack.c.l.b16 %v5013
    %v5189 = vunpack.c.h.b16 %v5013
    %v5190 = vunpack.c.l.b16 %v5014
    %v5191 = vunpack.c.h.b16 %v5014
    %v5192 = vunpack.c.l.b16 %v5015
    %v5193 = vunpack.c.h.b16 %v5015
    %v5194 = vunpack.c.l.b16 %v5016
    %v5195 = vunpack.c.h.b16 %v5016
    %v5196 = vunpack.c.l.b16 %v5017
    %v5197 = vunpack.c.h.b16 %v5017
    %v5198 = vunpack.c.l.b16 %v5018
    %v5199 = vunpack.c.h.b16 %v5018
    %v5200 = vunpack.c.l.b16 %v5019
    %v5201 = vunpack.c.h.b16 %v5019
    %v5202 = vunpack.c.l.b16 %v5020
    %v5203 = vunpack.c.h.b16 %v5020
    %v5204 = vunpack.c.l.b16 %v5021
    %v5205 = vunpack.c.h.b16 %v5021
    %v5206 = vunpack.c.l.b16 %v5022
    %v5207 = vunpack.c.h.b16 %v5022
    %v5208 = vunpack.c.l.b16 %v5023
    %v5209 = vunpack.c.h.b16 %v5023
    %v5210 = vunpack.c.l.b16 %v5024
    %v5211 = vunpack.c.h.b16 %v5024
    %v5212 = vunpack.c.l.b16 %v5025
    %v5213 = vunpack.c.h.b16 %v5025
    %v5214 = vunpack.c.l.b16 %v5026
    %v5215 = vunpack.c.h.b16 %v5026
    %v5216 = vunpack.c.l.b16 %v5027
    %v5217 = vunpack.c.h.b16 %v5027
    %v5218 = vunpack.c.l.b16 %v5028
    %v5219 = vunpack.c.h.b16 %v5028
    %v5220 = vunpack.c.l.b16 %v5029
    %v5221 = vunpack.c.h.b16 %v5029
    %v5222 = vpack.c.b16 %v5098, %v5094
    %v5223 = vpack.c.b16 %v5099, %v5095
    %v5224 = vpack.c.b16 %v5100, %v5096
    %v5225 = vpack.c.b16 %v5101, %v5097
    %v5226 = vpack.c.b16 %v5106, %v5102
    %v5227 = vpack.c.b16 %v5107, %v5103
    %v5228 = vpack.c.b16 %v5108, %v5104
    %v5229 = vpack.c.b16 %v5109, %v5105
    %v5230 = vpack.c.b16 %v5114, %v5110
    %v5231 = vpack.c.b16 %v5115, %v5111
    %v5232 = vpack.c.b16 %v5116, %v5112
    %v5233 = vpack.c.b16 %v5117, %v5113
    %v5234 = vpack.c.b16 %v5122, %v5118
    %v5235 = vpack.c.b16 %v5123, %v5119
    %v5236 = vpack.c.b16 %v5124, %v5120
    %v5237 = vpack.c.b16 %v5125, %v5121
    %v5238 = vpack.c.b16 %v5130, %v5126
    %v5239 = vpack.c.b16 %v5131, %v5127
    %v5240 = vpack.c.b16 %v5132, %v5128
    %v5241 = vpack.c.b16 %v5133, %v5129
    %v5242 = vpack.c.b16 %v5138, %v5134
    %v5243 = vpack.c.b16 %v5139, %v5135
    %v5244 = vpack.c.b16 %v5140, %v5136
    %v5245 = vpack.c.b16 %v5141, %v5137
    %v5246 = vpack.c.b16 %v5146, %v5142
    %v5247 = vpack.c.b16 %v5147, %v5143
    %v5248 = vpack.c.b16 %v5148, %v5144
    %v5249 = vpack.c.b16 %v5149, %v5145
    %v5250 = vpack.c.b16 %v5154, %v5150
    %v5251 = vpack.c.b16 %v5155, %v5151
    %v5252 = vpack.c.b16 %v5156, %v5152
    %v5253 = vpack.c.b16 %v5157, %v5153
    %v5254 = vpack.c.b16 %v5162, %v5158
    %v5255 = vpack.c.b16 %v5163, %v5159
    %v5256 = vpack.c.b16 %v5164, %v5160
    %v5257 = vpack.c.b16 %v5165, %v5161
    %v5258 = vpack.c.b16 %v5170, %v5166
    %v5259 = vpack.c.b16 %v5171, %v5167
    %v5260 = vpack.c.b16 %v5172, %v5168
    %v5261 = vpack.c.b16 %v5173, %v5169
    %v5262 = vpack.c.b16 %v5178, %v5174
    %v5263 = vpack.c.b16 %v5179, %v5175
    %v5264 = vpack.c.b16 %v5180, %v5176
    %v5265 = vpack.c.b16 %v5181, %v5177
    %v5266 = vpack.c.b16 %v5186, %v5182
    %v5267 = vpack.c.b16 %v5187, %v5183
    %v5268 = vpack.c.b16 %v5188, %v5184
    %v5269 = vpack.c.b16 %v5189, %v5185
    %v5270 = vpack.c.b16 %v5194, %v5190
    %v5271 = vpack.c.b16 %v5195, %v5191
    %v5272 = vpack.c.b16 %v5196, %v5192
    %v5273 = vpack.c.b16 %v5197, %v5193
    %v5274 = vpack.c.b16 %v5202, %v5198
    %v5275 = vpack.c.b16 %v5203, %v5199
    %v5276 = vpack.c.b16 %v5204, %v5200
    %v5277 = vpack.c.b16 %v5205, %v5201
    %v5278 = vpack.c.b16 %v5210, %v5206
    %v5279 = vpack.c.b16 %v5211, %v5207
    %v5280 = vpack.c.b16 %v5212, %v5208
    %v5281 = vpack.c.b16 %v5213, %v5209
    %v5282 = vpack.c.b16 %v5218, %v5214
    %v5283 = vpack.c.b16 %v5219, %v5215
    %v5284 = vpack.c.b16 %v5220, %v5216
    %v5285 = vpack.c.b16 %v5221, %v5217
    %5350 = vmatprep.subr.bf16.mxu0 %v5223
    %5351 = vmatpush1.bf16.msra.mxu0 %v5222
    %5352 = vmatprep.subr.bf16.mxu0 %v5227
    %5353 = vmatpush1.bf16.msra.mxu0 %v5226
    %5354 = vmatprep.subr.bf16.mxu0 %v5231
    %5355 = vmatpush1.bf16.msra.mxu0 %v5230
    %5356 = vmatprep.subr.bf16.mxu0 %v5235
    %5357 = vmatpush1.bf16.msra.mxu0 %v5234
    %5358 = vmatprep.subr.bf16.mxu0 %v5239
    %5359 = vmatpush1.bf16.msra.mxu0 %v5238
    %5360 = vmatprep.subr.bf16.mxu0 %v5243
    %5361 = vmatpush1.bf16.msra.mxu0 %v5242
    %5362 = vmatprep.subr.bf16.mxu0 %v5247
    %5363 = vmatpush1.bf16.msra.mxu0 %v5246
    %5364 = vmatprep.subr.bf16.mxu0 %v5251
    %5365 = vmatpush1.bf16.msra.mxu0 %v5250
    %5366 = vmatprep.subr.bf16.mxu0 %v5255
    %5367 = vmatpush1.bf16.msra.mxu0 %v5254
    %5368 = vmatprep.subr.bf16.mxu0 %v5259
    %5369 = vmatpush1.bf16.msra.mxu0 %v5258
    %5370 = vmatprep.subr.bf16.mxu0 %v5263
    %5371 = vmatpush1.bf16.msra.mxu0 %v5262
    %5372 = vmatprep.subr.bf16.mxu0 %v5267
    %5373 = vmatpush1.bf16.msra.mxu0 %v5266
    %5374 = vmatprep.subr.bf16.mxu0 %v5271
    %5375 = vmatpush1.bf16.msra.mxu0 %v5270
    %5376 = vmatprep.subr.bf16.mxu0 %v5275
    %5377 = vmatpush1.bf16.msra.mxu0 %v5274
    %5378 = vmatprep.subr.bf16.mxu0 %v5279
    %5379 = vmatpush1.bf16.msra.mxu0 %v5278
    %5380 = vmatprep.subr.bf16.mxu0 %v5283
    %5381 = vmatpush1.bf16.msra.mxu0 %v5282
    %5382 = vmatprep.mubr.bf16.mxu0 %v4965
    %5383 = vmatmul.mubr.bf16.gmra.mrb[0].mxu0 %v4964
    %v5384 = vpop.f32.mrb[0].mxu0
    %v5385 = vadd.f32 0.0, %v5384
    %v5386 = vpop.f32.mrb[0].mxu0
    %v5387 = vadd.f32 0.0, %v5386
    %v5388 = vpop.f32.mrb[0].mxu0
    %v5389 = vpop.f32.mrb[0].mxu0
    %5390 = vdwg.mxu0
    %5391 = vmatprep.subr.bf16.mxu0 %v5225
    %5392 = vmatpush1.bf16.msra.mxu0 %v5224
    %5393 = vmatprep.subr.bf16.mxu0 %v5229
    %5394 = vmatpush1.bf16.msra.mxu0 %v5228
    %5395 = vmatprep.subr.bf16.mxu0 %v5233
    %5396 = vmatpush1.bf16.msra.mxu0 %v5232
    %5397 = vmatprep.subr.bf16.mxu0 %v5237
    %5398 = vmatpush1.bf16.msra.mxu0 %v5236
    %5399 = vmatprep.subr.bf16.mxu0 %v5241
    %5400 = vmatpush1.bf16.msra.mxu0 %v5240
    %5401 = vmatprep.subr.bf16.mxu0 %v5245
    %5402 = vmatpush1.bf16.msra.mxu0 %v5244
    %5403 = vmatprep.subr.bf16.mxu0 %v5249
    %5404 = vmatpush1.bf16.msra.mxu0 %v5248
    %5405 = vmatprep.subr.bf16.mxu0 %v5253
    %5406 = vmatpush1.bf16.msra.mxu0 %v5252
    %5407 = vmatprep.subr.bf16.mxu0 %v5257
    %5408 = vmatpush1.bf16.msra.mxu0 %v5256
    %5409 = vmatprep.subr.bf16.mxu0 %v5261
    %5410 = vmatpush1.bf16.msra.mxu0 %v5260
    %5411 = vmatprep.subr.bf16.mxu0 %v5265
    %5412 = vmatpush1.bf16.msra.mxu0 %v5264
    %5413 = vmatprep.subr.bf16.mxu0 %v5269
    %5414 = vmatpush1.bf16.msra.mxu0 %v5268
    %5415 = vmatprep.subr.bf16.mxu0 %v5273
    %5416 = vmatpush1.bf16.msra.mxu0 %v5272
    %5417 = vmatprep.subr.bf16.mxu0 %v5277
    %5418 = vmatpush1.bf16.msra.mxu0 %v5276
    %5419 = vmatprep.subr.bf16.mxu0 %v5281
    %5420 = vmatpush1.bf16.msra.mxu0 %v5280
    %5421 = vmatprep.subr.bf16.mxu0 %v5285
    %5422 = vmatpush1.bf16.msra.mxu0 %v5284
    %5423 = vmatprep.mubr.bf16.mxu0 %v4965
    %5424 = vmatmul.mubr.bf16.gmra.mrb[0].mxu0 %v4964
    %v5425 = vpop.f32.mrb[0].mxu0
    %v5426 = vadd.f32 0.0, %v5425
    %v5427 = vpop.f32.mrb[0].mxu0
    %v5428 = vadd.f32 0.0, %v5427
    %v5429 = vpop.f32.mrb[0].mxu0
    %v5430 = vpop.f32.mrb[0].mxu0
    %5431 = vdwg.mxu0
    %v5432 = vadd.f32 %v4958, %v5385
    %v5433 = vadd.f32 %v4959, %v5387
    %v5434 = vadd.f32 %v4960, %v5426
    %v5435 = vadd.f32 %v4961, %v5428
    %v5436 = vxor.u32 %v5432, 2147483648
    %v5437 = vxor.u32 %v5433, 2147483648
    %v5438 = vxor.u32 %v5434, 2147483648
    %v5439 = vmul.f32 %v5436, 1.442695
    %v5440 = vpow.pop %v5439
    %v5441 = vmul.f32 %v5437, 1.442695
    %v5442 = vpow.pop %v5441
    %v5443 = vmul.f32 %v5438, 1.442695
    %v5444 = vpow.pop %v5443
    %v5445 = vadd.f32 %v5440, 1.0
    %v5446 = vadd.f32 %v5442, 1.0
    %v5447 = vadd.f32 %v5444, 1.0
    %v5448 = vrcp.pop %v5445
    %v5449 = vmul.f32 1.0, %v5448
    %v5450 = vrcp.pop %v5446
    %v5451 = vmul.f32 1.0, %v5450
    %v5452 = vrcp.pop %v5447
    %v5453 = vmul.f32 1.0, %v5452
    %v5454 = vtanh.pop %v5435
    %v5455 = vmul.f32 %v5451, %v4930
    %v5456 = vmul.f32 %v5449, %v5454
    %v5457 = vadd.f32 %v5455, %v5456
    %v5458 = vtanh.pop %v5457
    %v5459 = vmul.f32 %v5453, %v5458
    %v5461 = vrot.slane %v5459, 4
    %5463 = vst [vmem:[#allocation3 + $0x10] sm:$0x30] %v5461
    %5464 = vst [vmem:[#allocation3 + $0x8] sm:$0xc] %v5459
    %v5465 = vld [vmem:[#allocation2 + $0x40] sm:$0xc0]
    %v5466 = vld [vmem:[#allocation2 + $0x48] sm:$0xc0]
    %v5467 = vld [vmem:[#allocation2 + $0x50] sm:$0xc0]
    %v5468 = vld [vmem:[#allocation2 + $0x58] sm:$0xc0]
    %v5469 = vld [vmem:[#allocation2 + $0x20] sm:$0x3]
    %v5470 = vld [vmem:[#allocation2 + $0x28] sm:$0x3]
    %v5471 = vld [vmem:[#allocation2 + $0x30] sm:$0x3]
    %v5472 = vld [vmem:[#allocation2 + $0x38] sm:$0x3]
    %v5477 = vrot.slane %v5465, 6
    %v5478 = vrot.slane %v5466, 6
    %v5479 = vrot.slane %v5467, 6
    %v5480 = vrot.slane %v5468, 6
    %v5489 = vrot.slane %v5469, 6
    %v5490 = vrot.slane %v5470, 6
    %v5491 = vrot.slane %v5471, 6
    %v5492 = vrot.slane %v5472, 6
    %v5497 = vsel %vm1759, %v5477, %v5489
    %v5498 = vsel %vm1759, %v5478, %v5490
    %v5499 = vsel %vm1759, %v5479, %v5491
    %v5500 = vsel %vm1759, %v5480, %v5492
    %v5501 = vmul.f32 %v5459, %v163
    %v5502 = vmul.f32 %v5459, %v164
    %v5503 = vpack.c.bf16 %v5501, %v5501
    %v5504 = vpack.c.bf16 %v5502, %v5502
    %v5505 = vld [vmem:[%s3] sm:$0xff]
    %v5506 = vld [vmem:[%s3 + $0x8] sm:$0xff]
    %v5507 = vld [vmem:[%s3 + $0x10] sm:$0xff]
    %v5508 = vld [vmem:[%s3 + $0x18] sm:$0xff]
    %v5509 = vld [vmem:[%s3 + $0x20] sm:$0xff]
    %v5510 = vld [vmem:[%s3 + $0x28] sm:$0xff]
    %v5511 = vld [vmem:[%s3 + $0x30] sm:$0xff]
    %v5512 = vld [vmem:[%s3 + $0x38] sm:$0xff]
    %v5513 = vld [vmem:[%s3 + $0x40] sm:$0xff]
    %v5514 = vld [vmem:[%s3 + $0x48] sm:$0xff]
    %v5515 = vld [vmem:[%s3 + $0x50] sm:$0xff]
    %v5516 = vld [vmem:[%s3 + $0x58] sm:$0xff]
    %v5517 = vld [vmem:[%s3 + $0x60] sm:$0xff]
    %v5518 = vld [vmem:[%s3 + $0x68] sm:$0xff]
    %v5519 = vld [vmem:[%s3 + $0x70] sm:$0xff]
    %v5520 = vld [vmem:[%s3 + $0x78] sm:$0xff]
    %v5521 = vld [vmem:[%s3 + $0x80] sm:$0xff]
    %v5522 = vld [vmem:[%s3 + $0x88] sm:$0xff]
    %v5523 = vld [vmem:[%s3 + $0x90] sm:$0xff]
    %v5524 = vld [vmem:[%s3 + $0x98] sm:$0xff]
    %v5525 = vld [vmem:[%s3 + $0xa0] sm:$0xff]
    %v5526 = vld [vmem:[%s3 + $0xa8] sm:$0xff]
    %v5527 = vld [vmem:[%s3 + $0xb0] sm:$0xff]
    %v5528 = vld [vmem:[%s3 + $0xb8] sm:$0xff]
    %v5529 = vld [vmem:[%s3 + $0xc0] sm:$0xff]
    %v5530 = vld [vmem:[%s3 + $0xc8] sm:$0xff]
    %v5531 = vld [vmem:[%s3 + $0xd0] sm:$0xff]
    %v5532 = vld [vmem:[%s3 + $0xd8] sm:$0xff]
    %v5533 = vld [vmem:[%s3 + $0xe0] sm:$0xff]
    %v5534 = vld [vmem:[%s3 + $0xe8] sm:$0xff]
    %v5535 = vld [vmem:[%s3 + $0xf0] sm:$0xff]
    %v5536 = vld [vmem:[%s3 + $0xf8] sm:$0xff]
    %v5537 = vld [vmem:[%s3 + $0x100] sm:$0xff]
    %v5538 = vld [vmem:[%s3 + $0x108] sm:$0xff]
    %v5539 = vld [vmem:[%s3 + $0x110] sm:$0xff]
    %v5540 = vld [vmem:[%s3 + $0x118] sm:$0xff]
    %v5541 = vld [vmem:[%s3 + $0x120] sm:$0xff]
    %v5542 = vld [vmem:[%s3 + $0x128] sm:$0xff]
    %v5543 = vld [vmem:[%s3 + $0x130] sm:$0xff]
    %v5544 = vld [vmem:[%s3 + $0x138] sm:$0xff]
    %v5545 = vld [vmem:[%s3 + $0x140] sm:$0xff]
    %v5546 = vld [vmem:[%s3 + $0x148] sm:$0xff]
    %v5547 = vld [vmem:[%s3 + $0x150] sm:$0xff]
    %v5548 = vld [vmem:[%s3 + $0x158] sm:$0xff]
    %v5549 = vld [vmem:[%s3 + $0x160] sm:$0xff]
    %v5550 = vld [vmem:[%s3 + $0x168] sm:$0xff]
    %v5551 = vld [vmem:[%s3 + $0x170] sm:$0xff]
    %v5552 = vld [vmem:[%s3 + $0x178] sm:$0xff]
    %v5553 = vld [vmem:[%s3 + $0x180] sm:$0xff]
    %v5554 = vld [vmem:[%s3 + $0x188] sm:$0xff]
    %v5555 = vld [vmem:[%s3 + $0x190] sm:$0xff]
    %v5556 = vld [vmem:[%s3 + $0x198] sm:$0xff]
    %v5557 = vld [vmem:[%s3 + $0x1a0] sm:$0xff]
    %v5558 = vld [vmem:[%s3 + $0x1a8] sm:$0xff]
    %v5559 = vld [vmem:[%s3 + $0x1b0] sm:$0xff]
    %v5560 = vld [vmem:[%s3 + $0x1b8] sm:$0xff]
    %v5561 = vld [vmem:[%s3 + $0x1c0] sm:$0xff]
    %v5562 = vld [vmem:[%s3 + $0x1c8] sm:$0xff]
    %v5563 = vld [vmem:[%s3 + $0x1d0] sm:$0xff]
    %v5564 = vld [vmem:[%s3 + $0x1d8] sm:$0xff]
    %v5565 = vld [vmem:[%s3 + $0x1e0] sm:$0xff]
    %v5566 = vld [vmem:[%s3 + $0x1e8] sm:$0xff]
    %v5567 = vld [vmem:[%s3 + $0x1f0] sm:$0xff]
    %v5568 = vld [vmem:[%s3 + $0x1f8] sm:$0xff]
    %v5633 = vunpack.c.l.b16 %v5505
    %v5634 = vunpack.c.h.b16 %v5505
    %v5635 = vunpack.c.l.b16 %v5506
    %v5636 = vunpack.c.h.b16 %v5506
    %v5637 = vunpack.c.l.b16 %v5507
    %v5638 = vunpack.c.h.b16 %v5507
    %v5639 = vunpack.c.l.b16 %v5508
    %v5640 = vunpack.c.h.b16 %v5508
    %v5641 = vunpack.c.l.b16 %v5509
    %v5642 = vunpack.c.h.b16 %v5509
    %v5643 = vunpack.c.l.b16 %v5510
    %v5644 = vunpack.c.h.b16 %v5510
    %v5645 = vunpack.c.l.b16 %v5511
    %v5646 = vunpack.c.h.b16 %v5511
    %v5647 = vunpack.c.l.b16 %v5512
    %v5648 = vunpack.c.h.b16 %v5512
    %v5649 = vunpack.c.l.b16 %v5513
    %v5650 = vunpack.c.h.b16 %v5513
    %v5651 = vunpack.c.l.b16 %v5514
    %v5652 = vunpack.c.h.b16 %v5514
    %v5653 = vunpack.c.l.b16 %v5515
    %v5654 = vunpack.c.h.b16 %v5515
    %v5655 = vunpack.c.l.b16 %v5516
    %v5656 = vunpack.c.h.b16 %v5516
    %v5657 = vunpack.c.l.b16 %v5517
    %v5658 = vunpack.c.h.b16 %v5517
    %v5659 = vunpack.c.l.b16 %v5518
    %v5660 = vunpack.c.h.b16 %v5518
    %v5661 = vunpack.c.l.b16 %v5519
    %v5662 = vunpack.c.h.b16 %v5519
    %v5663 = vunpack.c.l.b16 %v5520
    %v5664 = vunpack.c.h.b16 %v5520
    %v5665 = vunpack.c.l.b16 %v5521
    %v5666 = vunpack.c.h.b16 %v5521
    %v5667 = vunpack.c.l.b16 %v5522
    %v5668 = vunpack.c.h.b16 %v5522
    %v5669 = vunpack.c.l.b16 %v5523
    %v5670 = vunpack.c.h.b16 %v5523
    %v5671 = vunpack.c.l.b16 %v5524
    %v5672 = vunpack.c.h.b16 %v5524
    %v5673 = vunpack.c.l.b16 %v5525
    %v5674 = vunpack.c.h.b16 %v5525
    %v5675 = vunpack.c.l.b16 %v5526
    %v5676 = vunpack.c.h.b16 %v5526
    %v5677 = vunpack.c.l.b16 %v5527
    %v5678 = vunpack.c.h.b16 %v5527
    %v5679 = vunpack.c.l.b16 %v5528
    %v5680 = vunpack.c.h.b16 %v5528
    %v5681 = vunpack.c.l.b16 %v5529
    %v5682 = vunpack.c.h.b16 %v5529
    %v5683 = vunpack.c.l.b16 %v5530
    %v5684 = vunpack.c.h.b16 %v5530
    %v5685 = vunpack.c.l.b16 %v5531
    %v5686 = vunpack.c.h.b16 %v5531
    %v5687 = vunpack.c.l.b16 %v5532
    %v5688 = vunpack.c.h.b16 %v5532
    %v5689 = vunpack.c.l.b16 %v5533
    %v5690 = vunpack.c.h.b16 %v5533
    %v5691 = vunpack.c.l.b16 %v5534
    %v5692 = vunpack.c.h.b16 %v5534
    %v5693 = vunpack.c.l.b16 %v5535
    %v5694 = vunpack.c.h.b16 %v5535
    %v5695 = vunpack.c.l.b16 %v5536
    %v5696 = vunpack.c.h.b16 %v5536
    %v5697 = vunpack.c.l.b16 %v5537
    %v5698 = vunpack.c.h.b16 %v5537
    %v5699 = vunpack.c.l.b16 %v5538
    %v5700 = vunpack.c.h.b16 %v5538
    %v5701 = vunpack.c.l.b16 %v5539
    %v5702 = vunpack.c.h.b16 %v5539
    %v5703 = vunpack.c.l.b16 %v5540
    %v5704 = vunpack.c.h.b16 %v5540
    %v5705 = vunpack.c.l.b16 %v5541
    %v5706 = vunpack.c.h.b16 %v5541
    %v5707 = vunpack.c.l.b16 %v5542
    %v5708 = vunpack.c.h.b16 %v5542
    %v5709 = vunpack.c.l.b16 %v5543
    %v5710 = vunpack.c.h.b16 %v5543
    %v5711 = vunpack.c.l.b16 %v5544
    %v5712 = vunpack.c.h.b16 %v5544
    %v5713 = vunpack.c.l.b16 %v5545
    %v5714 = vunpack.c.h.b16 %v5545
    %v5715 = vunpack.c.l.b16 %v5546
    %v5716 = vunpack.c.h.b16 %v5546
    %v5717 = vunpack.c.l.b16 %v5547
    %v5718 = vunpack.c.h.b16 %v5547
    %v5719 = vunpack.c.l.b16 %v5548
    %v5720 = vunpack.c.h.b16 %v5548
    %v5721 = vunpack.c.l.b16 %v5549
    %v5722 = vunpack.c.h.b16 %v5549
    %v5723 = vunpack.c.l.b16 %v5550
    %v5724 = vunpack.c.h.b16 %v5550
    %v5725 = vunpack.c.l.b16 %v5551
    %v5726 = vunpack.c.h.b16 %v5551
    %v5727 = vunpack.c.l.b16 %v5552
    %v5728 = vunpack.c.h.b16 %v5552
    %v5729 = vunpack.c.l.b16 %v5553
    %v5730 = vunpack.c.h.b16 %v5553
    %v5731 = vunpack.c.l.b16 %v5554
    %v5732 = vunpack.c.h.b16 %v5554
    %v5733 = vunpack.c.l.b16 %v5555
    %v5734 = vunpack.c.h.b16 %v5555
    %v5735 = vunpack.c.l.b16 %v5556
    %v5736 = vunpack.c.h.b16 %v5556
    %v5737 = vunpack.c.l.b16 %v5557
    %v5738 = vunpack.c.h.b16 %v5557
    %v5739 = vunpack.c.l.b16 %v5558
    %v5740 = vunpack.c.h.b16 %v5558
    %v5741 = vunpack.c.l.b16 %v5559
    %v5742 = vunpack.c.h.b16 %v5559
    %v5743 = vunpack.c.l.b16 %v5560
    %v5744 = vunpack.c.h.b16 %v5560
    %v5745 = vunpack.c.l.b16 %v5561
    %v5746 = vunpack.c.h.b16 %v5561
    %v5747 = vunpack.c.l.b16 %v5562
    %v5748 = vunpack.c.h.b16 %v5562
    %v5749 = vunpack.c.l.b16 %v5563
    %v5750 = vunpack.c.h.b16 %v5563
    %v5751 = vunpack.c.l.b16 %v5564
    %v5752 = vunpack.c.h.b16 %v5564
    %v5753 = vunpack.c.l.b16 %v5565
    %v5754 = vunpack.c.h.b16 %v5565
    %v5755 = vunpack.c.l.b16 %v5566
    %v5756 = vunpack.c.h.b16 %v5566
    %v5757 = vunpack.c.l.b16 %v5567
    %v5758 = vunpack.c.h.b16 %v5567
    %v5759 = vunpack.c.l.b16 %v5568
    %v5760 = vunpack.c.h.b16 %v5568
    %v5761 = vpack.c.b16 %v5637, %v5633
    %v5762 = vpack.c.b16 %v5638, %v5634
    %v5763 = vpack.c.b16 %v5639, %v5635
    %v5764 = vpack.c.b16 %v5640, %v5636
    %v5765 = vpack.c.b16 %v5645, %v5641
    %v5766 = vpack.c.b16 %v5646, %v5642
    %v5767 = vpack.c.b16 %v5647, %v5643
    %v5768 = vpack.c.b16 %v5648, %v5644
    %v5769 = vpack.c.b16 %v5653, %v5649
    %v5770 = vpack.c.b16 %v5654, %v5650
    %v5771 = vpack.c.b16 %v5655, %v5651
    %v5772 = vpack.c.b16 %v5656, %v5652
    %v5773 = vpack.c.b16 %v5661, %v5657
    %v5774 = vpack.c.b16 %v5662, %v5658
    %v5775 = vpack.c.b16 %v5663, %v5659
    %v5776 = vpack.c.b16 %v5664, %v5660
    %v5777 = vpack.c.b16 %v5669, %v5665
    %v5778 = vpack.c.b16 %v5670, %v5666
    %v5779 = vpack.c.b16 %v5671, %v5667
    %v5780 = vpack.c.b16 %v5672, %v5668
    %v5781 = vpack.c.b16 %v5677, %v5673
    %v5782 = vpack.c.b16 %v5678, %v5674
    %v5783 = vpack.c.b16 %v5679, %v5675
    %v5784 = vpack.c.b16 %v5680, %v5676
    %v5785 = vpack.c.b16 %v5685, %v5681
    %v5786 = vpack.c.b16 %v5686, %v5682
    %v5787 = vpack.c.b16 %v5687, %v5683
    %v5788 = vpack.c.b16 %v5688, %v5684
    %v5789 = vpack.c.b16 %v5693, %v5689
    %v5790 = vpack.c.b16 %v5694, %v5690
    %v5791 = vpack.c.b16 %v5695, %v5691
    %v5792 = vpack.c.b16 %v5696, %v5692
    %v5793 = vpack.c.b16 %v5701, %v5697
    %v5794 = vpack.c.b16 %v5702, %v5698
    %v5795 = vpack.c.b16 %v5703, %v5699
    %v5796 = vpack.c.b16 %v5704, %v5700
    %v5797 = vpack.c.b16 %v5709, %v5705
    %v5798 = vpack.c.b16 %v5710, %v5706
    %v5799 = vpack.c.b16 %v5711, %v5707
    %v5800 = vpack.c.b16 %v5712, %v5708
    %v5801 = vpack.c.b16 %v5717, %v5713
    %v5802 = vpack.c.b16 %v5718, %v5714
    %v5803 = vpack.c.b16 %v5719, %v5715
    %v5804 = vpack.c.b16 %v5720, %v5716
    %v5805 = vpack.c.b16 %v5725, %v5721
    %v5806 = vpack.c.b16 %v5726, %v5722
    %v5807 = vpack.c.b16 %v5727, %v5723
    %v5808 = vpack.c.b16 %v5728, %v5724
    %v5809 = vpack.c.b16 %v5733, %v5729
    %v5810 = vpack.c.b16 %v5734, %v5730
    %v5811 = vpack.c.b16 %v5735, %v5731
    %v5812 = vpack.c.b16 %v5736, %v5732
    %v5813 = vpack.c.b16 %v5741, %v5737
    %v5814 = vpack.c.b16 %v5742, %v5738
    %v5815 = vpack.c.b16 %v5743, %v5739
    %v5816 = vpack.c.b16 %v5744, %v5740
    %v5817 = vpack.c.b16 %v5749, %v5745
    %v5818 = vpack.c.b16 %v5750, %v5746
    %v5819 = vpack.c.b16 %v5751, %v5747
    %v5820 = vpack.c.b16 %v5752, %v5748
    %v5821 = vpack.c.b16 %v5757, %v5753
    %v5822 = vpack.c.b16 %v5758, %v5754
    %v5823 = vpack.c.b16 %v5759, %v5755
    %v5824 = vpack.c.b16 %v5760, %v5756
    %5889 = vmatprep.subr.bf16.mxu0 %v5762
    %5890 = vmatpush1.bf16.msra.mxu0 %v5761
    %5891 = vmatprep.subr.bf16.mxu0 %v5766
    %5892 = vmatpush1.bf16.msra.mxu0 %v5765
    %5893 = vmatprep.subr.bf16.mxu0 %v5770
    %5894 = vmatpush1.bf16.msra.mxu0 %v5769
    %5895 = vmatprep.subr.bf16.mxu0 %v5774
    %5896 = vmatpush1.bf16.msra.mxu0 %v5773
    %5897 = vmatprep.subr.bf16.mxu0 %v5778
    %5898 = vmatpush1.bf16.msra.mxu0 %v5777
    %5899 = vmatprep.subr.bf16.mxu0 %v5782
    %5900 = vmatpush1.bf16.msra.mxu0 %v5781
    %5901 = vmatprep.subr.bf16.mxu0 %v5786
    %5902 = vmatpush1.bf16.msra.mxu0 %v5785
    %5903 = vmatprep.subr.bf16.mxu0 %v5790
    %5904 = vmatpush1.bf16.msra.mxu0 %v5789
    %5905 = vmatprep.subr.bf16.mxu0 %v5794
    %5906 = vmatpush1.bf16.msra.mxu0 %v5793
    %5907 = vmatprep.subr.bf16.mxu0 %v5798
    %5908 = vmatpush1.bf16.msra.mxu0 %v5797
    %5909 = vmatprep.subr.bf16.mxu0 %v5802
    %5910 = vmatpush1.bf16.msra.mxu0 %v5801
    %5911 = vmatprep.subr.bf16.mxu0 %v5806
    %5912 = vmatpush1.bf16.msra.mxu0 %v5805
    %5913 = vmatprep.subr.bf16.mxu0 %v5810
    %5914 = vmatpush1.bf16.msra.mxu0 %v5809
    %5915 = vmatprep.subr.bf16.mxu0 %v5814
    %5916 = vmatpush1.bf16.msra.mxu0 %v5813
    %5917 = vmatprep.subr.bf16.mxu0 %v5818
    %5918 = vmatpush1.bf16.msra.mxu0 %v5817
    %5919 = vmatprep.subr.bf16.mxu0 %v5822
    %5920 = vmatpush1.bf16.msra.mxu0 %v5821
    %5921 = vmatprep.mubr.bf16.mxu0 %v5504
    %5922 = vmatmul.mubr.bf16.gmra.mrb[0].mxu0 %v5503
    %v5923 = vpop.f32.mrb[0].mxu0
    %v5924 = vadd.f32 0.0, %v5923
    %v5925 = vpop.f32.mrb[0].mxu0
    %v5926 = vadd.f32 0.0, %v5925
    %v5927 = vpop.f32.mrb[0].mxu0
    %v5928 = vpop.f32.mrb[0].mxu0
    %5929 = vdwg.mxu0
    %5930 = vmatprep.subr.bf16.mxu0 %v5764
    %5931 = vmatpush1.bf16.msra.mxu0 %v5763
    %5932 = vmatprep.subr.bf16.mxu0 %v5768
    %5933 = vmatpush1.bf16.msra.mxu0 %v5767
    %5934 = vmatprep.subr.bf16.mxu0 %v5772
    %5935 = vmatpush1.bf16.msra.mxu0 %v5771
    %5936 = vmatprep.subr.bf16.mxu0 %v5776
    %5937 = vmatpush1.bf16.msra.mxu0 %v5775
    %5938 = vmatprep.subr.bf16.mxu0 %v5780
    %5939 = vmatpush1.bf16.msra.mxu0 %v5779
    %5940 = vmatprep.subr.bf16.mxu0 %v5784
    %5941 = vmatpush1.bf16.msra.mxu0 %v5783
    %5942 = vmatprep.subr.bf16.mxu0 %v5788
    %5943 = vmatpush1.bf16.msra.mxu0 %v5787
    %5944 = vmatprep.subr.bf16.mxu0 %v5792
    %5945 = vmatpush1.bf16.msra.mxu0 %v5791
    %5946 = vmatprep.subr.bf16.mxu0 %v5796
    %5947 = vmatpush1.bf16.msra.mxu0 %v5795
    %5948 = vmatprep.subr.bf16.mxu0 %v5800
    %5949 = vmatpush1.bf16.msra.mxu0 %v5799
    %5950 = vmatprep.subr.bf16.mxu0 %v5804
    %5951 = vmatpush1.bf16.msra.mxu0 %v5803
    %5952 = vmatprep.subr.bf16.mxu0 %v5808
    %5953 = vmatpush1.bf16.msra.mxu0 %v5807
    %5954 = vmatprep.subr.bf16.mxu0 %v5812
    %5955 = vmatpush1.bf16.msra.mxu0 %v5811
    %5956 = vmatprep.subr.bf16.mxu0 %v5816
    %5957 = vmatpush1.bf16.msra.mxu0 %v5815
    %5958 = vmatprep.subr.bf16.mxu0 %v5820
    %5959 = vmatpush1.bf16.msra.mxu0 %v5819
    %5960 = vmatprep.subr.bf16.mxu0 %v5824
    %5961 = vmatpush1.bf16.msra.mxu0 %v5823
    %5962 = vmatprep.mubr.bf16.mxu0 %v5504
    %5963 = vmatmul.mubr.bf16.gmra.mrb[0].mxu0 %v5503
    %v5964 = vpop.f32.mrb[0].mxu0
    %v5965 = vadd.f32 0.0, %v5964
    %v5966 = vpop.f32.mrb[0].mxu0
    %v5967 = vadd.f32 0.0, %v5966
    %v5968 = vpop.f32.mrb[0].mxu0
    %v5969 = vpop.f32.mrb[0].mxu0
    %5970 = vdwg.mxu0
    %v5971 = vadd.f32 %v5497, %v5924
    %v5972 = vadd.f32 %v5498, %v5926
    %v5973 = vadd.f32 %v5499, %v5965
    %v5974 = vadd.f32 %v5500, %v5967
    %v5975 = vxor.u32 %v5971, 2147483648
    %v5976 = vxor.u32 %v5972, 2147483648
    %v5977 = vxor.u32 %v5973, 2147483648
    %v5978 = vmul.f32 %v5975, 1.442695
    %v5979 = vpow.pop %v5978
    %v5980 = vmul.f32 %v5976, 1.442695
    %v5981 = vpow.pop %v5980
    %v5982 = vmul.f32 %v5977, 1.442695
    %v5983 = vpow.pop %v5982
    %v5984 = vadd.f32 %v5979, 1.0
    %v5985 = vadd.f32 %v5981, 1.0
    %v5986 = vadd.f32 %v5983, 1.0
    %v5987 = vrcp.pop %v5984
    %v5988 = vmul.f32 1.0, %v5987
    %v5989 = vrcp.pop %v5985
    %v5990 = vmul.f32 1.0, %v5989
    %v5991 = vrcp.pop %v5986
    %v5992 = vmul.f32 1.0, %v5991
    %v5993 = vtanh.pop %v5974
    %v5994 = vmul.f32 %v5990, %v5457
    %v5995 = vmul.f32 %v5988, %v5993
    %v5996 = vadd.f32 %v5994, %v5995
    %v5997 = vtanh.pop %v5996
    %v5998 = vmul.f32 %v5992, %v5997
    %v6000 = vrot.slane %v5998, 2
    %6002 = vst [vmem:[#allocation3 + $0x10] sm:$0xc0] %v6000
    %6003 = vst [vmem:[#allocation3 + $0x8] sm:$0x3] %v6000
    %v6004 = vld [vmem:[#allocation3] sm:$0xff]
    %v6005 = vld [vmem:[#allocation3 + $0x8] sm:$0xff]
    %v6006 = vld [vmem:[#allocation3 + $0x10] sm:$0xff]
    %v6007 = vld [vmem:[#allocation3 + $0x18] sm:$0xff]
    %v6008 = vpack.c.bf16 %v6006, %v6004
    %v6009 = vpack.c.bf16 %v6007, %v6005
    %v6010 = vld [vmem:[%s4] sm:$0xff]
    %v6011 = vld [vmem:[%s4 + $0x8] sm:$0xff]
    %v6012 = vld [vmem:[%s4 + $0x10] sm:$0xff]
    %v6013 = vld [vmem:[%s4 + $0x18] sm:$0xff]
    %v6014 = vld [vmem:[%s4 + $0x20] sm:$0xff]
    %v6015 = vld [vmem:[%s4 + $0x28] sm:$0xff]
    %v6016 = vld [vmem:[%s4 + $0x30] sm:$0xff]
    %v6017 = vld [vmem:[%s4 + $0x38] sm:$0xff]
    %v6018 = vld [vmem:[%s4 + $0x40] sm:$0xff]
    %v6019 = vld [vmem:[%s4 + $0x48] sm:$0xff]
    %v6020 = vld [vmem:[%s4 + $0x50] sm:$0xff]
    %v6021 = vld [vmem:[%s4 + $0x58] sm:$0xff]
    %v6022 = vld [vmem:[%s4 + $0x60] sm:$0xff]
    %v6023 = vld [vmem:[%s4 + $0x68] sm:$0xff]
    %v6024 = vld [vmem:[%s4 + $0x70] sm:$0xff]
    %v6025 = vld [vmem:[%s4 + $0x78] sm:$0xff]
    %v6026 = vld [vmem:[%s4 + $0x80] sm:$0xff]
    %v6027 = vld [vmem:[%s4 + $0x88] sm:$0xff]
    %v6028 = vld [vmem:[%s4 + $0x90] sm:$0xff]
    %v6029 = vld [vmem:[%s4 + $0x98] sm:$0xff]
    %v6030 = vld [vmem:[%s4 + $0xa0] sm:$0xff]
    %v6031 = vld [vmem:[%s4 + $0xa8] sm:$0xff]
    %v6032 = vld [vmem:[%s4 + $0xb0] sm:$0xff]
    %v6033 = vld [vmem:[%s4 + $0xb8] sm:$0xff]
    %v6034 = vld [vmem:[%s4 + $0xc0] sm:$0xff]
    %v6035 = vld [vmem:[%s4 + $0xc8] sm:$0xff]
    %v6036 = vld [vmem:[%s4 + $0xd0] sm:$0xff]
    %v6037 = vld [vmem:[%s4 + $0xd8] sm:$0xff]
    %v6038 = vld [vmem:[%s4 + $0xe0] sm:$0xff]
    %v6039 = vld [vmem:[%s4 + $0xe8] sm:$0xff]
    %v6040 = vld [vmem:[%s4 + $0xf0] sm:$0xff]
    %v6041 = vld [vmem:[%s4 + $0xf8] sm:$0xff]
    %v6042 = vld [vmem:[%s4 + $0x100] sm:$0xff]
    %v6043 = vld [vmem:[%s4 + $0x108] sm:$0xff]
    %v6044 = vld [vmem:[%s4 + $0x110] sm:$0xff]
    %v6045 = vld [vmem:[%s4 + $0x118] sm:$0xff]
    %v6046 = vld [vmem:[%s4 + $0x120] sm:$0xff]
    %v6047 = vld [vmem:[%s4 + $0x128] sm:$0xff]
    %v6048 = vld [vmem:[%s4 + $0x130] sm:$0xff]
    %v6049 = vld [vmem:[%s4 + $0x138] sm:$0xff]
    %v6050 = vld [vmem:[%s4 + $0x140] sm:$0xff]
    %v6051 = vld [vmem:[%s4 + $0x148] sm:$0xff]
    %v6052 = vld [vmem:[%s4 + $0x150] sm:$0xff]
    %v6053 = vld [vmem:[%s4 + $0x158] sm:$0xff]
    %v6054 = vld [vmem:[%s4 + $0x160] sm:$0xff]
    %v6055 = vld [vmem:[%s4 + $0x168] sm:$0xff]
    %v6056 = vld [vmem:[%s4 + $0x170] sm:$0xff]
    %v6057 = vld [vmem:[%s4 + $0x178] sm:$0xff]
    %v6058 = vld [vmem:[%s4 + $0x180] sm:$0xff]
    %v6059 = vld [vmem:[%s4 + $0x188] sm:$0xff]
    %v6060 = vld [vmem:[%s4 + $0x190] sm:$0xff]
    %v6061 = vld [vmem:[%s4 + $0x198] sm:$0xff]
    %v6062 = vld [vmem:[%s4 + $0x1a0] sm:$0xff]
    %v6063 = vld [vmem:[%s4 + $0x1a8] sm:$0xff]
    %v6064 = vld [vmem:[%s4 + $0x1b0] sm:$0xff]
    %v6065 = vld [vmem:[%s4 + $0x1b8] sm:$0xff]
    %v6066 = vld [vmem:[%s4 + $0x1c0] sm:$0xff]
    %v6067 = vld [vmem:[%s4 + $0x1c8] sm:$0xff]
    %v6068 = vld [vmem:[%s4 + $0x1d0] sm:$0xff]
    %v6069 = vld [vmem:[%s4 + $0x1d8] sm:$0xff]
    %v6070 = vld [vmem:[%s4 + $0x1e0] sm:$0xff]
    %v6071 = vld [vmem:[%s4 + $0x1e8] sm:$0xff]
    %v6072 = vld [vmem:[%s4 + $0x1f0] sm:$0xff]
    %v6073 = vld [vmem:[%s4 + $0x1f8] sm:$0xff]
    %v6074 = vld [vmem:[%s4 + $0x200] sm:$0xff]
    %v6075 = vld [vmem:[%s4 + $0x208] sm:$0xff]
    %v6076 = vld [vmem:[%s4 + $0x210] sm:$0xff]
    %v6077 = vld [vmem:[%s4 + $0x218] sm:$0xff]
    %v6078 = vld [vmem:[%s4 + $0x220] sm:$0xff]
    %v6079 = vld [vmem:[%s4 + $0x228] sm:$0xff]
    %v6080 = vld [vmem:[%s4 + $0x230] sm:$0xff]
    %v6081 = vld [vmem:[%s4 + $0x238] sm:$0xff]
    %v6082 = vld [vmem:[%s4 + $0x240] sm:$0xff]
    %v6083 = vld [vmem:[%s4 + $0x248] sm:$0xff]
    %v6084 = vld [vmem:[%s4 + $0x250] sm:$0xff]
    %v6085 = vld [vmem:[%s4 + $0x258] sm:$0xff]
    %v6086 = vld [vmem:[%s4 + $0x260] sm:$0xff]
    %v6087 = vld [vmem:[%s4 + $0x268] sm:$0xff]
    %v6088 = vld [vmem:[%s4 + $0x270] sm:$0xff]
    %v6089 = vld [vmem:[%s4 + $0x278] sm:$0xff]
    %v6090 = vld [vmem:[%s4 + $0x280] sm:$0xff]
    %v6091 = vld [vmem:[%s4 + $0x288] sm:$0xff]
    %v6092 = vld [vmem:[%s4 + $0x290] sm:$0xff]
    %v6093 = vld [vmem:[%s4 + $0x298] sm:$0xff]
    %v6094 = vld [vmem:[%s4 + $0x2a0] sm:$0xff]
    %v6095 = vld [vmem:[%s4 + $0x2a8] sm:$0xff]
    %v6096 = vld [vmem:[%s4 + $0x2b0] sm:$0xff]
    %v6097 = vld [vmem:[%s4 + $0x2b8] sm:$0xff]
    %v6098 = vld [vmem:[%s4 + $0x2c0] sm:$0xff]
    %v6099 = vld [vmem:[%s4 + $0x2c8] sm:$0xff]
    %v6100 = vld [vmem:[%s4 + $0x2d0] sm:$0xff]
    %v6101 = vld [vmem:[%s4 + $0x2d8] sm:$0xff]
    %v6102 = vld [vmem:[%s4 + $0x2e0] sm:$0xff]
    %v6103 = vld [vmem:[%s4 + $0x2e8] sm:$0xff]
    %v6104 = vld [vmem:[%s4 + $0x2f0] sm:$0xff]
    %v6105 = vld [vmem:[%s4 + $0x2f8] sm:$0xff]
    %v6106 = vld [vmem:[%s4 + $0x300] sm:$0xff]
    %v6107 = vld [vmem:[%s4 + $0x308] sm:$0xff]
    %v6108 = vld [vmem:[%s4 + $0x310] sm:$0xff]
    %v6109 = vld [vmem:[%s4 + $0x318] sm:$0xff]
    %v6110 = vld [vmem:[%s4 + $0x320] sm:$0xff]
    %v6111 = vld [vmem:[%s4 + $0x328] sm:$0xff]
    %v6112 = vld [vmem:[%s4 + $0x330] sm:$0xff]
    %v6113 = vld [vmem:[%s4 + $0x338] sm:$0xff]
    %v6114 = vld [vmem:[%s4 + $0x340] sm:$0xff]
    %v6115 = vld [vmem:[%s4 + $0x348] sm:$0xff]
    %v6116 = vld [vmem:[%s4 + $0x350] sm:$0xff]
    %v6117 = vld [vmem:[%s4 + $0x358] sm:$0xff]
    %v6118 = vld [vmem:[%s4 + $0x360] sm:$0xff]
    %v6119 = vld [vmem:[%s4 + $0x368] sm:$0xff]
    %v6120 = vld [vmem:[%s4 + $0x370] sm:$0xff]
    %v6121 = vld [vmem:[%s4 + $0x378] sm:$0xff]
    %v6122 = vld [vmem:[%s4 + $0x380] sm:$0xff]
    %v6123 = vld [vmem:[%s4 + $0x388] sm:$0xff]
    %v6124 = vld [vmem:[%s4 + $0x390] sm:$0xff]
    %v6125 = vld [vmem:[%s4 + $0x398] sm:$0xff]
    %v6126 = vld [vmem:[%s4 + $0x3a0] sm:$0xff]
    %v6127 = vld [vmem:[%s4 + $0x3a8] sm:$0xff]
    %v6128 = vld [vmem:[%s4 + $0x3b0] sm:$0xff]
    %v6129 = vld [vmem:[%s4 + $0x3b8] sm:$0xff]
    %v6130 = vld [vmem:[%s4 + $0x3c0] sm:$0xff]
    %v6131 = vld [vmem:[%s4 + $0x3c8] sm:$0xff]
    %v6132 = vld [vmem:[%s4 + $0x3d0] sm:$0xff]
    %v6133 = vld [vmem:[%s4 + $0x3d8] sm:$0xff]
    %v6134 = vld [vmem:[%s4 + $0x3e0] sm:$0xff]
    %v6135 = vld [vmem:[%s4 + $0x3e8] sm:$0xff]
    %v6136 = vld [vmem:[%s4 + $0x3f0] sm:$0xff]
    %v6137 = vld [vmem:[%s4 + $0x3f8] sm:$0xff]
    %v6138 = vld [vmem:[#allocation7] sm:$0xff]
    %v6140 = vlaneseq
    %v6141 = vshrl.u32 %v6140, 7
    %v6142 = vsub.s32 0, %v6141
    %v6143 = vrot.slane %v6138, %v6142
    %v6144 = vlaneseq
    %v6145 = vshrl.u32 %v6144, 7
    %v6146 = vsub.s32 1, %v6145
    %v6147 = vrot.slane %v6138, %v6146
    %v6148 = vlaneseq
    %v6149 = vshrl.u32 %v6148, 7
    %v6150 = vsub.s32 2, %v6149
    %v6151 = vrot.slane %v6138, %v6150
    %v6152 = vlaneseq
    %v6153 = vshrl.u32 %v6152, 7
    %v6154 = vsub.s32 3, %v6153
    %v6155 = vrot.slane %v6138, %v6154
    %v6156 = vlaneseq
    %v6157 = vshrl.u32 %v6156, 7
    %v6158 = vsub.s32 4, %v6157
    %v6159 = vrot.slane %v6138, %v6158
    %v6160 = vlaneseq
    %v6161 = vshrl.u32 %v6160, 7
    %v6162 = vsub.s32 5, %v6161
    %v6163 = vrot.slane %v6138, %v6162
    %v6164 = vlaneseq
    %v6165 = vshrl.u32 %v6164, 7
    %v6166 = vsub.s32 6, %v6165
    %v6167 = vrot.slane %v6138, %v6166
    %v6168 = vlaneseq
    %v6169 = vshrl.u32 %v6168, 7
    %v6170 = vsub.s32 7, %v6169
    %v6171 = vrot.slane %v6138, %v6170
    %v6308 = vunpack.c.l.b16 %v6010
    %v6309 = vunpack.c.h.b16 %v6010
    %v6310 = vunpack.c.l.b16 %v6011
    %v6311 = vunpack.c.h.b16 %v6011
    %v6312 = vunpack.c.l.b16 %v6012
    %v6313 = vunpack.c.h.b16 %v6012
    %v6314 = vunpack.c.l.b16 %v6013
    %v6315 = vunpack.c.h.b16 %v6013
    %v6316 = vunpack.c.l.b16 %v6014
    %v6317 = vunpack.c.h.b16 %v6014
    %v6318 = vunpack.c.l.b16 %v6015
    %v6319 = vunpack.c.h.b16 %v6015
    %v6320 = vunpack.c.l.b16 %v6016
    %v6321 = vunpack.c.h.b16 %v6016
    %v6322 = vunpack.c.l.b16 %v6017
    %v6323 = vunpack.c.h.b16 %v6017
    %v6324 = vunpack.c.l.b16 %v6018
    %v6325 = vunpack.c.h.b16 %v6018
    %v6326 = vunpack.c.l.b16 %v6019
    %v6327 = vunpack.c.h.b16 %v6019
    %v6328 = vunpack.c.l.b16 %v6020
    %v6329 = vunpack.c.h.b16 %v6020
    %v6330 = vunpack.c.l.b16 %v6021
    %v6331 = vunpack.c.h.b16 %v6021
    %v6332 = vunpack.c.l.b16 %v6022
    %v6333 = vunpack.c.h.b16 %v6022
    %v6334 = vunpack.c.l.b16 %v6023
    %v6335 = vunpack.c.h.b16 %v6023
    %v6336 = vunpack.c.l.b16 %v6024
    %v6337 = vunpack.c.h.b16 %v6024
    %v6338 = vunpack.c.l.b16 %v6025
    %v6339 = vunpack.c.h.b16 %v6025
    %v6340 = vunpack.c.l.b16 %v6026
    %v6341 = vunpack.c.h.b16 %v6026
    %v6342 = vunpack.c.l.b16 %v6027
    %v6343 = vunpack.c.h.b16 %v6027
    %v6344 = vunpack.c.l.b16 %v6028
    %v6345 = vunpack.c.h.b16 %v6028
    %v6346 = vunpack.c.l.b16 %v6029
    %v6347 = vunpack.c.h.b16 %v6029
    %v6348 = vunpack.c.l.b16 %v6030
    %v6349 = vunpack.c.h.b16 %v6030
    %v6350 = vunpack.c.l.b16 %v6031
    %v6351 = vunpack.c.h.b16 %v6031
    %v6352 = vunpack.c.l.b16 %v6032
    %v6353 = vunpack.c.h.b16 %v6032
    %v6354 = vunpack.c.l.b16 %v6033
    %v6355 = vunpack.c.h.b16 %v6033
    %v6356 = vunpack.c.l.b16 %v6034
    %v6357 = vunpack.c.h.b16 %v6034
    %v6358 = vunpack.c.l.b16 %v6035
    %v6359 = vunpack.c.h.b16 %v6035
    %v6360 = vunpack.c.l.b16 %v6036
    %v6361 = vunpack.c.h.b16 %v6036
    %v6362 = vunpack.c.l.b16 %v6037
    %v6363 = vunpack.c.h.b16 %v6037
    %v6364 = vunpack.c.l.b16 %v6038
    %v6365 = vunpack.c.h.b16 %v6038
    %v6366 = vunpack.c.l.b16 %v6039
    %v6367 = vunpack.c.h.b16 %v6039
    %v6368 = vunpack.c.l.b16 %v6040
    %v6369 = vunpack.c.h.b16 %v6040
    %v6370 = vunpack.c.l.b16 %v6041
    %v6371 = vunpack.c.h.b16 %v6041
    %v6372 = vunpack.c.l.b16 %v6042
    %v6373 = vunpack.c.h.b16 %v6042
    %v6374 = vunpack.c.l.b16 %v6043
    %v6375 = vunpack.c.h.b16 %v6043
    %v6376 = vunpack.c.l.b16 %v6044
    %v6377 = vunpack.c.h.b16 %v6044
    %v6378 = vunpack.c.l.b16 %v6045
    %v6379 = vunpack.c.h.b16 %v6045
    %v6380 = vunpack.c.l.b16 %v6046
    %v6381 = vunpack.c.h.b16 %v6046
    %v6382 = vunpack.c.l.b16 %v6047
    %v6383 = vunpack.c.h.b16 %v6047
    %v6384 = vunpack.c.l.b16 %v6048
    %v6385 = vunpack.c.h.b16 %v6048
    %v6386 = vunpack.c.l.b16 %v6049
    %v6387 = vunpack.c.h.b16 %v6049
    %v6388 = vunpack.c.l.b16 %v6050
    %v6389 = vunpack.c.h.b16 %v6050
    %v6390 = vunpack.c.l.b16 %v6051
    %v6391 = vunpack.c.h.b16 %v6051
    %v6392 = vunpack.c.l.b16 %v6052
    %v6393 = vunpack.c.h.b16 %v6052
    %v6394 = vunpack.c.l.b16 %v6053
    %v6395 = vunpack.c.h.b16 %v6053
    %v6396 = vunpack.c.l.b16 %v6054
    %v6397 = vunpack.c.h.b16 %v6054
    %v6398 = vunpack.c.l.b16 %v6055
    %v6399 = vunpack.c.h.b16 %v6055
    %v6400 = vunpack.c.l.b16 %v6056
    %v6401 = vunpack.c.h.b16 %v6056
    %v6402 = vunpack.c.l.b16 %v6057
    %v6403 = vunpack.c.h.b16 %v6057
    %v6404 = vunpack.c.l.b16 %v6058
    %v6405 = vunpack.c.h.b16 %v6058
    %v6406 = vunpack.c.l.b16 %v6059
    %v6407 = vunpack.c.h.b16 %v6059
    %v6408 = vunpack.c.l.b16 %v6060
    %v6409 = vunpack.c.h.b16 %v6060
    %v6410 = vunpack.c.l.b16 %v6061
    %v6411 = vunpack.c.h.b16 %v6061
    %v6412 = vunpack.c.l.b16 %v6062
    %v6413 = vunpack.c.h.b16 %v6062
    %v6414 = vunpack.c.l.b16 %v6063
    %v6415 = vunpack.c.h.b16 %v6063
    %v6416 = vunpack.c.l.b16 %v6064
    %v6417 = vunpack.c.h.b16 %v6064
    %v6418 = vunpack.c.l.b16 %v6065
    %v6419 = vunpack.c.h.b16 %v6065
    %v6420 = vunpack.c.l.b16 %v6066
    %v6421 = vunpack.c.h.b16 %v6066
    %v6422 = vunpack.c.l.b16 %v6067
    %v6423 = vunpack.c.h.b16 %v6067
    %v6424 = vunpack.c.l.b16 %v6068
    %v6425 = vunpack.c.h.b16 %v6068
    %v6426 = vunpack.c.l.b16 %v6069
    %v6427 = vunpack.c.h.b16 %v6069
    %v6428 = vunpack.c.l.b16 %v6070
    %v6429 = vunpack.c.h.b16 %v6070
    %v6430 = vunpack.c.l.b16 %v6071
    %v6431 = vunpack.c.h.b16 %v6071
    %v6432 = vunpack.c.l.b16 %v6072
    %v6433 = vunpack.c.h.b16 %v6072
    %v6434 = vunpack.c.l.b16 %v6073
    %v6435 = vunpack.c.h.b16 %v6073
    %v6436 = vunpack.c.l.b16 %v6074
    %v6437 = vunpack.c.h.b16 %v6074
    %v6438 = vunpack.c.l.b16 %v6075
    %v6439 = vunpack.c.h.b16 %v6075
    %v6440 = vunpack.c.l.b16 %v6076
    %v6441 = vunpack.c.h.b16 %v6076
    %v6442 = vunpack.c.l.b16 %v6077
    %v6443 = vunpack.c.h.b16 %v6077
    %v6444 = vunpack.c.l.b16 %v6078
    %v6445 = vunpack.c.h.b16 %v6078
    %v6446 = vunpack.c.l.b16 %v6079
    %v6447 = vunpack.c.h.b16 %v6079
    %v6448 = vunpack.c.l.b16 %v6080
    %v6449 = vunpack.c.h.b16 %v6080
    %v6450 = vunpack.c.l.b16 %v6081
    %v6451 = vunpack.c.h.b16 %v6081
    %v6452 = vunpack.c.l.b16 %v6082
    %v6453 = vunpack.c.h.b16 %v6082
    %v6454 = vunpack.c.l.b16 %v6083
    %v6455 = vunpack.c.h.b16 %v6083
    %v6456 = vunpack.c.l.b16 %v6084
    %v6457 = vunpack.c.h.b16 %v6084
    %v6458 = vunpack.c.l.b16 %v6085
    %v6459 = vunpack.c.h.b16 %v6085
    %v6460 = vunpack.c.l.b16 %v6086
    %v6461 = vunpack.c.h.b16 %v6086
    %v6462 = vunpack.c.l.b16 %v6087
    %v6463 = vunpack.c.h.b16 %v6087
    %v6464 = vunpack.c.l.b16 %v6088
    %v6465 = vunpack.c.h.b16 %v6088
    %v6466 = vunpack.c.l.b16 %v6089
    %v6467 = vunpack.c.h.b16 %v6089
    %v6468 = vunpack.c.l.b16 %v6090
    %v6469 = vunpack.c.h.b16 %v6090
    %v6470 = vunpack.c.l.b16 %v6091
    %v6471 = vunpack.c.h.b16 %v6091
    %v6472 = vunpack.c.l.b16 %v6092
    %v6473 = vunpack.c.h.b16 %v6092
    %v6474 = vunpack.c.l.b16 %v6093
    %v6475 = vunpack.c.h.b16 %v6093
    %v6476 = vunpack.c.l.b16 %v6094
    %v6477 = vunpack.c.h.b16 %v6094
    %v6478 = vunpack.c.l.b16 %v6095
    %v6479 = vunpack.c.h.b16 %v6095
    %v6480 = vunpack.c.l.b16 %v6096
    %v6481 = vunpack.c.h.b16 %v6096
    %v6482 = vunpack.c.l.b16 %v6097
    %v6483 = vunpack.c.h.b16 %v6097
    %v6484 = vunpack.c.l.b16 %v6098
    %v6485 = vunpack.c.h.b16 %v6098
    %v6486 = vunpack.c.l.b16 %v6099
    %v6487 = vunpack.c.h.b16 %v6099
    %v6488 = vunpack.c.l.b16 %v6100
    %v6489 = vunpack.c.h.b16 %v6100
    %v6490 = vunpack.c.l.b16 %v6101
    %v6491 = vunpack.c.h.b16 %v6101
    %v6492 = vunpack.c.l.b16 %v6102
    %v6493 = vunpack.c.h.b16 %v6102
    %v6494 = vunpack.c.l.b16 %v6103
    %v6495 = vunpack.c.h.b16 %v6103
    %v6496 = vunpack.c.l.b16 %v6104
    %v6497 = vunpack.c.h.b16 %v6104
    %v6498 = vunpack.c.l.b16 %v6105
    %v6499 = vunpack.c.h.b16 %v6105
    %v6500 = vunpack.c.l.b16 %v6106
    %v6501 = vunpack.c.h.b16 %v6106
    %v6502 = vunpack.c.l.b16 %v6107
    %v6503 = vunpack.c.h.b16 %v6107
    %v6504 = vunpack.c.l.b16 %v6108
    %v6505 = vunpack.c.h.b16 %v6108
    %v6506 = vunpack.c.l.b16 %v6109
    %v6507 = vunpack.c.h.b16 %v6109
    %v6508 = vunpack.c.l.b16 %v6110
    %v6509 = vunpack.c.h.b16 %v6110
    %v6510 = vunpack.c.l.b16 %v6111
    %v6511 = vunpack.c.h.b16 %v6111
    %v6512 = vunpack.c.l.b16 %v6112
    %v6513 = vunpack.c.h.b16 %v6112
    %v6514 = vunpack.c.l.b16 %v6113
    %v6515 = vunpack.c.h.b16 %v6113
    %v6516 = vunpack.c.l.b16 %v6114
    %v6517 = vunpack.c.h.b16 %v6114
    %v6518 = vunpack.c.l.b16 %v6115
    %v6519 = vunpack.c.h.b16 %v6115
    %v6520 = vunpack.c.l.b16 %v6116
    %v6521 = vunpack.c.h.b16 %v6116
    %v6522 = vunpack.c.l.b16 %v6117
    %v6523 = vunpack.c.h.b16 %v6117
    %v6524 = vunpack.c.l.b16 %v6118
    %v6525 = vunpack.c.h.b16 %v6118
    %v6526 = vunpack.c.l.b16 %v6119
    %v6527 = vunpack.c.h.b16 %v6119
    %v6528 = vunpack.c.l.b16 %v6120
    %v6529 = vunpack.c.h.b16 %v6120
    %v6530 = vunpack.c.l.b16 %v6121
    %v6531 = vunpack.c.h.b16 %v6121
    %v6532 = vunpack.c.l.b16 %v6122
    %v6533 = vunpack.c.h.b16 %v6122
    %v6534 = vunpack.c.l.b16 %v6123
    %v6535 = vunpack.c.h.b16 %v6123
    %v6536 = vunpack.c.l.b16 %v6124
    %v6537 = vunpack.c.h.b16 %v6124
    %v6538 = vunpack.c.l.b16 %v6125
    %v6539 = vunpack.c.h.b16 %v6125
    %v6540 = vunpack.c.l.b16 %v6126
    %v6541 = vunpack.c.h.b16 %v6126
    %v6542 = vunpack.c.l.b16 %v6127
    %v6543 = vunpack.c.h.b16 %v6127
    %v6544 = vunpack.c.l.b16 %v6128
    %v6545 = vunpack.c.h.b16 %v6128
    %v6546 = vunpack.c.l.b16 %v6129
    %v6547 = vunpack.c.h.b16 %v6129
    %v6548 = vunpack.c.l.b16 %v6130
    %v6549 = vunpack.c.h.b16 %v6130
    %v6550 = vunpack.c.l.b16 %v6131
    %v6551 = vunpack.c.h.b16 %v6131
    %v6552 = vunpack.c.l.b16 %v6132
    %v6553 = vunpack.c.h.b16 %v6132
    %v6554 = vunpack.c.l.b16 %v6133
    %v6555 = vunpack.c.h.b16 %v6133
    %v6556 = vunpack.c.l.b16 %v6134
    %v6557 = vunpack.c.h.b16 %v6134
    %v6558 = vunpack.c.l.b16 %v6135
    %v6559 = vunpack.c.h.b16 %v6135
    %v6560 = vunpack.c.l.b16 %v6136
    %v6561 = vunpack.c.h.b16 %v6136
    %v6562 = vunpack.c.l.b16 %v6137
    %v6563 = vunpack.c.h.b16 %v6137
    %v6564 = vpack.c.b16 %v6316, %v6308
    %v6565 = vpack.c.b16 %v6317, %v6309
    %v6566 = vpack.c.b16 %v6318, %v6310
    %v6567 = vpack.c.b16 %v6319, %v6311
    %v6568 = vpack.c.b16 %v6320, %v6312
    %v6569 = vpack.c.b16 %v6321, %v6313
    %v6570 = vpack.c.b16 %v6322, %v6314
    %v6571 = vpack.c.b16 %v6323, %v6315
    %v6572 = vpack.c.b16 %v6332, %v6324
    %v6573 = vpack.c.b16 %v6333, %v6325
    %v6574 = vpack.c.b16 %v6334, %v6326
    %v6575 = vpack.c.b16 %v6335, %v6327
    %v6576 = vpack.c.b16 %v6336, %v6328
    %v6577 = vpack.c.b16 %v6337, %v6329
    %v6578 = vpack.c.b16 %v6338, %v6330
    %v6579 = vpack.c.b16 %v6339, %v6331
    %v6580 = vpack.c.b16 %v6348, %v6340
    %v6581 = vpack.c.b16 %v6349, %v6341
    %v6582 = vpack.c.b16 %v6350, %v6342
    %v6583 = vpack.c.b16 %v6351, %v6343
    %v6584 = vpack.c.b16 %v6352, %v6344
    %v6585 = vpack.c.b16 %v6353, %v6345
    %v6586 = vpack.c.b16 %v6354, %v6346
    %v6587 = vpack.c.b16 %v6355, %v6347
    %v6588 = vpack.c.b16 %v6364, %v6356
    %v6589 = vpack.c.b16 %v6365, %v6357
    %v6590 = vpack.c.b16 %v6366, %v6358
    %v6591 = vpack.c.b16 %v6367, %v6359
    %v6592 = vpack.c.b16 %v6368, %v6360
    %v6593 = vpack.c.b16 %v6369, %v6361
    %v6594 = vpack.c.b16 %v6370, %v6362
    %v6595 = vpack.c.b16 %v6371, %v6363
    %v6596 = vpack.c.b16 %v6380, %v6372
    %v6597 = vpack.c.b16 %v6381, %v6373
    %v6598 = vpack.c.b16 %v6382, %v6374
    %v6599 = vpack.c.b16 %v6383, %v6375
    %v6600 = vpack.c.b16 %v6384, %v6376
    %v6601 = vpack.c.b16 %v6385, %v6377
    %v6602 = vpack.c.b16 %v6386, %v6378
    %v6603 = vpack.c.b16 %v6387, %v6379
    %v6604 = vpack.c.b16 %v6396, %v6388
    %v6605 = vpack.c.b16 %v6397, %v6389
    %v6606 = vpack.c.b16 %v6398, %v6390
    %v6607 = vpack.c.b16 %v6399, %v6391
    %v6608 = vpack.c.b16 %v6400, %v6392
    %v6609 = vpack.c.b16 %v6401, %v6393
    %v6610 = vpack.c.b16 %v6402, %v6394
    %v6611 = vpack.c.b16 %v6403, %v6395
    %v6612 = vpack.c.b16 %v6412, %v6404
    %v6613 = vpack.c.b16 %v6413, %v6405
    %v6614 = vpack.c.b16 %v6414, %v6406
    %v6615 = vpack.c.b16 %v6415, %v6407
    %v6616 = vpack.c.b16 %v6416, %v6408
    %v6617 = vpack.c.b16 %v6417, %v6409
    %v6618 = vpack.c.b16 %v6418, %v6410
    %v6619 = vpack.c.b16 %v6419, %v6411
    %v6620 = vpack.c.b16 %v6428, %v6420
    %v6621 = vpack.c.b16 %v6429, %v6421
    %v6622 = vpack.c.b16 %v6430, %v6422
    %v6623 = vpack.c.b16 %v6431, %v6423
    %v6624 = vpack.c.b16 %v6432, %v6424
    %v6625 = vpack.c.b16 %v6433, %v6425
    %v6626 = vpack.c.b16 %v6434, %v6426
    %v6627 = vpack.c.b16 %v6435, %v6427
    %v6628 = vpack.c.b16 %v6444, %v6436
    %v6629 = vpack.c.b16 %v6445, %v6437
    %v6630 = vpack.c.b16 %v6446, %v6438
    %v6631 = vpack.c.b16 %v6447, %v6439
    %v6632 = vpack.c.b16 %v6448, %v6440
    %v6633 = vpack.c.b16 %v6449, %v6441
    %v6634 = vpack.c.b16 %v6450, %v6442
    %v6635 = vpack.c.b16 %v6451, %v6443
    %v6636 = vpack.c.b16 %v6460, %v6452
    %v6637 = vpack.c.b16 %v6461, %v6453
    %v6638 = vpack.c.b16 %v6462, %v6454
    %v6639 = vpack.c.b16 %v6463, %v6455
    %v6640 = vpack.c.b16 %v6464, %v6456
    %v6641 = vpack.c.b16 %v6465, %v6457
    %v6642 = vpack.c.b16 %v6466, %v6458
    %v6643 = vpack.c.b16 %v6467, %v6459
    %v6644 = vpack.c.b16 %v6476, %v6468
    %v6645 = vpack.c.b16 %v6477, %v6469
    %v6646 = vpack.c.b16 %v6478, %v6470
    %v6647 = vpack.c.b16 %v6479, %v6471
    %v6648 = vpack.c.b16 %v6480, %v6472
    %v6649 = vpack.c.b16 %v6481, %v6473
    %v6650 = vpack.c.b16 %v6482, %v6474
    %v6651 = vpack.c.b16 %v6483, %v6475
    %v6652 = vpack.c.b16 %v6492, %v6484
    %v6653 = vpack.c.b16 %v6493, %v6485
    %v6654 = vpack.c.b16 %v6494, %v6486
    %v6655 = vpack.c.b16 %v6495, %v6487
    %v6656 = vpack.c.b16 %v6496, %v6488
    %v6657 = vpack.c.b16 %v6497, %v6489
    %v6658 = vpack.c.b16 %v6498, %v6490
    %v6659 = vpack.c.b16 %v6499, %v6491
    %v6660 = vpack.c.b16 %v6508, %v6500
    %v6661 = vpack.c.b16 %v6509, %v6501
    %v6662 = vpack.c.b16 %v6510, %v6502
    %v6663 = vpack.c.b16 %v6511, %v6503
    %v6664 = vpack.c.b16 %v6512, %v6504
    %v6665 = vpack.c.b16 %v6513, %v6505
    %v6666 = vpack.c.b16 %v6514, %v6506
    %v6667 = vpack.c.b16 %v6515, %v6507
    %v6668 = vpack.c.b16 %v6524, %v6516
    %v6669 = vpack.c.b16 %v6525, %v6517
    %v6670 = vpack.c.b16 %v6526, %v6518
    %v6671 = vpack.c.b16 %v6527, %v6519
    %v6672 = vpack.c.b16 %v6528, %v6520
    %v6673 = vpack.c.b16 %v6529, %v6521
    %v6674 = vpack.c.b16 %v6530, %v6522
    %v6675 = vpack.c.b16 %v6531, %v6523
    %v6676 = vpack.c.b16 %v6540, %v6532
    %v6677 = vpack.c.b16 %v6541, %v6533
    %v6678 = vpack.c.b16 %v6542, %v6534
    %v6679 = vpack.c.b16 %v6543, %v6535
    %v6680 = vpack.c.b16 %v6544, %v6536
    %v6681 = vpack.c.b16 %v6545, %v6537
    %v6682 = vpack.c.b16 %v6546, %v6538
    %v6683 = vpack.c.b16 %v6547, %v6539
    %v6684 = vpack.c.b16 %v6556, %v6548
    %v6685 = vpack.c.b16 %v6557, %v6549
    %v6686 = vpack.c.b16 %v6558, %v6550
    %v6687 = vpack.c.b16 %v6559, %v6551
    %v6688 = vpack.c.b16 %v6560, %v6552
    %v6689 = vpack.c.b16 %v6561, %v6553
    %v6690 = vpack.c.b16 %v6562, %v6554
    %v6691 = vpack.c.b16 %v6563, %v6555
    %6820 = vmatprep.subr.bf16.mxu0 %v6565
    %6821 = vmatpush1.bf16.msra.mxu0 %v6564
    %6822 = vmatprep.subr.bf16.mxu0 %v6573
    %6823 = vmatpush1.bf16.msra.mxu0 %v6572
    %6824 = vmatprep.subr.bf16.mxu0 %v6581
    %6825 = vmatpush1.bf16.msra.mxu0 %v6580
    %6826 = vmatprep.subr.bf16.mxu0 %v6589
    %6827 = vmatpush1.bf16.msra.mxu0 %v6588
    %6828 = vmatprep.subr.bf16.mxu0 %v6597
    %6829 = vmatpush1.bf16.msra.mxu0 %v6596
    %6830 = vmatprep.subr.bf16.mxu0 %v6605
    %6831 = vmatpush1.bf16.msra.mxu0 %v6604
    %6832 = vmatprep.subr.bf16.mxu0 %v6613
    %6833 = vmatpush1.bf16.msra.mxu0 %v6612
    %6834 = vmatprep.subr.bf16.mxu0 %v6621
    %6835 = vmatpush1.bf16.msra.mxu0 %v6620
    %6836 = vmatprep.subr.bf16.mxu0 %v6629
    %6837 = vmatpush1.bf16.msra.mxu0 %v6628
    %6838 = vmatprep.subr.bf16.mxu0 %v6637
    %6839 = vmatpush1.bf16.msra.mxu0 %v6636
    %6840 = vmatprep.subr.bf16.mxu0 %v6645
    %6841 = vmatpush1.bf16.msra.mxu0 %v6644
    %6842 = vmatprep.subr.bf16.mxu0 %v6653
    %6843 = vmatpush1.bf16.msra.mxu0 %v6652
    %6844 = vmatprep.subr.bf16.mxu0 %v6661
    %6845 = vmatpush1.bf16.msra.mxu0 %v6660
    %6846 = vmatprep.subr.bf16.mxu0 %v6669
    %6847 = vmatpush1.bf16.msra.mxu0 %v6668
    %6848 = vmatprep.subr.bf16.mxu0 %v6677
    %6849 = vmatpush1.bf16.msra.mxu0 %v6676
    %6850 = vmatprep.subr.bf16.mxu0 %v6685
    %6851 = vmatpush1.bf16.msra.mxu0 %v6684
    %6852 = vmatprep.mubr.bf16.mxu0 %v6009
    %6853 = vmatmul.mubr.bf16.gmra.mrb[0].mxu0 %v6008
    %v6854 = vpop.f32.mrb[0].mxu0
    %v6855 = vadd.f32 %v6143, %v6854
    %v6856 = vpop.f32.mrb[0].mxu0
    %v6857 = vadd.f32 %v6147, %v6856
    %v6858 = vpop.f32.mrb[0].mxu0
    %v6859 = vadd.f32 %v6143, %v6858
    %v6860 = vpop.f32.mrb[0].mxu0
    %v6861 = vadd.f32 %v6147, %v6860
    %6862 = vdwg.mxu0
    %6863 = vmatprep.subr.bf16.mxu0 %v6567
    %6864 = vmatpush1.bf16.msra.mxu0 %v6566
    %6865 = vmatprep.subr.bf16.mxu0 %v6575
    %6866 = vmatpush1.bf16.msra.mxu0 %v6574
    %6867 = vmatprep.subr.bf16.mxu0 %v6583
    %6868 = vmatpush1.bf16.msra.mxu0 %v6582
    %6869 = vmatprep.subr.bf16.mxu0 %v6591
    %6870 = vmatpush1.bf16.msra.mxu0 %v6590
    %6871 = vmatprep.subr.bf16.mxu0 %v6599
    %6872 = vmatpush1.bf16.msra.mxu0 %v6598
    %6873 = vmatprep.subr.bf16.mxu0 %v6607
    %6874 = vmatpush1.bf16.msra.mxu0 %v6606
    %6875 = vmatprep.subr.bf16.mxu0 %v6615
    %6876 = vmatpush1.bf16.msra.mxu0 %v6614
    %6877 = vmatprep.subr.bf16.mxu0 %v6623
    %6878 = vmatpush1.bf16.msra.mxu0 %v6622
    %6879 = vmatprep.subr.bf16.mxu0 %v6631
    %6880 = vmatpush1.bf16.msra.mxu0 %v6630
    %6881 = vmatprep.subr.bf16.mxu0 %v6639
    %6882 = vmatpush1.bf16.msra.mxu0 %v6638
    %6883 = vmatprep.subr.bf16.mxu0 %v6647
    %6884 = vmatpush1.bf16.msra.mxu0 %v6646
    %6885 = vmatprep.subr.bf16.mxu0 %v6655
    %6886 = vmatpush1.bf16.msra.mxu0 %v6654
    %6887 = vmatprep.subr.bf16.mxu0 %v6663
    %6888 = vmatpush1.bf16.msra.mxu0 %v6662
    %6889 = vmatprep.subr.bf16.mxu0 %v6671
    %6890 = vmatpush1.bf16.msra.mxu0 %v6670
    %6891 = vmatprep.subr.bf16.mxu0 %v6679
    %6892 = vmatpush1.bf16.msra.mxu0 %v6678
    %6893 = vmatprep.subr.bf16.mxu0 %v6687
    %6894 = vmatpush1.bf16.msra.mxu0 %v6686
    %6895 = vmatprep.mubr.bf16.mxu0 %v6009
    %6896 = vmatmul.mubr.bf16.gmra.mrb[0].mxu0 %v6008
    %v6897 = vpop.f32.mrb[0].mxu0
    %v6898 = vadd.f32 %v6151, %v6897
    %v6899 = vpop.f32.mrb[0].mxu0
    %v6900 = vadd.f32 %v6155, %v6899
    %v6901 = vpop.f32.mrb[0].mxu0
    %v6902 = vadd.f32 %v6151, %v6901
    %v6903 = vpop.f32.mrb[0].mxu0
    %v6904 = vadd.f32 %v6155, %v6903
    %6905 = vdwg.mxu0
    %6906 = vmatprep.subr.bf16.mxu0 %v6569
    %6907 = vmatpush1.bf16.msra.mxu0 %v6568
    %6908 = vmatprep.subr.bf16.mxu0 %v6577
    %6909 = vmatpush1.bf16.msra.mxu0 %v6576
    %6910 = vmatprep.subr.bf16.mxu0 %v6585
    %6911 = vmatpush1.bf16.msra.mxu0 %v6584
    %6912 = vmatprep.subr.bf16.mxu0 %v6593
    %6913 = vmatpush1.bf16.msra.mxu0 %v6592
    %6914 = vmatprep.subr.bf16.mxu0 %v6601
    %6915 = vmatpush1.bf16.msra.mxu0 %v6600
    %6916 = vmatprep.subr.bf16.mxu0 %v6609
    %6917 = vmatpush1.bf16.msra.mxu0 %v6608
    %6918 = vmatprep.subr.bf16.mxu0 %v6617
    %6919 = vmatpush1.bf16.msra.mxu0 %v6616
    %6920 = vmatprep.subr.bf16.mxu0 %v6625
    %6921 = vmatpush1.bf16.msra.mxu0 %v6624
    %6922 = vmatprep.subr.bf16.mxu0 %v6633
    %6923 = vmatpush1.bf16.msra.mxu0 %v6632
    %6924 = vmatprep.subr.bf16.mxu0 %v6641
    %6925 = vmatpush1.bf16.msra.mxu0 %v6640
    %6926 = vmatprep.subr.bf16.mxu0 %v6649
    %6927 = vmatpush1.bf16.msra.mxu0 %v6648
    %6928 = vmatprep.subr.bf16.mxu0 %v6657
    %6929 = vmatpush1.bf16.msra.mxu0 %v6656
    %6930 = vmatprep.subr.bf16.mxu0 %v6665
    %6931 = vmatpush1.bf16.msra.mxu0 %v6664
    %6932 = vmatprep.subr.bf16.mxu0 %v6673
    %6933 = vmatpush1.bf16.msra.mxu0 %v6672
    %6934 = vmatprep.subr.bf16.mxu0 %v6681
    %6935 = vmatpush1.bf16.msra.mxu0 %v6680
    %6936 = vmatprep.subr.bf16.mxu0 %v6689
    %6937 = vmatpush1.bf16.msra.mxu0 %v6688
    %6938 = vmatprep.mubr.bf16.mxu0 %v6009
    %6939 = vmatmul.mubr.bf16.gmra.mrb[0].mxu0 %v6008
    %v6940 = vpop.f32.mrb[0].mxu0
    %v6941 = vadd.f32 %v6159, %v6940
    %v6942 = vpop.f32.mrb[0].mxu0
    %v6943 = vadd.f32 %v6163, %v6942
    %v6944 = vpop.f32.mrb[0].mxu0
    %v6945 = vadd.f32 %v6159, %v6944
    %v6946 = vpop.f32.mrb[0].mxu0
    %v6947 = vadd.f32 %v6163, %v6946
    %6948 = vdwg.mxu0
    %6949 = vmatprep.subr.bf16.mxu0 %v6571
    %6950 = vmatpush1.bf16.msra.mxu0 %v6570
    %6951 = vmatprep.subr.bf16.mxu0 %v6579
    %6952 = vmatpush1.bf16.msra.mxu0 %v6578
    %6953 = vmatprep.subr.bf16.mxu0 %v6587
    %6954 = vmatpush1.bf16.msra.mxu0 %v6586
    %6955 = vmatprep.subr.bf16.mxu0 %v6595
    %6956 = vmatpush1.bf16.msra.mxu0 %v6594
    %6957 = vmatprep.subr.bf16.mxu0 %v6603
    %6958 = vmatpush1.bf16.msra.mxu0 %v6602
    %6959 = vmatprep.subr.bf16.mxu0 %v6611
    %6960 = vmatpush1.bf16.msra.mxu0 %v6610
    %6961 = vmatprep.subr.bf16.mxu0 %v6619
    %6962 = vmatpush1.bf16.msra.mxu0 %v6618
    %6963 = vmatprep.subr.bf16.mxu0 %v6627
    %6964 = vmatpush1.bf16.msra.mxu0 %v6626
    %6965 = vmatprep.subr.bf16.mxu0 %v6635
    %6966 = vmatpush1.bf16.msra.mxu0 %v6634
    %6967 = vmatprep.subr.bf16.mxu0 %v6643
    %6968 = vmatpush1.bf16.msra.mxu0 %v6642
    %6969 = vmatprep.subr.bf16.mxu0 %v6651
    %6970 = vmatpush1.bf16.msra.mxu0 %v6650
    %6971 = vmatprep.subr.bf16.mxu0 %v6659
    %6972 = vmatpush1.bf16.msra.mxu0 %v6658
    %6973 = vmatprep.subr.bf16.mxu0 %v6667
    %6974 = vmatpush1.bf16.msra.mxu0 %v6666
    %6975 = vmatprep.subr.bf16.mxu0 %v6675
    %6976 = vmatpush1.bf16.msra.mxu0 %v6674
    %6977 = vmatprep.subr.bf16.mxu0 %v6683
    %6978 = vmatpush1.bf16.msra.mxu0 %v6682
    %6979 = vmatprep.subr.bf16.mxu0 %v6691
    %6980 = vmatpush1.bf16.msra.mxu0 %v6690
    %6981 = vmatprep.mubr.bf16.mxu0 %v6009
    %6982 = vmatmul.mubr.bf16.gmra.mrb[0].mxu0 %v6008
    %v6983 = vpop.f32.mrb[0].mxu0
    %v6984 = vadd.f32 %v6167, %v6983
    %v6985 = vpop.f32.mrb[0].mxu0
    %v6986 = vadd.f32 %v6171, %v6985
    %v6987 = vpop.f32.mrb[0].mxu0
    %v6988 = vadd.f32 %v6167, %v6987
    %v6989 = vpop.f32.mrb[0].mxu0
    %v6990 = vadd.f32 %v6171, %v6989
    %6991 = vdwg.mxu0
    %6992 = vst [vmem:[#allocation2] sm:$0xff] %v6855
    %6993 = vst [vmem:[#allocation2 + $0x8] sm:$0xff] %v6857
    %6994 = vst [vmem:[#allocation2 + $0x10] sm:$0xff] %v6898
    %6995 = vst [vmem:[#allocation2 + $0x18] sm:$0xff] %v6900
    %6996 = vst [vmem:[#allocation2 + $0x20] sm:$0xff] %v6941
    %6997 = vst [vmem:[#allocation2 + $0x28] sm:$0xff] %v6943
    %6998 = vst [vmem:[#allocation2 + $0x30] sm:$0xff] %v6984
    %6999 = vst [vmem:[#allocation2 + $0x38] sm:$0xff] %v6986
    %7000 = vst [vmem:[#allocation2 + $0x40] sm:$0xff] %v6859
    %7001 = vst [vmem:[#allocation2 + $0x48] sm:$0xff] %v6861
    %7002 = vst [vmem:[#allocation2 + $0x50] sm:$0xff] %v6902
    %7003 = vst [vmem:[#allocation2 + $0x58] sm:$0xff] %v6904
    %7004 = vst [vmem:[#allocation2 + $0x60] sm:$0xff] %v6945
    %7005 = vst [vmem:[#allocation2 + $0x68] sm:$0xff] %v6947
    %7006 = vst [vmem:[#allocation2 + $0x70] sm:$0xff] %v6988
    %7007 = vst [vmem:[#allocation2 + $0x78] sm:$0xff] %v6990
    %v7008 = vld [vmem:[#allocation2] sm:$0x3]
    %v7009 = vld [vmem:[#allocation2 + $0x8] sm:$0x3]
    %v7010 = vld [vmem:[#allocation2 + $0x10] sm:$0x3]
    %v7011 = vld [vmem:[#allocation2 + $0x18] sm:$0x3]
    %v7012 = vld [vmem:[#allocation2 + $0x60] sm:$0xc0]
    %v7013 = vld [vmem:[#allocation2 + $0x68] sm:$0xc0]
    %v7014 = vld [vmem:[#allocation2 + $0x70] sm:$0xc0]
    %v7015 = vld [vmem:[#allocation2 + $0x78] sm:$0xc0]
    %v7020 = vrot.slane %v7012, 4
    %v7021 = vrot.slane %v7013, 4
    %v7022 = vrot.slane %v7014, 4
    %v7023 = vrot.slane %v7015, 4
    %v7028 = vsel %vm1759, %v7008, %v7020
    %v7029 = vsel %vm1759, %v7009, %v7021
    %v7030 = vsel %vm1759, %v7010, %v7022
    %v7031 = vsel %vm1759, %v7011, %v7023
    %v7032 = vld [vmem:[%s6] sm:$0xff]
    %v7033 = vld [vmem:[%s6 + $0x8] sm:$0xff]
    %v7034 = vld [vmem:[%s6 + $0x10] sm:$0xff]
    %v7035 = vld [vmem:[%s6 + $0x18] sm:$0xff]
    %v7036 = vld [vmem:[%s6 + $0x20] sm:$0xff]
    %v7037 = vld [vmem:[%s6 + $0x28] sm:$0xff]
    %v7038 = vld [vmem:[%s6 + $0x30] sm:$0xff]
    %v7039 = vld [vmem:[%s6 + $0x38] sm:$0xff]
    %v7040 = vld [vmem:[%s6 + $0x40] sm:$0xff]
    %v7041 = vld [vmem:[%s6 + $0x48] sm:$0xff]
    %v7042 = vld [vmem:[%s6 + $0x50] sm:$0xff]
    %v7043 = vld [vmem:[%s6 + $0x58] sm:$0xff]
    %v7044 = vld [vmem:[%s6 + $0x60] sm:$0xff]
    %v7045 = vld [vmem:[%s6 + $0x68] sm:$0xff]
    %v7046 = vld [vmem:[%s6 + $0x70] sm:$0xff]
    %v7047 = vld [vmem:[%s6 + $0x78] sm:$0xff]
    %v7048 = vld [vmem:[%s6 + $0x80] sm:$0xff]
    %v7049 = vld [vmem:[%s6 + $0x88] sm:$0xff]
    %v7050 = vld [vmem:[%s6 + $0x90] sm:$0xff]
    %v7051 = vld [vmem:[%s6 + $0x98] sm:$0xff]
    %v7052 = vld [vmem:[%s6 + $0xa0] sm:$0xff]
    %v7053 = vld [vmem:[%s6 + $0xa8] sm:$0xff]
    %v7054 = vld [vmem:[%s6 + $0xb0] sm:$0xff]
    %v7055 = vld [vmem:[%s6 + $0xb8] sm:$0xff]
    %v7056 = vld [vmem:[%s6 + $0xc0] sm:$0xff]
    %v7057 = vld [vmem:[%s6 + $0xc8] sm:$0xff]
    %v7058 = vld [vmem:[%s6 + $0xd0] sm:$0xff]
    %v7059 = vld [vmem:[%s6 + $0xd8] sm:$0xff]
    %v7060 = vld [vmem:[%s6 + $0xe0] sm:$0xff]
    %v7061 = vld [vmem:[%s6 + $0xe8] sm:$0xff]
    %v7062 = vld [vmem:[%s6 + $0xf0] sm:$0xff]
    %v7063 = vld [vmem:[%s6 + $0xf8] sm:$0xff]
    %v7064 = vld [vmem:[%s6 + $0x100] sm:$0xff]
    %v7065 = vld [vmem:[%s6 + $0x108] sm:$0xff]
    %v7066 = vld [vmem:[%s6 + $0x110] sm:$0xff]
    %v7067 = vld [vmem:[%s6 + $0x118] sm:$0xff]
    %v7068 = vld [vmem:[%s6 + $0x120] sm:$0xff]
    %v7069 = vld [vmem:[%s6 + $0x128] sm:$0xff]
    %v7070 = vld [vmem:[%s6 + $0x130] sm:$0xff]
    %v7071 = vld [vmem:[%s6 + $0x138] sm:$0xff]
    %v7072 = vld [vmem:[%s6 + $0x140] sm:$0xff]
    %v7073 = vld [vmem:[%s6 + $0x148] sm:$0xff]
    %v7074 = vld [vmem:[%s6 + $0x150] sm:$0xff]
    %v7075 = vld [vmem:[%s6 + $0x158] sm:$0xff]
    %v7076 = vld [vmem:[%s6 + $0x160] sm:$0xff]
    %v7077 = vld [vmem:[%s6 + $0x168] sm:$0xff]
    %v7078 = vld [vmem:[%s6 + $0x170] sm:$0xff]
    %v7079 = vld [vmem:[%s6 + $0x178] sm:$0xff]
    %v7080 = vld [vmem:[%s6 + $0x180] sm:$0xff]
    %v7081 = vld [vmem:[%s6 + $0x188] sm:$0xff]
    %v7082 = vld [vmem:[%s6 + $0x190] sm:$0xff]
    %v7083 = vld [vmem:[%s6 + $0x198] sm:$0xff]
    %v7084 = vld [vmem:[%s6 + $0x1a0] sm:$0xff]
    %v7085 = vld [vmem:[%s6 + $0x1a8] sm:$0xff]
    %v7086 = vld [vmem:[%s6 + $0x1b0] sm:$0xff]
    %v7087 = vld [vmem:[%s6 + $0x1b8] sm:$0xff]
    %v7088 = vld [vmem:[%s6 + $0x1c0] sm:$0xff]
    %v7089 = vld [vmem:[%s6 + $0x1c8] sm:$0xff]
    %v7090 = vld [vmem:[%s6 + $0x1d0] sm:$0xff]
    %v7091 = vld [vmem:[%s6 + $0x1d8] sm:$0xff]
    %v7092 = vld [vmem:[%s6 + $0x1e0] sm:$0xff]
    %v7093 = vld [vmem:[%s6 + $0x1e8] sm:$0xff]
    %v7094 = vld [vmem:[%s6 + $0x1f0] sm:$0xff]
    %v7095 = vld [vmem:[%s6 + $0x1f8] sm:$0xff]
    %v7160 = vunpack.c.l.b16 %v7032
    %v7161 = vunpack.c.h.b16 %v7032
    %v7162 = vunpack.c.l.b16 %v7033
    %v7163 = vunpack.c.h.b16 %v7033
    %v7164 = vunpack.c.l.b16 %v7034
    %v7165 = vunpack.c.h.b16 %v7034
    %v7166 = vunpack.c.l.b16 %v7035
    %v7167 = vunpack.c.h.b16 %v7035
    %v7168 = vunpack.c.l.b16 %v7036
    %v7169 = vunpack.c.h.b16 %v7036
    %v7170 = vunpack.c.l.b16 %v7037
    %v7171 = vunpack.c.h.b16 %v7037
    %v7172 = vunpack.c.l.b16 %v7038
    %v7173 = vunpack.c.h.b16 %v7038
    %v7174 = vunpack.c.l.b16 %v7039
    %v7175 = vunpack.c.h.b16 %v7039
    %v7176 = vunpack.c.l.b16 %v7040
    %v7177 = vunpack.c.h.b16 %v7040
    %v7178 = vunpack.c.l.b16 %v7041
    %v7179 = vunpack.c.h.b16 %v7041
    %v7180 = vunpack.c.l.b16 %v7042
    %v7181 = vunpack.c.h.b16 %v7042
    %v7182 = vunpack.c.l.b16 %v7043
    %v7183 = vunpack.c.h.b16 %v7043
    %v7184 = vunpack.c.l.b16 %v7044
    %v7185 = vunpack.c.h.b16 %v7044
    %v7186 = vunpack.c.l.b16 %v7045
    %v7187 = vunpack.c.h.b16 %v7045
    %v7188 = vunpack.c.l.b16 %v7046
    %v7189 = vunpack.c.h.b16 %v7046
    %v7190 = vunpack.c.l.b16 %v7047
    %v7191 = vunpack.c.h.b16 %v7047
    %v7192 = vunpack.c.l.b16 %v7048
    %v7193 = vunpack.c.h.b16 %v7048
    %v7194 = vunpack.c.l.b16 %v7049
    %v7195 = vunpack.c.h.b16 %v7049
    %v7196 = vunpack.c.l.b16 %v7050
    %v7197 = vunpack.c.h.b16 %v7050
    %v7198 = vunpack.c.l.b16 %v7051
    %v7199 = vunpack.c.h.b16 %v7051
    %v7200 = vunpack.c.l.b16 %v7052
    %v7201 = vunpack.c.h.b16 %v7052
    %v7202 = vunpack.c.l.b16 %v7053
    %v7203 = vunpack.c.h.b16 %v7053
    %v7204 = vunpack.c.l.b16 %v7054
    %v7205 = vunpack.c.h.b16 %v7054
    %v7206 = vunpack.c.l.b16 %v7055
    %v7207 = vunpack.c.h.b16 %v7055
    %v7208 = vunpack.c.l.b16 %v7056
    %v7209 = vunpack.c.h.b16 %v7056
    %v7210 = vunpack.c.l.b16 %v7057
    %v7211 = vunpack.c.h.b16 %v7057
    %v7212 = vunpack.c.l.b16 %v7058
    %v7213 = vunpack.c.h.b16 %v7058
    %v7214 = vunpack.c.l.b16 %v7059
    %v7215 = vunpack.c.h.b16 %v7059
    %v7216 = vunpack.c.l.b16 %v7060
    %v7217 = vunpack.c.h.b16 %v7060
    %v7218 = vunpack.c.l.b16 %v7061
    %v7219 = vunpack.c.h.b16 %v7061
    %v7220 = vunpack.c.l.b16 %v7062
    %v7221 = vunpack.c.h.b16 %v7062
    %v7222 = vunpack.c.l.b16 %v7063
    %v7223 = vunpack.c.h.b16 %v7063
    %v7224 = vunpack.c.l.b16 %v7064
    %v7225 = vunpack.c.h.b16 %v7064
    %v7226 = vunpack.c.l.b16 %v7065
    %v7227 = vunpack.c.h.b16 %v7065
    %v7228 = vunpack.c.l.b16 %v7066
    %v7229 = vunpack.c.h.b16 %v7066
    %v7230 = vunpack.c.l.b16 %v7067
    %v7231 = vunpack.c.h.b16 %v7067
    %v7232 = vunpack.c.l.b16 %v7068
    %v7233 = vunpack.c.h.b16 %v7068
    %v7234 = vunpack.c.l.b16 %v7069
    %v7235 = vunpack.c.h.b16 %v7069
    %v7236 = vunpack.c.l.b16 %v7070
    %v7237 = vunpack.c.h.b16 %v7070
    %v7238 = vunpack.c.l.b16 %v7071
    %v7239 = vunpack.c.h.b16 %v7071
    %v7240 = vunpack.c.l.b16 %v7072
    %v7241 = vunpack.c.h.b16 %v7072
    %v7242 = vunpack.c.l.b16 %v7073
    %v7243 = vunpack.c.h.b16 %v7073
    %v7244 = vunpack.c.l.b16 %v7074
    %v7245 = vunpack.c.h.b16 %v7074
    %v7246 = vunpack.c.l.b16 %v7075
    %v7247 = vunpack.c.h.b16 %v7075
    %v7248 = vunpack.c.l.b16 %v7076
    %v7249 = vunpack.c.h.b16 %v7076
    %v7250 = vunpack.c.l.b16 %v7077
    %v7251 = vunpack.c.h.b16 %v7077
    %v7252 = vunpack.c.l.b16 %v7078
    %v7253 = vunpack.c.h.b16 %v7078
    %v7254 = vunpack.c.l.b16 %v7079
    %v7255 = vunpack.c.h.b16 %v7079
    %v7256 = vunpack.c.l.b16 %v7080
    %v7257 = vunpack.c.h.b16 %v7080
    %v7258 = vunpack.c.l.b16 %v7081
    %v7259 = vunpack.c.h.b16 %v7081
    %v7260 = vunpack.c.l.b16 %v7082
    %v7261 = vunpack.c.h.b16 %v7082
    %v7262 = vunpack.c.l.b16 %v7083
    %v7263 = vunpack.c.h.b16 %v7083
    %v7264 = vunpack.c.l.b16 %v7084
    %v7265 = vunpack.c.h.b16 %v7084
    %v7266 = vunpack.c.l.b16 %v7085
    %v7267 = vunpack.c.h.b16 %v7085
    %v7268 = vunpack.c.l.b16 %v7086
    %v7269 = vunpack.c.h.b16 %v7086
    %v7270 = vunpack.c.l.b16 %v7087
    %v7271 = vunpack.c.h.b16 %v7087
    %v7272 = vunpack.c.l.b16 %v7088
    %v7273 = vunpack.c.h.b16 %v7088
    %v7274 = vunpack.c.l.b16 %v7089
    %v7275 = vunpack.c.h.b16 %v7089
    %v7276 = vunpack.c.l.b16 %v7090
    %v7277 = vunpack.c.h.b16 %v7090
    %v7278 = vunpack.c.l.b16 %v7091
    %v7279 = vunpack.c.h.b16 %v7091
    %v7280 = vunpack.c.l.b16 %v7092
    %v7281 = vunpack.c.h.b16 %v7092
    %v7282 = vunpack.c.l.b16 %v7093
    %v7283 = vunpack.c.h.b16 %v7093
    %v7284 = vunpack.c.l.b16 %v7094
    %v7285 = vunpack.c.h.b16 %v7094
    %v7286 = vunpack.c.l.b16 %v7095
    %v7287 = vunpack.c.h.b16 %v7095
    %v7288 = vpack.c.b16 %v7164, %v7160
    %v7289 = vpack.c.b16 %v7165, %v7161
    %v7290 = vpack.c.b16 %v7166, %v7162
    %v7291 = vpack.c.b16 %v7167, %v7163
    %v7292 = vpack.c.b16 %v7172, %v7168
    %v7293 = vpack.c.b16 %v7173, %v7169
    %v7294 = vpack.c.b16 %v7174, %v7170
    %v7295 = vpack.c.b16 %v7175, %v7171
    %v7296 = vpack.c.b16 %v7180, %v7176
    %v7297 = vpack.c.b16 %v7181, %v7177
    %v7298 = vpack.c.b16 %v7182, %v7178
    %v7299 = vpack.c.b16 %v7183, %v7179
    %v7300 = vpack.c.b16 %v7188, %v7184
    %v7301 = vpack.c.b16 %v7189, %v7185
    %v7302 = vpack.c.b16 %v7190, %v7186
    %v7303 = vpack.c.b16 %v7191, %v7187
    %v7304 = vpack.c.b16 %v7196, %v7192
    %v7305 = vpack.c.b16 %v7197, %v7193
    %v7306 = vpack.c.b16 %v7198, %v7194
    %v7307 = vpack.c.b16 %v7199, %v7195
    %v7308 = vpack.c.b16 %v7204, %v7200
    %v7309 = vpack.c.b16 %v7205, %v7201
    %v7310 = vpack.c.b16 %v7206, %v7202
    %v7311 = vpack.c.b16 %v7207, %v7203
    %v7312 = vpack.c.b16 %v7212, %v7208
    %v7313 = vpack.c.b16 %v7213, %v7209
    %v7314 = vpack.c.b16 %v7214, %v7210
    %v7315 = vpack.c.b16 %v7215, %v7211
    %v7316 = vpack.c.b16 %v7220, %v7216
    %v7317 = vpack.c.b16 %v7221, %v7217
    %v7318 = vpack.c.b16 %v7222, %v7218
    %v7319 = vpack.c.b16 %v7223, %v7219
    %v7320 = vpack.c.b16 %v7228, %v7224
    %v7321 = vpack.c.b16 %v7229, %v7225
    %v7322 = vpack.c.b16 %v7230, %v7226
    %v7323 = vpack.c.b16 %v7231, %v7227
    %v7324 = vpack.c.b16 %v7236, %v7232
    %v7325 = vpack.c.b16 %v7237, %v7233
    %v7326 = vpack.c.b16 %v7238, %v7234
    %v7327 = vpack.c.b16 %v7239, %v7235
    %v7328 = vpack.c.b16 %v7244, %v7240
    %v7329 = vpack.c.b16 %v7245, %v7241
    %v7330 = vpack.c.b16 %v7246, %v7242
    %v7331 = vpack.c.b16 %v7247, %v7243
    %v7332 = vpack.c.b16 %v7252, %v7248
    %v7333 = vpack.c.b16 %v7253, %v7249
    %v7334 = vpack.c.b16 %v7254, %v7250
    %v7335 = vpack.c.b16 %v7255, %v7251
    %v7336 = vpack.c.b16 %v7260, %v7256
    %v7337 = vpack.c.b16 %v7261, %v7257
    %v7338 = vpack.c.b16 %v7262, %v7258
    %v7339 = vpack.c.b16 %v7263, %v7259
    %v7340 = vpack.c.b16 %v7268, %v7264
    %v7341 = vpack.c.b16 %v7269, %v7265
    %v7342 = vpack.c.b16 %v7270, %v7266
    %v7343 = vpack.c.b16 %v7271, %v7267
    %v7344 = vpack.c.b16 %v7276, %v7272
    %v7345 = vpack.c.b16 %v7277, %v7273
    %v7346 = vpack.c.b16 %v7278, %v7274
    %v7347 = vpack.c.b16 %v7279, %v7275
    %v7348 = vpack.c.b16 %v7284, %v7280
    %v7349 = vpack.c.b16 %v7285, %v7281
    %v7350 = vpack.c.b16 %v7286, %v7282
    %v7351 = vpack.c.b16 %v7287, %v7283
    %7416 = vmatprep.subr.bf16.mxu0 %v7289
    %7417 = vmatpush1.bf16.msra.mxu0 %v7288
    %7418 = vmatprep.subr.bf16.mxu0 %v7293
    %7419 = vmatpush1.bf16.msra.mxu0 %v7292
    %7420 = vmatprep.subr.bf16.mxu0 %v7297
    %7421 = vmatpush1.bf16.msra.mxu0 %v7296
    %7422 = vmatprep.subr.bf16.mxu0 %v7301
    %7423 = vmatpush1.bf16.msra.mxu0 %v7300
    %7424 = vmatprep.subr.bf16.mxu0 %v7305
    %7425 = vmatpush1.bf16.msra.mxu0 %v7304
    %7426 = vmatprep.subr.bf16.mxu0 %v7309
    %7427 = vmatpush1.bf16.msra.mxu0 %v7308
    %7428 = vmatprep.subr.bf16.mxu0 %v7313
    %7429 = vmatpush1.bf16.msra.mxu0 %v7312
    %7430 = vmatprep.subr.bf16.mxu0 %v7317
    %7431 = vmatpush1.bf16.msra.mxu0 %v7316
    %7432 = vmatprep.subr.bf16.mxu0 %v7321
    %7433 = vmatpush1.bf16.msra.mxu0 %v7320
    %7434 = vmatprep.subr.bf16.mxu0 %v7325
    %7435 = vmatpush1.bf16.msra.mxu0 %v7324
    %7436 = vmatprep.subr.bf16.mxu0 %v7329
    %7437 = vmatpush1.bf16.msra.mxu0 %v7328
    %7438 = vmatprep.subr.bf16.mxu0 %v7333
    %7439 = vmatpush1.bf16.msra.mxu0 %v7332
    %7440 = vmatprep.subr.bf16.mxu0 %v7337
    %7441 = vmatpush1.bf16.msra.mxu0 %v7336
    %7442 = vmatprep.subr.bf16.mxu0 %v7341
    %7443 = vmatpush1.bf16.msra.mxu0 %v7340
    %7444 = vmatprep.subr.bf16.mxu0 %v7345
    %7445 = vmatpush1.bf16.msra.mxu0 %v7344
    %7446 = vmatprep.subr.bf16.mxu0 %v7349
    %7447 = vmatpush1.bf16.msra.mxu0 %v7348
    %7448 = vmatprep.mubr.bf16.mxu0 %v1767
    %7449 = vmatmul.mubr.bf16.gmra.mrb[0].mxu0 %v1766
    %v7450 = vpop.f32.mrb[0].mxu0
    %v7451 = vadd.f32 0.0, %v7450
    %v7452 = vpop.f32.mrb[0].mxu0
    %v7453 = vadd.f32 0.0, %v7452
    %v7454 = vpop.f32.mrb[0].mxu0
    %v7455 = vpop.f32.mrb[0].mxu0
    %7456 = vdwg.mxu0
    %7457 = vmatprep.subr.bf16.mxu0 %v7291
    %7458 = vmatpush1.bf16.msra.mxu0 %v7290
    %7459 = vmatprep.subr.bf16.mxu0 %v7295
    %7460 = vmatpush1.bf16.msra.mxu0 %v7294
    %7461 = vmatprep.subr.bf16.mxu0 %v7299
    %7462 = vmatpush1.bf16.msra.mxu0 %v7298
    %7463 = vmatprep.subr.bf16.mxu0 %v7303
    %7464 = vmatpush1.bf16.msra.mxu0 %v7302
    %7465 = vmatprep.subr.bf16.mxu0 %v7307
    %7466 = vmatpush1.bf16.msra.mxu0 %v7306
    %7467 = vmatprep.subr.bf16.mxu0 %v7311
    %7468 = vmatpush1.bf16.msra.mxu0 %v7310
    %7469 = vmatprep.subr.bf16.mxu0 %v7315
    %7470 = vmatpush1.bf16.msra.mxu0 %v7314
    %7471 = vmatprep.subr.bf16.mxu0 %v7319
    %7472 = vmatpush1.bf16.msra.mxu0 %v7318
    %7473 = vmatprep.subr.bf16.mxu0 %v7323
    %7474 = vmatpush1.bf16.msra.mxu0 %v7322
    %7475 = vmatprep.subr.bf16.mxu0 %v7327
    %7476 = vmatpush1.bf16.msra.mxu0 %v7326
    %7477 = vmatprep.subr.bf16.mxu0 %v7331
    %7478 = vmatpush1.bf16.msra.mxu0 %v7330
    %7479 = vmatprep.subr.bf16.mxu0 %v7335
    %7480 = vmatpush1.bf16.msra.mxu0 %v7334
    %7481 = vmatprep.subr.bf16.mxu0 %v7339
    %7482 = vmatpush1.bf16.msra.mxu0 %v7338
    %7483 = vmatprep.subr.bf16.mxu0 %v7343
    %7484 = vmatpush1.bf16.msra.mxu0 %v7342
    %7485 = vmatprep.subr.bf16.mxu0 %v7347
    %7486 = vmatpush1.bf16.msra.mxu0 %v7346
    %7487 = vmatprep.subr.bf16.mxu0 %v7351
    %7488 = vmatpush1.bf16.msra.mxu0 %v7350
    %7489 = vmatprep.mubr.bf16.mxu0 %v1767
    %7490 = vmatmul.mubr.bf16.gmra.mrb[0].mxu0 %v1766
    %v7491 = vpop.f32.mrb[0].mxu0
    %v7492 = vadd.f32 0.0, %v7491
    %v7493 = vpop.f32.mrb[0].mxu0
    %v7494 = vadd.f32 0.0, %v7493
    %v7495 = vpop.f32.mrb[0].mxu0
    %v7496 = vpop.f32.mrb[0].mxu0
    %7497 = vdwg.mxu0
    %v7498 = vadd.f32 %v7028, %v7451
    %v7499 = vadd.f32 %v7029, %v7453
    %v7500 = vadd.f32 %v7030, %v7492
    %v7501 = vadd.f32 %v7031, %v7494
    %v7502 = vxor.u32 %v7498, 2147483648
    %v7503 = vxor.u32 %v7499, 2147483648
    %v7504 = vxor.u32 %v7500, 2147483648
    %v7505 = vmul.f32 %v7502, 1.442695
    %v7506 = vpow.pop %v7505
    %v7507 = vmul.f32 %v7503, 1.442695
    %v7508 = vpow.pop %v7507
    %v7509 = vmul.f32 %v7504, 1.442695
    %v7510 = vpow.pop %v7509
    %v7511 = vadd.f32 %v7506, 1.0
    %v7512 = vadd.f32 %v7508, 1.0
    %v7513 = vadd.f32 %v7510, 1.0
    %v7514 = vrcp.pop %v7511
    %v7515 = vmul.f32 1.0, %v7514
    %v7516 = vrcp.pop %v7512
    %v7517 = vmul.f32 1.0, %v7516
    %v7518 = vrcp.pop %v7513
    %v7519 = vmul.f32 1.0, %v7518
    %v7520 = vtanh.pop %v7501
    %v7521 = vmul.f32 %v7517, 0.0
    %v7522 = vmul.f32 %v7515, %v7520
    %v7523 = vadd.f32 %v7521, %v7522
    %v7524 = vtanh.pop %v7523
    %v7525 = vmul.f32 %v7519, %v7524
    %v7526 = vld [vmem:[#allocation2] sm:$0xc]
    %v7527 = vld [vmem:[#allocation2 + $0x8] sm:$0xc]
    %v7528 = vld [vmem:[#allocation2 + $0x10] sm:$0xc]
    %v7529 = vld [vmem:[#allocation2 + $0x18] sm:$0xc]
    %v7530 = vld [vmem:[#allocation2 + $0x60] sm:$0x30]
    %v7531 = vld [vmem:[#allocation2 + $0x68] sm:$0x30]
    %v7532 = vld [vmem:[#allocation2 + $0x70] sm:$0x30]
    %v7533 = vld [vmem:[#allocation2 + $0x78] sm:$0x30]
    %v7538 = vrot.slane %v7526, 2
    %v7539 = vrot.slane %v7527, 2
    %v7540 = vrot.slane %v7528, 2
    %v7541 = vrot.slane %v7529, 2
    %v7550 = vrot.slane %v7530, 2
    %v7551 = vrot.slane %v7531, 2
    %v7552 = vrot.slane %v7532, 2
    %v7553 = vrot.slane %v7533, 2
    %v7558 = vsel %vm1759, %v7538, %v7550
    %v7559 = vsel %vm1759, %v7539, %v7551
    %v7560 = vsel %vm1759, %v7540, %v7552
    %v7561 = vsel %vm1759, %v7541, %v7553
    %v7562 = vmul.f32 %v7525, %v163
    %v7563 = vmul.f32 %v7525, %v164
    %v7564 = vpack.c.bf16 %v7562, %v7562
    %v7565 = vpack.c.bf16 %v7563, %v7563
    %7566 = vmatprep.subr.bf16.mxu0 %v7289
    %7567 = vmatpush1.bf16.msra.mxu0 %v7288
    %7568 = vmatprep.subr.bf16.mxu0 %v7293
    %7569 = vmatpush1.bf16.msra.mxu0 %v7292
    %7570 = vmatprep.subr.bf16.mxu0 %v7297
    %7571 = vmatpush1.bf16.msra.mxu0 %v7296
    %7572 = vmatprep.subr.bf16.mxu0 %v7301
    %7573 = vmatpush1.bf16.msra.mxu0 %v7300
    %7574 = vmatprep.subr.bf16.mxu0 %v7305
    %7575 = vmatpush1.bf16.msra.mxu0 %v7304
    %7576 = vmatprep.subr.bf16.mxu0 %v7309
    %7577 = vmatpush1.bf16.msra.mxu0 %v7308
    %7578 = vmatprep.subr.bf16.mxu0 %v7313
    %7579 = vmatpush1.bf16.msra.mxu0 %v7312
    %7580 = vmatprep.subr.bf16.mxu0 %v7317
    %7581 = vmatpush1.bf16.msra.mxu0 %v7316
    %7582 = vmatprep.subr.bf16.mxu0 %v7321
    %7583 = vmatpush1.bf16.msra.mxu0 %v7320
    %7584 = vmatprep.subr.bf16.mxu0 %v7325
    %7585 = vmatpush1.bf16.msra.mxu0 %v7324
    %7586 = vmatprep.subr.bf16.mxu0 %v7329
    %7587 = vmatpush1.bf16.msra.mxu0 %v7328
    %7588 = vmatprep.subr.bf16.mxu0 %v7333
    %7589 = vmatpush1.bf16.msra.mxu0 %v7332
    %7590 = vmatprep.subr.bf16.mxu0 %v7337
    %7591 = vmatpush1.bf16.msra.mxu0 %v7336
    %7592 = vmatprep.subr.bf16.mxu0 %v7341
    %7593 = vmatpush1.bf16.msra.mxu0 %v7340
    %7594 = vmatprep.subr.bf16.mxu0 %v7345
    %7595 = vmatpush1.bf16.msra.mxu0 %v7344
    %7596 = vmatprep.subr.bf16.mxu0 %v7349
    %7597 = vmatpush1.bf16.msra.mxu0 %v7348
    %7598 = vmatprep.mubr.bf16.mxu0 %v7565
    %7599 = vmatmul.mubr.bf16.gmra.mrb[0].mxu0 %v7564
    %v7600 = vpop.f32.mrb[0].mxu0
    %v7601 = vadd.f32 0.0, %v7600
    %v7602 = vpop.f32.mrb[0].mxu0
    %v7603 = vadd.f32 0.0, %v7602
    %v7604 = vpop.f32.mrb[0].mxu0
    %v7605 = vpop.f32.mrb[0].mxu0
    %7606 = vdwg.mxu0
    %7607 = vmatprep.subr.bf16.mxu0 %v7291
    %7608 = vmatpush1.bf16.msra.mxu0 %v7290
    %7609 = vmatprep.subr.bf16.mxu0 %v7295
    %7610 = vmatpush1.bf16.msra.mxu0 %v7294
    %7611 = vmatprep.subr.bf16.mxu0 %v7299
    %7612 = vmatpush1.bf16.msra.mxu0 %v7298
    %7613 = vmatprep.subr.bf16.mxu0 %v7303
    %7614 = vmatpush1.bf16.msra.mxu0 %v7302
    %7615 = vmatprep.subr.bf16.mxu0 %v7307
    %7616 = vmatpush1.bf16.msra.mxu0 %v7306
    %7617 = vmatprep.subr.bf16.mxu0 %v7311
    %7618 = vmatpush1.bf16.msra.mxu0 %v7310
    %7619 = vmatprep.subr.bf16.mxu0 %v7315
    %7620 = vmatpush1.bf16.msra.mxu0 %v7314
    %7621 = vmatprep.subr.bf16.mxu0 %v7319
    %7622 = vmatpush1.bf16.msra.mxu0 %v7318
    %7623 = vmatprep.subr.bf16.mxu0 %v7323
    %7624 = vmatpush1.bf16.msra.mxu0 %v7322
    %7625 = vmatprep.subr.bf16.mxu0 %v7327
    %7626 = vmatpush1.bf16.msra.mxu0 %v7326
    %7627 = vmatprep.subr.bf16.mxu0 %v7331
    %7628 = vmatpush1.bf16.msra.mxu0 %v7330
    %7629 = vmatprep.subr.bf16.mxu0 %v7335
    %7630 = vmatpush1.bf16.msra.mxu0 %v7334
    %7631 = vmatprep.subr.bf16.mxu0 %v7339
    %7632 = vmatpush1.bf16.msra.mxu0 %v7338
    %7633 = vmatprep.subr.bf16.mxu0 %v7343
    %7634 = vmatpush1.bf16.msra.mxu0 %v7342
    %7635 = vmatprep.subr.bf16.mxu0 %v7347
    %7636 = vmatpush1.bf16.msra.mxu0 %v7346
    %7637 = vmatprep.subr.bf16.mxu0 %v7351
    %7638 = vmatpush1.bf16.msra.mxu0 %v7350
    %7639 = vmatprep.mubr.bf16.mxu0 %v7565
    %7640 = vmatmul.mubr.bf16.gmra.mrb[0].mxu0 %v7564
    %v7641 = vpop.f32.mrb[0].mxu0
    %v7642 = vadd.f32 0.0, %v7641
    %v7643 = vpop.f32.mrb[0].mxu0
    %v7644 = vadd.f32 0.0, %v7643
    %v7645 = vpop.f32.mrb[0].mxu0
    %v7646 = vpop.f32.mrb[0].mxu0
    %7647 = vdwg.mxu0
    %v7648 = vadd.f32 %v7558, %v7601
    %v7649 = vadd.f32 %v7559, %v7603
    %v7650 = vadd.f32 %v7560, %v7642
    %v7651 = vadd.f32 %v7561, %v7644
    %v7652 = vxor.u32 %v7648, 2147483648
    %v7653 = vxor.u32 %v7649, 2147483648
    %v7654 = vxor.u32 %v7650, 2147483648
    %v7655 = vmul.f32 %v7652, 1.442695
    %v7656 = vpow.pop %v7655
    %v7657 = vmul.f32 %v7653, 1.442695
    %v7658 = vpow.pop %v7657
    %v7659 = vmul.f32 %v7654, 1.442695
    %v7660 = vpow.pop %v7659
    %v7661 = vadd.f32 %v7656, 1.0
    %v7662 = vadd.f32 %v7658, 1.0
    %v7663 = vadd.f32 %v7660, 1.0
    %v7664 = vrcp.pop %v7661
    %v7665 = vmul.f32 1.0, %v7664
    %v7666 = vrcp.pop %v7662
    %v7667 = vmul.f32 1.0, %v7666
    %v7668 = vrcp.pop %v7663
    %v7669 = vmul.f32 1.0, %v7668
    %v7670 = vtanh.pop %v7651
    %v7671 = vmul.f32 %v7667, %v7523
    %v7672 = vmul.f32 %v7665, %v7670
    %v7673 = vadd.f32 %v7671, %v7672
    %v7674 = vtanh.pop %v7673
    %v7675 = vmul.f32 %v7669, %v7674
    %v7676 = vld [vmem:[#allocation2] sm:$0x30]
    %v7677 = vld [vmem:[#allocation2 + $0x8] sm:$0x30]
    %v7678 = vld [vmem:[#allocation2 + $0x10] sm:$0x30]
    %v7679 = vld [vmem:[#allocation2 + $0x18] sm:$0x30]
    %v7680 = vld [vmem:[#allocation2 + $0x60] sm:$0xc]
    %v7681 = vld [vmem:[#allocation2 + $0x68] sm:$0xc]
    %v7682 = vld [vmem:[#allocation2 + $0x70] sm:$0xc]
    %v7683 = vld [vmem:[#allocation2 + $0x78] sm:$0xc]
    %v7688 = vrot.slane %v7676, 4
    %v7689 = vrot.slane %v7677, 4
    %v7690 = vrot.slane %v7678, 4
    %v7691 = vrot.slane %v7679, 4
    %v7696 = vsel %vm1759, %v7688, %v7680
    %v7697 = vsel %vm1759, %v7689, %v7681
    %v7698 = vsel %vm1759, %v7690, %v7682
    %v7699 = vsel %vm1759, %v7691, %v7683
    %v7700 = vmul.f32 %v7675, %v163
    %v7701 = vmul.f32 %v7675, %v164
    %v7702 = vpack.c.bf16 %v7700, %v7700
    %v7703 = vpack.c.bf16 %v7701, %v7701
    %7704 = vmatprep.subr.bf16.mxu0 %v7289
    %7705 = vmatpush1.bf16.msra.mxu0 %v7288
    %7706 = vmatprep.subr.bf16.mxu0 %v7293
    %7707 = vmatpush1.bf16.msra.mxu0 %v7292
    %7708 = vmatprep.subr.bf16.mxu0 %v7297
    %7709 = vmatpush1.bf16.msra.mxu0 %v7296
    %7710 = vmatprep.subr.bf16.mxu0 %v7301
    %7711 = vmatpush1.bf16.msra.mxu0 %v7300
    %7712 = vmatprep.subr.bf16.mxu0 %v7305
    %7713 = vmatpush1.bf16.msra.mxu0 %v7304
    %7714 = vmatprep.subr.bf16.mxu0 %v7309
    %7715 = vmatpush1.bf16.msra.mxu0 %v7308
    %7716 = vmatprep.subr.bf16.mxu0 %v7313
    %7717 = vmatpush1.bf16.msra.mxu0 %v7312
    %7718 = vmatprep.subr.bf16.mxu0 %v7317
    %7719 = vmatpush1.bf16.msra.mxu0 %v7316
    %7720 = vmatprep.subr.bf16.mxu0 %v7321
    %7721 = vmatpush1.bf16.msra.mxu0 %v7320
    %7722 = vmatprep.subr.bf16.mxu0 %v7325
    %7723 = vmatpush1.bf16.msra.mxu0 %v7324
    %7724 = vmatprep.subr.bf16.mxu0 %v7329
    %7725 = vmatpush1.bf16.msra.mxu0 %v7328
    %7726 = vmatprep.subr.bf16.mxu0 %v7333
    %7727 = vmatpush1.bf16.msra.mxu0 %v7332
    %7728 = vmatprep.subr.bf16.mxu0 %v7337
    %7729 = vmatpush1.bf16.msra.mxu0 %v7336
    %7730 = vmatprep.subr.bf16.mxu0 %v7341
    %7731 = vmatpush1.bf16.msra.mxu0 %v7340
    %7732 = vmatprep.subr.bf16.mxu0 %v7345
    %7733 = vmatpush1.bf16.msra.mxu0 %v7344
    %7734 = vmatprep.subr.bf16.mxu0 %v7349
    %7735 = vmatpush1.bf16.msra.mxu0 %v7348
    %7736 = vmatprep.mubr.bf16.mxu0 %v7703
    %7737 = vmatmul.mubr.bf16.gmra.mrb[0].mxu0 %v7702
    %v7738 = vpop.f32.mrb[0].mxu0
    %v7739 = vadd.f32 0.0, %v7738
    %v7740 = vpop.f32.mrb[0].mxu0
    %v7741 = vadd.f32 0.0, %v7740
    %v7742 = vpop.f32.mrb[0].mxu0
    %v7743 = vpop.f32.mrb[0].mxu0
    %7744 = vdwg.mxu0
    %7745 = vmatprep.subr.bf16.mxu0 %v7291
    %7746 = vmatpush1.bf16.msra.mxu0 %v7290
    %7747 = vmatprep.subr.bf16.mxu0 %v7295
    %7748 = vmatpush1.bf16.msra.mxu0 %v7294
    %7749 = vmatprep.subr.bf16.mxu0 %v7299
    %7750 = vmatpush1.bf16.msra.mxu0 %v7298
    %7751 = vmatprep.subr.bf16.mxu0 %v7303
    %7752 = vmatpush1.bf16.msra.mxu0 %v7302
    %7753 = vmatprep.subr.bf16.mxu0 %v7307
    %7754 = vmatpush1.bf16.msra.mxu0 %v7306
    %7755 = vmatprep.subr.bf16.mxu0 %v7311
    %7756 = vmatpush1.bf16.msra.mxu0 %v7310
    %7757 = vmatprep.subr.bf16.mxu0 %v7315
    %7758 = vmatpush1.bf16.msra.mxu0 %v7314
    %7759 = vmatprep.subr.bf16.mxu0 %v7319
    %7760 = vmatpush1.bf16.msra.mxu0 %v7318
    %7761 = vmatprep.subr.bf16.mxu0 %v7323
    %7762 = vmatpush1.bf16.msra.mxu0 %v7322
    %7763 = vmatprep.subr.bf16.mxu0 %v7327
    %7764 = vmatpush1.bf16.msra.mxu0 %v7326
    %7765 = vmatprep.subr.bf16.mxu0 %v7331
    %7766 = vmatpush1.bf16.msra.mxu0 %v7330
    %7767 = vmatprep.subr.bf16.mxu0 %v7335
    %7768 = vmatpush1.bf16.msra.mxu0 %v7334
    %7769 = vmatprep.subr.bf16.mxu0 %v7339
    %7770 = vmatpush1.bf16.msra.mxu0 %v7338
    %7771 = vmatprep.subr.bf16.mxu0 %v7343
    %7772 = vmatpush1.bf16.msra.mxu0 %v7342
    %7773 = vmatprep.subr.bf16.mxu0 %v7347
    %7774 = vmatpush1.bf16.msra.mxu0 %v7346
    %7775 = vmatprep.subr.bf16.mxu0 %v7351
    %7776 = vmatpush1.bf16.msra.mxu0 %v7350
    %7777 = vmatprep.mubr.bf16.mxu0 %v7703
    %7778 = vmatmul.mubr.bf16.gmra.mrb[0].mxu0 %v7702
    %v7779 = vpop.f32.mrb[0].mxu0
    %v7780 = vadd.f32 0.0, %v7779
    %v7781 = vpop.f32.mrb[0].mxu0
    %v7782 = vadd.f32 0.0, %v7781
    %v7783 = vpop.f32.mrb[0].mxu0
    %v7784 = vpop.f32.mrb[0].mxu0
    %7785 = vdwg.mxu0
    %v7786 = vadd.f32 %v7696, %v7739
    %v7787 = vadd.f32 %v7697, %v7741
    %v7788 = vadd.f32 %v7698, %v7780
    %v7789 = vadd.f32 %v7699, %v7782
    %v7790 = vxor.u32 %v7786, 2147483648
    %v7791 = vxor.u32 %v7787, 2147483648
    %v7792 = vxor.u32 %v7788, 2147483648
    %v7793 = vmul.f32 %v7790, 1.442695
    %v7794 = vpow.pop %v7793
    %v7795 = vmul.f32 %v7791, 1.442695
    %v7796 = vpow.pop %v7795
    %v7797 = vmul.f32 %v7792, 1.442695
    %v7798 = vpow.pop %v7797
    %v7799 = vadd.f32 %v7794, 1.0
    %v7800 = vadd.f32 %v7796, 1.0
    %v7801 = vadd.f32 %v7798, 1.0
    %v7802 = vrcp.pop %v7799
    %v7803 = vmul.f32 1.0, %v7802
    %v7804 = vrcp.pop %v7800
    %v7805 = vmul.f32 1.0, %v7804
    %v7806 = vrcp.pop %v7801
    %v7807 = vmul.f32 1.0, %v7806
    %v7808 = vtanh.pop %v7789
    %v7809 = vmul.f32 %v7805, %v7673
    %v7810 = vmul.f32 %v7803, %v7808
    %v7811 = vadd.f32 %v7809, %v7810
    %v7812 = vtanh.pop %v7811
    %v7813 = vmul.f32 %v7807, %v7812
    %v7814 = vld [vmem:[#allocation2] sm:$0xc0]
    %v7815 = vld [vmem:[#allocation2 + $0x8] sm:$0xc0]
    %v7816 = vld [vmem:[#allocation2 + $0x10] sm:$0xc0]
    %v7817 = vld [vmem:[#allocation2 + $0x18] sm:$0xc0]
    %v7818 = vld [vmem:[#allocation2 + $0x60] sm:$0x3]
    %v7819 = vld [vmem:[#allocation2 + $0x68] sm:$0x3]
    %v7820 = vld [vmem:[#allocation2 + $0x70] sm:$0x3]
    %v7821 = vld [vmem:[#allocation2 + $0x78] sm:$0x3]
    %v7826 = vrot.slane %v7814, 6
    %v7827 = vrot.slane %v7815, 6
    %v7828 = vrot.slane %v7816, 6
    %v7829 = vrot.slane %v7817, 6
    %v7838 = vrot.slane %v7818, 6
    %v7839 = vrot.slane %v7819, 6
    %v7840 = vrot.slane %v7820, 6
    %v7841 = vrot.slane %v7821, 6
    %v7846 = vsel %vm1759, %v7826, %v7838
    %v7847 = vsel %vm1759, %v7827, %v7839
    %v7848 = vsel %vm1759, %v7828, %v7840
    %v7849 = vsel %vm1759, %v7829, %v7841
    %v7850 = vmul.f32 %v7813, %v163
    %v7851 = vmul.f32 %v7813, %v164
    %v7852 = vpack.c.bf16 %v7850, %v7850
    %v7853 = vpack.c.bf16 %v7851, %v7851
    %7854 = vmatprep.subr.bf16.mxu0 %v7289
    %7855 = vmatpush1.bf16.msra.mxu0 %v7288
    %7856 = vmatprep.subr.bf16.mxu0 %v7293
    %7857 = vmatpush1.bf16.msra.mxu0 %v7292
    %7858 = vmatprep.subr.bf16.mxu0 %v7297
    %7859 = vmatpush1.bf16.msra.mxu0 %v7296
    %7860 = vmatprep.subr.bf16.mxu0 %v7301
    %7861 = vmatpush1.bf16.msra.mxu0 %v7300
    %7862 = vmatprep.subr.bf16.mxu0 %v7305
    %7863 = vmatpush1.bf16.msra.mxu0 %v7304
    %7864 = vmatprep.subr.bf16.mxu0 %v7309
    %7865 = vmatpush1.bf16.msra.mxu0 %v7308
    %7866 = vmatprep.subr.bf16.mxu0 %v7313
    %7867 = vmatpush1.bf16.msra.mxu0 %v7312
    %7868 = vmatprep.subr.bf16.mxu0 %v7317
    %7869 = vmatpush1.bf16.msra.mxu0 %v7316
    %7870 = vmatprep.subr.bf16.mxu0 %v7321
    %7871 = vmatpush1.bf16.msra.mxu0 %v7320
    %7872 = vmatprep.subr.bf16.mxu0 %v7325
    %7873 = vmatpush1.bf16.msra.mxu0 %v7324
    %7874 = vmatprep.subr.bf16.mxu0 %v7329
    %7875 = vmatpush1.bf16.msra.mxu0 %v7328
    %7876 = vmatprep.subr.bf16.mxu0 %v7333
    %7877 = vmatpush1.bf16.msra.mxu0 %v7332
    %7878 = vmatprep.subr.bf16.mxu0 %v7337
    %7879 = vmatpush1.bf16.msra.mxu0 %v7336
    %7880 = vmatprep.subr.bf16.mxu0 %v7341
    %7881 = vmatpush1.bf16.msra.mxu0 %v7340
    %7882 = vmatprep.subr.bf16.mxu0 %v7345
    %7883 = vmatpush1.bf16.msra.mxu0 %v7344
    %7884 = vmatprep.subr.bf16.mxu0 %v7349
    %7885 = vmatpush1.bf16.msra.mxu0 %v7348
    %7886 = vmatprep.mubr.bf16.mxu0 %v7853
    %7887 = vmatmul.mubr.bf16.gmra.mrb[0].mxu0 %v7852
    %v7888 = vpop.f32.mrb[0].mxu0
    %v7889 = vadd.f32 0.0, %v7888
    %v7890 = vpop.f32.mrb[0].mxu0
    %v7891 = vadd.f32 0.0, %v7890
    %v7892 = vpop.f32.mrb[0].mxu0
    %v7893 = vpop.f32.mrb[0].mxu0
    %7894 = vdwg.mxu0
    %7895 = vmatprep.subr.bf16.mxu0 %v7291
    %7896 = vmatpush1.bf16.msra.mxu0 %v7290
    %7897 = vmatprep.subr.bf16.mxu0 %v7295
    %7898 = vmatpush1.bf16.msra.mxu0 %v7294
    %7899 = vmatprep.subr.bf16.mxu0 %v7299
    %7900 = vmatpush1.bf16.msra.mxu0 %v7298
    %7901 = vmatprep.subr.bf16.mxu0 %v7303
    %7902 = vmatpush1.bf16.msra.mxu0 %v7302
    %7903 = vmatprep.subr.bf16.mxu0 %v7307
    %7904 = vmatpush1.bf16.msra.mxu0 %v7306
    %7905 = vmatprep.subr.bf16.mxu0 %v7311
    %7906 = vmatpush1.bf16.msra.mxu0 %v7310
    %7907 = vmatprep.subr.bf16.mxu0 %v7315
    %7908 = vmatpush1.bf16.msra.mxu0 %v7314
    %7909 = vmatprep.subr.bf16.mxu0 %v7319
    %7910 = vmatpush1.bf16.msra.mxu0 %v7318
    %7911 = vmatprep.subr.bf16.mxu0 %v7323
    %7912 = vmatpush1.bf16.msra.mxu0 %v7322
    %7913 = vmatprep.subr.bf16.mxu0 %v7327
    %7914 = vmatpush1.bf16.msra.mxu0 %v7326
    %7915 = vmatprep.subr.bf16.mxu0 %v7331
    %7916 = vmatpush1.bf16.msra.mxu0 %v7330
    %7917 = vmatprep.subr.bf16.mxu0 %v7335
    %7918 = vmatpush1.bf16.msra.mxu0 %v7334
    %7919 = vmatprep.subr.bf16.mxu0 %v7339
    %7920 = vmatpush1.bf16.msra.mxu0 %v7338
    %7921 = vmatprep.subr.bf16.mxu0 %v7343
    %7922 = vmatpush1.bf16.msra.mxu0 %v7342
    %7923 = vmatprep.subr.bf16.mxu0 %v7347
    %7924 = vmatpush1.bf16.msra.mxu0 %v7346
    %7925 = vmatprep.subr.bf16.mxu0 %v7351
    %7926 = vmatpush1.bf16.msra.mxu0 %v7350
    %7927 = vmatprep.mubr.bf16.mxu0 %v7853
    %7928 = vmatmul.mubr.bf16.gmra.mrb[0].mxu0 %v7852
    %v7929 = vpop.f32.mrb[0].mxu0
    %v7930 = vadd.f32 0.0, %v7929
    %v7931 = vpop.f32.mrb[0].mxu0
    %v7932 = vadd.f32 0.0, %v7931
    %v7933 = vpop.f32.mrb[0].mxu0
    %v7934 = vpop.f32.mrb[0].mxu0
    %7935 = vdwg.mxu0
    %v7936 = vadd.f32 %v7846, %v7889
    %v7937 = vadd.f32 %v7847, %v7891
    %v7938 = vadd.f32 %v7848, %v7930
    %v7939 = vadd.f32 %v7849, %v7932
    %v7940 = vxor.u32 %v7936, 2147483648
    %v7941 = vxor.u32 %v7937, 2147483648
    %v7942 = vxor.u32 %v7938, 2147483648
    %v7943 = vmul.f32 %v7940, 1.442695
    %v7944 = vpow.pop %v7943
    %v7945 = vmul.f32 %v7941, 1.442695
    %v7946 = vpow.pop %v7945
    %v7947 = vmul.f32 %v7942, 1.442695
    %v7948 = vpow.pop %v7947
    %v7949 = vadd.f32 %v7944, 1.0
    %v7950 = vadd.f32 %v7946, 1.0
    %v7951 = vadd.f32 %v7948, 1.0
    %v7952 = vrcp.pop %v7949
    %v7953 = vmul.f32 1.0, %v7952
    %v7954 = vrcp.pop %v7950
    %v7955 = vmul.f32 1.0, %v7954
    %v7956 = vrcp.pop %v7951
    %v7957 = vmul.f32 1.0, %v7956
    %v7958 = vtanh.pop %v7939
    %v7959 = vmul.f32 %v7955, %v7811
    %v7960 = vmul.f32 %v7953, %v7958
    %v7961 = vadd.f32 %v7959, %v7960
    %v7962 = vtanh.pop %v7961
    %v7963 = vmul.f32 %v7957, %v7962
    %v7964 = vld [vmem:[#allocation2 + $0x40] sm:$0x3]
    %v7965 = vld [vmem:[#allocation2 + $0x48] sm:$0x3]
    %v7966 = vld [vmem:[#allocation2 + $0x50] sm:$0x3]
    %v7967 = vld [vmem:[#allocation2 + $0x58] sm:$0x3]
    %v7968 = vld [vmem:[#allocation2 + $0x20] sm:$0xc0]
    %v7969 = vld [vmem:[#allocation2 + $0x28] sm:$0xc0]
    %v7970 = vld [vmem:[#allocation2 + $0x30] sm:$0xc0]
    %v7971 = vld [vmem:[#allocation2 + $0x38] sm:$0xc0]
    %v7976 = vrot.slane %v7968, 4
    %v7977 = vrot.slane %v7969, 4
    %v7978 = vrot.slane %v7970, 4
    %v7979 = vrot.slane %v7971, 4
    %v7984 = vsel %vm1759, %v7964, %v7976
    %v7985 = vsel %vm1759, %v7965, %v7977
    %v7986 = vsel %vm1759, %v7966, %v7978
    %v7987 = vsel %vm1759, %v7967, %v7979
    %v7988 = vmul.f32 %v7963, %v163
    %v7989 = vmul.f32 %v7963, %v164
    %v7990 = vpack.c.bf16 %v7988, %v7988
    %v7991 = vpack.c.bf16 %v7989, %v7989
    %7992 = vmatprep.subr.bf16.mxu0 %v7289
    %7993 = vmatpush1.bf16.msra.mxu0 %v7288
    %7994 = vmatprep.subr.bf16.mxu0 %v7293
    %7995 = vmatpush1.bf16.msra.mxu0 %v7292
    %7996 = vmatprep.subr.bf16.mxu0 %v7297
    %7997 = vmatpush1.bf16.msra.mxu0 %v7296
    %7998 = vmatprep.subr.bf16.mxu0 %v7301
    %7999 = vmatpush1.bf16.msra.mxu0 %v7300
    %8000 = vmatprep.subr.bf16.mxu0 %v7305
    %8001 = vmatpush1.bf16.msra.mxu0 %v7304
    %8002 = vmatprep.subr.bf16.mxu0 %v7309
    %8003 = vmatpush1.bf16.msra.mxu0 %v7308
    %8004 = vmatprep.subr.bf16.mxu0 %v7313
    %8005 = vmatpush1.bf16.msra.mxu0 %v7312
    %8006 = vmatprep.subr.bf16.mxu0 %v7317
    %8007 = vmatpush1.bf16.msra.mxu0 %v7316
    %8008 = vmatprep.subr.bf16.mxu0 %v7321
    %8009 = vmatpush1.bf16.msra.mxu0 %v7320
    %8010 = vmatprep.subr.bf16.mxu0 %v7325
    %8011 = vmatpush1.bf16.msra.mxu0 %v7324
    %8012 = vmatprep.subr.bf16.mxu0 %v7329
    %8013 = vmatpush1.bf16.msra.mxu0 %v7328
    %8014 = vmatprep.subr.bf16.mxu0 %v7333
    %8015 = vmatpush1.bf16.msra.mxu0 %v7332
    %8016 = vmatprep.subr.bf16.mxu0 %v7337
    %8017 = vmatpush1.bf16.msra.mxu0 %v7336
    %8018 = vmatprep.subr.bf16.mxu0 %v7341
    %8019 = vmatpush1.bf16.msra.mxu0 %v7340
    %8020 = vmatprep.subr.bf16.mxu0 %v7345
    %8021 = vmatpush1.bf16.msra.mxu0 %v7344
    %8022 = vmatprep.subr.bf16.mxu0 %v7349
    %8023 = vmatpush1.bf16.msra.mxu0 %v7348
    %8024 = vmatprep.mubr.bf16.mxu0 %v7991
    %8025 = vmatmul.mubr.bf16.gmra.mrb[0].mxu0 %v7990
    %v8026 = vpop.f32.mrb[0].mxu0
    %v8027 = vadd.f32 0.0, %v8026
    %v8028 = vpop.f32.mrb[0].mxu0
    %v8029 = vadd.f32 0.0, %v8028
    %v8030 = vpop.f32.mrb[0].mxu0
    %v8031 = vpop.f32.mrb[0].mxu0
    %8032 = vdwg.mxu0
    %8033 = vmatprep.subr.bf16.mxu0 %v7291
    %8034 = vmatpush1.bf16.msra.mxu0 %v7290
    %8035 = vmatprep.subr.bf16.mxu0 %v7295
    %8036 = vmatpush1.bf16.msra.mxu0 %v7294
    %8037 = vmatprep.subr.bf16.mxu0 %v7299
    %8038 = vmatpush1.bf16.msra.mxu0 %v7298
    %8039 = vmatprep.subr.bf16.mxu0 %v7303
    %8040 = vmatpush1.bf16.msra.mxu0 %v7302
    %8041 = vmatprep.subr.bf16.mxu0 %v7307
    %8042 = vmatpush1.bf16.msra.mxu0 %v7306
    %8043 = vmatprep.subr.bf16.mxu0 %v7311
    %8044 = vmatpush1.bf16.msra.mxu0 %v7310
    %8045 = vmatprep.subr.bf16.mxu0 %v7315
    %8046 = vmatpush1.bf16.msra.mxu0 %v7314
    %8047 = vmatprep.subr.bf16.mxu0 %v7319
    %8048 = vmatpush1.bf16.msra.mxu0 %v7318
    %8049 = vmatprep.subr.bf16.mxu0 %v7323
    %8050 = vmatpush1.bf16.msra.mxu0 %v7322
    %8051 = vmatprep.subr.bf16.mxu0 %v7327
    %8052 = vmatpush1.bf16.msra.mxu0 %v7326
    %8053 = vmatprep.subr.bf16.mxu0 %v7331
    %8054 = vmatpush1.bf16.msra.mxu0 %v7330
    %8055 = vmatprep.subr.bf16.mxu0 %v7335
    %8056 = vmatpush1.bf16.msra.mxu0 %v7334
    %8057 = vmatprep.subr.bf16.mxu0 %v7339
    %8058 = vmatpush1.bf16.msra.mxu0 %v7338
    %8059 = vmatprep.subr.bf16.mxu0 %v7343
    %8060 = vmatpush1.bf16.msra.mxu0 %v7342
    %8061 = vmatprep.subr.bf16.mxu0 %v7347
    %8062 = vmatpush1.bf16.msra.mxu0 %v7346
    %8063 = vmatprep.subr.bf16.mxu0 %v7351
    %8064 = vmatpush1.bf16.msra.mxu0 %v7350
    %8065 = vmatprep.mubr.bf16.mxu0 %v7991
    %8066 = vmatmul.mubr.bf16.gmra.mrb[0].mxu0 %v7990
    %v8067 = vpop.f32.mrb[0].mxu0
    %v8068 = vadd.f32 0.0, %v8067
    %v8069 = vpop.f32.mrb[0].mxu0
    %v8070 = vadd.f32 0.0, %v8069
    %v8071 = vpop.f32.mrb[0].mxu0
    %v8072 = vpop.f32.mrb[0].mxu0
    %8073 = vdwg.mxu0
    %v8074 = vadd.f32 %v7984, %v8027
    %v8075 = vadd.f32 %v7985, %v8029
    %v8076 = vadd.f32 %v7986, %v8068
    %v8077 = vadd.f32 %v7987, %v8070
    %v8078 = vxor.u32 %v8074, 2147483648
    %v8079 = vxor.u32 %v8075, 2147483648
    %v8080 = vxor.u32 %v8076, 2147483648
    %v8081 = vmul.f32 %v8078, 1.442695
    %v8082 = vpow.pop %v8081
    %v8083 = vmul.f32 %v8079, 1.442695
    %v8084 = vpow.pop %v8083
    %v8085 = vmul.f32 %v8080, 1.442695
    %v8086 = vpow.pop %v8085
    %v8087 = vadd.f32 %v8082, 1.0
    %v8088 = vadd.f32 %v8084, 1.0
    %v8089 = vadd.f32 %v8086, 1.0
    %v8090 = vrcp.pop %v8087
    %v8091 = vmul.f32 1.0, %v8090
    %v8092 = vrcp.pop %v8088
    %v8093 = vmul.f32 1.0, %v8092
    %v8094 = vrcp.pop %v8089
    %v8095 = vmul.f32 1.0, %v8094
    %v8096 = vtanh.pop %v8077
    %v8097 = vmul.f32 %v8093, %v7961
    %v8098 = vmul.f32 %v8091, %v8096
    %v8099 = vadd.f32 %v8097, %v8098
    %v8100 = vtanh.pop %v8099
    %v8101 = vmul.f32 %v8095, %v8100
    %v8102 = vld [vmem:[#allocation2 + $0x40] sm:$0xc]
    %v8103 = vld [vmem:[#allocation2 + $0x48] sm:$0xc]
    %v8104 = vld [vmem:[#allocation2 + $0x50] sm:$0xc]
    %v8105 = vld [vmem:[#allocation2 + $0x58] sm:$0xc]
    %v8106 = vld [vmem:[#allocation2 + $0x20] sm:$0x30]
    %v8107 = vld [vmem:[#allocation2 + $0x28] sm:$0x30]
    %v8108 = vld [vmem:[#allocation2 + $0x30] sm:$0x30]
    %v8109 = vld [vmem:[#allocation2 + $0x38] sm:$0x30]
    %v8114 = vrot.slane %v8102, 2
    %v8115 = vrot.slane %v8103, 2
    %v8116 = vrot.slane %v8104, 2
    %v8117 = vrot.slane %v8105, 2
    %v8126 = vrot.slane %v8106, 2
    %v8127 = vrot.slane %v8107, 2
    %v8128 = vrot.slane %v8108, 2
    %v8129 = vrot.slane %v8109, 2
    %v8134 = vsel %vm1759, %v8114, %v8126
    %v8135 = vsel %vm1759, %v8115, %v8127
    %v8136 = vsel %vm1759, %v8116, %v8128
    %v8137 = vsel %vm1759, %v8117, %v8129
    %v8138 = vmul.f32 %v8101, %v163
    %v8139 = vmul.f32 %v8101, %v164
    %v8140 = vpack.c.bf16 %v8138, %v8138
    %v8141 = vpack.c.bf16 %v8139, %v8139
    %8142 = vmatprep.subr.bf16.mxu0 %v7289
    %8143 = vmatpush1.bf16.msra.mxu0 %v7288
    %8144 = vmatprep.subr.bf16.mxu0 %v7293
    %8145 = vmatpush1.bf16.msra.mxu0 %v7292
    %8146 = vmatprep.subr.bf16.mxu0 %v7297
    %8147 = vmatpush1.bf16.msra.mxu0 %v7296
    %8148 = vmatprep.subr.bf16.mxu0 %v7301
    %8149 = vmatpush1.bf16.msra.mxu0 %v7300
    %8150 = vmatprep.subr.bf16.mxu0 %v7305
    %8151 = vmatpush1.bf16.msra.mxu0 %v7304
    %8152 = vmatprep.subr.bf16.mxu0 %v7309
    %8153 = vmatpush1.bf16.msra.mxu0 %v7308
    %8154 = vmatprep.subr.bf16.mxu0 %v7313
    %8155 = vmatpush1.bf16.msra.mxu0 %v7312
    %8156 = vmatprep.subr.bf16.mxu0 %v7317
    %8157 = vmatpush1.bf16.msra.mxu0 %v7316
    %8158 = vmatprep.subr.bf16.mxu0 %v7321
    %8159 = vmatpush1.bf16.msra.mxu0 %v7320
    %8160 = vmatprep.subr.bf16.mxu0 %v7325
    %8161 = vmatpush1.bf16.msra.mxu0 %v7324
    %8162 = vmatprep.subr.bf16.mxu0 %v7329
    %8163 = vmatpush1.bf16.msra.mxu0 %v7328
    %8164 = vmatprep.subr.bf16.mxu0 %v7333
    %8165 = vmatpush1.bf16.msra.mxu0 %v7332
    %8166 = vmatprep.subr.bf16.mxu0 %v7337
    %8167 = vmatpush1.bf16.msra.mxu0 %v7336
    %8168 = vmatprep.subr.bf16.mxu0 %v7341
    %8169 = vmatpush1.bf16.msra.mxu0 %v7340
    %8170 = vmatprep.subr.bf16.mxu0 %v7345
    %8171 = vmatpush1.bf16.msra.mxu0 %v7344
    %8172 = vmatprep.subr.bf16.mxu0 %v7349
    %8173 = vmatpush1.bf16.msra.mxu0 %v7348
    %8174 = vmatprep.mubr.bf16.mxu0 %v8141
    %8175 = vmatmul.mubr.bf16.gmra.mrb[0].mxu0 %v8140
    %v8176 = vpop.f32.mrb[0].mxu0
    %v8177 = vadd.f32 0.0, %v8176
    %v8178 = vpop.f32.mrb[0].mxu0
    %v8179 = vadd.f32 0.0, %v8178
    %v8180 = vpop.f32.mrb[0].mxu0
    %v8181 = vpop.f32.mrb[0].mxu0
    %8182 = vdwg.mxu0
    %8183 = vmatprep.subr.bf16.mxu0 %v7291
    %8184 = vmatpush1.bf16.msra.mxu0 %v7290
    %8185 = vmatprep.subr.bf16.mxu0 %v7295
    %8186 = vmatpush1.bf16.msra.mxu0 %v7294
    %8187 = vmatprep.subr.bf16.mxu0 %v7299
    %8188 = vmatpush1.bf16.msra.mxu0 %v7298
    %8189 = vmatprep.subr.bf16.mxu0 %v7303
    %8190 = vmatpush1.bf16.msra.mxu0 %v7302
    %8191 = vmatprep.subr.bf16.mxu0 %v7307
    %8192 = vmatpush1.bf16.msra.mxu0 %v7306
    %8193 = vmatprep.subr.bf16.mxu0 %v7311
    %8194 = vmatpush1.bf16.msra.mxu0 %v7310
    %8195 = vmatprep.subr.bf16.mxu0 %v7315
    %8196 = vmatpush1.bf16.msra.mxu0 %v7314
    %8197 = vmatprep.subr.bf16.mxu0 %v7319
    %8198 = vmatpush1.bf16.msra.mxu0 %v7318
    %8199 = vmatprep.subr.bf16.mxu0 %v7323
    %8200 = vmatpush1.bf16.msra.mxu0 %v7322
    %8201 = vmatprep.subr.bf16.mxu0 %v7327
    %8202 = vmatpush1.bf16.msra.mxu0 %v7326
    %8203 = vmatprep.subr.bf16.mxu0 %v7331
    %8204 = vmatpush1.bf16.msra.mxu0 %v7330
    %8205 = vmatprep.subr.bf16.mxu0 %v7335
    %8206 = vmatpush1.bf16.msra.mxu0 %v7334
    %8207 = vmatprep.subr.bf16.mxu0 %v7339
    %8208 = vmatpush1.bf16.msra.mxu0 %v7338
    %8209 = vmatprep.subr.bf16.mxu0 %v7343
    %8210 = vmatpush1.bf16.msra.mxu0 %v7342
    %8211 = vmatprep.subr.bf16.mxu0 %v7347
    %8212 = vmatpush1.bf16.msra.mxu0 %v7346
    %8213 = vmatprep.subr.bf16.mxu0 %v7351
    %8214 = vmatpush1.bf16.msra.mxu0 %v7350
    %8215 = vmatprep.mubr.bf16.mxu0 %v8141
    %8216 = vmatmul.mubr.bf16.gmra.mrb[0].mxu0 %v8140
    %v8217 = vpop.f32.mrb[0].mxu0
    %v8218 = vadd.f32 0.0, %v8217
    %v8219 = vpop.f32.mrb[0].mxu0
    %v8220 = vadd.f32 0.0, %v8219
    %v8221 = vpop.f32.mrb[0].mxu0
    %v8222 = vpop.f32.mrb[0].mxu0
    %8223 = vdwg.mxu0
    %v8224 = vadd.f32 %v8134, %v8177
    %v8225 = vadd.f32 %v8135, %v8179
    %v8226 = vadd.f32 %v8136, %v8218
    %v8227 = vadd.f32 %v8137, %v8220
    %v8228 = vxor.u32 %v8224, 2147483648
    %v8229 = vxor.u32 %v8225, 2147483648
    %v8230 = vxor.u32 %v8226, 2147483648
    %v8231 = vmul.f32 %v8228, 1.442695
    %v8232 = vpow.pop %v8231
    %v8233 = vmul.f32 %v8229, 1.442695
    %v8234 = vpow.pop %v8233
    %v8235 = vmul.f32 %v8230, 1.442695
    %v8236 = vpow.pop %v8235
    %v8237 = vadd.f32 %v8232, 1.0
    %v8238 = vadd.f32 %v8234, 1.0
    %v8239 = vadd.f32 %v8236, 1.0
    %v8240 = vrcp.pop %v8237
    %v8241 = vmul.f32 1.0, %v8240
    %v8242 = vrcp.pop %v8238
    %v8243 = vmul.f32 1.0, %v8242
    %v8244 = vrcp.pop %v8239
    %v8245 = vmul.f32 1.0, %v8244
    %v8246 = vtanh.pop %v8227
    %v8247 = vmul.f32 %v8243, %v8099
    %v8248 = vmul.f32 %v8241, %v8246
    %v8249 = vadd.f32 %v8247, %v8248
    %v8250 = vtanh.pop %v8249
    %v8251 = vmul.f32 %v8245, %v8250
    %v8252 = vld [vmem:[#allocation2 + $0x40] sm:$0x30]
    %v8253 = vld [vmem:[#allocation2 + $0x48] sm:$0x30]
    %v8254 = vld [vmem:[#allocation2 + $0x50] sm:$0x30]
    %v8255 = vld [vmem:[#allocation2 + $0x58] sm:$0x30]
    %v8256 = vld [vmem:[#allocation2 + $0x20] sm:$0xc]
    %v8257 = vld [vmem:[#allocation2 + $0x28] sm:$0xc]
    %v8258 = vld [vmem:[#allocation2 + $0x30] sm:$0xc]
    %v8259 = vld [vmem:[#allocation2 + $0x38] sm:$0xc]
    %v8264 = vrot.slane %v8252, 4
    %v8265 = vrot.slane %v8253, 4
    %v8266 = vrot.slane %v8254, 4
    %v8267 = vrot.slane %v8255, 4
    %v8272 = vsel %vm1759, %v8264, %v8256
    %v8273 = vsel %vm1759, %v8265, %v8257
    %v8274 = vsel %vm1759, %v8266, %v8258
    %v8275 = vsel %vm1759, %v8267, %v8259
    %v8276 = vmul.f32 %v8251, %v163
    %v8277 = vmul.f32 %v8251, %v164
    %v8278 = vpack.c.bf16 %v8276, %v8276
    %v8279 = vpack.c.bf16 %v8277, %v8277
    %8280 = vmatprep.subr.bf16.mxu0 %v7289
    %8281 = vmatpush1.bf16.msra.mxu0 %v7288
    %8282 = vmatprep.subr.bf16.mxu0 %v7293
    %8283 = vmatpush1.bf16.msra.mxu0 %v7292
    %8284 = vmatprep.subr.bf16.mxu0 %v7297
    %8285 = vmatpush1.bf16.msra.mxu0 %v7296
    %8286 = vmatprep.subr.bf16.mxu0 %v7301
    %8287 = vmatpush1.bf16.msra.mxu0 %v7300
    %8288 = vmatprep.subr.bf16.mxu0 %v7305
    %8289 = vmatpush1.bf16.msra.mxu0 %v7304
    %8290 = vmatprep.subr.bf16.mxu0 %v7309
    %8291 = vmatpush1.bf16.msra.mxu0 %v7308
    %8292 = vmatprep.subr.bf16.mxu0 %v7313
    %8293 = vmatpush1.bf16.msra.mxu0 %v7312
    %8294 = vmatprep.subr.bf16.mxu0 %v7317
    %8295 = vmatpush1.bf16.msra.mxu0 %v7316
    %8296 = vmatprep.subr.bf16.mxu0 %v7321
    %8297 = vmatpush1.bf16.msra.mxu0 %v7320
    %8298 = vmatprep.subr.bf16.mxu0 %v7325
    %8299 = vmatpush1.bf16.msra.mxu0 %v7324
    %8300 = vmatprep.subr.bf16.mxu0 %v7329
    %8301 = vmatpush1.bf16.msra.mxu0 %v7328
    %8302 = vmatprep.subr.bf16.mxu0 %v7333
    %8303 = vmatpush1.bf16.msra.mxu0 %v7332
    %8304 = vmatprep.subr.bf16.mxu0 %v7337
    %8305 = vmatpush1.bf16.msra.mxu0 %v7336
    %8306 = vmatprep.subr.bf16.mxu0 %v7341
    %8307 = vmatpush1.bf16.msra.mxu0 %v7340
    %8308 = vmatprep.subr.bf16.mxu0 %v7345
    %8309 = vmatpush1.bf16.msra.mxu0 %v7344
    %8310 = vmatprep.subr.bf16.mxu0 %v7349
    %8311 = vmatpush1.bf16.msra.mxu0 %v7348
    %8312 = vmatprep.mubr.bf16.mxu0 %v8279
    %8313 = vmatmul.mubr.bf16.gmra.mrb[0].mxu0 %v8278
    %v8314 = vpop.f32.mrb[0].mxu0
    %v8315 = vadd.f32 0.0, %v8314
    %v8316 = vpop.f32.mrb[0].mxu0
    %v8317 = vadd.f32 0.0, %v8316
    %v8318 = vpop.f32.mrb[0].mxu0
    %v8319 = vpop.f32.mrb[0].mxu0
    %8320 = vdwg.mxu0
    %8321 = vmatprep.subr.bf16.mxu0 %v7291
    %8322 = vmatpush1.bf16.msra.mxu0 %v7290
    %8323 = vmatprep.subr.bf16.mxu0 %v7295
    %8324 = vmatpush1.bf16.msra.mxu0 %v7294
    %8325 = vmatprep.subr.bf16.mxu0 %v7299
    %8326 = vmatpush1.bf16.msra.mxu0 %v7298
    %8327 = vmatprep.subr.bf16.mxu0 %v7303
    %8328 = vmatpush1.bf16.msra.mxu0 %v7302
    %8329 = vmatprep.subr.bf16.mxu0 %v7307
    %8330 = vmatpush1.bf16.msra.mxu0 %v7306
    %8331 = vmatprep.subr.bf16.mxu0 %v7311
    %8332 = vmatpush1.bf16.msra.mxu0 %v7310
    %8333 = vmatprep.subr.bf16.mxu0 %v7315
    %8334 = vmatpush1.bf16.msra.mxu0 %v7314
    %8335 = vmatprep.subr.bf16.mxu0 %v7319
    %8336 = vmatpush1.bf16.msra.mxu0 %v7318
    %8337 = vmatprep.subr.bf16.mxu0 %v7323
    %8338 = vmatpush1.bf16.msra.mxu0 %v7322
    %8339 = vmatprep.subr.bf16.mxu0 %v7327
    %8340 = vmatpush1.bf16.msra.mxu0 %v7326
    %8341 = vmatprep.subr.bf16.mxu0 %v7331
    %8342 = vmatpush1.bf16.msra.mxu0 %v7330
    %8343 = vmatprep.subr.bf16.mxu0 %v7335
    %8344 = vmatpush1.bf16.msra.mxu0 %v7334
    %8345 = vmatprep.subr.bf16.mxu0 %v7339
    %8346 = vmatpush1.bf16.msra.mxu0 %v7338
    %8347 = vmatprep.subr.bf16.mxu0 %v7343
    %8348 = vmatpush1.bf16.msra.mxu0 %v7342
    %8349 = vmatprep.subr.bf16.mxu0 %v7347
    %8350 = vmatpush1.bf16.msra.mxu0 %v7346
    %8351 = vmatprep.subr.bf16.mxu0 %v7351
    %8352 = vmatpush1.bf16.msra.mxu0 %v7350
    %8353 = vmatprep.mubr.bf16.mxu0 %v8279
    %8354 = vmatmul.mubr.bf16.gmra.mrb[0].mxu0 %v8278
    %v8355 = vpop.f32.mrb[0].mxu0
    %v8356 = vadd.f32 0.0, %v8355
    %v8357 = vpop.f32.mrb[0].mxu0
    %v8358 = vadd.f32 0.0, %v8357
    %v8359 = vpop.f32.mrb[0].mxu0
    %v8360 = vpop.f32.mrb[0].mxu0
    %8361 = vdwg.mxu0
    %v8362 = vadd.f32 %v8272, %v8315
    %v8363 = vadd.f32 %v8273, %v8317
    %v8364 = vadd.f32 %v8274, %v8356
    %v8365 = vadd.f32 %v8275, %v8358
    %v8366 = vxor.u32 %v8362, 2147483648
    %v8367 = vxor.u32 %v8363, 2147483648
    %v8368 = vxor.u32 %v8364, 2147483648
    %v8369 = vmul.f32 %v8366, 1.442695
    %v8370 = vpow.pop %v8369
    %v8371 = vmul.f32 %v8367, 1.442695
    %v8372 = vpow.pop %v8371
    %v8373 = vmul.f32 %v8368, 1.442695
    %v8374 = vpow.pop %v8373
    %v8375 = vadd.f32 %v8370, 1.0
    %v8376 = vadd.f32 %v8372, 1.0
    %v8377 = vadd.f32 %v8374, 1.0
    %v8378 = vrcp.pop %v8375
    %v8379 = vmul.f32 1.0, %v8378
    %v8380 = vrcp.pop %v8376
    %v8381 = vmul.f32 1.0, %v8380
    %v8382 = vrcp.pop %v8377
    %v8383 = vmul.f32 1.0, %v8382
    %v8384 = vtanh.pop %v8365
    %v8385 = vmul.f32 %v8381, %v8249
    %v8386 = vmul.f32 %v8379, %v8384
    %v8387 = vadd.f32 %v8385, %v8386
    %v8388 = vtanh.pop %v8387
    %v8389 = vmul.f32 %v8383, %v8388
    %v8390 = vld [vmem:[#allocation2 + $0x40] sm:$0xc0]
    %v8391 = vld [vmem:[#allocation2 + $0x48] sm:$0xc0]
    %v8392 = vld [vmem:[#allocation2 + $0x50] sm:$0xc0]
    %v8393 = vld [vmem:[#allocation2 + $0x58] sm:$0xc0]
    %v8394 = vld [vmem:[#allocation2 + $0x20] sm:$0x3]
    %v8395 = vld [vmem:[#allocation2 + $0x28] sm:$0x3]
    %v8396 = vld [vmem:[#allocation2 + $0x30] sm:$0x3]
    %v8397 = vld [vmem:[#allocation2 + $0x38] sm:$0x3]
    %v8402 = vrot.slane %v8390, 6
    %v8403 = vrot.slane %v8391, 6
    %v8404 = vrot.slane %v8392, 6
    %v8405 = vrot.slane %v8393, 6
    %v8414 = vrot.slane %v8394, 6
    %v8415 = vrot.slane %v8395, 6
    %v8416 = vrot.slane %v8396, 6
    %v8417 = vrot.slane %v8397, 6
    %v8422 = vsel %vm1759, %v8402, %v8414
    %v8423 = vsel %vm1759, %v8403, %v8415
    %v8424 = vsel %vm1759, %v8404, %v8416
    %v8425 = vsel %vm1759, %v8405, %v8417
    %v8426 = vmul.f32 %v8389, %v163
    %v8427 = vmul.f32 %v8389, %v164
    %v8428 = vpack.c.bf16 %v8426, %v8426
    %v8429 = vpack.c.bf16 %v8427, %v8427
    %8430 = vmatprep.subr.bf16.mxu0 %v7289
    %8431 = vmatpush1.bf16.msra.mxu0 %v7288
    %8432 = vmatprep.subr.bf16.mxu0 %v7293
    %8433 = vmatpush1.bf16.msra.mxu0 %v7292
    %8434 = vmatprep.subr.bf16.mxu0 %v7297
    %8435 = vmatpush1.bf16.msra.mxu0 %v7296
    %8436 = vmatprep.subr.bf16.mxu0 %v7301
    %8437 = vmatpush1.bf16.msra.mxu0 %v7300
    %8438 = vmatprep.subr.bf16.mxu0 %v7305
    %8439 = vmatpush1.bf16.msra.mxu0 %v7304
    %8440 = vmatprep.subr.bf16.mxu0 %v7309
    %8441 = vmatpush1.bf16.msra.mxu0 %v7308
    %8442 = vmatprep.subr.bf16.mxu0 %v7313
    %8443 = vmatpush1.bf16.msra.mxu0 %v7312
    %8444 = vmatprep.subr.bf16.mxu0 %v7317
    %8445 = vmatpush1.bf16.msra.mxu0 %v7316
    %8446 = vmatprep.subr.bf16.mxu0 %v7321
    %8447 = vmatpush1.bf16.msra.mxu0 %v7320
    %8448 = vmatprep.subr.bf16.mxu0 %v7325
    %8449 = vmatpush1.bf16.msra.mxu0 %v7324
    %8450 = vmatprep.subr.bf16.mxu0 %v7329
    %8451 = vmatpush1.bf16.msra.mxu0 %v7328
    %8452 = vmatprep.subr.bf16.mxu0 %v7333
    %8453 = vmatpush1.bf16.msra.mxu0 %v7332
    %8454 = vmatprep.subr.bf16.mxu0 %v7337
    %8455 = vmatpush1.bf16.msra.mxu0 %v7336
    %8456 = vmatprep.subr.bf16.mxu0 %v7341
    %8457 = vmatpush1.bf16.msra.mxu0 %v7340
    %8458 = vmatprep.subr.bf16.mxu0 %v7345
    %8459 = vmatpush1.bf16.msra.mxu0 %v7344
    %8460 = vmatprep.subr.bf16.mxu0 %v7349
    %8461 = vmatpush1.bf16.msra.mxu0 %v7348
    %8462 = vmatprep.mubr.bf16.mxu0 %v8429
    %8463 = vmatmul.mubr.bf16.gmra.mrb[0].mxu0 %v8428
    %v8464 = vpop.f32.mrb[0].mxu0
    %v8465 = vadd.f32 0.0, %v8464
    %v8466 = vpop.f32.mrb[0].mxu0
    %v8467 = vadd.f32 0.0, %v8466
    %v8468 = vpop.f32.mrb[0].mxu0
    %v8469 = vpop.f32.mrb[0].mxu0
    %8470 = vdwg.mxu0
    %8471 = vmatprep.subr.bf16.mxu0 %v7291
    %8472 = vmatpush1.bf16.msra.mxu0 %v7290
    %8473 = vmatprep.subr.bf16.mxu0 %v7295
    %8474 = vmatpush1.bf16.msra.mxu0 %v7294
    %8475 = vmatprep.subr.bf16.mxu0 %v7299
    %8476 = vmatpush1.bf16.msra.mxu0 %v7298
    %8477 = vmatprep.subr.bf16.mxu0 %v7303
    %8478 = vmatpush1.bf16.msra.mxu0 %v7302
    %8479 = vmatprep.subr.bf16.mxu0 %v7307
    %8480 = vmatpush1.bf16.msra.mxu0 %v7306
    %8481 = vmatprep.subr.bf16.mxu0 %v7311
    %8482 = vmatpush1.bf16.msra.mxu0 %v7310
    %8483 = vmatprep.subr.bf16.mxu0 %v7315
    %8484 = vmatpush1.bf16.msra.mxu0 %v7314
    %8485 = vmatprep.subr.bf16.mxu0 %v7319
    %8486 = vmatpush1.bf16.msra.mxu0 %v7318
    %8487 = vmatprep.subr.bf16.mxu0 %v7323
    %8488 = vmatpush1.bf16.msra.mxu0 %v7322
    %8489 = vmatprep.subr.bf16.mxu0 %v7327
    %8490 = vmatpush1.bf16.msra.mxu0 %v7326
    %8491 = vmatprep.subr.bf16.mxu0 %v7331
    %8492 = vmatpush1.bf16.msra.mxu0 %v7330
    %8493 = vmatprep.subr.bf16.mxu0 %v7335
    %8494 = vmatpush1.bf16.msra.mxu0 %v7334
    %8495 = vmatprep.subr.bf16.mxu0 %v7339
    %8496 = vmatpush1.bf16.msra.mxu0 %v7338
    %8497 = vmatprep.subr.bf16.mxu0 %v7343
    %8498 = vmatpush1.bf16.msra.mxu0 %v7342
    %8499 = vmatprep.subr.bf16.mxu0 %v7347
    %8500 = vmatpush1.bf16.msra.mxu0 %v7346
    %8501 = vmatprep.subr.bf16.mxu0 %v7351
    %8502 = vmatpush1.bf16.msra.mxu0 %v7350
    %8503 = vmatprep.mubr.bf16.mxu0 %v8429
    %8504 = vmatmul.mubr.bf16.gmra.mrb[0].mxu0 %v8428
    %v8505 = vpop.f32.mrb[0].mxu0
    %v8506 = vadd.f32 0.0, %v8505
    %v8507 = vpop.f32.mrb[0].mxu0
    %v8508 = vadd.f32 0.0, %v8507
    %v8509 = vpop.f32.mrb[0].mxu0
    %v8510 = vpop.f32.mrb[0].mxu0
    %8511 = vdwg.mxu0
    %v8512 = vadd.f32 %v8422, %v8465
    %v8513 = vadd.f32 %v8423, %v8467
    %v8514 = vadd.f32 %v8424, %v8506
    %v8515 = vadd.f32 %v8425, %v8508
    %v8516 = vxor.u32 %v8512, 2147483648
    %v8517 = vxor.u32 %v8513, 2147483648
    %v8518 = vxor.u32 %v8514, 2147483648
    %v8519 = vmul.f32 %v8516, 1.442695
    %v8520 = vpow.pop %v8519
    %v8521 = vmul.f32 %v8517, 1.442695
    %v8522 = vpow.pop %v8521
    %v8523 = vmul.f32 %v8518, 1.442695
    %v8524 = vpow.pop %v8523
    %v8525 = vadd.f32 %v8520, 1.0
    %v8526 = vadd.f32 %v8522, 1.0
    %v8527 = vadd.f32 %v8524, 1.0
    %v8528 = vrcp.pop %v8525
    %v8529 = vmul.f32 1.0, %v8528
    %v8530 = vrcp.pop %v8526
    %v8531 = vmul.f32 1.0, %v8530
    %v8532 = vrcp.pop %v8527
    %v8533 = vmul.f32 1.0, %v8532
    %v8534 = vtanh.pop %v8515
    %v8535 = vmul.f32 %v8531, %v8387
    %v8536 = vmul.f32 %v8529, %v8534
    %v8537 = vadd.f32 %v8535, %v8536
    %v8538 = vtanh.pop %v8537
    %v8539 = vmul.f32 %v8533, %v8538
    %v8541 = vrot.slane %v8539, 2
    %v8543 = vpack.c.bf16 %v8539, %v8539
    %v8544 = vpack.c.bf16 %v8541, %v8541
    %v8545 = vld [vmem:[#allocation9] sm:$0xf]
    %v8546 = vld [vmem:[#allocation9 + $0x4] sm:$0xf]
    %v8547 = vld [vmem:[#allocation9 + $0x8] sm:$0xf]
    %v8548 = vld [vmem:[#allocation9 + $0xc] sm:$0xf]
    %v8549 = vld [vmem:[#allocation9 + $0x10] sm:$0xf]
    %v8550 = vld [vmem:[#allocation9 + $0x14] sm:$0xf]
    %v8551 = vld [vmem:[#allocation9 + $0x18] sm:$0xf]
    %v8552 = vld [vmem:[#allocation9 + $0x1c] sm:$0xf]
    %v8553 = vld [vmem:[#allocation9 + $0x20] sm:$0xf]
    %v8554 = vld [vmem:[#allocation9 + $0x24] sm:$0xf]
    %v8555 = vld [vmem:[#allocation9 + $0x28] sm:$0xf]
    %v8556 = vld [vmem:[#allocation9 + $0x2c] sm:$0xf]
    %v8557 = vld [vmem:[#allocation9 + $0x30] sm:$0xf]
    %v8558 = vld [vmem:[#allocation9 + $0x34] sm:$0xf]
    %v8559 = vld [vmem:[#allocation9 + $0x38] sm:$0xf]
    %v8560 = vld [vmem:[#allocation9 + $0x3c] sm:$0xf]
    %v8561 = vld [vmem:[#allocation9 + $0x40] sm:$0xf]
    %v8562 = vld [vmem:[#allocation9 + $0x44] sm:$0xf]
    %v8563 = vld [vmem:[#allocation9 + $0x48] sm:$0xf]
    %v8564 = vld [vmem:[#allocation9 + $0x4c] sm:$0xf]
    %v8565 = vld [vmem:[#allocation9 + $0x50] sm:$0xf]
    %v8566 = vld [vmem:[#allocation9 + $0x54] sm:$0xf]
    %v8567 = vld [vmem:[#allocation9 + $0x58] sm:$0xf]
    %v8568 = vld [vmem:[#allocation9 + $0x5c] sm:$0xf]
    %v8569 = vld [vmem:[#allocation9 + $0x60] sm:$0xf]
    %v8570 = vld [vmem:[#allocation9 + $0x64] sm:$0xf]
    %v8571 = vld [vmem:[#allocation9 + $0x68] sm:$0xf]
    %v8572 = vld [vmem:[#allocation9 + $0x6c] sm:$0xf]
    %v8573 = vld [vmem:[#allocation9 + $0x70] sm:$0xf]
    %v8574 = vld [vmem:[#allocation9 + $0x74] sm:$0xf]
    %v8575 = vld [vmem:[#allocation9 + $0x78] sm:$0xf]
    %v8576 = vld [vmem:[#allocation9 + $0x7c] sm:$0xf]
    %v8577 = vld [vmem:[#allocation10] sm:$0x1]
    %v8579 = vlaneseq
    %v8580 = vshrl.u32 %v8579, 7
    %v8581 = vsub.s32 0, %v8580
    %v8582 = vrot.slane %v8577, %v8581
    %v8616 = vunpack.c.l.b16 %v8545
    %v8617 = vunpack.c.l.b16 %v8546
    %v8618 = vunpack.c.l.b16 %v8547
    %v8619 = vunpack.c.l.b16 %v8548
    %v8620 = vunpack.c.l.b16 %v8549
    %v8621 = vunpack.c.l.b16 %v8550
    %v8622 = vunpack.c.l.b16 %v8551
    %v8623 = vunpack.c.l.b16 %v8552
    %v8624 = vunpack.c.l.b16 %v8553
    %v8625 = vunpack.c.l.b16 %v8554
    %v8626 = vunpack.c.l.b16 %v8555
    %v8627 = vunpack.c.l.b16 %v8556
    %v8628 = vunpack.c.l.b16 %v8557
    %v8629 = vunpack.c.l.b16 %v8558
    %v8630 = vunpack.c.l.b16 %v8559
    %v8631 = vunpack.c.l.b16 %v8560
    %v8632 = vunpack.c.l.b16 %v8561
    %v8633 = vunpack.c.l.b16 %v8562
    %v8634 = vunpack.c.l.b16 %v8563
    %v8635 = vunpack.c.l.b16 %v8564
    %v8636 = vunpack.c.l.b16 %v8565
    %v8637 = vunpack.c.l.b16 %v8566
    %v8638 = vunpack.c.l.b16 %v8567
    %v8639 = vunpack.c.l.b16 %v8568
    %v8640 = vunpack.c.l.b16 %v8569
    %v8641 = vunpack.c.l.b16 %v8570
    %v8642 = vunpack.c.l.b16 %v8571
    %v8643 = vunpack.c.l.b16 %v8572
    %v8644 = vunpack.c.l.b16 %v8573
    %v8645 = vunpack.c.l.b16 %v8574
    %v8646 = vunpack.c.l.b16 %v8575
    %v8647 = vunpack.c.l.b16 %v8576
    %v8648 = vpack.c.b16 %v8617, %v8616
    %v8649 = vpack.c.b16 %v8619, %v8618
    %v8650 = vpack.c.b16 %v8621, %v8620
    %v8651 = vpack.c.b16 %v8623, %v8622
    %v8652 = vpack.c.b16 %v8625, %v8624
    %v8653 = vpack.c.b16 %v8627, %v8626
    %v8654 = vpack.c.b16 %v8629, %v8628
    %v8655 = vpack.c.b16 %v8631, %v8630
    %v8656 = vpack.c.b16 %v8633, %v8632
    %v8657 = vpack.c.b16 %v8635, %v8634
    %v8658 = vpack.c.b16 %v8637, %v8636
    %v8659 = vpack.c.b16 %v8639, %v8638
    %v8660 = vpack.c.b16 %v8641, %v8640
    %v8661 = vpack.c.b16 %v8643, %v8642
    %v8662 = vpack.c.b16 %v8645, %v8644
    %v8663 = vpack.c.b16 %v8647, %v8646
    %8680 = vmatprep.subr.bf16.mxu0 0
    %8681 = vmatpush1.bf16.msra.mxu0 %v8648
    %8682 = vmatprep.subr.bf16.mxu0 0
    %8683 = vmatpush1.bf16.msra.mxu0 %v8649
    %8684 = vmatprep.subr.bf16.mxu0 0
    %8685 = vmatpush1.bf16.msra.mxu0 %v8650
    %8686 = vmatprep.subr.bf16.mxu0 0
    %8687 = vmatpush1.bf16.msra.mxu0 %v8651
    %8688 = vmatprep.subr.bf16.mxu0 0
    %8689 = vmatpush1.bf16.msra.mxu0 %v8652
    %8690 = vmatprep.subr.bf16.mxu0 0
    %8691 = vmatpush1.bf16.msra.mxu0 %v8653
    %8692 = vmatprep.subr.bf16.mxu0 0
    %8693 = vmatpush1.bf16.msra.mxu0 %v8654
    %8694 = vmatprep.subr.bf16.mxu0 0
    %8695 = vmatpush1.bf16.msra.mxu0 %v8655
    %8696 = vmatprep.subr.bf16.mxu0 0
    %8697 = vmatpush1.bf16.msra.mxu0 %v8656
    %8698 = vmatprep.subr.bf16.mxu0 0
    %8699 = vmatpush1.bf16.msra.mxu0 %v8657
    %8700 = vmatprep.subr.bf16.mxu0 0
    %8701 = vmatpush1.bf16.msra.mxu0 %v8658
    %8702 = vmatprep.subr.bf16.mxu0 0
    %8703 = vmatpush1.bf16.msra.mxu0 %v8659
    %8704 = vmatprep.subr.bf16.mxu0 0
    %8705 = vmatpush1.bf16.msra.mxu0 %v8660
    %8706 = vmatprep.subr.bf16.mxu0 0
    %8707 = vmatpush1.bf16.msra.mxu0 %v8661
    %8708 = vmatprep.subr.bf16.mxu0 0
    %8709 = vmatpush1.bf16.msra.mxu0 %v8662
    %8710 = vmatprep.subr.bf16.mxu0 0
    %8711 = vmatpush1.bf16.msra.mxu0 %v8663
    %8712 = vmatprep.mubr.bf16.mxu0 %v8544
    %8713 = vmatmul.mubr.bf16.gmra.mrb[0].mxu0 %v8543
    %v8714 = vpop.f32.mrb[0].mxu0
    %v8715 = vadd.f32 %v8582, %v8714
    %v8716 = vpop.f32.mrb[0].mxu0
    %v8717 = vpop.f32.mrb[0].mxu0
    %v8718 = vpop.f32.mrb[0].mxu0
    %8719 = vdwg.mxu0
    %v8720 = vld [vmem:[%s9] sm:$0x1]
    %v8722 = vlaneseq
    %v8723 = vshrl.u32 %v8722, 7
    %v8724 = vsub.s32 0, %v8723
    %v8725 = vrot.slane %v8720, %v8724
    %v8727 = vmul.f32 %v8715, %v8725
    %v8728 = vld [vmem:[%s10] sm:$0x1]
    %v8730 = vlaneseq
    %v8731 = vshrl.u32 %v8730, 7
    %v8732 = vsub.s32 0, %v8731
    %v8733 = vrot.slane %v8728, %v8732
    %v8735 = vadd.f32 %v8727, %v8733
    %v8736 = vmax.f32 %v8735, 0.0
    %v8737 = vpack.c.bf16 %v8736, %v8736
    %v8738 = vld [vmem:[#allocation12] sm:$0xf]
    %v8739 = vld [vmem:[#allocation12 + $0x4] sm:$0xf]
    %v8740 = vld [vmem:[#allocation12 + $0x8] sm:$0xf]
    %v8741 = vld [vmem:[#allocation12 + $0xc] sm:$0xf]
    %v8742 = vld [vmem:[#allocation12 + $0x10] sm:$0xf]
    %v8743 = vld [vmem:[#allocation12 + $0x14] sm:$0xf]
    %v8744 = vld [vmem:[#allocation12 + $0x18] sm:$0xf]
    %v8745 = vld [vmem:[#allocation12 + $0x1c] sm:$0xf]
    %v8746 = vld [vmem:[#allocation12 + $0x20] sm:$0xf]
    %v8747 = vld [vmem:[#allocation12 + $0x24] sm:$0xf]
    %v8748 = vld [vmem:[#allocation12 + $0x28] sm:$0xf]
    %v8749 = vld [vmem:[#allocation12 + $0x2c] sm:$0xf]
    %v8750 = vld [vmem:[#allocation12 + $0x30] sm:$0xf]
    %v8751 = vld [vmem:[#allocation12 + $0x34] sm:$0xf]
    %v8752 = vld [vmem:[#allocation12 + $0x38] sm:$0xf]
    %v8753 = vld [vmem:[#allocation12 + $0x3c] sm:$0xf]
    %v8754 = vld [vmem:[#allocation13] sm:$0x1]
    %v8756 = vlaneseq
    %v8757 = vshrl.u32 %v8756, 7
    %v8758 = vsub.s32 0, %v8757
    %v8759 = vrot.slane %v8754, %v8758
    %v8777 = vunpack.c.l.b16 %v8738
    %v8778 = vunpack.c.l.b16 %v8739
    %v8779 = vunpack.c.l.b16 %v8740
    %v8780 = vunpack.c.l.b16 %v8741
    %v8781 = vunpack.c.l.b16 %v8742
    %v8782 = vunpack.c.l.b16 %v8743
    %v8783 = vunpack.c.l.b16 %v8744
    %v8784 = vunpack.c.l.b16 %v8745
    %v8785 = vunpack.c.l.b16 %v8746
    %v8786 = vunpack.c.l.b16 %v8747
    %v8787 = vunpack.c.l.b16 %v8748
    %v8788 = vunpack.c.l.b16 %v8749
    %v8789 = vunpack.c.l.b16 %v8750
    %v8790 = vunpack.c.l.b16 %v8751
    %v8791 = vunpack.c.l.b16 %v8752
    %v8792 = vunpack.c.l.b16 %v8753
    %v8793 = vpack.c.b16 %v8778, %v8777
    %v8794 = vpack.c.b16 %v8780, %v8779
    %v8795 = vpack.c.b16 %v8782, %v8781
    %v8796 = vpack.c.b16 %v8784, %v8783
    %v8797 = vpack.c.b16 %v8786, %v8785
    %v8798 = vpack.c.b16 %v8788, %v8787
    %v8799 = vpack.c.b16 %v8790, %v8789
    %v8800 = vpack.c.b16 %v8792, %v8791
    %8809 = vmatprep.subr.bf16.mxu0 0
    %8810 = vmatpush1.bf16.msra.mxu0 %v8793
    %8811 = vmatprep.subr.bf16.mxu0 0
    %8812 = vmatpush1.bf16.msra.mxu0 %v8794
    %8813 = vmatprep.subr.bf16.mxu0 0
    %8814 = vmatpush1.bf16.msra.mxu0 %v8795
    %8815 = vmatprep.subr.bf16.mxu0 0
    %8816 = vmatpush1.bf16.msra.mxu0 %v8796
    %8817 = vmatprep.subr.bf16.mxu0 0
    %8818 = vmatpush1.bf16.msra.mxu0 %v8797
    %8819 = vmatprep.subr.bf16.mxu0 0
    %8820 = vmatpush1.bf16.msra.mxu0 %v8798
    %8821 = vmatprep.subr.bf16.mxu0 0
    %8822 = vmatpush1.bf16.msra.mxu0 %v8799
    %8823 = vmatprep.subr.bf16.mxu0 0
    %8824 = vmatpush1.bf16.msra.mxu0 %v8800
    %8825 = vmatprep.subr.bf16.mxu0 0
    %8826 = vmatpush1.bf16.msra.mxu0 0
    %8827 = vmatprep.subr.bf16.mxu0 0
    %8828 = vmatpush1.bf16.msra.mxu0 0
    %8829 = vmatprep.subr.bf16.mxu0 0
    %8830 = vmatpush1.bf16.msra.mxu0 0
    %8831 = vmatprep.subr.bf16.mxu0 0
    %8832 = vmatpush1.bf16.msra.mxu0 0
    %8833 = vmatprep.subr.bf16.mxu0 0
    %8834 = vmatpush1.bf16.msra.mxu0 0
    %8835 = vmatprep.subr.bf16.mxu0 0
    %8836 = vmatpush1.bf16.msra.mxu0 0
    %8837 = vmatprep.subr.bf16.mxu0 0
    %8838 = vmatpush1.bf16.msra.mxu0 0
    %8839 = vmatprep.subr.bf16.mxu0 0
    %8840 = vmatpush1.bf16.msra.mxu0 0
    %8841 = vmatprep.mubr.bf16.mxu0 0
    %8842 = vmatmul.mubr.bf16.gmra.mrb[0].mxu0 %v8737
    %v8843 = vpop.f32.mrb[0].mxu0
    %v8844 = vadd.f32 %v8759, %v8843
    %v8845 = vpop.f32.mrb[0].mxu0
    %v8846 = vpop.f32.mrb[0].mxu0
    %v8847 = vpop.f32.mrb[0].mxu0
    %8848 = vdwg.mxu0
    %v8849 = vld [vmem:[%s13] sm:$0x1]
    %v8851 = vlaneseq
    %v8852 = vshrl.u32 %v8851, 7
    %v8853 = vsub.s32 0, %v8852
    %v8854 = vrot.slane %v8849, %v8853
    %v8856 = vmul.f32 %v8844, %v8854
    %v8857 = vld [vmem:[%s14] sm:$0x1]
    %v8859 = vlaneseq
    %v8860 = vshrl.u32 %v8859, 7
    %v8861 = vsub.s32 0, %v8860
    %v8862 = vrot.slane %v8857, %v8861
    %v8864 = vadd.f32 %v8856, %v8862
    %v8865 = vmax.f32 %v8864, 0.0
    %v8866 = vpack.c.bf16 %v8865, %v8865
    %v8867 = vld [vmem:[#allocation15] sm:$0xf]
    %v8868 = vld [vmem:[#allocation15 + $0x4] sm:$0xf]
    %v8869 = vld [vmem:[#allocation15 + $0x8] sm:$0xf]
    %v8870 = vld [vmem:[#allocation15 + $0xc] sm:$0xf]
    %v8871 = vld [vmem:[#allocation15 + $0x10] sm:$0xf]
    %v8872 = vld [vmem:[#allocation15 + $0x14] sm:$0xf]
    %v8873 = vld [vmem:[#allocation15 + $0x18] sm:$0xf]
    %v8874 = vld [vmem:[#allocation15 + $0x1c] sm:$0xf]
    %v8875 = vld [vmem:[#allocation4] sm:$0x1]
    %v8877 = vlaneseq
    %v8878 = vshrl.u32 %v8877, 7
    %v8879 = vsub.s32 0, %v8878
    %v8880 = vrot.slane %v8875, %v8879
    %v8890 = vunpack.c.l.b16 %v8867
    %v8891 = vunpack.c.l.b16 %v8868
    %v8892 = vunpack.c.l.b16 %v8869
    %v8893 = vunpack.c.l.b16 %v8870
    %v8894 = vunpack.c.l.b16 %v8871
    %v8895 = vunpack.c.l.b16 %v8872
    %v8896 = vunpack.c.l.b16 %v8873
    %v8897 = vunpack.c.l.b16 %v8874
    %v8898 = vpack.c.b16 %v8891, %v8890
    %v8899 = vpack.c.b16 %v8893, %v8892
    %v8900 = vpack.c.b16 %v8895, %v8894
    %v8901 = vpack.c.b16 %v8897, %v8896
    %vm8906 = vcmask 523264
    %v8908 = vsel %vm8906, %v8866, 0
    %8910 = vmatprep.subr.bf16.mxu0 0
    %8911 = vmatpush1.bf16.msra.mxu0 %v8898
    %8912 = vmatprep.subr.bf16.mxu0 0
    %8913 = vmatpush1.bf16.msra.mxu0 %v8899
    %8914 = vmatprep.subr.bf16.mxu0 0
    %8915 = vmatpush1.bf16.msra.mxu0 %v8900
    %8916 = vmatprep.subr.bf16.mxu0 0
    %8917 = vmatpush1.bf16.msra.mxu0 %v8901
    %8918 = vmatprep.subr.bf16.mxu0 0
    %8919 = vmatpush1.bf16.msra.mxu0 0
    %8920 = vmatprep.subr.bf16.mxu0 0
    %8921 = vmatpush1.bf16.msra.mxu0 0
    %8922 = vmatprep.subr.bf16.mxu0 0
    %8923 = vmatpush1.bf16.msra.mxu0 0
    %8924 = vmatprep.subr.bf16.mxu0 0
    %8925 = vmatpush1.bf16.msra.mxu0 0
    %8926 = vmatprep.subr.bf16.mxu0 0
    %8927 = vmatpush1.bf16.msra.mxu0 0
    %8928 = vmatprep.subr.bf16.mxu0 0
    %8929 = vmatpush1.bf16.msra.mxu0 0
    %8930 = vmatprep.subr.bf16.mxu0 0
    %8931 = vmatpush1.bf16.msra.mxu0 0
    %8932 = vmatprep.subr.bf16.mxu0 0
    %8933 = vmatpush1.bf16.msra.mxu0 0
    %8934 = vmatprep.subr.bf16.mxu0 0
    %8935 = vmatpush1.bf16.msra.mxu0 0
    %8936 = vmatprep.subr.bf16.mxu0 0
    %8937 = vmatpush1.bf16.msra.mxu0 0
    %8938 = vmatprep.subr.bf16.mxu0 0
    %8939 = vmatpush1.bf16.msra.mxu0 0
    %8940 = vmatprep.subr.bf16.mxu0 0
    %8941 = vmatpush1.bf16.msra.mxu0 0
    %8942 = vmatprep.mubr.bf16.mxu0 0
    %8943 = vmatmul.mubr.bf16.gmra.mrb[0].mxu0 %v8908
    %v8944 = vpop.f32.mrb[0].mxu0
    %v8945 = vadd.f32 %v8880, %v8944
    %v8946 = vpop.f32.mrb[0].mxu0
    %v8947 = vpop.f32.mrb[0].mxu0
    %v8948 = vpop.f32.mrb[0].mxu0
    %8949 = vdwg.mxu0
    %v8950 = vxor.u32 %v8945, 2147483648
    %v8951 = vmul.f32 %v8950, 1.442695
    %v8952 = vpow.pop %v8951
    %v8953 = vadd.f32 %v8952, 1.0
    %v8954 = vrcp.pop %v8953
    %v8955 = vmul.f32 1.0, %v8954
    %vm8956 = vcmask 1024
    %8957 = vst.msk [vmem:[%s17] sm:$0x3] %vm8956, %v8955
    // Predicated region
    $region98: #{model_forward.1} parent=1 // pred_check
      _
    $region99: #{model_forward.1} parent=1 // pred_check_branch
      %8959 = sbr.rel (0) target = $region101
    $region100: #{model_forward.1} parent=1 // pred_region
      _
    $region101: #{model_forward.1} parent=1 // pred_fallthru
      _
    // Predicated region
    $region102: #{model_forward.1} parent=1 // pred_check
      _
    $region103: #{model_forward.1} parent=1 // pred_check_branch
      %8961 = sbr.rel (0) target = $region105
    $region104: #{model_forward.1} parent=1 // pred_region
      _
    $region105: #{model_forward.1} parent=1 // pred_fallthru
      _
    %8962 = vsyncpa [#allocation6], 1
    %8963 = vsyncpa [#allocation8], 1
    %8964 = vsyncpa [#allocation11], 1
    %8965 = vsyncpa [#allocation14], 1

</llo_original>
